<compile_context>
chip_gen: v6e
topology: v6e:2x2x1
jax: 0.10.0
libtpu: 0.0.40
codegen_flags: <defaults>
</compile_context>

<pallas_src>
import functools
import math

import numpy as np
import jax
import jax.numpy as jnp
from jax.experimental import pallas as pl
from jax.experimental.pallas import tpu as pltpu

F32 = jnp.float32
EPS = 1e-5  # PyTorch BatchNorm default eps


def find_power(n):
    # find_power is not defined in the reference source; assume floor(log2(n)).
    return int(math.floor(math.log2(n)))


def make_alphas(L):
    # nn.PReLU() default init = 0.25 (single shared parameter), kept as static floats.
    return {'in1': 0.25, 'in2': 0.25,
            'U': [0.25] * L, 'P': [0.25] * L,
            'g1': [0.25] * L, 'g2': [0.25] * L,
            'G1': 0.25, 'G2': 0.25, 'fc': 0.25}


# ------------------------------- host-side packer -------------------------------

class _Packer:
    """Packs many small 2-D f32 blocks into one (rows, 128) matrix.
    Every block starts at a sublane-aligned (multiple-of-8) row offset so that
    in-kernel static slices are aligned loads."""
    LANES = 128

    def __init__(self):
        self._chunks = []
        self._offs = {}
        self._row = 0

    def add(self, name, arr):
        a = np.asarray(arr, np.float32)
        if a.ndim == 1:
            a = a[None, :]
        r, c = a.shape
        assert c <= self.LANES, (name, a.shape)
        self._offs[name] = (self._row, r, c)
        pad_r = (-r) % 8
        self._chunks.append(np.pad(a, ((0, pad_r), (0, self.LANES - c))))
        self._row += r + pad_r

    def finish(self):
        return np.concatenate(self._chunks, axis=0), dict(self._offs)


# --------------------------------- parameters --------------------------------

def init_params(key, C, L, num_classes, k_size):
    K1 = k_size + 30
    D = (L + 1) * C
    LC = L * C

    def nrm(k, shape, s=0.1):
        return (s * jax.random.normal(k, shape)).astype(F32)

    keys = iter(jax.random.split(key, 32))
    p = {}
    p['w_in1'] = nrm(next(keys), (K1, C))
    p['b_in1'] = nrm(next(keys), (1, C), 0.01)
    p['g_in1'] = jnp.ones((1, C), F32)
    p['be_in1'] = jnp.zeros((1, C), F32)
    p['w_in2'] = nrm(next(keys), (k_size, C, C))
    p['b_in2'] = nrm(next(keys), (1, C), 0.01)
    p['g_in2'] = jnp.ones((1, C), F32)
    p['be_in2'] = jnp.zeros((1, C), F32)
    p['wU3'] = nrm(next(keys), (L, k_size, C, C))
    p['wU1'] = nrm(next(keys), (L, C, C))
    p['wP3'] = nrm(next(keys), (L, k_size, C, C))
    p['wP1'] = nrm(next(keys), (L, C, C))
    p['gw1'] = nrm(next(keys), (L, C, C))
    p['gw2'] = nrm(next(keys), (L, C, 2))
    p['Gw1'] = nrm(next(keys), (LC, LC))
    p['Gb1'] = nrm(next(keys), (1, LC), 0.01)
    p['Gw2'] = nrm(next(keys), (LC, L))
    p['Gb2'] = nrm(next(keys), (1, L), 0.01)
    p['fw1'] = nrm(next(keys), (D, D))
    p['fb1'] = nrm(next(keys), (1, D), 0.01)
    p['fg'] = jnp.ones((1, D), F32)
    p['fbe'] = jnp.zeros((1, D), F32)
    p['fw2'] = nrm(next(keys), (D, num_classes))
    p['fb2'] = nrm(next(keys), (1, num_classes), 0.01)
    return p


def build_packed(params, B, W, C, L):
    """Pack all weights and 0/1 structural matrices into one (rows, 128) array."""
    T = B * W
    Td = T // 2
    Nmax = B * (1 << (L - 1))
    N2 = 2 * Nmax

    pk = _Packer()
    # conv_in
    pk.add('w1', params['w_in1'])                              # (K1, C)
    pk.add('b1', params['b_in1']); pk.add('g1', params['g_in1']); pk.add('be1', params['be_in1'])
    pk.add('w2', np.asarray(params['w_in2']).reshape(3 * C, C))  # taps stacked along K
    pk.add('b2', params['b_in2']); pk.add('g2', params['g_in2']); pk.add('be2', params['be_in2'])

    # even/odd selection (stream widths are always even, so even rows <-> even global rows)
    sel_eo = np.zeros((T, T), np.float32)
    for r in range(Td):
        sel_eo[r, 2 * r] = 1.0
        sel_eo[Td + r, 2 * r + 1] = 1.0
    pk.add('sel_eo', sel_eo)

    for i in range(L):
        Ni = B << i                      # streams entering level i
        Wd = W >> (i + 1)                # width of c/d streams at level i
        S = 1 << (i + 1)                 # streams per batch sample after level i

        pk.add(f'wU3_{i}', np.asarray(params['wU3'][i]).reshape(3 * C, C))
        pk.add(f'wU1_{i}', params['wU1'][i])
        pk.add(f'wP3_{i}', np.asarray(params['wP3'][i]).reshape(3 * C, C))
        pk.add(f'wP1_{i}', params['wP1'][i])
        pk.add(f'gw1_{i}', params['gw1'][i])
        pk.add(f'gw2_{i}', params['gw2'][i])

        pool = np.zeros((Nmax, Td), np.float32)    # per-stream mean
        bcast = np.zeros((Td, Nmax), np.float32)   # per-stream scalar -> stream rows
        q_l = np.zeros((T, Td), np.float32)        # masked c streams -> even blocks
        q_h = np.zeros((T, Td), np.float32)        # masked d streams -> odd blocks
        for s in range(Ni):
            for t in range(Wd):
                r = s * Wd + t
                pool[s, r] = 1.0 / Wd
                bcast[r, s] = 1.0
                q_l[2 * s * Wd + t, r] = 1.0
                q_h[(2 * s + 1) * Wd + t, r] = 1.0
        P2 = np.zeros((N2, T), np.float32)         # blockdiag(pool, pool): pools c & d at once
        P2[:Nmax, :Td] = pool
        P2[Nmax:, Td:] = pool
        BC2 = np.zeros((T, N2), np.float32)        # blockdiag(bcast, bcast)
        BC2[:Td, :Nmax] = bcast
        BC2[Td:, Nmax:] = bcast
        batch = np.zeros((B, Nmax), np.float32)    # per-batch aggregation, weight 1/S
        for b in range(B):
            batch[b, b * (Ni // B):(b + 1) * (Ni // B)] = 1.0 / S
        batch2 = np.concatenate([batch, batch], axis=1)
        pk.add(f'P2_{i}', P2)
        pk.add(f'BC2_{i}', BC2)
        pk.add(f'batch2_{i}', batch2)
        if i < L - 1:
            # precomposed: (interleave masked c/d) then (even/odd split of next level)
            pk.add(f'shuf_{i}', sel_eo @ np.concatenate([q_l, q_h], axis=1))

    pk.add('Gw1', params['Gw1']); pk.add('Gb1', params['Gb1'])
    pk.add('Gw2', params['Gw2']); pk.add('Gb2', params['Gb2'])
    pk.add('fw1', params['fw1']); pk.add('fb1', params['fb1'])
    pk.add('fg', params['fg']); pk.add('fbe', params['fbe'])
    pk.add('fw2', params['fw2']); pk.add('fb2', params['fb2'])
    return pk.finish()


# ------------------------------ the fused kernel ------------------------------

def _dawn_kernel(packed_ref, patches_ref, dg_ref, gall_ref, out_ref, *,
                 offs, B, W, C, L, Td, Nmax, NC, alphas, tau, eps, rd, ra):
    N2 = 2 * Nmax
    inv_tau = 1.0 / tau

    def get(name):
        r0, r, c = offs[name]
        return packed_ref[r0:r0 + r, 0:c]

    def mm(a, b):
        return jnp.dot(a, b, preferred_element_type=F32)

    def prelu(v, a):
        return jnp.where(v >= 0.0, v, a * v)

    def bn_prelu(v, g, be, a):                     # training-mode BatchNorm + PReLU
        mu = jnp.mean(v, axis=0, keepdims=True)
        dv = v - mu
        var = jnp.mean(dv * dv, axis=0, keepdims=True)
        return prelu(dv * jax.lax.rsqrt(var + eps) * g + be, a)

    def sigm(v):                                   # EUP exp + approx reciprocal
        return pl.reciprocal(1.0 + jnp.exp(-v), approx=True)

    def softmax_last(z):
        z = z - jnp.max(z, axis=-1, keepdims=True)
        e = jnp.exp(z)
        return e * pl.reciprocal(jnp.sum(e, axis=-1, keepdims=True), approx=True)

    def mean_all(v):
        s = jnp.sum(jnp.sum(v, axis=1, keepdims=True), axis=0, keepdims=True)
        return s * (1.0 / (v.shape[0] * v.shape[1]))

    def rolled(src):
        rows = src.shape[0]
        down = pltpu.roll(src, shift=1, axis=0)          # value from row r-1 (wraps)
        up = pltpu.roll(src, shift=rows - 1, axis=0)     # value from row r+1 (wraps)
        return down, up

    def edge_masks(rows, blk):                     # blk is a power of two
        pos = jax.lax.broadcasted_iota(jnp.int32, (rows, 1), 0) & (blk - 1)
        mL = (pos == 0).astype(F32)
        mR = (pos == blk - 1).astype(F32)
        return mL, mR

    def taps_zero(src, blk):                       # zero 'same' padding (conv_in #2)
        mL, mR = edge_masks(src.shape[0], blk)
        down, up = rolled(src)
        return down * (1.0 - mL), up * (1.0 - mR)

    def taps_reflect(src, blk):                    # ReflectionPad2d((1,1,0,0))
        mL, mR = edge_masks(src.shape[0], blk)
        down, up = rolled(src)
        tm = down + mL * (up - down)               # left edge -> x[1]
        tp = up + mR * (down - up)                 # right edge -> x[blk-2]
        return tm, tp

    out_ref[...] = jnp.zeros_like(out_ref)

    # ---- conv_in: Conv(1,C,(1,K1)) as one im2col dot, then Conv(C,C,(1,3)) ----
    h = mm(patches_ref[...], get('w1')) + get('b1')                     # (T, C)
    h = bn_prelu(h, get('g1'), get('be1'), alphas['in1'])
    tm, tp = taps_zero(h, W)
    h = mm(jnp.concatenate([tm, h, tp], axis=-1), get('w2')) + get('b2')
    x0 = bn_prelu(h, get('g2'), get('be2'), alphas['in2'])              # (T, C)

    # level-0 even/odd stack; deeper levels produced directly via 'shuf'
    eo = mm(get('sel_eo'), x0)                                          # (T, C) = [even; odd]

    pool_x, pool_o, feats = [], [], []
    pool_o_cum = jnp.zeros((B, C), F32)

    for i in range(L):
        Wd = W >> (i + 1)
        even = eo[:Td, :]
        odd = eo[Td:, :]
        x_mean = mean_all(eo)                      # mean of level input (permutation-invariant)

        # --- LiftingScheme (modified=True): c = even + U(odd), d = odd - P(c) ---
        tmo, tpo = taps_reflect(odd, Wd)
        hU = prelu(mm(jnp.concatenate([tmo, odd, tpo], axis=-1), get(f'wU3_{i}')),
                   alphas['U'][i])
        c = even + jnp.tanh(mm(hU, get(f'wU1_{i}')))
        tmc, tpc = taps_reflect(c, Wd)
        hP = prelu(mm(jnp.concatenate([tmc, c, tpc], axis=-1), get(f'wP3_{i}')),
                   alphas['P'][i])
        d = odd - jnp.tanh(mm(hP, get(f'wP1_{i}')))

        # --- LevelDAWN regularizer, stored straight into the merged output ---
        r_i = rd * mean_all(jnp.abs(d)) + ra * jnp.abs(mean_all(c) - x_mean)
        out_ref[B:B + 1, i:i + 1] = r_i

        # --- gumble_block_2D (training path); c- and d-streams processed together ---
        cd = jnp.concatenate([c, d], axis=0)                            # (T, C)
        pcd = mm(get(f'P2_{i}'), cd)                                    # (2*Nmax, C) stream means
        hh = prelu(mm(pcd, get(f'gw1_{i}')), alphas['g1'][i])
        z = prelu(mm(hh, get(f'gw2_{i}')), alphas['g2'][i])             # (2*Nmax, 2)
        # 2-way gumbel softmax of the reference (softmax(z) + g, re-softmax) via sigmoids
        p0 = sigm(z[:, 0:1] - z[:, 1:2])
        dg = dg_ref[i * N2:(i + 1) * N2, :]                             # g0 - g1 (wrapper-made)
        y0 = sigm((2.0 * p0 - 1.0 + dg) * inv_tau)                      # conv weight per stream
        y1 = 1.0 - y0                                                   # res weight per stream

        # pooled per-sample features: avgpool(x_current) / avgpool(o_current)
        b2 = get(f'batch2_{i}')
        px = mm(b2, pcd * y0)                                           # (B, C)
        po = mm(b2, pcd * y1)
        pool_o_cum = pool_o_cum + po
        pool_x.append(px)
        pool_o.append(po)
        feats.append(pool_o_cum + px)              # pooled feature_all_levels[i]

        # next level input (even/odd stacked); not needed after the last level
        if i < L - 1:
            m_rows = mm(get(f'BC2_{i}'), y0)                            # (T, 1)
            eo = mm(get(f'shuf_{i}'), cd * m_rows)                      # (T, C)

    # ---- gumble_block_2D_all: level mask from pooled concatenated features ----
    feat = jnp.concatenate(feats, axis=-1)                              # (B, L*C)
    z1 = prelu(mm(feat, get('Gw1')) + get('Gb1'), alphas['G1'])
    z2 = prelu(mm(z1, get('Gw2')) + get('Gb2'), alphas['G2'])           # (B, L)
    y_all = softmax_last((softmax_last(z2) + gall_ref[...]) * inv_tau)  # (B, L)

    # ---- mode2 combine + classifier mode2 (Linear -> BN1d -> PReLU -> Linear) ----
    ysuf = [None] * L
    acc = jnp.zeros((B, 1), F32)
    for l in range(L - 1, -1, -1):
        acc = acc + y_all[:, l:l + 1]
        ysuf[l] = acc
    blocks = []
    for j in range(L + 1):
        xf_j = jnp.zeros((B, C), F32)
        if j <= L - 1:
            xf_j = xf_j + ysuf[j] * pool_o[j]
        if j >= 1:
            xf_j = xf_j + y_all[:, j - 1:j] * pool_x[j - 1]
        blocks.append(xf_j)
    xf = jnp.concatenate(blocks, axis=-1)                               # (B, (L+1)*C)

    h1 = mm(xf, get('fw1')) + get('fb1')
    hn = bn_prelu(h1, get('fg'), get('fbe'), alphas['fc'])
    logits = mm(hn, get('fw2')) + get('fb2')                            # (B, NC)
    out_ref[0:B, 0:NC] = logits


# -------------------------------- model wrapper --------------------------------

def dawn_gumble_forward(packed, offs, x_nchw, rng, *, cfg):
    B, Cin0, Hh, W = x_nchw.shape
    assert Cin0 == 1 and Hh == 1, "module semantics require NCHW input with C=1, H=1"
    C, L, ks = cfg['C'], cfg['L'], cfg['kernel_size']
    NC = cfg['num_classes']
    assert ks == 3, "tap fusion built for kernel_size=3 (module default)"
    assert W % (1 << L) == 0
    K1 = ks + 30
    T = B * W
    Td = T // 2
    Nmax = B * (1 << (L - 1))
    N2 = 2 * Nmax
    assert B + 1 <= 8 and NC <= 128 and L <= 128

    # im2col for the first conv_in conv (zero 'same' padding)
    x = x_nchw[:, 0, 0, :].astype(F32)                                  # (B, W)
    xpad = jnp.pad(x, ((0, 0), (K1 // 2, K1 // 2)))
    idx = jnp.arange(W)[:, None] + jnp.arange(K1)[None, :]
    patches = xpad[:, idx].reshape(T, K1)                               # (T, K1)

    # Gumbel noise hoisted out of the kernel: g = -log(-log(u))
    k1, k2 = jax.random.split(rng)
    u_lvl = jax.random.uniform(k1, (L, N2, 2), F32, minval=1e-6, maxval=1.0)
    g_lvl = -jnp.log(-jnp.log(u_lvl))
    dg = (g_lvl[..., 0] - g_lvl[..., 1]).reshape(L * N2, 1)             # g0 - g1 per stream
    u_all = jax.random.uniform(k2, (B, L), F32, minval=1e-6, maxval=1.0)
    g_all = -jnp.log(-jnp.log(u_all))

    kern = functools.partial(
        _dawn_kernel, offs=offs, B=B, W=W, C=C, L=L, Td=Td, Nmax=Nmax, NC=NC,
        alphas=cfg['alphas'], tau=1.0, eps=EPS,
        rd=cfg['regu_details'], ra=cfg['regu_approx'])

    out = pl.pallas_call(
        kern,
        out_shape=jax.ShapeDtypeStruct((8, 128), F32),  # rows 0..B-1: logits; row B: regs
    )(packed, patches, dg, g_all)

    logits = out[:B, :NC]
    regs = out[B, :L]
    return logits, regs


if __name__ == "__main__":
    key = jax.random.PRNGKey(0)
    kx, kp, kn = jax.random.split(key, 3)

    B = 2
    first_conv_chnnl = 8
    data_lenth = 32
    num_classes = 5
    kernel_size = 3
    L = find_power(data_lenth) - 2          # 3 decomposition levels

    x = jax.random.normal(kx, (B, 1, 1, data_lenth)).astype(F32)        # NCHW, H=1
    params = init_params(kp, first_conv_chnnl, L, num_classes, kernel_size)
    packed_np, offs = build_packed(params, B, data_lenth, first_conv_chnnl, L)
    packed = jnp.asarray(packed_np)

    cfg = dict(C=first_conv_chnnl, L=L, kernel_size=kernel_size,
               num_classes=num_classes,
               regu_details=0.01, regu_approx=0.01, alphas=make_alphas(L))

    fwd = jax.jit(lambda pk, xx, r: dawn_gumble_forward(pk, offs, xx, r, cfg=cfg))
    logits, regs = fwd(packed, x, kn)
    logits = jax.block_until_ready(logits)
    regs = jax.block_until_ready(regs)

    assert logits.shape == (B, num_classes)
    assert regs.shape == (L,)
    assert bool(jnp.all(jnp.isfinite(logits))) and bool(jnp.all(jnp.isfinite(regs)))
    print("KERNEL_OK")
</pallas_src>

<mosaic_0001>
module attributes {stable_mosaic.version = 11 : i64} {
  func.func @_dawn_kernel(%arg0: memref<968x128xf32, #tpu.memory_space<vmem>>, %arg1: memref<64x33xf32, #tpu.memory_space<vmem>>, %arg2: memref<48x1xf32, #tpu.memory_space<vmem>>, %arg3: memref<2x3xf32, #tpu.memory_space<vmem>>, %arg4: memref<8x128xf32, #tpu.memory_space<vmem>>) attributes {dimension_semantics = [], scalar_prefetch = 0 : i64, scratch_operands = 0 : i64, tpu.core_type = #tpu.core_type<tc>} {
    %cst = arith.constant 0.000000e+00 : f32
    %0 = vector.broadcast %cst : f32 to vector<8x128xf32>
    %c0 = arith.constant 0 : index
    %c0_0 = arith.constant 0 : index
    %1 = vector.load %arg4[%c0, %c0_0] : memref<8x128xf32, #tpu.memory_space<vmem>>, vector<8x128xf32>
    tpu.vector_store %arg4[%c0, %c0_0], %0 {strides = array<i32>} : memref<8x128xf32, #tpu.memory_space<vmem>>, vector<8x128xf32>,
    %c0_1 = arith.constant 0 : index
    %c0_2 = arith.constant 0 : index
    %2 = vector.load %arg1[%c0_1, %c0_2] : memref<64x33xf32, #tpu.memory_space<vmem>>, vector<64x33xf32>
    %c0_3 = arith.constant 0 : index
    %c0_4 = arith.constant 0 : index
    %3 = vector.load %arg0[%c0_3, %c0_4] : memref<968x128xf32, #tpu.memory_space<vmem>>, vector<33x8xf32>
    %cst_5 = arith.constant dense<0.000000e+00> : vector<64x8xf32>
    %4 = tpu.matmul %2, %3, %cst_5 {dimension_numbers = #tpu.dot_dimension_numbers<[1], [0], [0], [1], [0, 0, 1, 1], [], []>} : vector<64x33xf32>, vector<33x8xf32>, vector<64x8xf32> -> vector<64x8xf32>
    %c40 = arith.constant 40 : index
    %c0_6 = arith.constant 0 : index
    %5 = vector.load %arg0[%c40, %c0_6] : memref<968x128xf32, #tpu.memory_space<vmem>>, vector<1x8xf32>
    %6 = vector.broadcast %5 : vector<1x8xf32> to vector<64x8xf32>
    %7 = arith.addf %4, %6 : vector<64x8xf32>
    %c48 = arith.constant 48 : index
    %c0_7 = arith.constant 0 : index
    %8 = vector.load %arg0[%c48, %c0_7] : memref<968x128xf32, #tpu.memory_space<vmem>>, vector<1x8xf32>
    %c56 = arith.constant 56 : index
    %c0_8 = arith.constant 0 : index
    %9 = vector.load %arg0[%c56, %c0_8] : memref<968x128xf32, #tpu.memory_space<vmem>>, vector<1x8xf32>
    %cst_9 = arith.constant dense<0.000000e+00> : vector<8xf32>
    %10 = vector.multi_reduction <add>, %7, %cst_9 [0] : vector<64x8xf32> to vector<8xf32>
    %11 = vector.shape_cast %10 : vector<8xf32> to vector<1x8xf32>
    %cst_10 = arith.constant 6.400000e+01 : f32
    %12 = vector.broadcast %cst_10 : f32 to vector<1x8xf32>
    %13 = arith.divf %11, %12 : vector<1x8xf32>
    %14 = vector.broadcast %13 : vector<1x8xf32> to vector<64x8xf32>
    %15 = arith.subf %7, %14 : vector<64x8xf32>
    %16 = arith.mulf %15, %15 : vector<64x8xf32>
    %cst_11 = arith.constant dense<0.000000e+00> : vector<8xf32>
    %17 = vector.multi_reduction <add>, %16, %cst_11 [0] : vector<64x8xf32> to vector<8xf32>
    %18 = vector.shape_cast %17 : vector<8xf32> to vector<1x8xf32>
    %cst_12 = arith.constant 6.400000e+01 : f32
    %19 = vector.broadcast %cst_12 : f32 to vector<1x8xf32>
    %20 = arith.divf %18, %19 : vector<1x8xf32>
    %cst_13 = arith.constant 9.99999974E-6 : f32
    %21 = vector.broadcast %cst_13 : f32 to vector<1x8xf32>
    %22 = arith.addf %20, %21 : vector<1x8xf32>
    %23 = math.rsqrt %22 : vector<1x8xf32>
    %24 = vector.broadcast %23 : vector<1x8xf32> to vector<64x8xf32>
    %25 = arith.mulf %15, %24 : vector<64x8xf32>
    %26 = vector.broadcast %8 : vector<1x8xf32> to vector<64x8xf32>
    %27 = arith.mulf %25, %26 : vector<64x8xf32>
    %28 = vector.broadcast %9 : vector<1x8xf32> to vector<64x8xf32>
    %29 = arith.addf %27, %28 : vector<64x8xf32>
    %cst_14 = arith.constant 0.000000e+00 : f32
    %30 = vector.broadcast %cst_14 : f32 to vector<64x8xf32>
    %31 = arith.cmpf oge, %29, %30 : vector<64x8xf32>
    %cst_15 = arith.constant 2.500000e-01 : f32
    %32 = vector.broadcast %cst_15 : f32 to vector<64x8xf32>
    %33 = arith.mulf %32, %29 : vector<64x8xf32>
    %34 = arith.select %31, %29, %33 : vector<64x8xi1>, vector<64x8xf32>
    %35 = tpu.iota {dimensions = array<i32: 0>} : vector<64x1xi32>
    %c31_i32 = arith.constant 31 : i32
    %36 = vector.broadcast %c31_i32 : i32 to vector<64x1xi32>
    %37 = arith.andi %35, %36 : vector<64x1xi32>
    %c0_i32 = arith.constant 0 : i32
    %38 = vector.broadcast %c0_i32 : i32 to vector<64x1xi32>
    %39 = arith.cmpi eq, %37, %38 : vector<64x1xi32>
    %40 = arith.extui %39 : vector<64x1xi1> to vector<64x1xi32>
    %41 = arith.sitofp %40 : vector<64x1xi32> to vector<64x1xf32>
    %c31_i32_16 = arith.constant 31 : i32
    %42 = vector.broadcast %c31_i32_16 : i32 to vector<64x1xi32>
    %43 = arith.cmpi eq, %37, %42 : vector<64x1xi32>
    %44 = arith.extui %43 : vector<64x1xi1> to vector<64x1xi32>
    %45 = arith.sitofp %44 : vector<64x1xi32> to vector<64x1xf32>
    %c1_i32 = arith.constant 1 : i32
    %46 = tpu.dynamic_rotate %34 by %c1_i32 dim 0 : vector<64x8xf32>, i32 -> vector<64x8xf32>
    %c63_i32 = arith.constant 63 : i32
    %47 = tpu.dynamic_rotate %34 by %c63_i32 dim 0 : vector<64x8xf32>, i32 -> vector<64x8xf32>
    %cst_17 = arith.constant 1.000000e+00 : f32
    %48 = vector.broadcast %cst_17 : f32 to vector<64x1xf32>
    %49 = arith.subf %48, %41 : vector<64x1xf32>
    %50 = vector.broadcast %49 : vector<64x1xf32> to vector<64x8xf32>
    %51 = arith.mulf %46, %50 : vector<64x8xf32>
    %cst_18 = arith.constant 1.000000e+00 : f32
    %52 = vector.broadcast %cst_18 : f32 to vector<64x1xf32>
    %53 = arith.subf %52, %45 : vector<64x1xf32>
    %54 = vector.broadcast %53 : vector<64x1xf32> to vector<64x8xf32>
    %55 = arith.mulf %47, %54 : vector<64x8xf32>
    %56 = tpu.concatenate %51, %34, %55 in 1 : vector<64x8xf32>, vector<64x8xf32>, vector<64x8xf32> -> vector<64x24xf32>
    %c64 = arith.constant 64 : index
    %c0_19 = arith.constant 0 : index
    %57 = vector.load %arg0[%c64, %c0_19] : memref<968x128xf32, #tpu.memory_space<vmem>>, vector<24x8xf32>
    %cst_20 = arith.constant dense<0.000000e+00> : vector<64x8xf32>
    %58 = tpu.matmul %56, %57, %cst_20 {dimension_numbers = #tpu.dot_dimension_numbers<[1], [0], [0], [1], [0, 0, 1, 1], [], []>} : vector<64x24xf32>, vector<24x8xf32>, vector<64x8xf32> -> vector<64x8xf32>
    %c88 = arith.constant 88 : index
    %c0_21 = arith.constant 0 : index
    %59 = vector.load %arg0[%c88, %c0_21] : memref<968x128xf32, #tpu.memory_space<vmem>>, vector<1x8xf32>
    %60 = vector.broadcast %59 : vector<1x8xf32> to vector<64x8xf32>
    %61 = arith.addf %58, %60 : vector<64x8xf32>
    %c96 = arith.constant 96 : index
    %c0_22 = arith.constant 0 : index
    %62 = vector.load %arg0[%c96, %c0_22] : memref<968x128xf32, #tpu.memory_space<vmem>>, vector<1x8xf32>
    %c104 = arith.constant 104 : index
    %c0_23 = arith.constant 0 : index
    %63 = vector.load %arg0[%c104, %c0_23] : memref<968x128xf32, #tpu.memory_space<vmem>>, vector<1x8xf32>
    %cst_24 = arith.constant dense<0.000000e+00> : vector<8xf32>
    %64 = vector.multi_reduction <add>, %61, %cst_24 [0] : vector<64x8xf32> to vector<8xf32>
    %65 = vector.shape_cast %64 : vector<8xf32> to vector<1x8xf32>
    %cst_25 = arith.constant 6.400000e+01 : f32
    %66 = vector.broadcast %cst_25 : f32 to vector<1x8xf32>
    %67 = arith.divf %65, %66 : vector<1x8xf32>
    %68 = vector.broadcast %67 : vector<1x8xf32> to vector<64x8xf32>
    %69 = arith.subf %61, %68 : vector<64x8xf32>
    %70 = arith.mulf %69, %69 : vector<64x8xf32>
    %cst_26 = arith.constant dense<0.000000e+00> : vector<8xf32>
    %71 = vector.multi_reduction <add>, %70, %cst_26 [0] : vector<64x8xf32> to vector<8xf32>
    %72 = vector.shape_cast %71 : vector<8xf32> to vector<1x8xf32>
    %cst_27 = arith.constant 6.400000e+01 : f32
    %73 = vector.broadcast %cst_27 : f32 to vector<1x8xf32>
    %74 = arith.divf %72, %73 : vector<1x8xf32>
    %cst_28 = arith.constant 9.99999974E-6 : f32
    %75 = vector.broadcast %cst_28 : f32 to vector<1x8xf32>
    %76 = arith.addf %74, %75 : vector<1x8xf32>
    %77 = math.rsqrt %76 : vector<1x8xf32>
    %78 = vector.broadcast %77 : vector<1x8xf32> to vector<64x8xf32>
    %79 = arith.mulf %69, %78 : vector<64x8xf32>
    %80 = vector.broadcast %62 : vector<1x8xf32> to vector<64x8xf32>
    %81 = arith.mulf %79, %80 : vector<64x8xf32>
    %82 = vector.broadcast %63 : vector<1x8xf32> to vector<64x8xf32>
    %83 = arith.addf %81, %82 : vector<64x8xf32>
    %cst_29 = arith.constant 0.000000e+00 : f32
    %84 = vector.broadcast %cst_29 : f32 to vector<64x8xf32>
    %85 = arith.cmpf oge, %83, %84 : vector<64x8xf32>
    %cst_30 = arith.constant 2.500000e-01 : f32
    %86 = vector.broadcast %cst_30 : f32 to vector<64x8xf32>
    %87 = arith.mulf %86, %83 : vector<64x8xf32>
    %88 = arith.select %85, %83, %87 : vector<64x8xi1>, vector<64x8xf32>
    %c112 = arith.constant 112 : index
    %c0_31 = arith.constant 0 : index
    %89 = vector.load %arg0[%c112, %c0_31] : memref<968x128xf32, #tpu.memory_space<vmem>>, vector<64x64xf32>
    %cst_32 = arith.constant dense<0.000000e+00> : vector<64x8xf32>
    %90 = tpu.matmul %89, %88, %cst_32 {dimension_numbers = #tpu.dot_dimension_numbers<[1], [0], [0], [1], [0, 0, 1, 1], [], []>} : vector<64x64xf32>, vector<64x8xf32>, vector<64x8xf32> -> vector<64x8xf32>
    %cst_33 = arith.constant 0.000000e+00 : f32
    %91 = vector.broadcast %cst_33 : f32 to vector<2x8xf32>
    %92 = vector.extract_strided_slice %90 {offsets = [0, 0], sizes = [32, 8], strides = [1, 1]} : vector<64x8xf32> to vector<32x8xf32>
    %93 = vector.extract_strided_slice %90 {offsets = [32, 0], sizes = [32, 8], strides = [1, 1]} : vector<64x8xf32> to vector<32x8xf32>
    %cst_34 = arith.constant dense<0.000000e+00> : vector<64xf32>
    %94 = vector.multi_reduction <add>, %90, %cst_34 [1] : vector<64x8xf32> to vector<64xf32>
    %95 = vector.shape_cast %94 : vector<64xf32> to vector<64x1xf32>
    %cst_35 = arith.constant dense<0.000000e+00> : vector<1xf32>
    %96 = vector.multi_reduction <add>, %95, %cst_35 [0] : vector<64x1xf32> to vector<1xf32>
    %97 = vector.shape_cast %96 : vector<1xf32> to vector<1x1xf32>
    %cst_36 = arith.constant 0.001953125 : f32
    %98 = vector.broadcast %cst_36 : f32 to vector<1x1xf32>
    %99 = arith.mulf %97, %98 : vector<1x1xf32>
    %100 = tpu.iota {dimensions = array<i32: 0>} : vector<32x1xi32>
    %c15_i32 = arith.constant 15 : i32
    %101 = vector.broadcast %c15_i32 : i32 to vector<32x1xi32>
    %102 = arith.andi %100, %101 : vector<32x1xi32>
    %c0_i32_37 = arith.constant 0 : i32
    %103 = vector.broadcast %c0_i32_37 : i32 to vector<32x1xi32>
    %104 = arith.cmpi eq, %102, %103 : vector<32x1xi32>
    %105 = arith.extui %104 : vector<32x1xi1> to vector<32x1xi32>
    %106 = arith.sitofp %105 : vector<32x1xi32> to vector<32x1xf32>
    %c15_i32_38 = arith.constant 15 : i32
    %107 = vector.broadcast %c15_i32_38 : i32 to vector<32x1xi32>
    %108 = arith.cmpi eq, %102, %107 : vector<32x1xi32>
    %109 = arith.extui %108 : vector<32x1xi1> to vector<32x1xi32>
    %110 = arith.sitofp %109 : vector<32x1xi32> to vector<32x1xf32>
    %c1_i32_39 = arith.constant 1 : i32
    %111 = tpu.dynamic_rotate %93 by %c1_i32_39 dim 0 : vector<32x8xf32>, i32 -> vector<32x8xf32>
    %c31_i32_40 = arith.constant 31 : i32
    %112 = tpu.dynamic_rotate %93 by %c31_i32_40 dim 0 : vector<32x8xf32>, i32 -> vector<32x8xf32>
    %113 = arith.subf %112, %111 : vector<32x8xf32>
    %114 = vector.broadcast %106 : vector<32x1xf32> to vector<32x8xf32>
    %115 = arith.mulf %114, %113 : vector<32x8xf32>
    %116 = arith.addf %111, %115 : vector<32x8xf32>
    %117 = arith.subf %111, %112 : vector<32x8xf32>
    %118 = vector.broadcast %110 : vector<32x1xf32> to vector<32x8xf32>
    %119 = arith.mulf %118, %117 : vector<32x8xf32>
    %120 = arith.addf %112, %119 : vector<32x8xf32>
    %121 = tpu.concatenate %116, %93, %120 in 1 : vector<32x8xf32>, vector<32x8xf32>, vector<32x8xf32> -> vector<32x24xf32>
    %c176 = arith.constant 176 : index
    %c0_41 = arith.constant 0 : index
    %122 = vector.load %arg0[%c176, %c0_41] : memref<968x128xf32, #tpu.memory_space<vmem>>, vector<24x8xf32>
    %cst_42 = arith.constant dense<0.000000e+00> : vector<32x8xf32>
    %123 = tpu.matmul %121, %122, %cst_42 {dimension_numbers = #tpu.dot_dimension_numbers<[1], [0], [0], [1], [0, 0, 1, 1], [], []>} : vector<32x24xf32>, vector<24x8xf32>, vector<32x8xf32> -> vector<32x8xf32>
    %cst_43 = arith.constant 0.000000e+00 : f32
    %124 = vector.broadcast %cst_43 : f32 to vector<32x8xf32>
    %125 = arith.cmpf oge, %123, %124 : vector<32x8xf32>
    %cst_44 = arith.constant 2.500000e-01 : f32
    %126 = vector.broadcast %cst_44 : f32 to vector<32x8xf32>
    %127 = arith.mulf %126, %123 : vector<32x8xf32>
    %128 = arith.select %125, %123, %127 : vector<32x8xi1>, vector<32x8xf32>
    %c200 = arith.constant 200 : index
    %c0_45 = arith.constant 0 : index
    %129 = vector.load %arg0[%c200, %c0_45] : memref<968x128xf32, #tpu.memory_space<vmem>>, vector<8x8xf32>
    %cst_46 = arith.constant dense<0.000000e+00> : vector<32x8xf32>
    %130 = tpu.matmul %128, %129, %cst_46 {dimension_numbers = #tpu.dot_dimension_numbers<[1], [0], [0], [1], [0, 0, 1, 1], [], []>} : vector<32x8xf32>, vector<8x8xf32>, vector<32x8xf32> -> vector<32x8xf32>
    %131 = math.tanh %130 : vector<32x8xf32>
    %132 = arith.addf %92, %131 : vector<32x8xf32>
    %133 = tpu.iota {dimensions = array<i32: 0>} : vector<32x1xi32>
    %c15_i32_47 = arith.constant 15 : i32
    %134 = vector.broadcast %c15_i32_47 : i32 to vector<32x1xi32>
    %135 = arith.andi %133, %134 : vector<32x1xi32>
    %c0_i32_48 = arith.constant 0 : i32
    %136 = vector.broadcast %c0_i32_48 : i32 to vector<32x1xi32>
    %137 = arith.cmpi eq, %135, %136 : vector<32x1xi32>
    %138 = arith.extui %137 : vector<32x1xi1> to vector<32x1xi32>
    %139 = arith.sitofp %138 : vector<32x1xi32> to vector<32x1xf32>
    %c15_i32_49 = arith.constant 15 : i32
    %140 = vector.broadcast %c15_i32_49 : i32 to vector<32x1xi32>
    %141 = arith.cmpi eq, %135, %140 : vector<32x1xi32>
    %142 = arith.extui %141 : vector<32x1xi1> to vector<32x1xi32>
    %143 = arith.sitofp %142 : vector<32x1xi32> to vector<32x1xf32>
    %c1_i32_50 = arith.constant 1 : i32
    %144 = tpu.dynamic_rotate %132 by %c1_i32_50 dim 0 : vector<32x8xf32>, i32 -> vector<32x8xf32>
    %c31_i32_51 = arith.constant 31 : i32
    %145 = tpu.dynamic_rotate %132 by %c31_i32_51 dim 0 : vector<32x8xf32>, i32 -> vector<32x8xf32>
    %146 = arith.subf %145, %144 : vector<32x8xf32>
    %147 = vector.broadcast %139 : vector<32x1xf32> to vector<32x8xf32>
    %148 = arith.mulf %147, %146 : vector<32x8xf32>
    %149 = arith.addf %144, %148 : vector<32x8xf32>
    %150 = arith.subf %144, %145 : vector<32x8xf32>
    %151 = vector.broadcast %143 : vector<32x1xf32> to vector<32x8xf32>
    %152 = arith.mulf %151, %150 : vector<32x8xf32>
    %153 = arith.addf %145, %152 : vector<32x8xf32>
    %154 = tpu.concatenate %149, %132, %153 in 1 : vector<32x8xf32>, vector<32x8xf32>, vector<32x8xf32> -> vector<32x24xf32>
    %c208 = arith.constant 208 : index
    %c0_52 = arith.constant 0 : index
    %155 = vector.load %arg0[%c208, %c0_52] : memref<968x128xf32, #tpu.memory_space<vmem>>, vector<24x8xf32>
    %cst_53 = arith.constant dense<0.000000e+00> : vector<32x8xf32>
    %156 = tpu.matmul %154, %155, %cst_53 {dimension_numbers = #tpu.dot_dimension_numbers<[1], [0], [0], [1], [0, 0, 1, 1], [], []>} : vector<32x24xf32>, vector<24x8xf32>, vector<32x8xf32> -> vector<32x8xf32>
    %cst_54 = arith.constant 0.000000e+00 : f32
    %157 = vector.broadcast %cst_54 : f32 to vector<32x8xf32>
    %158 = arith.cmpf oge, %156, %157 : vector<32x8xf32>
    %cst_55 = arith.constant 2.500000e-01 : f32
    %159 = vector.broadcast %cst_55 : f32 to vector<32x8xf32>
    %160 = arith.mulf %159, %156 : vector<32x8xf32>
    %161 = arith.select %158, %156, %160 : vector<32x8xi1>, vector<32x8xf32>
    %c232 = arith.constant 232 : index
    %c0_56 = arith.constant 0 : index
    %162 = vector.load %arg0[%c232, %c0_56] : memref<968x128xf32, #tpu.memory_space<vmem>>, vector<8x8xf32>
    %cst_57 = arith.constant dense<0.000000e+00> : vector<32x8xf32>
    %163 = tpu.matmul %161, %162, %cst_57 {dimension_numbers = #tpu.dot_dimension_numbers<[1], [0], [0], [1], [0, 0, 1, 1], [], []>} : vector<32x8xf32>, vector<8x8xf32>, vector<32x8xf32> -> vector<32x8xf32>
    %164 = math.tanh %163 : vector<32x8xf32>
    %165 = arith.subf %93, %164 : vector<32x8xf32>
    %166 = math.absf %165 : vector<32x8xf32>
    %cst_58 = arith.constant dense<0.000000e+00> : vector<32xf32>
    %167 = vector.multi_reduction <add>, %166, %cst_58 [1] : vector<32x8xf32> to vector<32xf32>
    %168 = vector.shape_cast %167 : vector<32xf32> to vector<32x1xf32>
    %cst_59 = arith.constant dense<0.000000e+00> : vector<1xf32>
    %169 = vector.multi_reduction <add>, %168, %cst_59 [0] : vector<32x1xf32> to vector<1xf32>
    %170 = vector.shape_cast %169 : vector<1xf32> to vector<1x1xf32>
    %cst_60 = arith.constant 3.906250e-03 : f32
    %171 = vector.broadcast %cst_60 : f32 to vector<1x1xf32>
    %172 = arith.mulf %170, %171 : vector<1x1xf32>
    %cst_61 = arith.constant 0.00999999977 : f32
    %173 = vector.broadcast %cst_61 : f32 to vector<1x1xf32>
    %174 = arith.mulf %173, %172 : vector<1x1xf32>
    %cst_62 = arith.constant dense<0.000000e+00> : vector<32xf32>
    %175 = vector.multi_reduction <add>, %132, %cst_62 [1] : vector<32x8xf32> to vector<32xf32>
    %176 = vector.shape_cast %175 : vector<32xf32> to vector<32x1xf32>
    %cst_63 = arith.constant dense<0.000000e+00> : vector<1xf32>
    %177 = vector.multi_reduction <add>, %176, %cst_63 [0] : vector<32x1xf32> to vector<1xf32>
    %178 = vector.shape_cast %177 : vector<1xf32> to vector<1x1xf32>
    %cst_64 = arith.constant 3.906250e-03 : f32
    %179 = vector.broadcast %cst_64 : f32 to vector<1x1xf32>
    %180 = arith.mulf %178, %179 : vector<1x1xf32>
    %181 = arith.subf %180, %99 : vector<1x1xf32>
    %182 = math.absf %181 : vector<1x1xf32>
    %cst_65 = arith.constant 0.00999999977 : f32
    %183 = vector.broadcast %cst_65 : f32 to vector<1x1xf32>
    %184 = arith.mulf %183, %182 : vector<1x1xf32>
    %185 = arith.addf %174, %184 : vector<1x1xf32>
    %c2 = arith.constant 2 : index
    %c0_66 = arith.constant 0 : index
    %186 = vector.load %arg4[%c2, %c0_66] : memref<8x128xf32, #tpu.memory_space<vmem>>, vector<1x1xf32>
    tpu.vector_store %arg4[%c2, %c0_66], %185 {strides = array<i32>} : memref<8x128xf32, #tpu.memory_space<vmem>>, vector<1x1xf32>,
    %187 = tpu.concatenate %132, %165 in 0 : vector<32x8xf32>, vector<32x8xf32> -> vector<64x8xf32>
    %c256 = arith.constant 256 : index
    %c0_67 = arith.constant 0 : index
    %188 = vector.load %arg0[%c256, %c0_67] : memref<968x128xf32, #tpu.memory_space<vmem>>, vector<16x64xf32>
    %cst_68 = arith.constant dense<0.000000e+00> : vector<16x8xf32>
    %189 = tpu.matmul %188, %187, %cst_68 {dimension_numbers = #tpu.dot_dimension_numbers<[1], [0], [0], [1], [0, 0, 1, 1], [], []>} : vector<16x64xf32>, vector<64x8xf32>, vector<16x8xf32> -> vector<16x8xf32>
    %c240 = arith.constant 240 : index
    %c0_69 = arith.constant 0 : index
    %190 = vector.load %arg0[%c240, %c0_69] : memref<968x128xf32, #tpu.memory_space<vmem>>, vector<8x8xf32>
    %cst_70 = arith.constant dense<0.000000e+00> : vector<16x8xf32>
    %191 = tpu.matmul %189, %190, %cst_70 {dimension_numbers = #tpu.dot_dimension_numbers<[1], [0], [0], [1], [0, 0, 1, 1], [], []>} : vector<16x8xf32>, vector<8x8xf32>, vector<16x8xf32> -> vector<16x8xf32>
    %cst_71 = arith.constant 0.000000e+00 : f32
    %192 = vector.broadcast %cst_71 : f32 to vector<16x8xf32>
    %193 = arith.cmpf oge, %191, %192 : vector<16x8xf32>
    %cst_72 = arith.constant 2.500000e-01 : f32
    %194 = vector.broadcast %cst_72 : f32 to vector<16x8xf32>
    %195 = arith.mulf %194, %191 : vector<16x8xf32>
    %196 = arith.select %193, %191, %195 : vector<16x8xi1>, vector<16x8xf32>
    %c248 = arith.constant 248 : index
    %c0_73 = arith.constant 0 : index
    %197 = vector.load %arg0[%c248, %c0_73] : memref<968x128xf32, #tpu.memory_space<vmem>>, vector<8x2xf32>
    %cst_74 = arith.constant dense<0.000000e+00> : vector<16x2xf32>
    %198 = tpu.matmul %196, %197, %cst_74 {dimension_numbers = #tpu.dot_dimension_numbers<[1], [0], [0], [1], [0, 0, 1, 1], [], []>} : vector<16x8xf32>, vector<8x2xf32>, vector<16x2xf32> -> vector<16x2xf32>
    %cst_75 = arith.constant 0.000000e+00 : f32
    %199 = vector.broadcast %cst_75 : f32 to vector<16x2xf32>
    %200 = arith.cmpf oge, %198, %199 : vector<16x2xf32>
    %cst_76 = arith.constant 2.500000e-01 : f32
    %201 = vector.broadcast %cst_76 : f32 to vector<16x2xf32>
    %202 = arith.mulf %201, %198 : vector<16x2xf32>
    %203 = arith.select %200, %198, %202 : vector<16x2xi1>, vector<16x2xf32>
    %204 = vector.extract_strided_slice %203 {offsets = [0, 0], sizes = [16, 1], strides = [1, 1]} : vector<16x2xf32> to vector<16x1xf32>
    %205 = vector.extract_strided_slice %203 {offsets = [0, 1], sizes = [16, 1], strides = [1, 1]} : vector<16x2xf32> to vector<16x1xf32>
    %206 = arith.subf %204, %205 : vector<16x1xf32>
    %cst_77 = arith.constant 0.000000e+00 : f32
    %207 = vector.broadcast %cst_77 : f32 to vector<16x1xf32>
    %208 = arith.subf %207, %206 : vector<16x1xf32>
    %209 = math.exp %208 : vector<16x1xf32>
    %cst_78 = arith.constant 1.000000e+00 : f32
    %210 = vector.broadcast %cst_78 : f32 to vector<16x1xf32>
    %211 = arith.addf %210, %209 : vector<16x1xf32>
    %212 = tpu.reciprocal %211 {approx = true} : vector<16x1xf32> -> vector<16x1xf32>
    %c0_79 = arith.constant 0 : index
    %c0_80 = arith.constant 0 : index
    %213 = vector.load %arg2[%c0_79, %c0_80] : memref<48x1xf32, #tpu.memory_space<vmem>>, vector<16x1xf32>
    %cst_81 = arith.constant 2.000000e+00 : f32
    %214 = vector.broadcast %cst_81 : f32 to vector<16x1xf32>
    %215 = arith.mulf %214, %212 : vector<16x1xf32>
    %cst_82 = arith.constant 1.000000e+00 : f32
    %216 = vector.broadcast %cst_82 : f32 to vector<16x1xf32>
    %217 = arith.subf %215, %216 : vector<16x1xf32>
    %218 = arith.addf %217, %213 : vector<16x1xf32>
    %cst_83 = arith.constant 1.000000e+00 : f32
    %219 = vector.broadcast %cst_83 : f32 to vector<16x1xf32>
    %220 = arith.mulf %218, %219 : vector<16x1xf32>
    %cst_84 = arith.constant 0.000000e+00 : f32
    %221 = vector.broadcast %cst_84 : f32 to vector<16x1xf32>
    %222 = arith.subf %221, %220 : vector<16x1xf32>
    %223 = math.exp %222 : vector<16x1xf32>
    %cst_85 = arith.constant 1.000000e+00 : f32
    %224 = vector.broadcast %cst_85 : f32 to vector<16x1xf32>
    %225 = arith.addf %224, %223 : vector<16x1xf32>
    %226 = tpu.reciprocal %225 {approx = true} : vector<16x1xf32> -> vector<16x1xf32>
    %cst_86 = arith.constant 1.000000e+00 : f32
    %227 = vector.broadcast %cst_86 : f32 to vector<16x1xf32>
    %228 = arith.subf %227, %226 : vector<16x1xf32>
    %c336 = arith.constant 336 : index
    %c0_87 = arith.constant 0 : index
    %229 = vector.load %arg0[%c336, %c0_87] : memref<968x128xf32, #tpu.memory_space<vmem>>, vector<2x16xf32>
    %230 = vector.broadcast %226 : vector<16x1xf32> to vector<16x8xf32>
    %231 = arith.mulf %189, %230 : vector<16x8xf32>
    %cst_88 = arith.constant dense<0.000000e+00> : vector<2x8xf32>
    %232 = tpu.matmul %229, %231, %cst_88 {dimension_numbers = #tpu.dot_dimension_numbers<[1], [0], [0], [1], [0, 0, 1, 1], [], []>} : vector<2x16xf32>, vector<16x8xf32>, vector<2x8xf32> -> vector<2x8xf32>
    %233 = vector.broadcast %228 : vector<16x1xf32> to vector<16x8xf32>
    %234 = arith.mulf %189, %233 : vector<16x8xf32>
    %cst_89 = arith.constant dense<0.000000e+00> : vector<2x8xf32>
    %235 = tpu.matmul %229, %234, %cst_89 {dimension_numbers = #tpu.dot_dimension_numbers<[1], [0], [0], [1], [0, 0, 1, 1], [], []>} : vector<2x16xf32>, vector<16x8xf32>, vector<2x8xf32> -> vector<2x8xf32>
    %236 = arith.addf %91, %235 : vector<2x8xf32>
    %237 = arith.addf %236, %232 : vector<2x8xf32>
    %c272 = arith.constant 272 : index
    %c0_90 = arith.constant 0 : index
    %238 = vector.load %arg0[%c272, %c0_90] : memref<968x128xf32, #tpu.memory_space<vmem>>, vector<64x16xf32>
    %cst_91 = arith.constant dense<0.000000e+00> : vector<64x1xf32>
    %239 = tpu.matmul %238, %226, %cst_91 {dimension_numbers = #tpu.dot_dimension_numbers<[1], [0], [0], [1], [0, 0, 1, 1], [], []>} : vector<64x16xf32>, vector<16x1xf32>, vector<64x1xf32> -> vector<64x1xf32>
    %c344 = arith.constant 344 : index
    %c0_92 = arith.constant 0 : index
    %240 = vector.load %arg0[%c344, %c0_92] : memref<968x128xf32, #tpu.memory_space<vmem>>, vector<64x64xf32>
    %241 = vector.broadcast %239 : vector<64x1xf32> to vector<64x8xf32>
    %242 = arith.mulf %187, %241 : vector<64x8xf32>
    %cst_93 = arith.constant dense<0.000000e+00> : vector<64x8xf32>
    %243 = tpu.matmul %240, %242, %cst_93 {dimension_numbers = #tpu.dot_dimension_numbers<[1], [0], [0], [1], [0, 0, 1, 1], [], []>} : vector<64x64xf32>, vector<64x8xf32>, vector<64x8xf32> -> vector<64x8xf32>
    %244 = vector.extract_strided_slice %243 {offsets = [0, 0], sizes = [32, 8], strides = [1, 1]} : vector<64x8xf32> to vector<32x8xf32>
    %245 = vector.extract_strided_slice %243 {offsets = [32, 0], sizes = [32, 8], strides = [1, 1]} : vector<64x8xf32> to vector<32x8xf32>
    %cst_94 = arith.constant dense<0.000000e+00> : vector<64xf32>
    %246 = vector.multi_reduction <add>, %243, %cst_94 [1] : vector<64x8xf32> to vector<64xf32>
    %247 = vector.shape_cast %246 : vector<64xf32> to vector<64x1xf32>
    %cst_95 = arith.constant dense<0.000000e+00> : vector<1xf32>
    %248 = vector.multi_reduction <add>, %247, %cst_95 [0] : vector<64x1xf32> to vector<1xf32>
    %249 = vector.shape_cast %248 : vector<1xf32> to vector<1x1xf32>
    %cst_96 = arith.constant 0.001953125 : f32
    %250 = vector.broadcast %cst_96 : f32 to vector<1x1xf32>
    %251 = arith.mulf %249, %250 : vector<1x1xf32>
    %252 = tpu.iota {dimensions = array<i32: 0>} : vector<32x1xi32>
    %c7_i32 = arith.constant 7 : i32
    %253 = vector.broadcast %c7_i32 : i32 to vector<32x1xi32>
    %254 = arith.andi %252, %253 : vector<32x1xi32>
    %c0_i32_97 = arith.constant 0 : i32
    %255 = vector.broadcast %c0_i32_97 : i32 to vector<32x1xi32>
    %256 = arith.cmpi eq, %254, %255 : vector<32x1xi32>
    %257 = arith.extui %256 : vector<32x1xi1> to vector<32x1xi32>
    %258 = arith.sitofp %257 : vector<32x1xi32> to vector<32x1xf32>
    %c7_i32_98 = arith.constant 7 : i32
    %259 = vector.broadcast %c7_i32_98 : i32 to vector<32x1xi32>
    %260 = arith.cmpi eq, %254, %259 : vector<32x1xi32>
    %261 = arith.extui %260 : vector<32x1xi1> to vector<32x1xi32>
    %262 = arith.sitofp %261 : vector<32x1xi32> to vector<32x1xf32>
    %c1_i32_99 = arith.constant 1 : i32
    %263 = tpu.dynamic_rotate %245 by %c1_i32_99 dim 0 : vector<32x8xf32>, i32 -> vector<32x8xf32>
    %c31_i32_100 = arith.constant 31 : i32
    %264 = tpu.dynamic_rotate %245 by %c31_i32_100 dim 0 : vector<32x8xf32>, i32 -> vector<32x8xf32>
    %265 = arith.subf %264, %263 : vector<32x8xf32>
    %266 = vector.broadcast %258 : vector<32x1xf32> to vector<32x8xf32>
    %267 = arith.mulf %266, %265 : vector<32x8xf32>
    %268 = arith.addf %263, %267 : vector<32x8xf32>
    %269 = arith.subf %263, %264 : vector<32x8xf32>
    %270 = vector.broadcast %262 : vector<32x1xf32> to vector<32x8xf32>
    %271 = arith.mulf %270, %269 : vector<32x8xf32>
    %272 = arith.addf %264, %271 : vector<32x8xf32>
    %273 = tpu.concatenate %268, %245, %272 in 1 : vector<32x8xf32>, vector<32x8xf32>, vector<32x8xf32> -> vector<32x24xf32>
    %c408 = arith.constant 408 : index
    %c0_101 = arith.constant 0 : index
    %274 = vector.load %arg0[%c408, %c0_101] : memref<968x128xf32, #tpu.memory_space<vmem>>, vector<24x8xf32>
    %cst_102 = arith.constant dense<0.000000e+00> : vector<32x8xf32>
    %275 = tpu.matmul %273, %274, %cst_102 {dimension_numbers = #tpu.dot_dimension_numbers<[1], [0], [0], [1], [0, 0, 1, 1], [], []>} : vector<32x24xf32>, vector<24x8xf32>, vector<32x8xf32> -> vector<32x8xf32>
    %cst_103 = arith.constant 0.000000e+00 : f32
    %276 = vector.broadcast %cst_103 : f32 to vector<32x8xf32>
    %277 = arith.cmpf oge, %275, %276 : vector<32x8xf32>
    %cst_104 = arith.constant 2.500000e-01 : f32
    %278 = vector.broadcast %cst_104 : f32 to vector<32x8xf32>
    %279 = arith.mulf %278, %275 : vector<32x8xf32>
    %280 = arith.select %277, %275, %279 : vector<32x8xi1>, vector<32x8xf32>
    %c432 = arith.constant 432 : index
    %c0_105 = arith.constant 0 : index
    %281 = vector.load %arg0[%c432, %c0_105] : memref<968x128xf32, #tpu.memory_space<vmem>>, vector<8x8xf32>
    %cst_106 = arith.constant dense<0.000000e+00> : vector<32x8xf32>
    %282 = tpu.matmul %280, %281, %cst_106 {dimension_numbers = #tpu.dot_dimension_numbers<[1], [0], [0], [1], [0, 0, 1, 1], [], []>} : vector<32x8xf32>, vector<8x8xf32>, vector<32x8xf32> -> vector<32x8xf32>
    %283 = math.tanh %282 : vector<32x8xf32>
    %284 = arith.addf %244, %283 : vector<32x8xf32>
    %285 = tpu.iota {dimensions = array<i32: 0>} : vector<32x1xi32>
    %c7_i32_107 = arith.constant 7 : i32
    %286 = vector.broadcast %c7_i32_107 : i32 to vector<32x1xi32>
    %287 = arith.andi %285, %286 : vector<32x1xi32>
    %c0_i32_108 = arith.constant 0 : i32
    %288 = vector.broadcast %c0_i32_108 : i32 to vector<32x1xi32>
    %289 = arith.cmpi eq, %287, %288 : vector<32x1xi32>
    %290 = arith.extui %289 : vector<32x1xi1> to vector<32x1xi32>
    %291 = arith.sitofp %290 : vector<32x1xi32> to vector<32x1xf32>
    %c7_i32_109 = arith.constant 7 : i32
    %292 = vector.broadcast %c7_i32_109 : i32 to vector<32x1xi32>
    %293 = arith.cmpi eq, %287, %292 : vector<32x1xi32>
    %294 = arith.extui %293 : vector<32x1xi1> to vector<32x1xi32>
    %295 = arith.sitofp %294 : vector<32x1xi32> to vector<32x1xf32>
    %c1_i32_110 = arith.constant 1 : i32
    %296 = tpu.dynamic_rotate %284 by %c1_i32_110 dim 0 : vector<32x8xf32>, i32 -> vector<32x8xf32>
    %c31_i32_111 = arith.constant 31 : i32
    %297 = tpu.dynamic_rotate %284 by %c31_i32_111 dim 0 : vector<32x8xf32>, i32 -> vector<32x8xf32>
    %298 = arith.subf %297, %296 : vector<32x8xf32>
    %299 = vector.broadcast %291 : vector<32x1xf32> to vector<32x8xf32>
    %300 = arith.mulf %299, %298 : vector<32x8xf32>
    %301 = arith.addf %296, %300 : vector<32x8xf32>
    %302 = arith.subf %296, %297 : vector<32x8xf32>
    %303 = vector.broadcast %295 : vector<32x1xf32> to vector<32x8xf32>
    %304 = arith.mulf %303, %302 : vector<32x8xf32>
    %305 = arith.addf %297, %304 : vector<32x8xf32>
    %306 = tpu.concatenate %301, %284, %305 in 1 : vector<32x8xf32>, vector<32x8xf32>, vector<32x8xf32> -> vector<32x24xf32>
    %c440 = arith.constant 440 : index
    %c0_112 = arith.constant 0 : index
    %307 = vector.load %arg0[%c440, %c0_112] : memref<968x128xf32, #tpu.memory_space<vmem>>, vector<24x8xf32>
    %cst_113 = arith.constant dense<0.000000e+00> : vector<32x8xf32>
    %308 = tpu.matmul %306, %307, %cst_113 {dimension_numbers = #tpu.dot_dimension_numbers<[1], [0], [0], [1], [0, 0, 1, 1], [], []>} : vector<32x24xf32>, vector<24x8xf32>, vector<32x8xf32> -> vector<32x8xf32>
    %cst_114 = arith.constant 0.000000e+00 : f32
    %309 = vector.broadcast %cst_114 : f32 to vector<32x8xf32>
    %310 = arith.cmpf oge, %308, %309 : vector<32x8xf32>
    %cst_115 = arith.constant 2.500000e-01 : f32
    %311 = vector.broadcast %cst_115 : f32 to vector<32x8xf32>
    %312 = arith.mulf %311, %308 : vector<32x8xf32>
    %313 = arith.select %310, %308, %312 : vector<32x8xi1>, vector<32x8xf32>
    %c464 = arith.constant 464 : index
    %c0_116 = arith.constant 0 : index
    %314 = vector.load %arg0[%c464, %c0_116] : memref<968x128xf32, #tpu.memory_space<vmem>>, vector<8x8xf32>
    %cst_117 = arith.constant dense<0.000000e+00> : vector<32x8xf32>
    %315 = tpu.matmul %313, %314, %cst_117 {dimension_numbers = #tpu.dot_dimension_numbers<[1], [0], [0], [1], [0, 0, 1, 1], [], []>} : vector<32x8xf32>, vector<8x8xf32>, vector<32x8xf32> -> vector<32x8xf32>
    %316 = math.tanh %315 : vector<32x8xf32>
    %317 = arith.subf %245, %316 : vector<32x8xf32>
    %318 = math.absf %317 : vector<32x8xf32>
    %cst_118 = arith.constant dense<0.000000e+00> : vector<32xf32>
    %319 = vector.multi_reduction <add>, %318, %cst_118 [1] : vector<32x8xf32> to vector<32xf32>
    %320 = vector.shape_cast %319 : vector<32xf32> to vector<32x1xf32>
    %cst_119 = arith.constant dense<0.000000e+00> : vector<1xf32>
    %321 = vector.multi_reduction <add>, %320, %cst_119 [0] : vector<32x1xf32> to vector<1xf32>
    %322 = vector.shape_cast %321 : vector<1xf32> to vector<1x1xf32>
    %cst_120 = arith.constant 3.906250e-03 : f32
    %323 = vector.broadcast %cst_120 : f32 to vector<1x1xf32>
    %324 = arith.mulf %322, %323 : vector<1x1xf32>
    %cst_121 = arith.constant 0.00999999977 : f32
    %325 = vector.broadcast %cst_121 : f32 to vector<1x1xf32>
    %326 = arith.mulf %325, %324 : vector<1x1xf32>
    %cst_122 = arith.constant dense<0.000000e+00> : vector<32xf32>
    %327 = vector.multi_reduction <add>, %284, %cst_122 [1] : vector<32x8xf32> to vector<32xf32>
    %328 = vector.shape_cast %327 : vector<32xf32> to vector<32x1xf32>
    %cst_123 = arith.constant dense<0.000000e+00> : vector<1xf32>
    %329 = vector.multi_reduction <add>, %328, %cst_123 [0] : vector<32x1xf32> to vector<1xf32>
    %330 = vector.shape_cast %329 : vector<1xf32> to vector<1x1xf32>
    %cst_124 = arith.constant 3.906250e-03 : f32
    %331 = vector.broadcast %cst_124 : f32 to vector<1x1xf32>
    %332 = arith.mulf %330, %331 : vector<1x1xf32>
    %333 = arith.subf %332, %251 : vector<1x1xf32>
    %334 = math.absf %333 : vector<1x1xf32>
    %cst_125 = arith.constant 0.00999999977 : f32
    %335 = vector.broadcast %cst_125 : f32 to vector<1x1xf32>
    %336 = arith.mulf %335, %334 : vector<1x1xf32>
    %337 = arith.addf %326, %336 : vector<1x1xf32>
    %c2_126 = arith.constant 2 : index
    %c1 = arith.constant 1 : index
    %338 = vector.load %arg4[%c2_126, %c1] : memref<8x128xf32, #tpu.memory_space<vmem>>, vector<1x1xf32>
    tpu.vector_store %arg4[%c2_126, %c1], %337 {strides = array<i32>} : memref<8x128xf32, #tpu.memory_space<vmem>>, vector<1x1xf32>,
    %339 = tpu.concatenate %284, %317 in 0 : vector<32x8xf32>, vector<32x8xf32> -> vector<64x8xf32>
    %c488 = arith.constant 488 : index
    %c0_127 = arith.constant 0 : index
    %340 = vector.load %arg0[%c488, %c0_127] : memref<968x128xf32, #tpu.memory_space<vmem>>, vector<16x64xf32>
    %cst_128 = arith.constant dense<0.000000e+00> : vector<16x8xf32>
    %341 = tpu.matmul %340, %339, %cst_128 {dimension_numbers = #tpu.dot_dimension_numbers<[1], [0], [0], [1], [0, 0, 1, 1], [], []>} : vector<16x64xf32>, vector<64x8xf32>, vector<16x8xf32> -> vector<16x8xf32>
    %c472 = arith.constant 472 : index
    %c0_129 = arith.constant 0 : index
    %342 = vector.load %arg0[%c472, %c0_129] : memref<968x128xf32, #tpu.memory_space<vmem>>, vector<8x8xf32>
    %cst_130 = arith.constant dense<0.000000e+00> : vector<16x8xf32>
    %343 = tpu.matmul %341, %342, %cst_130 {dimension_numbers = #tpu.dot_dimension_numbers<[1], [0], [0], [1], [0, 0, 1, 1], [], []>} : vector<16x8xf32>, vector<8x8xf32>, vector<16x8xf32> -> vector<16x8xf32>
    %cst_131 = arith.constant 0.000000e+00 : f32
    %344 = vector.broadcast %cst_131 : f32 to vector<16x8xf32>
    %345 = arith.cmpf oge, %343, %344 : vector<16x8xf32>
    %cst_132 = arith.constant 2.500000e-01 : f32
    %346 = vector.broadcast %cst_132 : f32 to vector<16x8xf32>
    %347 = arith.mulf %346, %343 : vector<16x8xf32>
    %348 = arith.select %345, %343, %347 : vector<16x8xi1>, vector<16x8xf32>
    %c480 = arith.constant 480 : index
    %c0_133 = arith.constant 0 : index
    %349 = vector.load %arg0[%c480, %c0_133] : memref<968x128xf32, #tpu.memory_space<vmem>>, vector<8x2xf32>
    %cst_134 = arith.constant dense<0.000000e+00> : vector<16x2xf32>
    %350 = tpu.matmul %348, %349, %cst_134 {dimension_numbers = #tpu.dot_dimension_numbers<[1], [0], [0], [1], [0, 0, 1, 1], [], []>} : vector<16x8xf32>, vector<8x2xf32>, vector<16x2xf32> -> vector<16x2xf32>
    %cst_135 = arith.constant 0.000000e+00 : f32
    %351 = vector.broadcast %cst_135 : f32 to vector<16x2xf32>
    %352 = arith.cmpf oge, %350, %351 : vector<16x2xf32>
    %cst_136 = arith.constant 2.500000e-01 : f32
    %353 = vector.broadcast %cst_136 : f32 to vector<16x2xf32>
    %354 = arith.mulf %353, %350 : vector<16x2xf32>
    %355 = arith.select %352, %350, %354 : vector<16x2xi1>, vector<16x2xf32>
    %356 = vector.extract_strided_slice %355 {offsets = [0, 0], sizes = [16, 1], strides = [1, 1]} : vector<16x2xf32> to vector<16x1xf32>
    %357 = vector.extract_strided_slice %355 {offsets = [0, 1], sizes = [16, 1], strides = [1, 1]} : vector<16x2xf32> to vector<16x1xf32>
    %358 = arith.subf %356, %357 : vector<16x1xf32>
    %cst_137 = arith.constant 0.000000e+00 : f32
    %359 = vector.broadcast %cst_137 : f32 to vector<16x1xf32>
    %360 = arith.subf %359, %358 : vector<16x1xf32>
    %361 = math.exp %360 : vector<16x1xf32>
    %cst_138 = arith.constant 1.000000e+00 : f32
    %362 = vector.broadcast %cst_138 : f32 to vector<16x1xf32>
    %363 = arith.addf %362, %361 : vector<16x1xf32>
    %364 = tpu.reciprocal %363 {approx = true} : vector<16x1xf32> -> vector<16x1xf32>
    %c16 = arith.constant 16 : index
    %c0_139 = arith.constant 0 : index
    %365 = vector.load %arg2[%c16, %c0_139] : memref<48x1xf32, #tpu.memory_space<vmem>>, vector<16x1xf32>
    %cst_140 = arith.constant 2.000000e+00 : f32
    %366 = vector.broadcast %cst_140 : f32 to vector<16x1xf32>
    %367 = arith.mulf %366, %364 : vector<16x1xf32>
    %cst_141 = arith.constant 1.000000e+00 : f32
    %368 = vector.broadcast %cst_141 : f32 to vector<16x1xf32>
    %369 = arith.subf %367, %368 : vector<16x1xf32>
    %370 = arith.addf %369, %365 : vector<16x1xf32>
    %cst_142 = arith.constant 1.000000e+00 : f32
    %371 = vector.broadcast %cst_142 : f32 to vector<16x1xf32>
    %372 = arith.mulf %370, %371 : vector<16x1xf32>
    %cst_143 = arith.constant 0.000000e+00 : f32
    %373 = vector.broadcast %cst_143 : f32 to vector<16x1xf32>
    %374 = arith.subf %373, %372 : vector<16x1xf32>
    %375 = math.exp %374 : vector<16x1xf32>
    %cst_144 = arith.constant 1.000000e+00 : f32
    %376 = vector.broadcast %cst_144 : f32 to vector<16x1xf32>
    %377 = arith.addf %376, %375 : vector<16x1xf32>
    %378 = tpu.reciprocal %377 {approx = true} : vector<16x1xf32> -> vector<16x1xf32>
    %cst_145 = arith.constant 1.000000e+00 : f32
    %379 = vector.broadcast %cst_145 : f32 to vector<16x1xf32>
    %380 = arith.subf %379, %378 : vector<16x1xf32>
    %c568 = arith.constant 568 : index
    %c0_146 = arith.constant 0 : index
    %381 = vector.load %arg0[%c568, %c0_146] : memref<968x128xf32, #tpu.memory_space<vmem>>, vector<2x16xf32>
    %382 = vector.broadcast %378 : vector<16x1xf32> to vector<16x8xf32>
    %383 = arith.mulf %341, %382 : vector<16x8xf32>
    %cst_147 = arith.constant dense<0.000000e+00> : vector<2x8xf32>
    %384 = tpu.matmul %381, %383, %cst_147 {dimension_numbers = #tpu.dot_dimension_numbers<[1], [0], [0], [1], [0, 0, 1, 1], [], []>} : vector<2x16xf32>, vector<16x8xf32>, vector<2x8xf32> -> vector<2x8xf32>
    %385 = vector.broadcast %380 : vector<16x1xf32> to vector<16x8xf32>
    %386 = arith.mulf %341, %385 : vector<16x8xf32>
    %cst_148 = arith.constant dense<0.000000e+00> : vector<2x8xf32>
    %387 = tpu.matmul %381, %386, %cst_148 {dimension_numbers = #tpu.dot_dimension_numbers<[1], [0], [0], [1], [0, 0, 1, 1], [], []>} : vector<2x16xf32>, vector<16x8xf32>, vector<2x8xf32> -> vector<2x8xf32>
    %388 = arith.addf %236, %387 : vector<2x8xf32>
    %389 = arith.addf %388, %384 : vector<2x8xf32>
    %c504 = arith.constant 504 : index
    %c0_149 = arith.constant 0 : index
    %390 = vector.load %arg0[%c504, %c0_149] : memref<968x128xf32, #tpu.memory_space<vmem>>, vector<64x16xf32>
    %cst_150 = arith.constant dense<0.000000e+00> : vector<64x1xf32>
    %391 = tpu.matmul %390, %378, %cst_150 {dimension_numbers = #tpu.dot_dimension_numbers<[1], [0], [0], [1], [0, 0, 1, 1], [], []>} : vector<64x16xf32>, vector<16x1xf32>, vector<64x1xf32> -> vector<64x1xf32>
    %c576 = arith.constant 576 : index
    %c0_151 = arith.constant 0 : index
    %392 = vector.load %arg0[%c576, %c0_151] : memref<968x128xf32, #tpu.memory_space<vmem>>, vector<64x64xf32>
    %393 = vector.broadcast %391 : vector<64x1xf32> to vector<64x8xf32>
    %394 = arith.mulf %339, %393 : vector<64x8xf32>
    %cst_152 = arith.constant dense<0.000000e+00> : vector<64x8xf32>
    %395 = tpu.matmul %392, %394, %cst_152 {dimension_numbers = #tpu.dot_dimension_numbers<[1], [0], [0], [1], [0, 0, 1, 1], [], []>} : vector<64x64xf32>, vector<64x8xf32>, vector<64x8xf32> -> vector<64x8xf32>
    %396 = vector.extract_strided_slice %395 {offsets = [0, 0], sizes = [32, 8], strides = [1, 1]} : vector<64x8xf32> to vector<32x8xf32>
    %397 = vector.extract_strided_slice %395 {offsets = [32, 0], sizes = [32, 8], strides = [1, 1]} : vector<64x8xf32> to vector<32x8xf32>
    %cst_153 = arith.constant dense<0.000000e+00> : vector<64xf32>
    %398 = vector.multi_reduction <add>, %395, %cst_153 [1] : vector<64x8xf32> to vector<64xf32>
    %399 = vector.shape_cast %398 : vector<64xf32> to vector<64x1xf32>
    %cst_154 = arith.constant dense<0.000000e+00> : vector<1xf32>
    %400 = vector.multi_reduction <add>, %399, %cst_154 [0] : vector<64x1xf32> to vector<1xf32>
    %401 = vector.shape_cast %400 : vector<1xf32> to vector<1x1xf32>
    %cst_155 = arith.constant 0.001953125 : f32
    %402 = vector.broadcast %cst_155 : f32 to vector<1x1xf32>
    %403 = arith.mulf %401, %402 : vector<1x1xf32>
    %404 = tpu.iota {dimensions = array<i32: 0>} : vector<32x1xi32>
    %c3_i32 = arith.constant 3 : i32
    %405 = vector.broadcast %c3_i32 : i32 to vector<32x1xi32>
    %406 = arith.andi %404, %405 : vector<32x1xi32>
    %c0_i32_156 = arith.constant 0 : i32
    %407 = vector.broadcast %c0_i32_156 : i32 to vector<32x1xi32>
    %408 = arith.cmpi eq, %406, %407 : vector<32x1xi32>
    %409 = arith.extui %408 : vector<32x1xi1> to vector<32x1xi32>
    %410 = arith.sitofp %409 : vector<32x1xi32> to vector<32x1xf32>
    %c3_i32_157 = arith.constant 3 : i32
    %411 = vector.broadcast %c3_i32_157 : i32 to vector<32x1xi32>
    %412 = arith.cmpi eq, %406, %411 : vector<32x1xi32>
    %413 = arith.extui %412 : vector<32x1xi1> to vector<32x1xi32>
    %414 = arith.sitofp %413 : vector<32x1xi32> to vector<32x1xf32>
    %c1_i32_158 = arith.constant 1 : i32
    %415 = tpu.dynamic_rotate %397 by %c1_i32_158 dim 0 : vector<32x8xf32>, i32 -> vector<32x8xf32>
    %c31_i32_159 = arith.constant 31 : i32
    %416 = tpu.dynamic_rotate %397 by %c31_i32_159 dim 0 : vector<32x8xf32>, i32 -> vector<32x8xf32>
    %417 = arith.subf %416, %415 : vector<32x8xf32>
    %418 = vector.broadcast %410 : vector<32x1xf32> to vector<32x8xf32>
    %419 = arith.mulf %418, %417 : vector<32x8xf32>
    %420 = arith.addf %415, %419 : vector<32x8xf32>
    %421 = arith.subf %415, %416 : vector<32x8xf32>
    %422 = vector.broadcast %414 : vector<32x1xf32> to vector<32x8xf32>
    %423 = arith.mulf %422, %421 : vector<32x8xf32>
    %424 = arith.addf %416, %423 : vector<32x8xf32>
    %425 = tpu.concatenate %420, %397, %424 in 1 : vector<32x8xf32>, vector<32x8xf32>, vector<32x8xf32> -> vector<32x24xf32>
    %c640 = arith.constant 640 : index
    %c0_160 = arith.constant 0 : index
    %426 = vector.load %arg0[%c640, %c0_160] : memref<968x128xf32, #tpu.memory_space<vmem>>, vector<24x8xf32>
    %cst_161 = arith.constant dense<0.000000e+00> : vector<32x8xf32>
    %427 = tpu.matmul %425, %426, %cst_161 {dimension_numbers = #tpu.dot_dimension_numbers<[1], [0], [0], [1], [0, 0, 1, 1], [], []>} : vector<32x24xf32>, vector<24x8xf32>, vector<32x8xf32> -> vector<32x8xf32>
    %cst_162 = arith.constant 0.000000e+00 : f32
    %428 = vector.broadcast %cst_162 : f32 to vector<32x8xf32>
    %429 = arith.cmpf oge, %427, %428 : vector<32x8xf32>
    %cst_163 = arith.constant 2.500000e-01 : f32
    %430 = vector.broadcast %cst_163 : f32 to vector<32x8xf32>
    %431 = arith.mulf %430, %427 : vector<32x8xf32>
    %432 = arith.select %429, %427, %431 : vector<32x8xi1>, vector<32x8xf32>
    %c664 = arith.constant 664 : index
    %c0_164 = arith.constant 0 : index
    %433 = vector.load %arg0[%c664, %c0_164] : memref<968x128xf32, #tpu.memory_space<vmem>>, vector<8x8xf32>
    %cst_165 = arith.constant dense<0.000000e+00> : vector<32x8xf32>
    %434 = tpu.matmul %432, %433, %cst_165 {dimension_numbers = #tpu.dot_dimension_numbers<[1], [0], [0], [1], [0, 0, 1, 1], [], []>} : vector<32x8xf32>, vector<8x8xf32>, vector<32x8xf32> -> vector<32x8xf32>
    %435 = math.tanh %434 : vector<32x8xf32>
    %436 = arith.addf %396, %435 : vector<32x8xf32>
    %437 = tpu.iota {dimensions = array<i32: 0>} : vector<32x1xi32>
    %c3_i32_166 = arith.constant 3 : i32
    %438 = vector.broadcast %c3_i32_166 : i32 to vector<32x1xi32>
    %439 = arith.andi %437, %438 : vector<32x1xi32>
    %c0_i32_167 = arith.constant 0 : i32
    %440 = vector.broadcast %c0_i32_167 : i32 to vector<32x1xi32>
    %441 = arith.cmpi eq, %439, %440 : vector<32x1xi32>
    %442 = arith.extui %441 : vector<32x1xi1> to vector<32x1xi32>
    %443 = arith.sitofp %442 : vector<32x1xi32> to vector<32x1xf32>
    %c3_i32_168 = arith.constant 3 : i32
    %444 = vector.broadcast %c3_i32_168 : i32 to vector<32x1xi32>
    %445 = arith.cmpi eq, %439, %444 : vector<32x1xi32>
    %446 = arith.extui %445 : vector<32x1xi1> to vector<32x1xi32>
    %447 = arith.sitofp %446 : vector<32x1xi32> to vector<32x1xf32>
    %c1_i32_169 = arith.constant 1 : i32
    %448 = tpu.dynamic_rotate %436 by %c1_i32_169 dim 0 : vector<32x8xf32>, i32 -> vector<32x8xf32>
    %c31_i32_170 = arith.constant 31 : i32
    %449 = tpu.dynamic_rotate %436 by %c31_i32_170 dim 0 : vector<32x8xf32>, i32 -> vector<32x8xf32>
    %450 = arith.subf %449, %448 : vector<32x8xf32>
    %451 = vector.broadcast %443 : vector<32x1xf32> to vector<32x8xf32>
    %452 = arith.mulf %451, %450 : vector<32x8xf32>
    %453 = arith.addf %448, %452 : vector<32x8xf32>
    %454 = arith.subf %448, %449 : vector<32x8xf32>
    %455 = vector.broadcast %447 : vector<32x1xf32> to vector<32x8xf32>
    %456 = arith.mulf %455, %454 : vector<32x8xf32>
    %457 = arith.addf %449, %456 : vector<32x8xf32>
    %458 = tpu.concatenate %453, %436, %457 in 1 : vector<32x8xf32>, vector<32x8xf32>, vector<32x8xf32> -> vector<32x24xf32>
    %c672 = arith.constant 672 : index
    %c0_171 = arith.constant 0 : index
    %459 = vector.load %arg0[%c672, %c0_171] : memref<968x128xf32, #tpu.memory_space<vmem>>, vector<24x8xf32>
    %cst_172 = arith.constant dense<0.000000e+00> : vector<32x8xf32>
    %460 = tpu.matmul %458, %459, %cst_172 {dimension_numbers = #tpu.dot_dimension_numbers<[1], [0], [0], [1], [0, 0, 1, 1], [], []>} : vector<32x24xf32>, vector<24x8xf32>, vector<32x8xf32> -> vector<32x8xf32>
    %cst_173 = arith.constant 0.000000e+00 : f32
    %461 = vector.broadcast %cst_173 : f32 to vector<32x8xf32>
    %462 = arith.cmpf oge, %460, %461 : vector<32x8xf32>
    %cst_174 = arith.constant 2.500000e-01 : f32
    %463 = vector.broadcast %cst_174 : f32 to vector<32x8xf32>
    %464 = arith.mulf %463, %460 : vector<32x8xf32>
    %465 = arith.select %462, %460, %464 : vector<32x8xi1>, vector<32x8xf32>
    %c696 = arith.constant 696 : index
    %c0_175 = arith.constant 0 : index
    %466 = vector.load %arg0[%c696, %c0_175] : memref<968x128xf32, #tpu.memory_space<vmem>>, vector<8x8xf32>
    %cst_176 = arith.constant dense<0.000000e+00> : vector<32x8xf32>
    %467 = tpu.matmul %465, %466, %cst_176 {dimension_numbers = #tpu.dot_dimension_numbers<[1], [0], [0], [1], [0, 0, 1, 1], [], []>} : vector<32x8xf32>, vector<8x8xf32>, vector<32x8xf32> -> vector<32x8xf32>
    %468 = math.tanh %467 : vector<32x8xf32>
    %469 = arith.subf %397, %468 : vector<32x8xf32>
    %470 = math.absf %469 : vector<32x8xf32>
    %cst_177 = arith.constant dense<0.000000e+00> : vector<32xf32>
    %471 = vector.multi_reduction <add>, %470, %cst_177 [1] : vector<32x8xf32> to vector<32xf32>
    %472 = vector.shape_cast %471 : vector<32xf32> to vector<32x1xf32>
    %cst_178 = arith.constant dense<0.000000e+00> : vector<1xf32>
    %473 = vector.multi_reduction <add>, %472, %cst_178 [0] : vector<32x1xf32> to vector<1xf32>
    %474 = vector.shape_cast %473 : vector<1xf32> to vector<1x1xf32>
    %cst_179 = arith.constant 3.906250e-03 : f32
    %475 = vector.broadcast %cst_179 : f32 to vector<1x1xf32>
    %476 = arith.mulf %474, %475 : vector<1x1xf32>
    %cst_180 = arith.constant 0.00999999977 : f32
    %477 = vector.broadcast %cst_180 : f32 to vector<1x1xf32>
    %478 = arith.mulf %477, %476 : vector<1x1xf32>
    %cst_181 = arith.constant dense<0.000000e+00> : vector<32xf32>
    %479 = vector.multi_reduction <add>, %436, %cst_181 [1] : vector<32x8xf32> to vector<32xf32>
    %480 = vector.shape_cast %479 : vector<32xf32> to vector<32x1xf32>
    %cst_182 = arith.constant dense<0.000000e+00> : vector<1xf32>
    %481 = vector.multi_reduction <add>, %480, %cst_182 [0] : vector<32x1xf32> to vector<1xf32>
    %482 = vector.shape_cast %481 : vector<1xf32> to vector<1x1xf32>
    %cst_183 = arith.constant 3.906250e-03 : f32
    %483 = vector.broadcast %cst_183 : f32 to vector<1x1xf32>
    %484 = arith.mulf %482, %483 : vector<1x1xf32>
    %485 = arith.subf %484, %403 : vector<1x1xf32>
    %486 = math.absf %485 : vector<1x1xf32>
    %cst_184 = arith.constant 0.00999999977 : f32
    %487 = vector.broadcast %cst_184 : f32 to vector<1x1xf32>
    %488 = arith.mulf %487, %486 : vector<1x1xf32>
    %489 = arith.addf %478, %488 : vector<1x1xf32>
    %c2_185 = arith.constant 2 : index
    %c2_186 = arith.constant 2 : index
    %490 = vector.load %arg4[%c2_185, %c2_186] : memref<8x128xf32, #tpu.memory_space<vmem>>, vector<1x1xf32>
    tpu.vector_store %arg4[%c2_185, %c2_186], %489 {strides = array<i32>} : memref<8x128xf32, #tpu.memory_space<vmem>>, vector<1x1xf32>,
    %491 = tpu.concatenate %436, %469 in 0 : vector<32x8xf32>, vector<32x8xf32> -> vector<64x8xf32>
    %c720 = arith.constant 720 : index
    %c0_187 = arith.constant 0 : index
    %492 = vector.load %arg0[%c720, %c0_187] : memref<968x128xf32, #tpu.memory_space<vmem>>, vector<16x64xf32>
    %cst_188 = arith.constant dense<0.000000e+00> : vector<16x8xf32>
    %493 = tpu.matmul %492, %491, %cst_188 {dimension_numbers = #tpu.dot_dimension_numbers<[1], [0], [0], [1], [0, 0, 1, 1], [], []>} : vector<16x64xf32>, vector<64x8xf32>, vector<16x8xf32> -> vector<16x8xf32>
    %c704 = arith.constant 704 : index
    %c0_189 = arith.constant 0 : index
    %494 = vector.load %arg0[%c704, %c0_189] : memref<968x128xf32, #tpu.memory_space<vmem>>, vector<8x8xf32>
    %cst_190 = arith.constant dense<0.000000e+00> : vector<16x8xf32>
    %495 = tpu.matmul %493, %494, %cst_190 {dimension_numbers = #tpu.dot_dimension_numbers<[1], [0], [0], [1], [0, 0, 1, 1], [], []>} : vector<16x8xf32>, vector<8x8xf32>, vector<16x8xf32> -> vector<16x8xf32>
    %cst_191 = arith.constant 0.000000e+00 : f32
    %496 = vector.broadcast %cst_191 : f32 to vector<16x8xf32>
    %497 = arith.cmpf oge, %495, %496 : vector<16x8xf32>
    %cst_192 = arith.constant 2.500000e-01 : f32
    %498 = vector.broadcast %cst_192 : f32 to vector<16x8xf32>
    %499 = arith.mulf %498, %495 : vector<16x8xf32>
    %500 = arith.select %497, %495, %499 : vector<16x8xi1>, vector<16x8xf32>
    %c712 = arith.constant 712 : index
    %c0_193 = arith.constant 0 : index
    %501 = vector.load %arg0[%c712, %c0_193] : memref<968x128xf32, #tpu.memory_space<vmem>>, vector<8x2xf32>
    %cst_194 = arith.constant dense<0.000000e+00> : vector<16x2xf32>
    %502 = tpu.matmul %500, %501, %cst_194 {dimension_numbers = #tpu.dot_dimension_numbers<[1], [0], [0], [1], [0, 0, 1, 1], [], []>} : vector<16x8xf32>, vector<8x2xf32>, vector<16x2xf32> -> vector<16x2xf32>
    %cst_195 = arith.constant 0.000000e+00 : f32
    %503 = vector.broadcast %cst_195 : f32 to vector<16x2xf32>
    %504 = arith.cmpf oge, %502, %503 : vector<16x2xf32>
    %cst_196 = arith.constant 2.500000e-01 : f32
    %505 = vector.broadcast %cst_196 : f32 to vector<16x2xf32>
    %506 = arith.mulf %505, %502 : vector<16x2xf32>
    %507 = arith.select %504, %502, %506 : vector<16x2xi1>, vector<16x2xf32>
    %508 = vector.extract_strided_slice %507 {offsets = [0, 0], sizes = [16, 1], strides = [1, 1]} : vector<16x2xf32> to vector<16x1xf32>
    %509 = vector.extract_strided_slice %507 {offsets = [0, 1], sizes = [16, 1], strides = [1, 1]} : vector<16x2xf32> to vector<16x1xf32>
    %510 = arith.subf %508, %509 : vector<16x1xf32>
    %cst_197 = arith.constant 0.000000e+00 : f32
    %511 = vector.broadcast %cst_197 : f32 to vector<16x1xf32>
    %512 = arith.subf %511, %510 : vector<16x1xf32>
    %513 = math.exp %512 : vector<16x1xf32>
    %cst_198 = arith.constant 1.000000e+00 : f32
    %514 = vector.broadcast %cst_198 : f32 to vector<16x1xf32>
    %515 = arith.addf %514, %513 : vector<16x1xf32>
    %516 = tpu.reciprocal %515 {approx = true} : vector<16x1xf32> -> vector<16x1xf32>
    %c32 = arith.constant 32 : index
    %c0_199 = arith.constant 0 : index
    %517 = vector.load %arg2[%c32, %c0_199] : memref<48x1xf32, #tpu.memory_space<vmem>>, vector<16x1xf32>
    %cst_200 = arith.constant 2.000000e+00 : f32
    %518 = vector.broadcast %cst_200 : f32 to vector<16x1xf32>
    %519 = arith.mulf %518, %516 : vector<16x1xf32>
    %cst_201 = arith.constant 1.000000e+00 : f32
    %520 = vector.broadcast %cst_201 : f32 to vector<16x1xf32>
    %521 = arith.subf %519, %520 : vector<16x1xf32>
    %522 = arith.addf %521, %517 : vector<16x1xf32>
    %cst_202 = arith.constant 1.000000e+00 : f32
    %523 = vector.broadcast %cst_202 : f32 to vector<16x1xf32>
    %524 = arith.mulf %522, %523 : vector<16x1xf32>
    %cst_203 = arith.constant 0.000000e+00 : f32
    %525 = vector.broadcast %cst_203 : f32 to vector<16x1xf32>
    %526 = arith.subf %525, %524 : vector<16x1xf32>
    %527 = math.exp %526 : vector<16x1xf32>
    %cst_204 = arith.constant 1.000000e+00 : f32
    %528 = vector.broadcast %cst_204 : f32 to vector<16x1xf32>
    %529 = arith.addf %528, %527 : vector<16x1xf32>
    %530 = tpu.reciprocal %529 {approx = true} : vector<16x1xf32> -> vector<16x1xf32>
    %cst_205 = arith.constant 1.000000e+00 : f32
    %531 = vector.broadcast %cst_205 : f32 to vector<16x1xf32>
    %532 = arith.subf %531, %530 : vector<16x1xf32>
    %c800 = arith.constant 800 : index
    %c0_206 = arith.constant 0 : index
    %533 = vector.load %arg0[%c800, %c0_206] : memref<968x128xf32, #tpu.memory_space<vmem>>, vector<2x16xf32>
    %534 = vector.broadcast %530 : vector<16x1xf32> to vector<16x8xf32>
    %535 = arith.mulf %493, %534 : vector<16x8xf32>
    %cst_207 = arith.constant dense<0.000000e+00> : vector<2x8xf32>
    %536 = tpu.matmul %533, %535, %cst_207 {dimension_numbers = #tpu.dot_dimension_numbers<[1], [0], [0], [1], [0, 0, 1, 1], [], []>} : vector<2x16xf32>, vector<16x8xf32>, vector<2x8xf32> -> vector<2x8xf32>
    %537 = vector.broadcast %532 : vector<16x1xf32> to vector<16x8xf32>
    %538 = arith.mulf %493, %537 : vector<16x8xf32>
    %cst_208 = arith.constant dense<0.000000e+00> : vector<2x8xf32>
    %539 = tpu.matmul %533, %538, %cst_208 {dimension_numbers = #tpu.dot_dimension_numbers<[1], [0], [0], [1], [0, 0, 1, 1], [], []>} : vector<2x16xf32>, vector<16x8xf32>, vector<2x8xf32> -> vector<2x8xf32>
    %540 = arith.addf %388, %539 : vector<2x8xf32>
    %541 = arith.addf %540, %536 : vector<2x8xf32>
    %542 = tpu.concatenate %237, %389, %541 in 1 : vector<2x8xf32>, vector<2x8xf32>, vector<2x8xf32> -> vector<2x24xf32>
    %c808 = arith.constant 808 : index
    %c0_209 = arith.constant 0 : index
    %543 = vector.load %arg0[%c808, %c0_209] : memref<968x128xf32, #tpu.memory_space<vmem>>, vector<24x24xf32>
    %cst_210 = arith.constant dense<0.000000e+00> : vector<2x24xf32>
    %544 = tpu.matmul %542, %543, %cst_210 {dimension_numbers = #tpu.dot_dimension_numbers<[1], [0], [0], [1], [0, 0, 1, 1], [], []>} : vector<2x24xf32>, vector<24x24xf32>, vector<2x24xf32> -> vector<2x24xf32>
    %c832 = arith.constant 832 : index
    %c0_211 = arith.constant 0 : index
    %545 = vector.load %arg0[%c832, %c0_211] : memref<968x128xf32, #tpu.memory_space<vmem>>, vector<1x24xf32>
    %546 = vector.broadcast %545 : vector<1x24xf32> to vector<2x24xf32>
    %547 = arith.addf %544, %546 : vector<2x24xf32>
    %cst_212 = arith.constant 0.000000e+00 : f32
    %548 = vector.broadcast %cst_212 : f32 to vector<2x24xf32>
    %549 = arith.cmpf oge, %547, %548 : vector<2x24xf32>
    %cst_213 = arith.constant 2.500000e-01 : f32
    %550 = vector.broadcast %cst_213 : f32 to vector<2x24xf32>
    %551 = arith.mulf %550, %547 : vector<2x24xf32>
    %552 = arith.select %549, %547, %551 : vector<2x24xi1>, vector<2x24xf32>
    %c840 = arith.constant 840 : index
    %c0_214 = arith.constant 0 : index
    %553 = vector.load %arg0[%c840, %c0_214] : memref<968x128xf32, #tpu.memory_space<vmem>>, vector<24x3xf32>
    %cst_215 = arith.constant dense<0.000000e+00> : vector<2x3xf32>
    %554 = tpu.matmul %552, %553, %cst_215 {dimension_numbers = #tpu.dot_dimension_numbers<[1], [0], [0], [1], [0, 0, 1, 1], [], []>} : vector<2x24xf32>, vector<24x3xf32>, vector<2x3xf32> -> vector<2x3xf32>
    %c864 = arith.constant 864 : index
    %c0_216 = arith.constant 0 : index
    %555 = vector.load %arg0[%c864, %c0_216] : memref<968x128xf32, #tpu.memory_space<vmem>>, vector<1x3xf32>
    %556 = vector.broadcast %555 : vector<1x3xf32> to vector<2x3xf32>
    %557 = arith.addf %554, %556 : vector<2x3xf32>
    %cst_217 = arith.constant 0.000000e+00 : f32
    %558 = vector.broadcast %cst_217 : f32 to vector<2x3xf32>
    %559 = arith.cmpf oge, %557, %558 : vector<2x3xf32>
    %cst_218 = arith.constant 2.500000e-01 : f32
    %560 = vector.broadcast %cst_218 : f32 to vector<2x3xf32>
    %561 = arith.mulf %560, %557 : vector<2x3xf32>
    %562 = arith.select %559, %557, %561 : vector<2x3xi1>, vector<2x3xf32>
    %cst_219 = arith.constant dense<0xFF800000> : vector<2xf32>
    %563 = vector.multi_reduction <maximumf>, %562, %cst_219 [1] : vector<2x3xf32> to vector<2xf32>
    %564 = vector.shape_cast %563 : vector<2xf32> to vector<2x1xf32>
    %565 = vector.broadcast %564 : vector<2x1xf32> to vector<2x3xf32>
    %566 = arith.subf %562, %565 : vector<2x3xf32>
    %567 = math.exp %566 : vector<2x3xf32>
    %cst_220 = arith.constant dense<0.000000e+00> : vector<2xf32>
    %568 = vector.multi_reduction <add>, %567, %cst_220 [1] : vector<2x3xf32> to vector<2xf32>
    %569 = vector.shape_cast %568 : vector<2xf32> to vector<2x1xf32>
    %570 = tpu.reciprocal %569 {approx = true} : vector<2x1xf32> -> vector<2x1xf32>
    %571 = vector.broadcast %570 : vector<2x1xf32> to vector<2x3xf32>
    %572 = arith.mulf %567, %571 : vector<2x3xf32>
    %c0_221 = arith.constant 0 : index
    %c0_222 = arith.constant 0 : index
    %573 = vector.load %arg3[%c0_221, %c0_222] : memref<2x3xf32, #tpu.memory_space<vmem>>, vector<2x3xf32>
    %574 = arith.addf %572, %573 : vector<2x3xf32>
    %cst_223 = arith.constant 1.000000e+00 : f32
    %575 = vector.broadcast %cst_223 : f32 to vector<2x3xf32>
    %576 = arith.mulf %574, %575 : vector<2x3xf32>
    %cst_224 = arith.constant dense<0xFF800000> : vector<2xf32>
    %577 = vector.multi_reduction <maximumf>, %576, %cst_224 [1] : vector<2x3xf32> to vector<2xf32>
    %578 = vector.shape_cast %577 : vector<2xf32> to vector<2x1xf32>
    %579 = vector.broadcast %578 : vector<2x1xf32> to vector<2x3xf32>
    %580 = arith.subf %576, %579 : vector<2x3xf32>
    %581 = math.exp %580 : vector<2x3xf32>
    %cst_225 = arith.constant dense<0.000000e+00> : vector<2xf32>
    %582 = vector.multi_reduction <add>, %581, %cst_225 [1] : vector<2x3xf32> to vector<2xf32>
    %583 = vector.shape_cast %582 : vector<2xf32> to vector<2x1xf32>
    %584 = tpu.reciprocal %583 {approx = true} : vector<2x1xf32> -> vector<2x1xf32>
    %585 = vector.broadcast %584 : vector<2x1xf32> to vector<2x3xf32>
    %586 = arith.mulf %581, %585 : vector<2x3xf32>
    %cst_226 = arith.constant 0.000000e+00 : f32
    %587 = vector.broadcast %cst_226 : f32 to vector<2x1xf32>
    %588 = vector.extract_strided_slice %586 {offsets = [0, 2], sizes = [2, 1], strides = [1, 1]} : vector<2x3xf32> to vector<2x1xf32>
    %589 = arith.addf %587, %588 : vector<2x1xf32>
    %590 = vector.extract_strided_slice %586 {offsets = [0, 1], sizes = [2, 1], strides = [1, 1]} : vector<2x3xf32> to vector<2x1xf32>
    %591 = arith.addf %589, %590 : vector<2x1xf32>
    %592 = vector.extract_strided_slice %586 {offsets = [0, 0], sizes = [2, 1], strides = [1, 1]} : vector<2x3xf32> to vector<2x1xf32>
    %593 = arith.addf %591, %592 : vector<2x1xf32>
    %cst_227 = arith.constant 0.000000e+00 : f32
    %594 = vector.broadcast %cst_227 : f32 to vector<2x8xf32>
    %595 = vector.broadcast %593 : vector<2x1xf32> to vector<2x8xf32>
    %596 = arith.mulf %595, %235 : vector<2x8xf32>
    %597 = arith.addf %594, %596 : vector<2x8xf32>
    %cst_228 = arith.constant 0.000000e+00 : f32
    %598 = vector.broadcast %cst_228 : f32 to vector<2x8xf32>
    %599 = vector.broadcast %591 : vector<2x1xf32> to vector<2x8xf32>
    %600 = arith.mulf %599, %387 : vector<2x8xf32>
    %601 = arith.addf %598, %600 : vector<2x8xf32>
    %602 = vector.extract_strided_slice %586 {offsets = [0, 0], sizes = [2, 1], strides = [1, 1]} : vector<2x3xf32> to vector<2x1xf32>
    %603 = vector.broadcast %602 : vector<2x1xf32> to vector<2x8xf32>
    %604 = arith.mulf %603, %232 : vector<2x8xf32>
    %605 = arith.addf %601, %604 : vector<2x8xf32>
    %cst_229 = arith.constant 0.000000e+00 : f32
    %606 = vector.broadcast %cst_229 : f32 to vector<2x8xf32>
    %607 = vector.broadcast %589 : vector<2x1xf32> to vector<2x8xf32>
    %608 = arith.mulf %607, %539 : vector<2x8xf32>
    %609 = arith.addf %606, %608 : vector<2x8xf32>
    %610 = vector.extract_strided_slice %586 {offsets = [0, 1], sizes = [2, 1], strides = [1, 1]} : vector<2x3xf32> to vector<2x1xf32>
    %611 = vector.broadcast %610 : vector<2x1xf32> to vector<2x8xf32>
    %612 = arith.mulf %611, %384 : vector<2x8xf32>
    %613 = arith.addf %609, %612 : vector<2x8xf32>
    %cst_230 = arith.constant 0.000000e+00 : f32
    %614 = vector.broadcast %cst_230 : f32 to vector<2x8xf32>
    %615 = vector.extract_strided_slice %586 {offsets = [0, 2], sizes = [2, 1], strides = [1, 1]} : vector<2x3xf32> to vector<2x1xf32>
    %616 = vector.broadcast %615 : vector<2x1xf32> to vector<2x8xf32>
    %617 = arith.mulf %616, %536 : vector<2x8xf32>
    %618 = arith.addf %614, %617 : vector<2x8xf32>
    %619 = tpu.concatenate %597, %605, %613, %618 in 1 : vector<2x8xf32>, vector<2x8xf32>, vector<2x8xf32>, vector<2x8xf32> -> vector<2x32xf32>
    %c872 = arith.constant 872 : index
    %c0_231 = arith.constant 0 : index
    %620 = vector.load %arg0[%c872, %c0_231] : memref<968x128xf32, #tpu.memory_space<vmem>>, vector<32x32xf32>
    %cst_232 = arith.constant dense<0.000000e+00> : vector<2x32xf32>
    %621 = tpu.matmul %619, %620, %cst_232 {dimension_numbers = #tpu.dot_dimension_numbers<[1], [0], [0], [1], [0, 0, 1, 1], [], []>} : vector<2x32xf32>, vector<32x32xf32>, vector<2x32xf32> -> vector<2x32xf32>
    %c904 = arith.constant 904 : index
    %c0_233 = arith.constant 0 : index
    %622 = vector.load %arg0[%c904, %c0_233] : memref<968x128xf32, #tpu.memory_space<vmem>>, vector<1x32xf32>
    %623 = vector.broadcast %622 : vector<1x32xf32> to vector<2x32xf32>
    %624 = arith.addf %621, %623 : vector<2x32xf32>
    %c912 = arith.constant 912 : index
    %c0_234 = arith.constant 0 : index
    %625 = vector.load %arg0[%c912, %c0_234] : memref<968x128xf32, #tpu.memory_space<vmem>>, vector<1x32xf32>
    %c920 = arith.constant 920 : index
    %c0_235 = arith.constant 0 : index
    %626 = vector.load %arg0[%c920, %c0_235] : memref<968x128xf32, #tpu.memory_space<vmem>>, vector<1x32xf32>
    %cst_236 = arith.constant dense<0.000000e+00> : vector<32xf32>
    %627 = vector.multi_reduction <add>, %624, %cst_236 [0] : vector<2x32xf32> to vector<32xf32>
    %628 = vector.shape_cast %627 : vector<32xf32> to vector<1x32xf32>
    %cst_237 = arith.constant 2.000000e+00 : f32
    %629 = vector.broadcast %cst_237 : f32 to vector<1x32xf32>
    %630 = arith.divf %628, %629 : vector<1x32xf32>
    %631 = vector.broadcast %630 : vector<1x32xf32> to vector<2x32xf32>
    %632 = arith.subf %624, %631 : vector<2x32xf32>
    %633 = arith.mulf %632, %632 : vector<2x32xf32>
    %cst_238 = arith.constant dense<0.000000e+00> : vector<32xf32>
    %634 = vector.multi_reduction <add>, %633, %cst_238 [0] : vector<2x32xf32> to vector<32xf32>
    %635 = vector.shape_cast %634 : vector<32xf32> to vector<1x32xf32>
    %cst_239 = arith.constant 2.000000e+00 : f32
    %636 = vector.broadcast %cst_239 : f32 to vector<1x32xf32>
    %637 = arith.divf %635, %636 : vector<1x32xf32>
    %cst_240 = arith.constant 9.99999974E-6 : f32
    %638 = vector.broadcast %cst_240 : f32 to vector<1x32xf32>
    %639 = arith.addf %637, %638 : vector<1x32xf32>
    %640 = math.rsqrt %639 : vector<1x32xf32>
    %641 = vector.broadcast %640 : vector<1x32xf32> to vector<2x32xf32>
    %642 = arith.mulf %632, %641 : vector<2x32xf32>
    %643 = vector.broadcast %625 : vector<1x32xf32> to vector<2x32xf32>
    %644 = arith.mulf %642, %643 : vector<2x32xf32>
    %645 = vector.broadcast %626 : vector<1x32xf32> to vector<2x32xf32>
    %646 = arith.addf %644, %645 : vector<2x32xf32>
    %cst_241 = arith.constant 0.000000e+00 : f32
    %647 = vector.broadcast %cst_241 : f32 to vector<2x32xf32>
    %648 = arith.cmpf oge, %646, %647 : vector<2x32xf32>
    %cst_242 = arith.constant 2.500000e-01 : f32
    %649 = vector.broadcast %cst_242 : f32 to vector<2x32xf32>
    %650 = arith.mulf %649, %646 : vector<2x32xf32>
    %651 = arith.select %648, %646, %650 : vector<2x32xi1>, vector<2x32xf32>
    %c928 = arith.constant 928 : index
    %c0_243 = arith.constant 0 : index
    %652 = vector.load %arg0[%c928, %c0_243] : memref<968x128xf32, #tpu.memory_space<vmem>>, vector<32x5xf32>
    %cst_244 = arith.constant dense<0.000000e+00> : vector<2x5xf32>
    %653 = tpu.matmul %651, %652, %cst_244 {dimension_numbers = #tpu.dot_dimension_numbers<[1], [0], [0], [1], [0, 0, 1, 1], [], []>} : vector<2x32xf32>, vector<32x5xf32>, vector<2x5xf32> -> vector<2x5xf32>
    %c960 = arith.constant 960 : index
    %c0_245 = arith.constant 0 : index
    %654 = vector.load %arg0[%c960, %c0_245] : memref<968x128xf32, #tpu.memory_space<vmem>>, vector<1x5xf32>
    %655 = vector.broadcast %654 : vector<1x5xf32> to vector<2x5xf32>
    %656 = arith.addf %653, %655 : vector<2x5xf32>
    %c0_246 = arith.constant 0 : index
    %c0_247 = arith.constant 0 : index
    %657 = vector.load %arg4[%c0_246, %c0_247] : memref<8x128xf32, #tpu.memory_space<vmem>>, vector<2x5xf32>
    tpu.vector_store %arg4[%c0_246, %c0_247], %656 {strides = array<i32>} : memref<8x128xf32, #tpu.memory_space<vmem>>, vector<2x5xf32>,
    return
  }
}

</mosaic_0001>

<llo_original>
// kernel: _lambda_.1
$region0: #{_lambda_.1}
  #allocation0 [shape = 'u32[]', space=smem, size = 0x4, offset = 0x4, fixed_abs, tag = 'smem constant byte address 0x4 - core index']
  #allocation1 [shape = 'u32[144,128]{1,0:T(1,128)}', space=vmem, size = 0x12000, scoped, tag = 'internal scratch']
  %s0 = inlined_call_operand.vmem [shape: f32[968,128], index: 0, kind: input, shape index: {}]
  %s1 = inlined_call_operand.vmem [shape: f32[64,33], index: 1, kind: input, shape index: {}]
  %s2 = inlined_call_operand.vmem [shape: f32[48,1], index: 2, kind: input, shape index: {}]
  %s3 = inlined_call_operand.vmem [shape: f32[2,3], index: 3, kind: input, shape index: {}]
  %s4 = inlined_call_operand.vmem [shape: f32[8,128], index: 4, kind: output, shape index: {}]
  %s5 = sld [smem:[#allocation0]]
  $region26: #{_lambda_.1} parent=0
    _
  %s7 = ssub.s32 1, %s5
  %s8 = scalar_select 0, %s7, %s5
  // Predicated region
  $region2: #{_lambda_.1} parent=0 // pred_check
    _
  $region3: #{_lambda_.1} parent=0 // pred_check_branch
    %10 = sbr.rel (0) target = $region5
  $region4: #{_lambda_.1} parent=0 // pred_region
    _
  $region5: #{_lambda_.1} parent=0 // pred_fallthru
    _
  // Predicated region
  $region6: #{_lambda_.1} parent=0 // pred_check
    _
  $region7: #{_lambda_.1} parent=0 // pred_check_branch
    %12 = sbr.rel (0) target = $region9
  $region8: #{_lambda_.1} parent=0 // pred_region
    _
  $region9: #{_lambda_.1} parent=0 // pred_fallthru
    _
  // Predicated region
  $region10: #{_lambda_.1} parent=0 // pred_check
    _
  $region11: #{_lambda_.1} parent=0 // pred_check_branch
    %14 = sbr.rel (0) target = $region13
  $region12: #{_lambda_.1} parent=0 // pred_region
    _
  $region13: #{_lambda_.1} parent=0 // pred_fallthru
    _
  // Predicated region
  $region14: #{_lambda_.1} parent=0 // pred_check
    _
  $region15: #{_lambda_.1} parent=0 // pred_check_branch
    %16 = sbr.rel (0) target = $region17
  $region16: #{_lambda_.1} parent=0 // pred_region
    _
  $region17: #{_lambda_.1} parent=0 // pred_fallthru
    _
  %17 = vst [vmem:[%s4] sm:$0xff] 0.0
  %v18 = vld [vmem:[%s1] sm:$0xff]
  %v19 = vld [vmem:[%s1 + $0x8] sm:$0xff]
  %v20 = vld [vmem:[%s1 + $0x10] sm:$0xff]
  %v21 = vld [vmem:[%s1 + $0x18] sm:$0xff]
  %v22 = vld [vmem:[%s1 + $0x20] sm:$0xff]
  %v23 = vld [vmem:[%s1 + $0x28] sm:$0xff]
  %v24 = vld [vmem:[%s1 + $0x30] sm:$0xff]
  %v25 = vld [vmem:[%s1 + $0x38] sm:$0xff]
  %v26 = vld [vmem:[%s0] sm:$0xff]
  %v27 = vld [vmem:[%s0 + $0x8] sm:$0xff]
  %v28 = vld [vmem:[%s0 + $0x10] sm:$0xff]
  %v29 = vld [vmem:[%s0 + $0x18] sm:$0xff]
  %v30 = vld [vmem:[%s0 + $0x20] sm:$0x1]
  %v31 = vld [vmem:[%s0 + $0x28] sm:$0x1]
  %v32 = vlaneseq
  %v33 = vshrl.u32 %v32, 7
  %v34 = vsub.s32 0, %v33
  %v35 = vrot.slane %v31, %v34
  %vm36 = vcmask 269312
  %v38 = vsel %vm36, %v18, 0
  %v41 = vsel %vm36, %v19, 0
  %v44 = vsel %vm36, %v20, 0
  %v47 = vsel %vm36, %v21, 0
  %v50 = vsel %vm36, %v22, 0
  %v53 = vsel %vm36, %v23, 0
  %v56 = vsel %vm36, %v24, 0
  %v59 = vsel %vm36, %v25, 0
  %vm61 = vcmask 1040384
  %v63 = vsel %vm61, %v30, 0
  %65 = vmatprep.subr.mxu0 0.0
  %66 = vmatpush1.msra.mxu0 0.0
  %67 = vmatprep.subr.mxu0 0.0
  %68 = vmatpush1.msra.mxu0 0.0
  %69 = vmatprep.subr.mxu0 0.0
  %70 = vmatpush1.msra.mxu0 0.0
  %71 = vmatprep.subr.mxu0 0.0
  %72 = vmatpush1.msra.mxu0 0.0
  %73 = vmatprep.subr.mxu0 0.0
  %74 = vmatpush1.msra.mxu0 0.0
  %75 = vmatprep.subr.mxu0 0.0
  %76 = vmatpush1.msra.mxu0 0.0
  %77 = vmatprep.subr.mxu0 0.0
  %78 = vmatpush1.msra.mxu0 0.0
  %79 = vmatprep.subr.mxu0 0.0
  %80 = vmatpush1.msra.mxu0 0.0
  %81 = vmatprep.subr.mxu0 0.0
  %82 = vmatpush1.msra.mxu0 0.0
  %83 = vmatprep.subr.mxu0 0.0
  %84 = vmatpush1.msra.mxu0 0.0
  %85 = vmatprep.subr.mxu0 0.0
  %86 = vmatpush1.msra.mxu0 0.0
  %87 = vmatprep.subr.mxu0 0.0
  %88 = vmatpush1.msra.mxu0 %v63
  %89 = vmatprep.subr.mxu0 0.0
  %90 = vmatpush1.msra.mxu0 %v29
  %91 = vmatprep.subr.mxu0 0.0
  %92 = vmatpush1.msra.mxu0 %v28
  %93 = vmatprep.subr.mxu0 0.0
  %94 = vmatpush1.msra.mxu0 %v27
  %95 = vmatprep.subr.mxu0 0.0
  %96 = vmatpush1.msra.mxu0 %v26
  %97 = vmatprep.subr.mxu0 0.0
  %98 = vmatpush2.msra.mxu0 0.0
  %99 = vmatprep.subr.mxu0 0.0
  %100 = vmatpush2.msra.mxu0 0.0
  %101 = vmatprep.subr.mxu0 0.0
  %102 = vmatpush2.msra.mxu0 0.0
  %103 = vmatprep.subr.mxu0 0.0
  %104 = vmatpush2.msra.mxu0 0.0
  %105 = vmatprep.subr.mxu0 0.0
  %106 = vmatpush2.msra.mxu0 0.0
  %107 = vmatprep.subr.mxu0 0.0
  %108 = vmatpush2.msra.mxu0 0.0
  %109 = vmatprep.subr.mxu0 0.0
  %110 = vmatpush2.msra.mxu0 0.0
  %111 = vmatprep.subr.mxu0 0.0
  %112 = vmatpush2.msra.mxu0 0.0
  %113 = vmatprep.subr.mxu0 0.0
  %114 = vmatpush2.msra.mxu0 0.0
  %115 = vmatprep.subr.mxu0 0.0
  %116 = vmatpush2.msra.mxu0 0.0
  %117 = vmatprep.subr.mxu0 0.0
  %118 = vmatpush2.msra.mxu0 0.0
  %119 = vmatprep.subr.mxu0 0.0
  %120 = vmatpush2.msra.mxu0 0.0
  %121 = vmatprep.subr.mxu0 0.0
  %122 = vmatpush2.msra.mxu0 0.0
  %123 = vmatprep.subr.mxu0 0.0
  %124 = vmatpush2.msra.mxu0 0.0
  %125 = vmatprep.subr.mxu0 0.0
  %126 = vmatpush2.msra.mxu0 0.0
  %127 = vmatprep.subr.mxu0 0.0
  %128 = vmatpush2.msra.mxu0 0.0
  %129 = vmatprep.mubr.f32.mxu0 0.0
  %130 = vmatmul.mubr.f32.gmra.mxu0 %v38
  %v131 = vpop.f32.mrf.mxu0
  %v132 = vadd.f32 %v35, %v131
  %v133 = vpop.f32.mrf.mxu0
  %134 = vmatprep.mubr.f32.mxu0 0.0
  %135 = vmatmul.mubr.f32.gmra.mxu0 %v41
  %v136 = vpop.f32.mrf.mxu0
  %v137 = vadd.f32 %v35, %v136
  %v138 = vpop.f32.mrf.mxu0
  %139 = vmatprep.mubr.f32.mxu0 0.0
  %140 = vmatmul.mubr.f32.gmra.mxu0 %v44
  %v141 = vpop.f32.mrf.mxu0
  %v142 = vadd.f32 %v35, %v141
  %v143 = vpop.f32.mrf.mxu0
  %144 = vmatprep.mubr.f32.mxu0 0.0
  %145 = vmatmul.mubr.f32.gmra.mxu0 %v47
  %v146 = vpop.f32.mrf.mxu0
  %v147 = vadd.f32 %v35, %v146
  %v148 = vpop.f32.mrf.mxu0
  %149 = vmatprep.mubr.f32.mxu0 0.0
  %150 = vmatmul.mubr.f32.gmra.mxu0 %v50
  %v151 = vpop.f32.mrf.mxu0
  %v152 = vadd.f32 %v35, %v151
  %v153 = vpop.f32.mrf.mxu0
  %154 = vmatprep.mubr.f32.mxu0 0.0
  %155 = vmatmul.mubr.f32.gmra.mxu0 %v53
  %v156 = vpop.f32.mrf.mxu0
  %v157 = vadd.f32 %v35, %v156
  %v158 = vpop.f32.mrf.mxu0
  %159 = vmatprep.mubr.f32.mxu0 0.0
  %160 = vmatmul.mubr.f32.gmra.mxu0 %v56
  %v161 = vpop.f32.mrf.mxu0
  %v162 = vadd.f32 %v35, %v161
  %v163 = vpop.f32.mrf.mxu0
  %164 = vmatprep.mubr.f32.mxu0 0.0
  %165 = vmatmul.mubr.f32.gmra.mxu0 %v59
  %v166 = vpop.f32.mrf.mxu0
  %v167 = vadd.f32 %v35, %v166
  %v168 = vpop.f32.mrf.mxu0
  %169 = vdwg.mxu0
  %v170 = vld [vmem:[%s0 + $0x30] sm:$0x1]
  %v171 = vld [vmem:[%s0 + $0x38] sm:$0x1]
  %vm172 = vcmask 64512
  %v173 = vsel %vm172, %v132, 0.0
  %v174 = vsel %vm172, %v137, 0.0
  %v175 = vadd.f32 %v173, %v174
  %v176 = vsel %vm172, %v142, 0.0
  %v177 = vadd.f32 %v175, %v176
  %v178 = vsel %vm172, %v147, 0.0
  %v179 = vadd.f32 %v177, %v178
  %v180 = vsel %vm172, %v152, 0.0
  %v181 = vadd.f32 %v179, %v180
  %v182 = vsel %vm172, %v157, 0.0
  %v183 = vadd.f32 %v181, %v182
  %v184 = vsel %vm172, %v162, 0.0
  %v185 = vadd.f32 %v183, %v184
  %v186 = vsel %vm172, %v167, 0.0
  %v187 = vadd.f32 %v185, %v186
  %v188 = vrot.slane %v187, 4
  %v189 = vadd.f32 %v187, %v188
  %v190 = vrot.slane %v189, 2
  %v191 = vadd.f32 %v189, %v190
  %v192 = vrot.slane %v191, 1
  %v193 = vadd.f32 %v191, %v192
  %v194 = vrcp.pop 64.0
  %v195 = vmul.f32 %v193, %v194
  %v196 = vsub.f32 %v132, %v195
  %v197 = vsub.f32 %v137, %v195
  %v198 = vsub.f32 %v142, %v195
  %v199 = vsub.f32 %v147, %v195
  %v200 = vsub.f32 %v152, %v195
  %v201 = vsub.f32 %v157, %v195
  %v202 = vsub.f32 %v162, %v195
  %v203 = vsub.f32 %v167, %v195
  %v204 = vmul.f32 %v196, %v196
  %v205 = vmul.f32 %v197, %v197
  %v206 = vmul.f32 %v198, %v198
  %v207 = vmul.f32 %v199, %v199
  %v208 = vmul.f32 %v200, %v200
  %v209 = vmul.f32 %v201, %v201
  %v210 = vmul.f32 %v202, %v202
  %v211 = vmul.f32 %v203, %v203
  %v212 = vsel %vm172, %v204, 0.0
  %v213 = vsel %vm172, %v205, 0.0
  %v214 = vadd.f32 %v212, %v213
  %v215 = vsel %vm172, %v206, 0.0
  %v216 = vadd.f32 %v214, %v215
  %v217 = vsel %vm172, %v207, 0.0
  %v218 = vadd.f32 %v216, %v217
  %v219 = vsel %vm172, %v208, 0.0
  %v220 = vadd.f32 %v218, %v219
  %v221 = vsel %vm172, %v209, 0.0
  %v222 = vadd.f32 %v220, %v221
  %v223 = vsel %vm172, %v210, 0.0
  %v224 = vadd.f32 %v222, %v223
  %v225 = vsel %vm172, %v211, 0.0
  %v226 = vadd.f32 %v224, %v225
  %v227 = vrot.slane %v226, 4
  %v228 = vadd.f32 %v226, %v227
  %v229 = vrot.slane %v228, 2
  %v230 = vadd.f32 %v228, %v229
  %v231 = vrot.slane %v230, 1
  %v232 = vadd.f32 %v230, %v231
  %v233 = vmul.f32 %v232, %v194
  %v234 = vadd.f32 %v233, 1e-05
  %v235 = vrsqrt.pop %v234
  %v236 = vmul.f32 %v196, %v235
  %v237 = vmul.f32 %v197, %v235
  %v238 = vmul.f32 %v198, %v235
  %v239 = vmul.f32 %v199, %v235
  %v240 = vmul.f32 %v200, %v235
  %v241 = vmul.f32 %v201, %v235
  %v242 = vmul.f32 %v202, %v235
  %v243 = vmul.f32 %v203, %v235
  %v244 = vlaneseq
  %v245 = vshrl.u32 %v244, 7
  %v246 = vsub.s32 0, %v245
  %v247 = vrot.slane %v170, %v246
  %v248 = vmul.f32 %v236, %v247
  %v249 = vmul.f32 %v237, %v247
  %v250 = vmul.f32 %v238, %v247
  %v251 = vmul.f32 %v239, %v247
  %v252 = vmul.f32 %v240, %v247
  %v253 = vmul.f32 %v241, %v247
  %v254 = vmul.f32 %v242, %v247
  %v255 = vmul.f32 %v243, %v247
  %v256 = vlaneseq
  %v257 = vshrl.u32 %v256, 7
  %v258 = vsub.s32 0, %v257
  %v259 = vrot.slane %v171, %v258
  %v260 = vadd.f32 %v248, %v259
  %v261 = vadd.f32 %v249, %v259
  %v262 = vadd.f32 %v250, %v259
  %v263 = vadd.f32 %v251, %v259
  %v264 = vadd.f32 %v252, %v259
  %v265 = vadd.f32 %v253, %v259
  %v266 = vadd.f32 %v254, %v259
  %v267 = vadd.f32 %v255, %v259
  %vm268 = vcmp.ge.f32.partialorder %v260, 0.0
  %vm269 = vcmp.ge.f32.partialorder %v261, 0.0
  %vm270 = vcmp.ge.f32.partialorder %v262, 0.0
  %vm271 = vcmp.ge.f32.partialorder %v263, 0.0
  %vm272 = vcmp.ge.f32.partialorder %v264, 0.0
  %vm273 = vcmp.ge.f32.partialorder %v265, 0.0
  %vm274 = vcmp.ge.f32.partialorder %v266, 0.0
  %vm275 = vcmp.ge.f32.partialorder %v267, 0.0
  %v276 = vmul.f32 %v260, 0.25
  %v277 = vmul.f32 %v261, 0.25
  %v278 = vmul.f32 %v262, 0.25
  %v279 = vmul.f32 %v263, 0.25
  %v280 = vmul.f32 %v264, 0.25
  %v281 = vmul.f32 %v265, 0.25
  %v282 = vmul.f32 %v266, 0.25
  %v283 = vmul.f32 %v267, 0.25
  %v284 = vsel %vm268, %v260, %v276
  %v285 = vsel %vm269, %v261, %v277
  %v286 = vsel %vm270, %v262, %v278
  %v287 = vsel %vm271, %v263, %v279
  %v288 = vsel %vm272, %v264, %v280
  %v289 = vsel %vm273, %v265, %v281
  %v290 = vsel %vm274, %v266, %v282
  %v291 = vsel %vm275, %v267, %v283
  %v292 = vlaneseq
  %v293 = vshrl.u32 %v292, 7
  %v294 = vadd.s32 %v293, 8
  %v295 = vadd.s32 %v293, 16
  %v296 = vadd.s32 %v293, 24
  %v297 = vadd.s32 %v293, 32
  %v298 = vadd.s32 %v293, 40
  %v299 = vadd.s32 %v293, 48
  %v300 = vadd.s32 %v293, 56
  %v301 = vand.u32 %v293, 31
  %v302 = vand.u32 %v294, 31
  %v303 = vand.u32 %v295, 31
  %v304 = vand.u32 %v296, 31
  %v305 = vand.u32 %v297, 31
  %v306 = vand.u32 %v298, 31
  %v307 = vand.u32 %v299, 31
  %v308 = vand.u32 %v300, 31
  %vm309 = vcmp.eq.s32.totalorder %v301, 0
  %vm310 = vcmp.eq.s32.totalorder %v302, 0
  %vm311 = vcmp.eq.s32.totalorder %v303, 0
  %vm312 = vcmp.eq.s32.totalorder %v304, 0
  %vm313 = vcmp.eq.s32.totalorder %v305, 0
  %vm314 = vcmp.eq.s32.totalorder %v306, 0
  %vm315 = vcmp.eq.s32.totalorder %v307, 0
  %vm316 = vcmp.eq.s32.totalorder %v308, 0
  %v317 = vsel %vm309, 1, 0
  %v318 = vsel %vm310, 1, 0
  %v319 = vsel %vm311, 1, 0
  %v320 = vsel %vm312, 1, 0
  %v321 = vsel %vm313, 1, 0
  %v322 = vsel %vm314, 1, 0
  %v323 = vsel %vm315, 1, 0
  %v324 = vsel %vm316, 1, 0
  %v325 = vcvt.s32.f32 %v317
  %v326 = vcvt.s32.f32 %v318
  %v327 = vcvt.s32.f32 %v319
  %v328 = vcvt.s32.f32 %v320
  %v329 = vcvt.s32.f32 %v321
  %v330 = vcvt.s32.f32 %v322
  %v331 = vcvt.s32.f32 %v323
  %v332 = vcvt.s32.f32 %v324
  %vm333 = vcmp.eq.s32.totalorder %v301, 31
  %vm334 = vcmp.eq.s32.totalorder %v302, 31
  %vm335 = vcmp.eq.s32.totalorder %v303, 31
  %vm336 = vcmp.eq.s32.totalorder %v304, 31
  %vm337 = vcmp.eq.s32.totalorder %v305, 31
  %vm338 = vcmp.eq.s32.totalorder %v306, 31
  %vm339 = vcmp.eq.s32.totalorder %v307, 31
  %vm340 = vcmp.eq.s32.totalorder %v308, 31
  %v341 = vsel %vm333, 1, 0
  %v342 = vsel %vm334, 1, 0
  %v343 = vsel %vm335, 1, 0
  %v344 = vsel %vm336, 1, 0
  %v345 = vsel %vm337, 1, 0
  %v346 = vsel %vm338, 1, 0
  %v347 = vsel %vm339, 1, 0
  %v348 = vsel %vm340, 1, 0
  %v349 = vcvt.s32.f32 %v341
  %v350 = vcvt.s32.f32 %v342
  %v351 = vcvt.s32.f32 %v343
  %v352 = vcvt.s32.f32 %v344
  %v353 = vcvt.s32.f32 %v345
  %v354 = vcvt.s32.f32 %v346
  %v355 = vcvt.s32.f32 %v347
  %v356 = vcvt.s32.f32 %v348
  %v357 = vrot.slane %v284, 7
  %v358 = vrot.slane %v285, 7
  %v359 = vrot.slane %v286, 7
  %v360 = vrot.slane %v287, 7
  %v361 = vrot.slane %v288, 7
  %v362 = vrot.slane %v289, 7
  %v363 = vrot.slane %v290, 7
  %v364 = vrot.slane %v291, 7
  %vm365 = vcmp.lt.s32.totalorder %v293, 1
  %v366 = vsel %vm365, %v363, %v364
  %v367 = vsel %vm365, %v362, %v363
  %v368 = vsel %vm365, %v361, %v362
  %v369 = vsel %vm365, %v360, %v361
  %v370 = vsel %vm365, %v359, %v360
  %v371 = vsel %vm365, %v358, %v359
  %v372 = vsel %vm365, %v357, %v358
  %v373 = vsel %vm365, %v364, %v357
  %v374 = vrot.slane %v284, 1
  %v375 = vrot.slane %v285, 1
  %v376 = vrot.slane %v286, 1
  %v377 = vrot.slane %v287, 1
  %v378 = vrot.slane %v288, 1
  %v379 = vrot.slane %v289, 1
  %v380 = vrot.slane %v290, 1
  %v381 = vrot.slane %v291, 1
  %vm382 = vcmp.lt.s32.totalorder %v293, 7
  %v383 = vsel %vm382, %v380, %v381
  %v384 = vsel %vm382, %v379, %v380
  %v385 = vsel %vm382, %v378, %v379
  %v386 = vsel %vm382, %v377, %v378
  %v387 = vsel %vm382, %v376, %v377
  %v388 = vsel %vm382, %v375, %v376
  %v389 = vsel %vm382, %v374, %v375
  %v390 = vsel %vm382, %v381, %v374
  %v391 = vsub.f32 1.0, %v325
  %v392 = vsub.f32 1.0, %v326
  %v393 = vsub.f32 1.0, %v327
  %v394 = vsub.f32 1.0, %v328
  %v395 = vsub.f32 1.0, %v329
  %v396 = vsub.f32 1.0, %v330
  %v397 = vsub.f32 1.0, %v331
  %v398 = vsub.f32 1.0, %v332
  %v399 = vmul.f32 %v373, %v391
  %v400 = vmul.f32 %v372, %v392
  %v401 = vmul.f32 %v371, %v393
  %v402 = vmul.f32 %v370, %v394
  %v403 = vmul.f32 %v369, %v395
  %v404 = vmul.f32 %v368, %v396
  %v405 = vmul.f32 %v367, %v397
  %v406 = vmul.f32 %v366, %v398
  %v407 = vsub.f32 1.0, %v349
  %v408 = vsub.f32 1.0, %v350
  %v409 = vsub.f32 1.0, %v351
  %v410 = vsub.f32 1.0, %v352
  %v411 = vsub.f32 1.0, %v353
  %v412 = vsub.f32 1.0, %v354
  %v413 = vsub.f32 1.0, %v355
  %v414 = vsub.f32 1.0, %v356
  %v415 = vmul.f32 %v389, %v407
  %v416 = vmul.f32 %v388, %v408
  %v417 = vmul.f32 %v387, %v409
  %v418 = vmul.f32 %v386, %v410
  %v419 = vmul.f32 %v385, %v411
  %v420 = vmul.f32 %v384, %v412
  %v421 = vmul.f32 %v383, %v413
  %v422 = vmul.f32 %v390, %v414
  %431 = vrot.lane.b32.xlu0 %v284, 8
  %v432 = vpop.permute.xlu0 %431
  %433 = vrot.lane.b32.xlu0 %v285, 8
  %v434 = vpop.permute.xlu0 %433
  %435 = vrot.lane.b32.xlu0 %v286, 8
  %v436 = vpop.permute.xlu0 %435
  %437 = vrot.lane.b32.xlu0 %v287, 8
  %v438 = vpop.permute.xlu0 %437
  %439 = vrot.lane.b32.xlu0 %v288, 8
  %v440 = vpop.permute.xlu0 %439
  %441 = vrot.lane.b32.xlu0 %v289, 8
  %v442 = vpop.permute.xlu0 %441
  %443 = vrot.lane.b32.xlu0 %v290, 8
  %v444 = vpop.permute.xlu0 %443
  %445 = vrot.lane.b32.xlu0 %v291, 8
  %v446 = vpop.permute.xlu0 %445
  %463 = vrot.lane.b32.xlu0 %v415, 16
  %v464 = vpop.permute.xlu0 %463
  %465 = vrot.lane.b32.xlu0 %v416, 16
  %v466 = vpop.permute.xlu0 %465
  %467 = vrot.lane.b32.xlu0 %v417, 16
  %v468 = vpop.permute.xlu0 %467
  %469 = vrot.lane.b32.xlu0 %v418, 16
  %v470 = vpop.permute.xlu0 %469
  %471 = vrot.lane.b32.xlu0 %v419, 16
  %v472 = vpop.permute.xlu0 %471
  %473 = vrot.lane.b32.xlu0 %v420, 16
  %v474 = vpop.permute.xlu0 %473
  %475 = vrot.lane.b32.xlu0 %v421, 16
  %v476 = vpop.permute.xlu0 %475
  %477 = vrot.lane.b32.xlu0 %v422, 16
  %v478 = vpop.permute.xlu0 %477
  %v487 = vsel %vm172, %v399, %v432
  %v488 = vsel %vm172, %v400, %v434
  %v489 = vsel %vm172, %v401, %v436
  %v490 = vsel %vm172, %v402, %v438
  %v491 = vsel %vm172, %v403, %v440
  %v492 = vsel %vm172, %v404, %v442
  %v493 = vsel %vm172, %v405, %v444
  %v494 = vsel %vm172, %v406, %v446
  %vm495 = vcmask 130048
  %v496 = vsel %vm495, %v487, %v464
  %v497 = vsel %vm495, %v488, %v466
  %v498 = vsel %vm495, %v489, %v468
  %v499 = vsel %vm495, %v490, %v470
  %v500 = vsel %vm495, %v491, %v472
  %v501 = vsel %vm495, %v492, %v474
  %v502 = vsel %vm495, %v493, %v476
  %v503 = vsel %vm495, %v494, %v478
  %v504 = vld [vmem:[%s0 + $0x40] sm:$0xff]
  %v505 = vld [vmem:[%s0 + $0x48] sm:$0xff]
  %v506 = vld [vmem:[%s0 + $0x50] sm:$0xff]
  %v507 = vld [vmem:[%s0 + $0x58] sm:$0x1]
  %v508 = vlaneseq
  %v509 = vshrl.u32 %v508, 7
  %v510 = vsub.s32 0, %v509
  %v511 = vrot.slane %v507, %v510
  %vm512 = vcmask 195584
  %v514 = vsel %vm512, %v496, 0
  %v517 = vsel %vm512, %v497, 0
  %v520 = vsel %vm512, %v498, 0
  %v523 = vsel %vm512, %v499, 0
  %v526 = vsel %vm512, %v500, 0
  %v529 = vsel %vm512, %v501, 0
  %v532 = vsel %vm512, %v502, 0
  %v535 = vsel %vm512, %v503, 0
  %537 = vmatprep.subr.mxu0 0.0
  %538 = vmatpush1.msra.mxu0 0.0
  %539 = vmatprep.subr.mxu0 0.0
  %540 = vmatpush1.msra.mxu0 0.0
  %541 = vmatprep.subr.mxu0 0.0
  %542 = vmatpush1.msra.mxu0 0.0
  %543 = vmatprep.subr.mxu0 0.0
  %544 = vmatpush1.msra.mxu0 0.0
  %545 = vmatprep.subr.mxu0 0.0
  %546 = vmatpush1.msra.mxu0 0.0
  %547 = vmatprep.subr.mxu0 0.0
  %548 = vmatpush1.msra.mxu0 0.0
  %549 = vmatprep.subr.mxu0 0.0
  %550 = vmatpush1.msra.mxu0 0.0
  %551 = vmatprep.subr.mxu0 0.0
  %552 = vmatpush1.msra.mxu0 0.0
  %553 = vmatprep.subr.mxu0 0.0
  %554 = vmatpush1.msra.mxu0 0.0
  %555 = vmatprep.subr.mxu0 0.0
  %556 = vmatpush1.msra.mxu0 0.0
  %557 = vmatprep.subr.mxu0 0.0
  %558 = vmatpush1.msra.mxu0 0.0
  %559 = vmatprep.subr.mxu0 0.0
  %560 = vmatpush1.msra.mxu0 0.0
  %561 = vmatprep.subr.mxu0 0.0
  %562 = vmatpush1.msra.mxu0 0.0
  %563 = vmatprep.subr.mxu0 0.0
  %564 = vmatpush1.msra.mxu0 %v506
  %565 = vmatprep.subr.mxu0 0.0
  %566 = vmatpush1.msra.mxu0 %v505
  %567 = vmatprep.subr.mxu0 0.0
  %568 = vmatpush1.msra.mxu0 %v504
  %569 = vmatprep.subr.mxu0 0.0
  %570 = vmatpush2.msra.mxu0 0.0
  %571 = vmatprep.subr.mxu0 0.0
  %572 = vmatpush2.msra.mxu0 0.0
  %573 = vmatprep.subr.mxu0 0.0
  %574 = vmatpush2.msra.mxu0 0.0
  %575 = vmatprep.subr.mxu0 0.0
  %576 = vmatpush2.msra.mxu0 0.0
  %577 = vmatprep.subr.mxu0 0.0
  %578 = vmatpush2.msra.mxu0 0.0
  %579 = vmatprep.subr.mxu0 0.0
  %580 = vmatpush2.msra.mxu0 0.0
  %581 = vmatprep.subr.mxu0 0.0
  %582 = vmatpush2.msra.mxu0 0.0
  %583 = vmatprep.subr.mxu0 0.0
  %584 = vmatpush2.msra.mxu0 0.0
  %585 = vmatprep.subr.mxu0 0.0
  %586 = vmatpush2.msra.mxu0 0.0
  %587 = vmatprep.subr.mxu0 0.0
  %588 = vmatpush2.msra.mxu0 0.0
  %589 = vmatprep.subr.mxu0 0.0
  %590 = vmatpush2.msra.mxu0 0.0
  %591 = vmatprep.subr.mxu0 0.0
  %592 = vmatpush2.msra.mxu0 0.0
  %593 = vmatprep.subr.mxu0 0.0
  %594 = vmatpush2.msra.mxu0 0.0
  %595 = vmatprep.subr.mxu0 0.0
  %596 = vmatpush2.msra.mxu0 0.0
  %597 = vmatprep.subr.mxu0 0.0
  %598 = vmatpush2.msra.mxu0 0.0
  %599 = vmatprep.subr.mxu0 0.0
  %600 = vmatpush2.msra.mxu0 0.0
  %601 = vmatprep.mubr.f32.mxu0 0.0
  %602 = vmatmul.mubr.f32.gmra.mxu0 %v514
  %v603 = vpop.f32.mrf.mxu0
  %v604 = vadd.f32 %v511, %v603
  %v605 = vpop.f32.mrf.mxu0
  %606 = vmatprep.mubr.f32.mxu0 0.0
  %607 = vmatmul.mubr.f32.gmra.mxu0 %v517
  %v608 = vpop.f32.mrf.mxu0
  %v609 = vadd.f32 %v511, %v608
  %v610 = vpop.f32.mrf.mxu0
  %611 = vmatprep.mubr.f32.mxu0 0.0
  %612 = vmatmul.mubr.f32.gmra.mxu0 %v520
  %v613 = vpop.f32.mrf.mxu0
  %v614 = vadd.f32 %v511, %v613
  %v615 = vpop.f32.mrf.mxu0
  %616 = vmatprep.mubr.f32.mxu0 0.0
  %617 = vmatmul.mubr.f32.gmra.mxu0 %v523
  %v618 = vpop.f32.mrf.mxu0
  %v619 = vadd.f32 %v511, %v618
  %v620 = vpop.f32.mrf.mxu0
  %621 = vmatprep.mubr.f32.mxu0 0.0
  %622 = vmatmul.mubr.f32.gmra.mxu0 %v526
  %v623 = vpop.f32.mrf.mxu0
  %v624 = vadd.f32 %v511, %v623
  %v625 = vpop.f32.mrf.mxu0
  %626 = vmatprep.mubr.f32.mxu0 0.0
  %627 = vmatmul.mubr.f32.gmra.mxu0 %v529
  %v628 = vpop.f32.mrf.mxu0
  %v629 = vadd.f32 %v511, %v628
  %v630 = vpop.f32.mrf.mxu0
  %631 = vmatprep.mubr.f32.mxu0 0.0
  %632 = vmatmul.mubr.f32.gmra.mxu0 %v532
  %v633 = vpop.f32.mrf.mxu0
  %v634 = vadd.f32 %v511, %v633
  %v635 = vpop.f32.mrf.mxu0
  %636 = vmatprep.mubr.f32.mxu0 0.0
  %637 = vmatmul.mubr.f32.gmra.mxu0 %v535
  %v638 = vpop.f32.mrf.mxu0
  %v639 = vadd.f32 %v511, %v638
  %v640 = vpop.f32.mrf.mxu0
  %641 = vdwg.mxu0
  %v642 = vld [vmem:[%s0 + $0x60] sm:$0x1]
  %v643 = vld [vmem:[%s0 + $0x68] sm:$0x1]
  %v644 = vsel %vm172, %v604, 0.0
  %v645 = vsel %vm172, %v609, 0.0
  %v646 = vadd.f32 %v644, %v645
  %v647 = vsel %vm172, %v614, 0.0
  %v648 = vadd.f32 %v646, %v647
  %v649 = vsel %vm172, %v619, 0.0
  %v650 = vadd.f32 %v648, %v649
  %v651 = vsel %vm172, %v624, 0.0
  %v652 = vadd.f32 %v650, %v651
  %v653 = vsel %vm172, %v629, 0.0
  %v654 = vadd.f32 %v652, %v653
  %v655 = vsel %vm172, %v634, 0.0
  %v656 = vadd.f32 %v654, %v655
  %v657 = vsel %vm172, %v639, 0.0
  %v658 = vadd.f32 %v656, %v657
  %v659 = vrot.slane %v658, 4
  %v660 = vadd.f32 %v658, %v659
  %v661 = vrot.slane %v660, 2
  %v662 = vadd.f32 %v660, %v661
  %v663 = vrot.slane %v662, 1
  %v664 = vadd.f32 %v662, %v663
  %v665 = vmul.f32 %v664, %v194
  %v666 = vsub.f32 %v604, %v665
  %v667 = vsub.f32 %v609, %v665
  %v668 = vsub.f32 %v614, %v665
  %v669 = vsub.f32 %v619, %v665
  %v670 = vsub.f32 %v624, %v665
  %v671 = vsub.f32 %v629, %v665
  %v672 = vsub.f32 %v634, %v665
  %v673 = vsub.f32 %v639, %v665
  %v674 = vmul.f32 %v666, %v666
  %v675 = vmul.f32 %v667, %v667
  %v676 = vmul.f32 %v668, %v668
  %v677 = vmul.f32 %v669, %v669
  %v678 = vmul.f32 %v670, %v670
  %v679 = vmul.f32 %v671, %v671
  %v680 = vmul.f32 %v672, %v672
  %v681 = vmul.f32 %v673, %v673
  %v682 = vsel %vm172, %v674, 0.0
  %v683 = vsel %vm172, %v675, 0.0
  %v684 = vadd.f32 %v682, %v683
  %v685 = vsel %vm172, %v676, 0.0
  %v686 = vadd.f32 %v684, %v685
  %v687 = vsel %vm172, %v677, 0.0
  %v688 = vadd.f32 %v686, %v687
  %v689 = vsel %vm172, %v678, 0.0
  %v690 = vadd.f32 %v688, %v689
  %v691 = vsel %vm172, %v679, 0.0
  %v692 = vadd.f32 %v690, %v691
  %v693 = vsel %vm172, %v680, 0.0
  %v694 = vadd.f32 %v692, %v693
  %v695 = vsel %vm172, %v681, 0.0
  %v696 = vadd.f32 %v694, %v695
  %v697 = vrot.slane %v696, 4
  %v698 = vadd.f32 %v696, %v697
  %v699 = vrot.slane %v698, 2
  %v700 = vadd.f32 %v698, %v699
  %v701 = vrot.slane %v700, 1
  %v702 = vadd.f32 %v700, %v701
  %v703 = vmul.f32 %v702, %v194
  %v704 = vadd.f32 %v703, 1e-05
  %v705 = vrsqrt.pop %v704
  %v706 = vmul.f32 %v666, %v705
  %v707 = vmul.f32 %v667, %v705
  %v708 = vmul.f32 %v668, %v705
  %v709 = vmul.f32 %v669, %v705
  %v710 = vmul.f32 %v670, %v705
  %v711 = vmul.f32 %v671, %v705
  %v712 = vmul.f32 %v672, %v705
  %v713 = vmul.f32 %v673, %v705
  %v714 = vlaneseq
  %v715 = vshrl.u32 %v714, 7
  %v716 = vsub.s32 0, %v715
  %v717 = vrot.slane %v642, %v716
  %v718 = vmul.f32 %v706, %v717
  %v719 = vmul.f32 %v707, %v717
  %v720 = vmul.f32 %v708, %v717
  %v721 = vmul.f32 %v709, %v717
  %v722 = vmul.f32 %v710, %v717
  %v723 = vmul.f32 %v711, %v717
  %v724 = vmul.f32 %v712, %v717
  %v725 = vmul.f32 %v713, %v717
  %v726 = vlaneseq
  %v727 = vshrl.u32 %v726, 7
  %v728 = vsub.s32 0, %v727
  %v729 = vrot.slane %v643, %v728
  %v730 = vadd.f32 %v718, %v729
  %v731 = vadd.f32 %v719, %v729
  %v732 = vadd.f32 %v720, %v729
  %v733 = vadd.f32 %v721, %v729
  %v734 = vadd.f32 %v722, %v729
  %v735 = vadd.f32 %v723, %v729
  %v736 = vadd.f32 %v724, %v729
  %v737 = vadd.f32 %v725, %v729
  %vm738 = vcmp.ge.f32.partialorder %v730, 0.0
  %vm739 = vcmp.ge.f32.partialorder %v731, 0.0
  %vm740 = vcmp.ge.f32.partialorder %v732, 0.0
  %vm741 = vcmp.ge.f32.partialorder %v733, 0.0
  %vm742 = vcmp.ge.f32.partialorder %v734, 0.0
  %vm743 = vcmp.ge.f32.partialorder %v735, 0.0
  %vm744 = vcmp.ge.f32.partialorder %v736, 0.0
  %vm745 = vcmp.ge.f32.partialorder %v737, 0.0
  %v746 = vmul.f32 %v730, 0.25
  %v747 = vmul.f32 %v731, 0.25
  %v748 = vmul.f32 %v732, 0.25
  %v749 = vmul.f32 %v733, 0.25
  %v750 = vmul.f32 %v734, 0.25
  %v751 = vmul.f32 %v735, 0.25
  %v752 = vmul.f32 %v736, 0.25
  %v753 = vmul.f32 %v737, 0.25
  %v754 = vsel %vm738, %v730, %v746
  %v755 = vsel %vm739, %v731, %v747
  %v756 = vsel %vm740, %v732, %v748
  %v757 = vsel %vm741, %v733, %v749
  %v758 = vsel %vm742, %v734, %v750
  %v759 = vsel %vm743, %v735, %v751
  %v760 = vsel %vm744, %v736, %v752
  %v761 = vsel %vm745, %v737, %v753
  %v762 = vld [vmem:[%s0 + $0x70] sm:$0xff]
  %v763 = vld [vmem:[%s0 + $0x78] sm:$0xff]
  %v764 = vld [vmem:[%s0 + $0x80] sm:$0xff]
  %v765 = vld [vmem:[%s0 + $0x88] sm:$0xff]
  %v766 = vld [vmem:[%s0 + $0x90] sm:$0xff]
  %v767 = vld [vmem:[%s0 + $0x98] sm:$0xff]
  %v768 = vld [vmem:[%s0 + $0xa0] sm:$0xff]
  %v769 = vld [vmem:[%s0 + $0xa8] sm:$0xff]
  %vm770 = vcmask 523264
  %v772 = vsel %vm770, %v762, 0
  %v775 = vsel %vm770, %v763, 0
  %v778 = vsel %vm770, %v764, 0
  %v781 = vsel %vm770, %v765, 0
  %v784 = vsel %vm770, %v766, 0
  %v787 = vsel %vm770, %v767, 0
  %v790 = vsel %vm770, %v768, 0
  %v793 = vsel %vm770, %v769, 0
  %795 = vmatprep.subr.mxu0 0.0
  %796 = vmatpush1.msra.mxu0 0.0
  %797 = vmatprep.subr.mxu0 0.0
  %798 = vmatpush1.msra.mxu0 0.0
  %799 = vmatprep.subr.mxu0 0.0
  %800 = vmatpush1.msra.mxu0 0.0
  %801 = vmatprep.subr.mxu0 0.0
  %802 = vmatpush1.msra.mxu0 0.0
  %803 = vmatprep.subr.mxu0 0.0
  %804 = vmatpush1.msra.mxu0 0.0
  %805 = vmatprep.subr.mxu0 0.0
  %806 = vmatpush1.msra.mxu0 0.0
  %807 = vmatprep.subr.mxu0 0.0
  %808 = vmatpush1.msra.mxu0 0.0
  %809 = vmatprep.subr.mxu0 0.0
  %810 = vmatpush1.msra.mxu0 0.0
  %811 = vmatprep.subr.mxu0 0.0
  %812 = vmatpush1.msra.mxu0 %v761
  %813 = vmatprep.subr.mxu0 0.0
  %814 = vmatpush1.msra.mxu0 %v760
  %815 = vmatprep.subr.mxu0 0.0
  %816 = vmatpush1.msra.mxu0 %v759
  %817 = vmatprep.subr.mxu0 0.0
  %818 = vmatpush1.msra.mxu0 %v758
  %819 = vmatprep.subr.mxu0 0.0
  %820 = vmatpush1.msra.mxu0 %v757
  %821 = vmatprep.subr.mxu0 0.0
  %822 = vmatpush1.msra.mxu0 %v756
  %823 = vmatprep.subr.mxu0 0.0
  %824 = vmatpush1.msra.mxu0 %v755
  %825 = vmatprep.subr.mxu0 0.0
  %826 = vmatpush1.msra.mxu0 %v754
  %827 = vmatprep.subr.mxu0 0.0
  %828 = vmatpush2.msra.mxu0 0.0
  %829 = vmatprep.subr.mxu0 0.0
  %830 = vmatpush2.msra.mxu0 0.0
  %831 = vmatprep.subr.mxu0 0.0
  %832 = vmatpush2.msra.mxu0 0.0
  %833 = vmatprep.subr.mxu0 0.0
  %834 = vmatpush2.msra.mxu0 0.0
  %835 = vmatprep.subr.mxu0 0.0
  %836 = vmatpush2.msra.mxu0 0.0
  %837 = vmatprep.subr.mxu0 0.0
  %838 = vmatpush2.msra.mxu0 0.0
  %839 = vmatprep.subr.mxu0 0.0
  %840 = vmatpush2.msra.mxu0 0.0
  %841 = vmatprep.subr.mxu0 0.0
  %842 = vmatpush2.msra.mxu0 0.0
  %843 = vmatprep.subr.mxu0 0.0
  %844 = vmatpush2.msra.mxu0 0.0
  %845 = vmatprep.subr.mxu0 0.0
  %846 = vmatpush2.msra.mxu0 0.0
  %847 = vmatprep.subr.mxu0 0.0
  %848 = vmatpush2.msra.mxu0 0.0
  %849 = vmatprep.subr.mxu0 0.0
  %850 = vmatpush2.msra.mxu0 0.0
  %851 = vmatprep.subr.mxu0 0.0
  %852 = vmatpush2.msra.mxu0 0.0
  %853 = vmatprep.subr.mxu0 0.0
  %854 = vmatpush2.msra.mxu0 0.0
  %855 = vmatprep.subr.mxu0 0.0
  %856 = vmatpush2.msra.mxu0 0.0
  %857 = vmatprep.subr.mxu0 0.0
  %858 = vmatpush2.msra.mxu0 0.0
  %859 = vmatprep.mubr.f32.mxu0 0.0
  %860 = vmatmul.mubr.f32.gmra.mxu0 %v772
  %v861 = vpop.f32.mrf.mxu0
  %v862 = vadd.f32 0.0, %v861
  %v863 = vpop.f32.mrf.mxu0
  %864 = vmatprep.mubr.f32.mxu0 0.0
  %865 = vmatmul.mubr.f32.gmra.mxu0 %v775
  %v866 = vpop.f32.mrf.mxu0
  %v867 = vadd.f32 0.0, %v866
  %v868 = vpop.f32.mrf.mxu0
  %869 = vmatprep.mubr.f32.mxu0 0.0
  %870 = vmatmul.mubr.f32.gmra.mxu0 %v778
  %v871 = vpop.f32.mrf.mxu0
  %v872 = vadd.f32 0.0, %v871
  %v873 = vpop.f32.mrf.mxu0
  %874 = vmatprep.mubr.f32.mxu0 0.0
  %875 = vmatmul.mubr.f32.gmra.mxu0 %v781
  %v876 = vpop.f32.mrf.mxu0
  %v877 = vadd.f32 0.0, %v876
  %v878 = vpop.f32.mrf.mxu0
  %879 = vmatprep.mubr.f32.mxu0 0.0
  %880 = vmatmul.mubr.f32.gmra.mxu0 %v784
  %v881 = vpop.f32.mrf.mxu0
  %v882 = vadd.f32 0.0, %v881
  %v883 = vpop.f32.mrf.mxu0
  %884 = vmatprep.mubr.f32.mxu0 0.0
  %885 = vmatmul.mubr.f32.gmra.mxu0 %v787
  %v886 = vpop.f32.mrf.mxu0
  %v887 = vadd.f32 0.0, %v886
  %v888 = vpop.f32.mrf.mxu0
  %889 = vmatprep.mubr.f32.mxu0 0.0
  %890 = vmatmul.mubr.f32.gmra.mxu0 %v790
  %v891 = vpop.f32.mrf.mxu0
  %v892 = vadd.f32 0.0, %v891
  %v893 = vpop.f32.mrf.mxu0
  %894 = vmatprep.mubr.f32.mxu0 0.0
  %895 = vmatmul.mubr.f32.gmra.mxu0 %v793
  %v896 = vpop.f32.mrf.mxu0
  %v897 = vadd.f32 0.0, %v896
  %v898 = vpop.f32.mrf.mxu0
  %899 = vdwg.mxu0
  %v900 = vsel %vm172, %v862, 0.0
  %901 = vadd.xlane.f32.xlu0 %v900
  %v902 = vpop.xlane.xlu0 %901
  %v903 = vsel %vm172, %v867, 0.0
  %904 = vadd.xlane.f32.xlu0 %v903
  %v905 = vpop.xlane.xlu0 %904
  %v906 = vsel %vm172, %v872, 0.0
  %907 = vadd.xlane.f32.xlu0 %v906
  %v908 = vpop.xlane.xlu0 %907
  %v909 = vsel %vm172, %v877, 0.0
  %910 = vadd.xlane.f32.xlu0 %v909
  %v911 = vpop.xlane.xlu0 %910
  %v912 = vsel %vm172, %v882, 0.0
  %913 = vadd.xlane.f32.xlu0 %v912
  %v914 = vpop.xlane.xlu0 %913
  %v915 = vsel %vm172, %v887, 0.0
  %916 = vadd.xlane.f32.xlu0 %v915
  %v917 = vpop.xlane.xlu0 %916
  %v918 = vsel %vm172, %v892, 0.0
  %919 = vadd.xlane.f32.xlu0 %v918
  %v920 = vpop.xlane.xlu0 %919
  %v921 = vsel %vm172, %v897, 0.0
  %922 = vadd.xlane.f32.xlu0 %v921
  %v923 = vpop.xlane.xlu0 %922
  %v924 = vadd.f32 %v902, %v905
  %v925 = vadd.f32 %v924, %v908
  %v926 = vadd.f32 %v925, %v911
  %v927 = vadd.f32 %v926, %v914
  %v928 = vadd.f32 %v927, %v917
  %v929 = vadd.f32 %v928, %v920
  %v930 = vadd.f32 %v929, %v923
  %v931 = vrot.slane %v930, 4
  %v932 = vadd.f32 %v930, %v931
  %v933 = vrot.slane %v932, 2
  %v934 = vadd.f32 %v932, %v933
  %v935 = vrot.slane %v934, 1
  %v936 = vadd.f32 %v934, %v935
  %v937 = vmul.f32 %v936, 0.001953125
  %v938 = vand.u32 %v293, 15
  %v939 = vand.u32 %v294, 15
  %v940 = vand.u32 %v295, 15
  %v941 = vand.u32 %v296, 15
  %vm942 = vcmp.eq.s32.totalorder %v938, 0
  %vm943 = vcmp.eq.s32.totalorder %v939, 0
  %vm944 = vcmp.eq.s32.totalorder %v940, 0
  %vm945 = vcmp.eq.s32.totalorder %v941, 0
  %v946 = vsel %vm942, 1, 0
  %v947 = vsel %vm943, 1, 0
  %v948 = vsel %vm944, 1, 0
  %v949 = vsel %vm945, 1, 0
  %v950 = vcvt.s32.f32 %v946
  %v951 = vcvt.s32.f32 %v947
  %v952 = vcvt.s32.f32 %v948
  %v953 = vcvt.s32.f32 %v949
  %vm954 = vcmp.eq.s32.totalorder %v938, 15
  %vm955 = vcmp.eq.s32.totalorder %v939, 15
  %vm956 = vcmp.eq.s32.totalorder %v940, 15
  %vm957 = vcmp.eq.s32.totalorder %v941, 15
  %v958 = vsel %vm954, 1, 0
  %v959 = vsel %vm955, 1, 0
  %v960 = vsel %vm956, 1, 0
  %v961 = vsel %vm957, 1, 0
  %v962 = vcvt.s32.f32 %v958
  %v963 = vcvt.s32.f32 %v959
  %v964 = vcvt.s32.f32 %v960
  %v965 = vcvt.s32.f32 %v961
  %v966 = vrot.slane %v882, 7
  %v967 = vrot.slane %v887, 7
  %v968 = vrot.slane %v892, 7
  %v969 = vrot.slane %v897, 7
  %v970 = vsel %vm365, %v968, %v969
  %v971 = vsel %vm365, %v967, %v968
  %v972 = vsel %vm365, %v966, %v967
  %v973 = vsel %vm365, %v969, %v966
  %v974 = vrot.slane %v882, 1
  %v975 = vrot.slane %v887, 1
  %v976 = vrot.slane %v892, 1
  %v977 = vrot.slane %v897, 1
  %v978 = vsel %vm382, %v976, %v977
  %v979 = vsel %vm382, %v975, %v976
  %v980 = vsel %vm382, %v974, %v975
  %v981 = vsel %vm382, %v977, %v974
  %v982 = vsub.f32 %v980, %v973
  %v983 = vsub.f32 %v979, %v972
  %v984 = vsub.f32 %v978, %v971
  %v985 = vsub.f32 %v981, %v970
  %v986 = vmul.f32 %v950, %v982
  %v987 = vmul.f32 %v951, %v983
  %v988 = vmul.f32 %v952, %v984
  %v989 = vmul.f32 %v953, %v985
  %v990 = vadd.f32 %v973, %v986
  %v991 = vadd.f32 %v972, %v987
  %v992 = vadd.f32 %v971, %v988
  %v993 = vadd.f32 %v970, %v989
  %v994 = vsub.f32 %v973, %v980
  %v995 = vsub.f32 %v972, %v979
  %v996 = vsub.f32 %v971, %v978
  %v997 = vsub.f32 %v970, %v981
  %v998 = vmul.f32 %v962, %v994
  %v999 = vmul.f32 %v963, %v995
  %v1000 = vmul.f32 %v964, %v996
  %v1001 = vmul.f32 %v965, %v997
  %v1002 = vadd.f32 %v980, %v998
  %v1003 = vadd.f32 %v979, %v999
  %v1004 = vadd.f32 %v978, %v1000
  %v1005 = vadd.f32 %v981, %v1001
  %1010 = vrot.lane.b32.xlu0 %v882, 8
  %v1011 = vpop.permute.xlu0 %1010
  %1012 = vrot.lane.b32.xlu0 %v887, 8
  %v1013 = vpop.permute.xlu0 %1012
  %1014 = vrot.lane.b32.xlu0 %v892, 8
  %v1015 = vpop.permute.xlu0 %1014
  %1016 = vrot.lane.b32.xlu0 %v897, 8
  %v1017 = vpop.permute.xlu0 %1016
  %1026 = vrot.lane.b32.xlu0 %v1002, 16
  %v1027 = vpop.permute.xlu0 %1026
  %1028 = vrot.lane.b32.xlu0 %v1003, 16
  %v1029 = vpop.permute.xlu0 %1028
  %1030 = vrot.lane.b32.xlu0 %v1004, 16
  %v1031 = vpop.permute.xlu0 %1030
  %1032 = vrot.lane.b32.xlu0 %v1005, 16
  %v1033 = vpop.permute.xlu0 %1032
  %v1038 = vsel %vm172, %v990, %v1011
  %v1039 = vsel %vm172, %v991, %v1013
  %v1040 = vsel %vm172, %v992, %v1015
  %v1041 = vsel %vm172, %v993, %v1017
  %v1042 = vsel %vm495, %v1038, %v1027
  %v1043 = vsel %vm495, %v1039, %v1029
  %v1044 = vsel %vm495, %v1040, %v1031
  %v1045 = vsel %vm495, %v1041, %v1033
  %v1046 = vld [vmem:[%s0 + $0xb0] sm:$0xff]
  %v1047 = vld [vmem:[%s0 + $0xb8] sm:$0xff]
  %v1048 = vld [vmem:[%s0 + $0xc0] sm:$0xff]
  %v1050 = vsel %vm512, %v1042, 0
  %v1053 = vsel %vm512, %v1043, 0
  %v1056 = vsel %vm512, %v1044, 0
  %v1059 = vsel %vm512, %v1045, 0
  %1061 = vmatprep.subr.mxu0 0.0
  %1062 = vmatpush1.msra.mxu0 0.0
  %1063 = vmatprep.subr.mxu0 0.0
  %1064 = vmatpush1.msra.mxu0 0.0
  %1065 = vmatprep.subr.mxu0 0.0
  %1066 = vmatpush1.msra.mxu0 0.0
  %1067 = vmatprep.subr.mxu0 0.0
  %1068 = vmatpush1.msra.mxu0 0.0
  %1069 = vmatprep.subr.mxu0 0.0
  %1070 = vmatpush1.msra.mxu0 0.0
  %1071 = vmatprep.subr.mxu0 0.0
  %1072 = vmatpush1.msra.mxu0 0.0
  %1073 = vmatprep.subr.mxu0 0.0
  %1074 = vmatpush1.msra.mxu0 0.0
  %1075 = vmatprep.subr.mxu0 0.0
  %1076 = vmatpush1.msra.mxu0 0.0
  %1077 = vmatprep.subr.mxu0 0.0
  %1078 = vmatpush1.msra.mxu0 0.0
  %1079 = vmatprep.subr.mxu0 0.0
  %1080 = vmatpush1.msra.mxu0 0.0
  %1081 = vmatprep.subr.mxu0 0.0
  %1082 = vmatpush1.msra.mxu0 0.0
  %1083 = vmatprep.subr.mxu0 0.0
  %1084 = vmatpush1.msra.mxu0 0.0
  %1085 = vmatprep.subr.mxu0 0.0
  %1086 = vmatpush1.msra.mxu0 0.0
  %1087 = vmatprep.subr.mxu0 0.0
  %1088 = vmatpush1.msra.mxu0 %v1048
  %1089 = vmatprep.subr.mxu0 0.0
  %1090 = vmatpush1.msra.mxu0 %v1047
  %1091 = vmatprep.subr.mxu0 0.0
  %1092 = vmatpush1.msra.mxu0 %v1046
  %1093 = vmatprep.subr.mxu0 0.0
  %1094 = vmatpush2.msra.mxu0 0.0
  %1095 = vmatprep.subr.mxu0 0.0
  %1096 = vmatpush2.msra.mxu0 0.0
  %1097 = vmatprep.subr.mxu0 0.0
  %1098 = vmatpush2.msra.mxu0 0.0
  %1099 = vmatprep.subr.mxu0 0.0
  %1100 = vmatpush2.msra.mxu0 0.0
  %1101 = vmatprep.subr.mxu0 0.0
  %1102 = vmatpush2.msra.mxu0 0.0
  %1103 = vmatprep.subr.mxu0 0.0
  %1104 = vmatpush2.msra.mxu0 0.0
  %1105 = vmatprep.subr.mxu0 0.0
  %1106 = vmatpush2.msra.mxu0 0.0
  %1107 = vmatprep.subr.mxu0 0.0
  %1108 = vmatpush2.msra.mxu0 0.0
  %1109 = vmatprep.subr.mxu0 0.0
  %1110 = vmatpush2.msra.mxu0 0.0
  %1111 = vmatprep.subr.mxu0 0.0
  %1112 = vmatpush2.msra.mxu0 0.0
  %1113 = vmatprep.subr.mxu0 0.0
  %1114 = vmatpush2.msra.mxu0 0.0
  %1115 = vmatprep.subr.mxu0 0.0
  %1116 = vmatpush2.msra.mxu0 0.0
  %1117 = vmatprep.subr.mxu0 0.0
  %1118 = vmatpush2.msra.mxu0 0.0
  %1119 = vmatprep.subr.mxu0 0.0
  %1120 = vmatpush2.msra.mxu0 0.0
  %1121 = vmatprep.subr.mxu0 0.0
  %1122 = vmatpush2.msra.mxu0 0.0
  %1123 = vmatprep.subr.mxu0 0.0
  %1124 = vmatpush2.msra.mxu0 0.0
  %1125 = vmatprep.mubr.f32.mxu0 0.0
  %1126 = vmatmul.mubr.f32.gmra.mxu0 %v1050
  %v1127 = vpop.f32.mrf.mxu0
  %v1128 = vadd.f32 0.0, %v1127
  %v1129 = vpop.f32.mrf.mxu0
  %1130 = vmatprep.mubr.f32.mxu0 0.0
  %1131 = vmatmul.mubr.f32.gmra.mxu0 %v1053
  %v1132 = vpop.f32.mrf.mxu0
  %v1133 = vadd.f32 0.0, %v1132
  %v1134 = vpop.f32.mrf.mxu0
  %1135 = vmatprep.mubr.f32.mxu0 0.0
  %1136 = vmatmul.mubr.f32.gmra.mxu0 %v1056
  %v1137 = vpop.f32.mrf.mxu0
  %v1138 = vadd.f32 0.0, %v1137
  %v1139 = vpop.f32.mrf.mxu0
  %1140 = vmatprep.mubr.f32.mxu0 0.0
  %1141 = vmatmul.mubr.f32.gmra.mxu0 %v1059
  %v1142 = vpop.f32.mrf.mxu0
  %v1143 = vadd.f32 0.0, %v1142
  %v1144 = vpop.f32.mrf.mxu0
  %1145 = vdwg.mxu0
  %vm1146 = vcmp.ge.f32.partialorder %v1128, 0.0
  %vm1147 = vcmp.ge.f32.partialorder %v1133, 0.0
  %vm1148 = vcmp.ge.f32.partialorder %v1138, 0.0
  %vm1149 = vcmp.ge.f32.partialorder %v1143, 0.0
  %v1150 = vmul.f32 %v1128, 0.25
  %v1151 = vmul.f32 %v1133, 0.25
  %v1152 = vmul.f32 %v1138, 0.25
  %v1153 = vmul.f32 %v1143, 0.25
  %v1154 = vsel %vm1146, %v1128, %v1150
  %v1155 = vsel %vm1147, %v1133, %v1151
  %v1156 = vsel %vm1148, %v1138, %v1152
  %v1157 = vsel %vm1149, %v1143, %v1153
  %v1158 = vld [vmem:[%s0 + $0xc8] sm:$0xff]
  %v1160 = vsel %vm172, %v1154, 0
  %v1163 = vsel %vm172, %v1155, 0
  %v1166 = vsel %vm172, %v1156, 0
  %v1169 = vsel %vm172, %v1157, 0
  %1171 = vmatprep.subr.mxu0 0.0
  %1172 = vmatpush1.msra.mxu0 0.0
  %1173 = vmatprep.subr.mxu0 0.0
  %1174 = vmatpush1.msra.mxu0 0.0
  %1175 = vmatprep.subr.mxu0 0.0
  %1176 = vmatpush1.msra.mxu0 0.0
  %1177 = vmatprep.subr.mxu0 0.0
  %1178 = vmatpush1.msra.mxu0 0.0
  %1179 = vmatprep.subr.mxu0 0.0
  %1180 = vmatpush1.msra.mxu0 0.0
  %1181 = vmatprep.subr.mxu0 0.0
  %1182 = vmatpush1.msra.mxu0 0.0
  %1183 = vmatprep.subr.mxu0 0.0
  %1184 = vmatpush1.msra.mxu0 0.0
  %1185 = vmatprep.subr.mxu0 0.0
  %1186 = vmatpush1.msra.mxu0 0.0
  %1187 = vmatprep.subr.mxu0 0.0
  %1188 = vmatpush1.msra.mxu0 0.0
  %1189 = vmatprep.subr.mxu0 0.0
  %1190 = vmatpush1.msra.mxu0 0.0
  %1191 = vmatprep.subr.mxu0 0.0
  %1192 = vmatpush1.msra.mxu0 0.0
  %1193 = vmatprep.subr.mxu0 0.0
  %1194 = vmatpush1.msra.mxu0 0.0
  %1195 = vmatprep.subr.mxu0 0.0
  %1196 = vmatpush1.msra.mxu0 0.0
  %1197 = vmatprep.subr.mxu0 0.0
  %1198 = vmatpush1.msra.mxu0 0.0
  %1199 = vmatprep.subr.mxu0 0.0
  %1200 = vmatpush1.msra.mxu0 0.0
  %1201 = vmatprep.subr.mxu0 0.0
  %1202 = vmatpush1.msra.mxu0 %v1158
  %1203 = vmatprep.subr.mxu0 0.0
  %1204 = vmatpush2.msra.mxu0 0.0
  %1205 = vmatprep.subr.mxu0 0.0
  %1206 = vmatpush2.msra.mxu0 0.0
  %1207 = vmatprep.subr.mxu0 0.0
  %1208 = vmatpush2.msra.mxu0 0.0
  %1209 = vmatprep.subr.mxu0 0.0
  %1210 = vmatpush2.msra.mxu0 0.0
  %1211 = vmatprep.subr.mxu0 0.0
  %1212 = vmatpush2.msra.mxu0 0.0
  %1213 = vmatprep.subr.mxu0 0.0
  %1214 = vmatpush2.msra.mxu0 0.0
  %1215 = vmatprep.subr.mxu0 0.0
  %1216 = vmatpush2.msra.mxu0 0.0
  %1217 = vmatprep.subr.mxu0 0.0
  %1218 = vmatpush2.msra.mxu0 0.0
  %1219 = vmatprep.subr.mxu0 0.0
  %1220 = vmatpush2.msra.mxu0 0.0
  %1221 = vmatprep.subr.mxu0 0.0
  %1222 = vmatpush2.msra.mxu0 0.0
  %1223 = vmatprep.subr.mxu0 0.0
  %1224 = vmatpush2.msra.mxu0 0.0
  %1225 = vmatprep.subr.mxu0 0.0
  %1226 = vmatpush2.msra.mxu0 0.0
  %1227 = vmatprep.subr.mxu0 0.0
  %1228 = vmatpush2.msra.mxu0 0.0
  %1229 = vmatprep.subr.mxu0 0.0
  %1230 = vmatpush2.msra.mxu0 0.0
  %1231 = vmatprep.subr.mxu0 0.0
  %1232 = vmatpush2.msra.mxu0 0.0
  %1233 = vmatprep.subr.mxu0 0.0
  %1234 = vmatpush2.msra.mxu0 0.0
  %1235 = vmatprep.mubr.f32.mxu0 0.0
  %1236 = vmatmul.mubr.f32.gmra.mxu0 %v1160
  %v1237 = vpop.f32.mrf.mxu0
  %v1238 = vadd.f32 0.0, %v1237
  %v1239 = vpop.f32.mrf.mxu0
  %1240 = vmatprep.mubr.f32.mxu0 0.0
  %1241 = vmatmul.mubr.f32.gmra.mxu0 %v1163
  %v1242 = vpop.f32.mrf.mxu0
  %v1243 = vadd.f32 0.0, %v1242
  %v1244 = vpop.f32.mrf.mxu0
  %1245 = vmatprep.mubr.f32.mxu0 0.0
  %1246 = vmatmul.mubr.f32.gmra.mxu0 %v1166
  %v1247 = vpop.f32.mrf.mxu0
  %v1248 = vadd.f32 0.0, %v1247
  %v1249 = vpop.f32.mrf.mxu0
  %1250 = vmatprep.mubr.f32.mxu0 0.0
  %1251 = vmatmul.mubr.f32.gmra.mxu0 %v1169
  %v1252 = vpop.f32.mrf.mxu0
  %v1253 = vadd.f32 0.0, %v1252
  %v1254 = vpop.f32.mrf.mxu0
  %1255 = vdwg.mxu0
  %v1256 = vtanh.pop %v1238
  %v1257 = vtanh.pop %v1243
  %v1258 = vtanh.pop %v1248
  %v1259 = vtanh.pop %v1253
  %v1260 = vadd.f32 %v862, %v1256
  %v1261 = vadd.f32 %v867, %v1257
  %v1262 = vadd.f32 %v872, %v1258
  %v1263 = vadd.f32 %v877, %v1259
  %v1264 = vrot.slane %v1260, 7
  %v1265 = vrot.slane %v1261, 7
  %v1266 = vrot.slane %v1262, 7
  %v1267 = vrot.slane %v1263, 7
  %v1268 = vsel %vm365, %v1266, %v1267
  %v1269 = vsel %vm365, %v1265, %v1266
  %v1270 = vsel %vm365, %v1264, %v1265
  %v1271 = vsel %vm365, %v1267, %v1264
  %v1272 = vrot.slane %v1260, 1
  %v1273 = vrot.slane %v1261, 1
  %v1274 = vrot.slane %v1262, 1
  %v1275 = vrot.slane %v1263, 1
  %v1276 = vsel %vm382, %v1274, %v1275
  %v1277 = vsel %vm382, %v1273, %v1274
  %v1278 = vsel %vm382, %v1272, %v1273
  %v1279 = vsel %vm382, %v1275, %v1272
  %v1280 = vsub.f32 %v1278, %v1271
  %v1281 = vsub.f32 %v1277, %v1270
  %v1282 = vsub.f32 %v1276, %v1269
  %v1283 = vsub.f32 %v1279, %v1268
  %v1284 = vmul.f32 %v950, %v1280
  %v1285 = vmul.f32 %v951, %v1281
  %v1286 = vmul.f32 %v952, %v1282
  %v1287 = vmul.f32 %v953, %v1283
  %v1288 = vadd.f32 %v1271, %v1284
  %v1289 = vadd.f32 %v1270, %v1285
  %v1290 = vadd.f32 %v1269, %v1286
  %v1291 = vadd.f32 %v1268, %v1287
  %v1292 = vsub.f32 %v1271, %v1278
  %v1293 = vsub.f32 %v1270, %v1277
  %v1294 = vsub.f32 %v1269, %v1276
  %v1295 = vsub.f32 %v1268, %v1279
  %v1296 = vmul.f32 %v962, %v1292
  %v1297 = vmul.f32 %v963, %v1293
  %v1298 = vmul.f32 %v964, %v1294
  %v1299 = vmul.f32 %v965, %v1295
  %v1300 = vadd.f32 %v1278, %v1296
  %v1301 = vadd.f32 %v1277, %v1297
  %v1302 = vadd.f32 %v1276, %v1298
  %v1303 = vadd.f32 %v1279, %v1299
  %1308 = vrot.lane.b32.xlu0 %v1260, 8
  %v1309 = vpop.permute.xlu0 %1308
  %1310 = vrot.lane.b32.xlu0 %v1261, 8
  %v1311 = vpop.permute.xlu0 %1310
  %1312 = vrot.lane.b32.xlu0 %v1262, 8
  %v1313 = vpop.permute.xlu0 %1312
  %1314 = vrot.lane.b32.xlu0 %v1263, 8
  %v1315 = vpop.permute.xlu0 %1314
  %1324 = vrot.lane.b32.xlu0 %v1300, 16
  %v1325 = vpop.permute.xlu0 %1324
  %1326 = vrot.lane.b32.xlu0 %v1301, 16
  %v1327 = vpop.permute.xlu0 %1326
  %1328 = vrot.lane.b32.xlu0 %v1302, 16
  %v1329 = vpop.permute.xlu0 %1328
  %1330 = vrot.lane.b32.xlu0 %v1303, 16
  %v1331 = vpop.permute.xlu0 %1330
  %v1336 = vsel %vm172, %v1288, %v1309
  %v1337 = vsel %vm172, %v1289, %v1311
  %v1338 = vsel %vm172, %v1290, %v1313
  %v1339 = vsel %vm172, %v1291, %v1315
  %v1340 = vsel %vm495, %v1336, %v1325
  %v1341 = vsel %vm495, %v1337, %v1327
  %v1342 = vsel %vm495, %v1338, %v1329
  %v1343 = vsel %vm495, %v1339, %v1331
  %v1344 = vld [vmem:[%s0 + $0xd0] sm:$0xff]
  %v1345 = vld [vmem:[%s0 + $0xd8] sm:$0xff]
  %v1346 = vld [vmem:[%s0 + $0xe0] sm:$0xff]
  %v1348 = vsel %vm512, %v1340, 0
  %v1351 = vsel %vm512, %v1341, 0
  %v1354 = vsel %vm512, %v1342, 0
  %v1357 = vsel %vm512, %v1343, 0
  %1359 = vmatprep.subr.mxu0 0.0
  %1360 = vmatpush1.msra.mxu0 0.0
  %1361 = vmatprep.subr.mxu0 0.0
  %1362 = vmatpush1.msra.mxu0 0.0
  %1363 = vmatprep.subr.mxu0 0.0
  %1364 = vmatpush1.msra.mxu0 0.0
  %1365 = vmatprep.subr.mxu0 0.0
  %1366 = vmatpush1.msra.mxu0 0.0
  %1367 = vmatprep.subr.mxu0 0.0
  %1368 = vmatpush1.msra.mxu0 0.0
  %1369 = vmatprep.subr.mxu0 0.0
  %1370 = vmatpush1.msra.mxu0 0.0
  %1371 = vmatprep.subr.mxu0 0.0
  %1372 = vmatpush1.msra.mxu0 0.0
  %1373 = vmatprep.subr.mxu0 0.0
  %1374 = vmatpush1.msra.mxu0 0.0
  %1375 = vmatprep.subr.mxu0 0.0
  %1376 = vmatpush1.msra.mxu0 0.0
  %1377 = vmatprep.subr.mxu0 0.0
  %1378 = vmatpush1.msra.mxu0 0.0
  %1379 = vmatprep.subr.mxu0 0.0
  %1380 = vmatpush1.msra.mxu0 0.0
  %1381 = vmatprep.subr.mxu0 0.0
  %1382 = vmatpush1.msra.mxu0 0.0
  %1383 = vmatprep.subr.mxu0 0.0
  %1384 = vmatpush1.msra.mxu0 0.0
  %1385 = vmatprep.subr.mxu0 0.0
  %1386 = vmatpush1.msra.mxu0 %v1346
  %1387 = vmatprep.subr.mxu0 0.0
  %1388 = vmatpush1.msra.mxu0 %v1345
  %1389 = vmatprep.subr.mxu0 0.0
  %1390 = vmatpush1.msra.mxu0 %v1344
  %1391 = vmatprep.subr.mxu0 0.0
  %1392 = vmatpush2.msra.mxu0 0.0
  %1393 = vmatprep.subr.mxu0 0.0
  %1394 = vmatpush2.msra.mxu0 0.0
  %1395 = vmatprep.subr.mxu0 0.0
  %1396 = vmatpush2.msra.mxu0 0.0
  %1397 = vmatprep.subr.mxu0 0.0
  %1398 = vmatpush2.msra.mxu0 0.0
  %1399 = vmatprep.subr.mxu0 0.0
  %1400 = vmatpush2.msra.mxu0 0.0
  %1401 = vmatprep.subr.mxu0 0.0
  %1402 = vmatpush2.msra.mxu0 0.0
  %1403 = vmatprep.subr.mxu0 0.0
  %1404 = vmatpush2.msra.mxu0 0.0
  %1405 = vmatprep.subr.mxu0 0.0
  %1406 = vmatpush2.msra.mxu0 0.0
  %1407 = vmatprep.subr.mxu0 0.0
  %1408 = vmatpush2.msra.mxu0 0.0
  %1409 = vmatprep.subr.mxu0 0.0
  %1410 = vmatpush2.msra.mxu0 0.0
  %1411 = vmatprep.subr.mxu0 0.0
  %1412 = vmatpush2.msra.mxu0 0.0
  %1413 = vmatprep.subr.mxu0 0.0
  %1414 = vmatpush2.msra.mxu0 0.0
  %1415 = vmatprep.subr.mxu0 0.0
  %1416 = vmatpush2.msra.mxu0 0.0
  %1417 = vmatprep.subr.mxu0 0.0
  %1418 = vmatpush2.msra.mxu0 0.0
  %1419 = vmatprep.subr.mxu0 0.0
  %1420 = vmatpush2.msra.mxu0 0.0
  %1421 = vmatprep.subr.mxu0 0.0
  %1422 = vmatpush2.msra.mxu0 0.0
  %1423 = vmatprep.mubr.f32.mxu0 0.0
  %1424 = vmatmul.mubr.f32.gmra.mxu0 %v1348
  %v1425 = vpop.f32.mrf.mxu0
  %v1426 = vadd.f32 0.0, %v1425
  %v1427 = vpop.f32.mrf.mxu0
  %1428 = vmatprep.mubr.f32.mxu0 0.0
  %1429 = vmatmul.mubr.f32.gmra.mxu0 %v1351
  %v1430 = vpop.f32.mrf.mxu0
  %v1431 = vadd.f32 0.0, %v1430
  %v1432 = vpop.f32.mrf.mxu0
  %1433 = vmatprep.mubr.f32.mxu0 0.0
  %1434 = vmatmul.mubr.f32.gmra.mxu0 %v1354
  %v1435 = vpop.f32.mrf.mxu0
  %v1436 = vadd.f32 0.0, %v1435
  %v1437 = vpop.f32.mrf.mxu0
  %1438 = vmatprep.mubr.f32.mxu0 0.0
  %1439 = vmatmul.mubr.f32.gmra.mxu0 %v1357
  %v1440 = vpop.f32.mrf.mxu0
  %v1441 = vadd.f32 0.0, %v1440
  %v1442 = vpop.f32.mrf.mxu0
  %1443 = vdwg.mxu0
  %vm1444 = vcmp.ge.f32.partialorder %v1426, 0.0
  %vm1445 = vcmp.ge.f32.partialorder %v1431, 0.0
  %vm1446 = vcmp.ge.f32.partialorder %v1436, 0.0
  %vm1447 = vcmp.ge.f32.partialorder %v1441, 0.0
  %v1448 = vmul.f32 %v1426, 0.25
  %v1449 = vmul.f32 %v1431, 0.25
  %v1450 = vmul.f32 %v1436, 0.25
  %v1451 = vmul.f32 %v1441, 0.25
  %v1452 = vsel %vm1444, %v1426, %v1448
  %v1453 = vsel %vm1445, %v1431, %v1449
  %v1454 = vsel %vm1446, %v1436, %v1450
  %v1455 = vsel %vm1447, %v1441, %v1451
  %v1456 = vld [vmem:[%s0 + $0xe8] sm:$0xff]
  %v1458 = vsel %vm172, %v1452, 0
  %v1461 = vsel %vm172, %v1453, 0
  %v1464 = vsel %vm172, %v1454, 0
  %v1467 = vsel %vm172, %v1455, 0
  %1469 = vmatprep.subr.mxu0 0.0
  %1470 = vmatpush1.msra.mxu0 0.0
  %1471 = vmatprep.subr.mxu0 0.0
  %1472 = vmatpush1.msra.mxu0 0.0
  %1473 = vmatprep.subr.mxu0 0.0
  %1474 = vmatpush1.msra.mxu0 0.0
  %1475 = vmatprep.subr.mxu0 0.0
  %1476 = vmatpush1.msra.mxu0 0.0
  %1477 = vmatprep.subr.mxu0 0.0
  %1478 = vmatpush1.msra.mxu0 0.0
  %1479 = vmatprep.subr.mxu0 0.0
  %1480 = vmatpush1.msra.mxu0 0.0
  %1481 = vmatprep.subr.mxu0 0.0
  %1482 = vmatpush1.msra.mxu0 0.0
  %1483 = vmatprep.subr.mxu0 0.0
  %1484 = vmatpush1.msra.mxu0 0.0
  %1485 = vmatprep.subr.mxu0 0.0
  %1486 = vmatpush1.msra.mxu0 0.0
  %1487 = vmatprep.subr.mxu0 0.0
  %1488 = vmatpush1.msra.mxu0 0.0
  %1489 = vmatprep.subr.mxu0 0.0
  %1490 = vmatpush1.msra.mxu0 0.0
  %1491 = vmatprep.subr.mxu0 0.0
  %1492 = vmatpush1.msra.mxu0 0.0
  %1493 = vmatprep.subr.mxu0 0.0
  %1494 = vmatpush1.msra.mxu0 0.0
  %1495 = vmatprep.subr.mxu0 0.0
  %1496 = vmatpush1.msra.mxu0 0.0
  %1497 = vmatprep.subr.mxu0 0.0
  %1498 = vmatpush1.msra.mxu0 0.0
  %1499 = vmatprep.subr.mxu0 0.0
  %1500 = vmatpush1.msra.mxu0 %v1456
  %1501 = vmatprep.subr.mxu0 0.0
  %1502 = vmatpush2.msra.mxu0 0.0
  %1503 = vmatprep.subr.mxu0 0.0
  %1504 = vmatpush2.msra.mxu0 0.0
  %1505 = vmatprep.subr.mxu0 0.0
  %1506 = vmatpush2.msra.mxu0 0.0
  %1507 = vmatprep.subr.mxu0 0.0
  %1508 = vmatpush2.msra.mxu0 0.0
  %1509 = vmatprep.subr.mxu0 0.0
  %1510 = vmatpush2.msra.mxu0 0.0
  %1511 = vmatprep.subr.mxu0 0.0
  %1512 = vmatpush2.msra.mxu0 0.0
  %1513 = vmatprep.subr.mxu0 0.0
  %1514 = vmatpush2.msra.mxu0 0.0
  %1515 = vmatprep.subr.mxu0 0.0
  %1516 = vmatpush2.msra.mxu0 0.0
  %1517 = vmatprep.subr.mxu0 0.0
  %1518 = vmatpush2.msra.mxu0 0.0
  %1519 = vmatprep.subr.mxu0 0.0
  %1520 = vmatpush2.msra.mxu0 0.0
  %1521 = vmatprep.subr.mxu0 0.0
  %1522 = vmatpush2.msra.mxu0 0.0
  %1523 = vmatprep.subr.mxu0 0.0
  %1524 = vmatpush2.msra.mxu0 0.0
  %1525 = vmatprep.subr.mxu0 0.0
  %1526 = vmatpush2.msra.mxu0 0.0
  %1527 = vmatprep.subr.mxu0 0.0
  %1528 = vmatpush2.msra.mxu0 0.0
  %1529 = vmatprep.subr.mxu0 0.0
  %1530 = vmatpush2.msra.mxu0 0.0
  %1531 = vmatprep.subr.mxu0 0.0
  %1532 = vmatpush2.msra.mxu0 0.0
  %1533 = vmatprep.mubr.f32.mxu0 0.0
  %1534 = vmatmul.mubr.f32.gmra.mxu0 %v1458
  %v1535 = vpop.f32.mrf.mxu0
  %v1536 = vadd.f32 0.0, %v1535
  %v1537 = vpop.f32.mrf.mxu0
  %1538 = vmatprep.mubr.f32.mxu0 0.0
  %1539 = vmatmul.mubr.f32.gmra.mxu0 %v1461
  %v1540 = vpop.f32.mrf.mxu0
  %v1541 = vadd.f32 0.0, %v1540
  %v1542 = vpop.f32.mrf.mxu0
  %1543 = vmatprep.mubr.f32.mxu0 0.0
  %1544 = vmatmul.mubr.f32.gmra.mxu0 %v1464
  %v1545 = vpop.f32.mrf.mxu0
  %v1546 = vadd.f32 0.0, %v1545
  %v1547 = vpop.f32.mrf.mxu0
  %1548 = vmatprep.mubr.f32.mxu0 0.0
  %1549 = vmatmul.mubr.f32.gmra.mxu0 %v1467
  %v1550 = vpop.f32.mrf.mxu0
  %v1551 = vadd.f32 0.0, %v1550
  %v1552 = vpop.f32.mrf.mxu0
  %1553 = vdwg.mxu0
  %v1554 = vtanh.pop %v1536
  %v1555 = vtanh.pop %v1541
  %v1556 = vtanh.pop %v1546
  %v1557 = vtanh.pop %v1551
  %v1558 = vsub.f32 %v882, %v1554
  %v1559 = vsub.f32 %v887, %v1555
  %v1560 = vsub.f32 %v892, %v1556
  %v1561 = vsub.f32 %v897, %v1557
  %v1562 = vand.u32 2147483647, %v1558
  %v1563 = vand.u32 2147483647, %v1559
  %v1564 = vand.u32 2147483647, %v1560
  %v1565 = vand.u32 2147483647, %v1561
  %v1566 = vsel %vm172, %v1562, 0.0
  %1567 = vadd.xlane.f32.xlu0 %v1566
  %v1568 = vpop.xlane.xlu0 %1567
  %v1569 = vsel %vm172, %v1563, 0.0
  %1570 = vadd.xlane.f32.xlu0 %v1569
  %v1571 = vpop.xlane.xlu0 %1570
  %v1572 = vsel %vm172, %v1564, 0.0
  %1573 = vadd.xlane.f32.xlu0 %v1572
  %v1574 = vpop.xlane.xlu0 %1573
  %v1575 = vsel %vm172, %v1565, 0.0
  %1576 = vadd.xlane.f32.xlu0 %v1575
  %v1577 = vpop.xlane.xlu0 %1576
  %v1578 = vadd.f32 %v1568, %v1571
  %v1579 = vadd.f32 %v1578, %v1574
  %v1580 = vadd.f32 %v1579, %v1577
  %v1581 = vrot.slane %v1580, 4
  %v1582 = vadd.f32 %v1580, %v1581
  %v1583 = vrot.slane %v1582, 2
  %v1584 = vadd.f32 %v1582, %v1583
  %v1585 = vrot.slane %v1584, 1
  %v1586 = vadd.f32 %v1584, %v1585
  %v1587 = vmul.f32 %v1586, 0.00390625
  %v1588 = vmul.f32 %v1587, 0.01
  %v1589 = vsel %vm172, %v1260, 0.0
  %1590 = vadd.xlane.f32.xlu0 %v1589
  %v1591 = vpop.xlane.xlu0 %1590
  %v1592 = vsel %vm172, %v1261, 0.0
  %1593 = vadd.xlane.f32.xlu0 %v1592
  %v1594 = vpop.xlane.xlu0 %1593
  %v1595 = vsel %vm172, %v1262, 0.0
  %1596 = vadd.xlane.f32.xlu0 %v1595
  %v1597 = vpop.xlane.xlu0 %1596
  %v1598 = vsel %vm172, %v1263, 0.0
  %1599 = vadd.xlane.f32.xlu0 %v1598
  %v1600 = vpop.xlane.xlu0 %1599
  %v1601 = vadd.f32 %v1591, %v1594
  %v1602 = vadd.f32 %v1601, %v1597
  %v1603 = vadd.f32 %v1602, %v1600
  %v1604 = vrot.slane %v1603, 4
  %v1605 = vadd.f32 %v1603, %v1604
  %v1606 = vrot.slane %v1605, 2
  %v1607 = vadd.f32 %v1605, %v1606
  %v1608 = vrot.slane %v1607, 1
  %v1609 = vadd.f32 %v1607, %v1608
  %v1610 = vmul.f32 %v1609, 0.00390625
  %v1611 = vsub.f32 %v1610, %v937
  %v1612 = vand.u32 2147483647, %v1611
  %v1613 = vmul.f32 %v1612, 0.01
  %v1614 = vadd.f32 %v1588, %v1613
  %vm1615 = vcmask 0
  %1616 = vst.msk [vmem:[%s4 + $0x2] sm:$0x1] %vm1615, %v1614
  %v1617 = vld [vmem:[%s0 + $0x100] sm:$0xff]
  %v1618 = vld [vmem:[%s0 + $0x108] sm:$0xff]
  %v1620 = vsel %vm770, %v1617, 0
  %v1623 = vsel %vm770, %v1618, 0
  %1625 = vmatprep.subr.mxu0 0.0
  %1626 = vmatpush1.msra.mxu0 0.0
  %1627 = vmatprep.subr.mxu0 0.0
  %1628 = vmatpush1.msra.mxu0 0.0
  %1629 = vmatprep.subr.mxu0 0.0
  %1630 = vmatpush1.msra.mxu0 0.0
  %1631 = vmatprep.subr.mxu0 0.0
  %1632 = vmatpush1.msra.mxu0 0.0
  %1633 = vmatprep.subr.mxu0 0.0
  %1634 = vmatpush1.msra.mxu0 0.0
  %1635 = vmatprep.subr.mxu0 0.0
  %1636 = vmatpush1.msra.mxu0 0.0
  %1637 = vmatprep.subr.mxu0 0.0
  %1638 = vmatpush1.msra.mxu0 0.0
  %1639 = vmatprep.subr.mxu0 0.0
  %1640 = vmatpush1.msra.mxu0 0.0
  %1641 = vmatprep.subr.mxu0 0.0
  %1642 = vmatpush1.msra.mxu0 %v1561
  %1643 = vmatprep.subr.mxu0 0.0
  %1644 = vmatpush1.msra.mxu0 %v1560
  %1645 = vmatprep.subr.mxu0 0.0
  %1646 = vmatpush1.msra.mxu0 %v1559
  %1647 = vmatprep.subr.mxu0 0.0
  %1648 = vmatpush1.msra.mxu0 %v1558
  %1649 = vmatprep.subr.mxu0 0.0
  %1650 = vmatpush1.msra.mxu0 %v1263
  %1651 = vmatprep.subr.mxu0 0.0
  %1652 = vmatpush1.msra.mxu0 %v1262
  %1653 = vmatprep.subr.mxu0 0.0
  %1654 = vmatpush1.msra.mxu0 %v1261
  %1655 = vmatprep.subr.mxu0 0.0
  %1656 = vmatpush1.msra.mxu0 %v1260
  %1657 = vmatprep.subr.mxu0 0.0
  %1658 = vmatpush2.msra.mxu0 0.0
  %1659 = vmatprep.subr.mxu0 0.0
  %1660 = vmatpush2.msra.mxu0 0.0
  %1661 = vmatprep.subr.mxu0 0.0
  %1662 = vmatpush2.msra.mxu0 0.0
  %1663 = vmatprep.subr.mxu0 0.0
  %1664 = vmatpush2.msra.mxu0 0.0
  %1665 = vmatprep.subr.mxu0 0.0
  %1666 = vmatpush2.msra.mxu0 0.0
  %1667 = vmatprep.subr.mxu0 0.0
  %1668 = vmatpush2.msra.mxu0 0.0
  %1669 = vmatprep.subr.mxu0 0.0
  %1670 = vmatpush2.msra.mxu0 0.0
  %1671 = vmatprep.subr.mxu0 0.0
  %1672 = vmatpush2.msra.mxu0 0.0
  %1673 = vmatprep.subr.mxu0 0.0
  %1674 = vmatpush2.msra.mxu0 0.0
  %1675 = vmatprep.subr.mxu0 0.0
  %1676 = vmatpush2.msra.mxu0 0.0
  %1677 = vmatprep.subr.mxu0 0.0
  %1678 = vmatpush2.msra.mxu0 0.0
  %1679 = vmatprep.subr.mxu0 0.0
  %1680 = vmatpush2.msra.mxu0 0.0
  %1681 = vmatprep.subr.mxu0 0.0
  %1682 = vmatpush2.msra.mxu0 0.0
  %1683 = vmatprep.subr.mxu0 0.0
  %1684 = vmatpush2.msra.mxu0 0.0
  %1685 = vmatprep.subr.mxu0 0.0
  %1686 = vmatpush2.msra.mxu0 0.0
  %1687 = vmatprep.subr.mxu0 0.0
  %1688 = vmatpush2.msra.mxu0 0.0
  %1689 = vmatprep.mubr.f32.mxu0 0.0
  %1690 = vmatmul.mubr.f32.gmra.mxu0 %v1620
  %v1691 = vpop.f32.mrf.mxu0
  %v1692 = vadd.f32 0.0, %v1691
  %v1693 = vpop.f32.mrf.mxu0
  %1694 = vmatprep.mubr.f32.mxu0 0.0
  %1695 = vmatmul.mubr.f32.gmra.mxu0 %v1623
  %v1696 = vpop.f32.mrf.mxu0
  %v1697 = vadd.f32 0.0, %v1696
  %v1698 = vpop.f32.mrf.mxu0
  %1699 = vdwg.mxu0
  %v1700 = vld [vmem:[%s0 + $0xf0] sm:$0xff]
  %v1702 = vsel %vm172, %v1692, 0
  %v1705 = vsel %vm172, %v1697, 0
  %1707 = vmatprep.subr.mxu0 0.0
  %1708 = vmatpush1.msra.mxu0 0.0
  %1709 = vmatprep.subr.mxu0 0.0
  %1710 = vmatpush1.msra.mxu0 0.0
  %1711 = vmatprep.subr.mxu0 0.0
  %1712 = vmatpush1.msra.mxu0 0.0
  %1713 = vmatprep.subr.mxu0 0.0
  %1714 = vmatpush1.msra.mxu0 0.0
  %1715 = vmatprep.subr.mxu0 0.0
  %1716 = vmatpush1.msra.mxu0 0.0
  %1717 = vmatprep.subr.mxu0 0.0
  %1718 = vmatpush1.msra.mxu0 0.0
  %1719 = vmatprep.subr.mxu0 0.0
  %1720 = vmatpush1.msra.mxu0 0.0
  %1721 = vmatprep.subr.mxu0 0.0
  %1722 = vmatpush1.msra.mxu0 0.0
  %1723 = vmatprep.subr.mxu0 0.0
  %1724 = vmatpush1.msra.mxu0 0.0
  %1725 = vmatprep.subr.mxu0 0.0
  %1726 = vmatpush1.msra.mxu0 0.0
  %1727 = vmatprep.subr.mxu0 0.0
  %1728 = vmatpush1.msra.mxu0 0.0
  %1729 = vmatprep.subr.mxu0 0.0
  %1730 = vmatpush1.msra.mxu0 0.0
  %1731 = vmatprep.subr.mxu0 0.0
  %1732 = vmatpush1.msra.mxu0 0.0
  %1733 = vmatprep.subr.mxu0 0.0
  %1734 = vmatpush1.msra.mxu0 0.0
  %1735 = vmatprep.subr.mxu0 0.0
  %1736 = vmatpush1.msra.mxu0 0.0
  %1737 = vmatprep.subr.mxu0 0.0
  %1738 = vmatpush1.msra.mxu0 %v1700
  %1739 = vmatprep.subr.mxu0 0.0
  %1740 = vmatpush2.msra.mxu0 0.0
  %1741 = vmatprep.subr.mxu0 0.0
  %1742 = vmatpush2.msra.mxu0 0.0
  %1743 = vmatprep.subr.mxu0 0.0
  %1744 = vmatpush2.msra.mxu0 0.0
  %1745 = vmatprep.subr.mxu0 0.0
  %1746 = vmatpush2.msra.mxu0 0.0
  %1747 = vmatprep.subr.mxu0 0.0
  %1748 = vmatpush2.msra.mxu0 0.0
  %1749 = vmatprep.subr.mxu0 0.0
  %1750 = vmatpush2.msra.mxu0 0.0
  %1751 = vmatprep.subr.mxu0 0.0
  %1752 = vmatpush2.msra.mxu0 0.0
  %1753 = vmatprep.subr.mxu0 0.0
  %1754 = vmatpush2.msra.mxu0 0.0
  %1755 = vmatprep.subr.mxu0 0.0
  %1756 = vmatpush2.msra.mxu0 0.0
  %1757 = vmatprep.subr.mxu0 0.0
  %1758 = vmatpush2.msra.mxu0 0.0
  %1759 = vmatprep.subr.mxu0 0.0
  %1760 = vmatpush2.msra.mxu0 0.0
  %1761 = vmatprep.subr.mxu0 0.0
  %1762 = vmatpush2.msra.mxu0 0.0
  %1763 = vmatprep.subr.mxu0 0.0
  %1764 = vmatpush2.msra.mxu0 0.0
  %1765 = vmatprep.subr.mxu0 0.0
  %1766 = vmatpush2.msra.mxu0 0.0
  %1767 = vmatprep.subr.mxu0 0.0
  %1768 = vmatpush2.msra.mxu0 0.0
  %1769 = vmatprep.subr.mxu0 0.0
  %1770 = vmatpush2.msra.mxu0 0.0
  %1771 = vmatprep.mubr.f32.mxu0 0.0
  %1772 = vmatmul.mubr.f32.gmra.mxu0 %v1702
  %v1773 = vpop.f32.mrf.mxu0
  %v1774 = vadd.f32 0.0, %v1773
  %v1775 = vpop.f32.mrf.mxu0
  %1776 = vmatprep.mubr.f32.mxu0 0.0
  %1777 = vmatmul.mubr.f32.gmra.mxu0 %v1705
  %v1778 = vpop.f32.mrf.mxu0
  %v1779 = vadd.f32 0.0, %v1778
  %v1780 = vpop.f32.mrf.mxu0
  %1781 = vdwg.mxu0
  %vm1782 = vcmp.ge.f32.partialorder %v1774, 0.0
  %vm1783 = vcmp.ge.f32.partialorder %v1779, 0.0
  %v1784 = vmul.f32 %v1774, 0.25
  %v1785 = vmul.f32 %v1779, 0.25
  %v1786 = vsel %vm1782, %v1774, %v1784
  %v1787 = vsel %vm1783, %v1779, %v1785
  %v1788 = vld [vmem:[%s0 + $0xf8] sm:$0xff]
  %v1790 = vsel %vm172, %v1786, 0
  %v1793 = vsel %vm172, %v1787, 0
  %1795 = vmatprep.subr.mxu0 0.0
  %1796 = vmatpush1.msra.mxu0 0.0
  %1797 = vmatprep.subr.mxu0 0.0
  %1798 = vmatpush1.msra.mxu0 0.0
  %1799 = vmatprep.subr.mxu0 0.0
  %1800 = vmatpush1.msra.mxu0 0.0
  %1801 = vmatprep.subr.mxu0 0.0
  %1802 = vmatpush1.msra.mxu0 0.0
  %1803 = vmatprep.subr.mxu0 0.0
  %1804 = vmatpush1.msra.mxu0 0.0
  %1805 = vmatprep.subr.mxu0 0.0
  %1806 = vmatpush1.msra.mxu0 0.0
  %1807 = vmatprep.subr.mxu0 0.0
  %1808 = vmatpush1.msra.mxu0 0.0
  %1809 = vmatprep.subr.mxu0 0.0
  %1810 = vmatpush1.msra.mxu0 0.0
  %1811 = vmatprep.subr.mxu0 0.0
  %1812 = vmatpush1.msra.mxu0 0.0
  %1813 = vmatprep.subr.mxu0 0.0
  %1814 = vmatpush1.msra.mxu0 0.0
  %1815 = vmatprep.subr.mxu0 0.0
  %1816 = vmatpush1.msra.mxu0 0.0
  %1817 = vmatprep.subr.mxu0 0.0
  %1818 = vmatpush1.msra.mxu0 0.0
  %1819 = vmatprep.subr.mxu0 0.0
  %1820 = vmatpush1.msra.mxu0 0.0
  %1821 = vmatprep.subr.mxu0 0.0
  %1822 = vmatpush1.msra.mxu0 0.0
  %1823 = vmatprep.subr.mxu0 0.0
  %1824 = vmatpush1.msra.mxu0 0.0
  %1825 = vmatprep.subr.mxu0 0.0
  %1826 = vmatpush1.msra.mxu0 %v1788
  %1827 = vmatprep.subr.mxu0 0.0
  %1828 = vmatpush2.msra.mxu0 0.0
  %1829 = vmatprep.subr.mxu0 0.0
  %1830 = vmatpush2.msra.mxu0 0.0
  %1831 = vmatprep.subr.mxu0 0.0
  %1832 = vmatpush2.msra.mxu0 0.0
  %1833 = vmatprep.subr.mxu0 0.0
  %1834 = vmatpush2.msra.mxu0 0.0
  %1835 = vmatprep.subr.mxu0 0.0
  %1836 = vmatpush2.msra.mxu0 0.0
  %1837 = vmatprep.subr.mxu0 0.0
  %1838 = vmatpush2.msra.mxu0 0.0
  %1839 = vmatprep.subr.mxu0 0.0
  %1840 = vmatpush2.msra.mxu0 0.0
  %1841 = vmatprep.subr.mxu0 0.0
  %1842 = vmatpush2.msra.mxu0 0.0
  %1843 = vmatprep.subr.mxu0 0.0
  %1844 = vmatpush2.msra.mxu0 0.0
  %1845 = vmatprep.subr.mxu0 0.0
  %1846 = vmatpush2.msra.mxu0 0.0
  %1847 = vmatprep.subr.mxu0 0.0
  %1848 = vmatpush2.msra.mxu0 0.0
  %1849 = vmatprep.subr.mxu0 0.0
  %1850 = vmatpush2.msra.mxu0 0.0
  %1851 = vmatprep.subr.mxu0 0.0
  %1852 = vmatpush2.msra.mxu0 0.0
  %1853 = vmatprep.subr.mxu0 0.0
  %1854 = vmatpush2.msra.mxu0 0.0
  %1855 = vmatprep.subr.mxu0 0.0
  %1856 = vmatpush2.msra.mxu0 0.0
  %1857 = vmatprep.subr.mxu0 0.0
  %1858 = vmatpush2.msra.mxu0 0.0
  %1859 = vmatprep.mubr.f32.mxu0 0.0
  %1860 = vmatmul.mubr.f32.gmra.mxu0 %v1790
  %v1861 = vpop.f32.mrf.mxu0
  %v1862 = vadd.f32 0.0, %v1861
  %v1863 = vpop.f32.mrf.mxu0
  %1864 = vmatprep.mubr.f32.mxu0 0.0
  %1865 = vmatmul.mubr.f32.gmra.mxu0 %v1793
  %v1866 = vpop.f32.mrf.mxu0
  %v1867 = vadd.f32 0.0, %v1866
  %v1868 = vpop.f32.mrf.mxu0
  %1869 = vdwg.mxu0
  %vm1870 = vcmp.ge.f32.partialorder %v1862, 0.0
  %vm1871 = vcmp.ge.f32.partialorder %v1867, 0.0
  %v1872 = vmul.f32 %v1862, 0.25
  %v1873 = vmul.f32 %v1867, 0.25
  %v1874 = vsel %vm1870, %v1862, %v1872
  %v1875 = vsel %vm1871, %v1867, %v1873
  %1878 = vrot.lane.b32.xlu0 %v1874, 127
  %v1879 = vpop.permute.xlu0 %1878
  %1880 = vrot.lane.b32.xlu0 %v1875, 127
  %v1881 = vpop.permute.xlu0 %1880
  %v1884 = vsub.f32 %v1874, %v1879
  %v1885 = vsub.f32 %v1875, %v1881
  %v1886 = vsub.f32 0.0, %v1884
  %v1887 = vsub.f32 0.0, %v1885
  %v1888 = vmul.f32 %v1886, 1.442695
  %v1889 = vpow.pop %v1888
  %v1890 = vmul.f32 %v1887, 1.442695
  %v1891 = vpow.pop %v1890
  %v1892 = vadd.f32 %v1889, 1.0
  %v1893 = vadd.f32 %v1891, 1.0
  %v1894 = vrcp.pop %v1892
  %v1895 = vrcp.pop %v1893
  %v1896 = vld [vmem:[%s2] sm:$0xff]
  %v1897 = vld [vmem:[%s2 + $0x8] sm:$0xff]
  %v1898 = vmul.f32 %v1894, 2.0
  %v1899 = vmul.f32 %v1895, 2.0
  %v1900 = vsub.f32 %v1898, 1.0
  %v1901 = vsub.f32 %v1899, 1.0
  %v1902 = vadd.f32 %v1900, %v1896
  %v1903 = vadd.f32 %v1901, %v1897
  %v1904 = vsub.f32 0.0, %v1902
  %v1905 = vsub.f32 0.0, %v1903
  %v1906 = vmul.f32 %v1904, 1.442695
  %v1907 = vpow.pop %v1906
  %v1908 = vmul.f32 %v1905, 1.442695
  %v1909 = vpow.pop %v1908
  %v1910 = vadd.f32 %v1907, 1.0
  %v1911 = vadd.f32 %v1909, 1.0
  %v1912 = vrcp.pop %v1910
  %v1913 = vrcp.pop %v1911
  %v1914 = vsub.f32 1.0, %v1912
  %v1915 = vsub.f32 1.0, %v1913
  %v1916 = vld [vmem:[%s0 + $0x150] sm:$0x3]
  %1918 = vset.pattern.permute.xlu0 0
  %1919 = vperm.xlu0 %1918, %v1912
  %v1920 = vpop.permute.xlu0 %1919
  %1923 = vset.pattern.permute.xlu0 0
  %1924 = vperm.xlu0 %1923, %v1913
  %v1925 = vpop.permute.xlu0 %1924
  %v1927 = vmul.f32 %v1692, %v1920
  %v1928 = vmul.f32 %v1697, %v1925
  %v1930 = vsel %vm495, %v1916, 0
  %1932 = vmatprep.subr.mxu0 0.0
  %1933 = vmatpush1.msra.mxu0 0.0
  %1934 = vmatprep.subr.mxu0 0.0
  %1935 = vmatpush1.msra.mxu0 0.0
  %1936 = vmatprep.subr.mxu0 0.0
  %1937 = vmatpush1.msra.mxu0 0.0
  %1938 = vmatprep.subr.mxu0 0.0
  %1939 = vmatpush1.msra.mxu0 0.0
  %1940 = vmatprep.subr.mxu0 0.0
  %1941 = vmatpush1.msra.mxu0 0.0
  %1942 = vmatprep.subr.mxu0 0.0
  %1943 = vmatpush1.msra.mxu0 0.0
  %1944 = vmatprep.subr.mxu0 0.0
  %1945 = vmatpush1.msra.mxu0 0.0
  %1946 = vmatprep.subr.mxu0 0.0
  %1947 = vmatpush1.msra.mxu0 0.0
  %1948 = vmatprep.subr.mxu0 0.0
  %1949 = vmatpush1.msra.mxu0 0.0
  %1950 = vmatprep.subr.mxu0 0.0
  %1951 = vmatpush1.msra.mxu0 0.0
  %1952 = vmatprep.subr.mxu0 0.0
  %1953 = vmatpush1.msra.mxu0 0.0
  %1954 = vmatprep.subr.mxu0 0.0
  %1955 = vmatpush1.msra.mxu0 0.0
  %1956 = vmatprep.subr.mxu0 0.0
  %1957 = vmatpush1.msra.mxu0 0.0
  %1958 = vmatprep.subr.mxu0 0.0
  %1959 = vmatpush1.msra.mxu0 0.0
  %1960 = vmatprep.subr.mxu0 0.0
  %1961 = vmatpush1.msra.mxu0 %v1928
  %1962 = vmatprep.subr.mxu0 0.0
  %1963 = vmatpush1.msra.mxu0 %v1927
  %1964 = vmatprep.subr.mxu0 0.0
  %1965 = vmatpush2.msra.mxu0 0.0
  %1966 = vmatprep.subr.mxu0 0.0
  %1967 = vmatpush2.msra.mxu0 0.0
  %1968 = vmatprep.subr.mxu0 0.0
  %1969 = vmatpush2.msra.mxu0 0.0
  %1970 = vmatprep.subr.mxu0 0.0
  %1971 = vmatpush2.msra.mxu0 0.0
  %1972 = vmatprep.subr.mxu0 0.0
  %1973 = vmatpush2.msra.mxu0 0.0
  %1974 = vmatprep.subr.mxu0 0.0
  %1975 = vmatpush2.msra.mxu0 0.0
  %1976 = vmatprep.subr.mxu0 0.0
  %1977 = vmatpush2.msra.mxu0 0.0
  %1978 = vmatprep.subr.mxu0 0.0
  %1979 = vmatpush2.msra.mxu0 0.0
  %1980 = vmatprep.subr.mxu0 0.0
  %1981 = vmatpush2.msra.mxu0 0.0
  %1982 = vmatprep.subr.mxu0 0.0
  %1983 = vmatpush2.msra.mxu0 0.0
  %1984 = vmatprep.subr.mxu0 0.0
  %1985 = vmatpush2.msra.mxu0 0.0
  %1986 = vmatprep.subr.mxu0 0.0
  %1987 = vmatpush2.msra.mxu0 0.0
  %1988 = vmatprep.subr.mxu0 0.0
  %1989 = vmatpush2.msra.mxu0 0.0
  %1990 = vmatprep.subr.mxu0 0.0
  %1991 = vmatpush2.msra.mxu0 0.0
  %1992 = vmatprep.subr.mxu0 0.0
  %1993 = vmatpush2.msra.mxu0 0.0
  %1994 = vmatprep.subr.mxu0 0.0
  %1995 = vmatpush2.msra.mxu0 0.0
  %1996 = vmatprep.mubr.f32.mxu0 0.0
  %1997 = vmatmul.mubr.f32.gmra.mxu0 %v1930
  %v1998 = vpop.f32.mrf.mxu0
  %v1999 = vadd.f32 0.0, %v1998
  %v2000 = vpop.f32.mrf.mxu0
  %2001 = vdwg.mxu0
  %2003 = vset.pattern.permute.xlu0 0
  %2004 = vperm.xlu0 %2003, %v1914
  %v2005 = vpop.permute.xlu0 %2004
  %2008 = vset.pattern.permute.xlu0 0
  %2009 = vperm.xlu0 %2008, %v1915
  %v2010 = vpop.permute.xlu0 %2009
  %v2012 = vmul.f32 %v1692, %v2005
  %v2013 = vmul.f32 %v1697, %v2010
  %2014 = vmatprep.subr.mxu0 0.0
  %2015 = vmatpush1.msra.mxu0 0.0
  %2016 = vmatprep.subr.mxu0 0.0
  %2017 = vmatpush1.msra.mxu0 0.0
  %2018 = vmatprep.subr.mxu0 0.0
  %2019 = vmatpush1.msra.mxu0 0.0
  %2020 = vmatprep.subr.mxu0 0.0
  %2021 = vmatpush1.msra.mxu0 0.0
  %2022 = vmatprep.subr.mxu0 0.0
  %2023 = vmatpush1.msra.mxu0 0.0
  %2024 = vmatprep.subr.mxu0 0.0
  %2025 = vmatpush1.msra.mxu0 0.0
  %2026 = vmatprep.subr.mxu0 0.0
  %2027 = vmatpush1.msra.mxu0 0.0
  %2028 = vmatprep.subr.mxu0 0.0
  %2029 = vmatpush1.msra.mxu0 0.0
  %2030 = vmatprep.subr.mxu0 0.0
  %2031 = vmatpush1.msra.mxu0 0.0
  %2032 = vmatprep.subr.mxu0 0.0
  %2033 = vmatpush1.msra.mxu0 0.0
  %2034 = vmatprep.subr.mxu0 0.0
  %2035 = vmatpush1.msra.mxu0 0.0
  %2036 = vmatprep.subr.mxu0 0.0
  %2037 = vmatpush1.msra.mxu0 0.0
  %2038 = vmatprep.subr.mxu0 0.0
  %2039 = vmatpush1.msra.mxu0 0.0
  %2040 = vmatprep.subr.mxu0 0.0
  %2041 = vmatpush1.msra.mxu0 0.0
  %2042 = vmatprep.subr.mxu0 0.0
  %2043 = vmatpush1.msra.mxu0 %v2013
  %2044 = vmatprep.subr.mxu0 0.0
  %2045 = vmatpush1.msra.mxu0 %v2012
  %2046 = vmatprep.subr.mxu0 0.0
  %2047 = vmatpush2.msra.mxu0 0.0
  %2048 = vmatprep.subr.mxu0 0.0
  %2049 = vmatpush2.msra.mxu0 0.0
  %2050 = vmatprep.subr.mxu0 0.0
  %2051 = vmatpush2.msra.mxu0 0.0
  %2052 = vmatprep.subr.mxu0 0.0
  %2053 = vmatpush2.msra.mxu0 0.0
  %2054 = vmatprep.subr.mxu0 0.0
  %2055 = vmatpush2.msra.mxu0 0.0
  %2056 = vmatprep.subr.mxu0 0.0
  %2057 = vmatpush2.msra.mxu0 0.0
  %2058 = vmatprep.subr.mxu0 0.0
  %2059 = vmatpush2.msra.mxu0 0.0
  %2060 = vmatprep.subr.mxu0 0.0
  %2061 = vmatpush2.msra.mxu0 0.0
  %2062 = vmatprep.subr.mxu0 0.0
  %2063 = vmatpush2.msra.mxu0 0.0
  %2064 = vmatprep.subr.mxu0 0.0
  %2065 = vmatpush2.msra.mxu0 0.0
  %2066 = vmatprep.subr.mxu0 0.0
  %2067 = vmatpush2.msra.mxu0 0.0
  %2068 = vmatprep.subr.mxu0 0.0
  %2069 = vmatpush2.msra.mxu0 0.0
  %2070 = vmatprep.subr.mxu0 0.0
  %2071 = vmatpush2.msra.mxu0 0.0
  %2072 = vmatprep.subr.mxu0 0.0
  %2073 = vmatpush2.msra.mxu0 0.0
  %2074 = vmatprep.subr.mxu0 0.0
  %2075 = vmatpush2.msra.mxu0 0.0
  %2076 = vmatprep.subr.mxu0 0.0
  %2077 = vmatpush2.msra.mxu0 0.0
  %2078 = vmatprep.mubr.f32.mxu0 0.0
  %2079 = vmatmul.mubr.f32.gmra.mxu0 %v1930
  %v2080 = vpop.f32.mrf.mxu0
  %v2081 = vadd.f32 0.0, %v2080
  %v2082 = vpop.f32.mrf.mxu0
  %2083 = vdwg.mxu0
  %v2084 = vadd.f32 %v2081, 0.0
  %v2085 = vadd.f32 %v2084, %v1999
  %v2086 = vld [vmem:[%s0 + $0x110] sm:$0xff]
  %v2087 = vld [vmem:[%s0 + $0x118] sm:$0xff]
  %v2088 = vld [vmem:[%s0 + $0x120] sm:$0xff]
  %v2089 = vld [vmem:[%s0 + $0x128] sm:$0xff]
  %v2090 = vld [vmem:[%s0 + $0x130] sm:$0xff]
  %v2091 = vld [vmem:[%s0 + $0x138] sm:$0xff]
  %v2092 = vld [vmem:[%s0 + $0x140] sm:$0xff]
  %v2093 = vld [vmem:[%s0 + $0x148] sm:$0xff]
  %v2095 = vsel %vm495, %v2086, 0
  %v2098 = vsel %vm495, %v2087, 0
  %v2101 = vsel %vm495, %v2088, 0
  %v2104 = vsel %vm495, %v2089, 0
  %v2107 = vsel %vm495, %v2090, 0
  %v2110 = vsel %vm495, %v2091, 0
  %v2113 = vsel %vm495, %v2092, 0
  %v2116 = vsel %vm495, %v2093, 0
  %2118 = vmatprep.subr.mxu0 0.0
  %2119 = vmatpush1.msra.mxu0 0.0
  %2120 = vmatprep.subr.mxu0 0.0
  %2121 = vmatpush1.msra.mxu0 0.0
  %2122 = vmatprep.subr.mxu0 0.0
  %2123 = vmatpush1.msra.mxu0 0.0
  %2124 = vmatprep.subr.mxu0 0.0
  %2125 = vmatpush1.msra.mxu0 0.0
  %2126 = vmatprep.subr.mxu0 0.0
  %2127 = vmatpush1.msra.mxu0 0.0
  %2128 = vmatprep.subr.mxu0 0.0
  %2129 = vmatpush1.msra.mxu0 0.0
  %2130 = vmatprep.subr.mxu0 0.0
  %2131 = vmatpush1.msra.mxu0 0.0
  %2132 = vmatprep.subr.mxu0 0.0
  %2133 = vmatpush1.msra.mxu0 0.0
  %2134 = vmatprep.subr.mxu0 0.0
  %2135 = vmatpush1.msra.mxu0 0.0
  %2136 = vmatprep.subr.mxu0 0.0
  %2137 = vmatpush1.msra.mxu0 0.0
  %2138 = vmatprep.subr.mxu0 0.0
  %2139 = vmatpush1.msra.mxu0 0.0
  %2140 = vmatprep.subr.mxu0 0.0
  %2141 = vmatpush1.msra.mxu0 0.0
  %2142 = vmatprep.subr.mxu0 0.0
  %2143 = vmatpush1.msra.mxu0 0.0
  %2144 = vmatprep.subr.mxu0 0.0
  %2145 = vmatpush1.msra.mxu0 0.0
  %2146 = vmatprep.subr.mxu0 0.0
  %2147 = vmatpush1.msra.mxu0 %v1913
  %2148 = vmatprep.subr.mxu0 0.0
  %2149 = vmatpush1.msra.mxu0 %v1912
  %2150 = vmatprep.subr.mxu0 0.0
  %2151 = vmatpush2.msra.mxu0 0.0
  %2152 = vmatprep.subr.mxu0 0.0
  %2153 = vmatpush2.msra.mxu0 0.0
  %2154 = vmatprep.subr.mxu0 0.0
  %2155 = vmatpush2.msra.mxu0 0.0
  %2156 = vmatprep.subr.mxu0 0.0
  %2157 = vmatpush2.msra.mxu0 0.0
  %2158 = vmatprep.subr.mxu0 0.0
  %2159 = vmatpush2.msra.mxu0 0.0
  %2160 = vmatprep.subr.mxu0 0.0
  %2161 = vmatpush2.msra.mxu0 0.0
  %2162 = vmatprep.subr.mxu0 0.0
  %2163 = vmatpush2.msra.mxu0 0.0
  %2164 = vmatprep.subr.mxu0 0.0
  %2165 = vmatpush2.msra.mxu0 0.0
  %2166 = vmatprep.subr.mxu0 0.0
  %2167 = vmatpush2.msra.mxu0 0.0
  %2168 = vmatprep.subr.mxu0 0.0
  %2169 = vmatpush2.msra.mxu0 0.0
  %2170 = vmatprep.subr.mxu0 0.0
  %2171 = vmatpush2.msra.mxu0 0.0
  %2172 = vmatprep.subr.mxu0 0.0
  %2173 = vmatpush2.msra.mxu0 0.0
  %2174 = vmatprep.subr.mxu0 0.0
  %2175 = vmatpush2.msra.mxu0 0.0
  %2176 = vmatprep.subr.mxu0 0.0
  %2177 = vmatpush2.msra.mxu0 0.0
  %2178 = vmatprep.subr.mxu0 0.0
  %2179 = vmatpush2.msra.mxu0 0.0
  %2180 = vmatprep.subr.mxu0 0.0
  %2181 = vmatpush2.msra.mxu0 0.0
  %2182 = vmatprep.mubr.f32.mxu0 0.0
  %2183 = vmatmul.mubr.f32.gmra.mxu0 %v2095
  %v2184 = vpop.f32.mrf.mxu0
  %v2185 = vadd.f32 0.0, %v2184
  %v2186 = vpop.f32.mrf.mxu0
  %2187 = vmatprep.mubr.f32.mxu0 0.0
  %2188 = vmatmul.mubr.f32.gmra.mxu0 %v2098
  %v2189 = vpop.f32.mrf.mxu0
  %v2190 = vadd.f32 0.0, %v2189
  %v2191 = vpop.f32.mrf.mxu0
  %2192 = vmatprep.mubr.f32.mxu0 0.0
  %2193 = vmatmul.mubr.f32.gmra.mxu0 %v2101
  %v2194 = vpop.f32.mrf.mxu0
  %v2195 = vadd.f32 0.0, %v2194
  %v2196 = vpop.f32.mrf.mxu0
  %2197 = vmatprep.mubr.f32.mxu0 0.0
  %2198 = vmatmul.mubr.f32.gmra.mxu0 %v2104
  %v2199 = vpop.f32.mrf.mxu0
  %v2200 = vadd.f32 0.0, %v2199
  %v2201 = vpop.f32.mrf.mxu0
  %2202 = vmatprep.mubr.f32.mxu0 0.0
  %2203 = vmatmul.mubr.f32.gmra.mxu0 %v2107
  %v2204 = vpop.f32.mrf.mxu0
  %v2205 = vadd.f32 0.0, %v2204
  %v2206 = vpop.f32.mrf.mxu0
  %2207 = vmatprep.mubr.f32.mxu0 0.0
  %2208 = vmatmul.mubr.f32.gmra.mxu0 %v2110
  %v2209 = vpop.f32.mrf.mxu0
  %v2210 = vadd.f32 0.0, %v2209
  %v2211 = vpop.f32.mrf.mxu0
  %2212 = vmatprep.mubr.f32.mxu0 0.0
  %2213 = vmatmul.mubr.f32.gmra.mxu0 %v2113
  %v2214 = vpop.f32.mrf.mxu0
  %v2215 = vadd.f32 0.0, %v2214
  %v2216 = vpop.f32.mrf.mxu0
  %2217 = vmatprep.mubr.f32.mxu0 0.0
  %2218 = vmatmul.mubr.f32.gmra.mxu0 %v2116
  %v2219 = vpop.f32.mrf.mxu0
  %v2220 = vadd.f32 0.0, %v2219
  %v2221 = vpop.f32.mrf.mxu0
  %2222 = vdwg.mxu0
  %v2223 = vld [vmem:[%s0 + $0x158] sm:$0xff]
  %v2224 = vld [vmem:[%s0 + $0x160] sm:$0xff]
  %v2225 = vld [vmem:[%s0 + $0x168] sm:$0xff]
  %v2226 = vld [vmem:[%s0 + $0x170] sm:$0xff]
  %v2227 = vld [vmem:[%s0 + $0x178] sm:$0xff]
  %v2228 = vld [vmem:[%s0 + $0x180] sm:$0xff]
  %v2229 = vld [vmem:[%s0 + $0x188] sm:$0xff]
  %v2230 = vld [vmem:[%s0 + $0x190] sm:$0xff]
  %2232 = vset.pattern.permute.xlu0 0
  %2233 = vperm.xlu0 %2232, %v2185
  %v2234 = vpop.permute.xlu0 %2233
  %2237 = vset.pattern.permute.xlu0 0
  %2238 = vperm.xlu0 %2237, %v2190
  %v2239 = vpop.permute.xlu0 %2238
  %2242 = vset.pattern.permute.xlu0 0
  %2243 = vperm.xlu0 %2242, %v2195
  %v2244 = vpop.permute.xlu0 %2243
  %2247 = vset.pattern.permute.xlu0 0
  %2248 = vperm.xlu0 %2247, %v2200
  %v2249 = vpop.permute.xlu0 %2248
  %2252 = vset.pattern.permute.xlu0 0
  %2253 = vperm.xlu0 %2252, %v2205
  %v2254 = vpop.permute.xlu0 %2253
  %2257 = vset.pattern.permute.xlu0 0
  %2258 = vperm.xlu0 %2257, %v2210
  %v2259 = vpop.permute.xlu0 %2258
  %2262 = vset.pattern.permute.xlu0 0
  %2263 = vperm.xlu0 %2262, %v2215
  %v2264 = vpop.permute.xlu0 %2263
  %2267 = vset.pattern.permute.xlu0 0
  %2268 = vperm.xlu0 %2267, %v2220
  %v2269 = vpop.permute.xlu0 %2268
  %v2271 = vmul.f32 %v1260, %v2234
  %v2272 = vmul.f32 %v1261, %v2239
  %v2273 = vmul.f32 %v1262, %v2244
  %v2274 = vmul.f32 %v1263, %v2249
  %v2275 = vmul.f32 %v1558, %v2254
  %v2276 = vmul.f32 %v1559, %v2259
  %v2277 = vmul.f32 %v1560, %v2264
  %v2278 = vmul.f32 %v1561, %v2269
  %v2280 = vsel %vm770, %v2223, 0
  %v2283 = vsel %vm770, %v2224, 0
  %v2286 = vsel %vm770, %v2225, 0
  %v2289 = vsel %vm770, %v2226, 0
  %v2292 = vsel %vm770, %v2227, 0
  %v2295 = vsel %vm770, %v2228, 0
  %v2298 = vsel %vm770, %v2229, 0
  %v2301 = vsel %vm770, %v2230, 0
  %2303 = vmatprep.subr.mxu0 0.0
  %2304 = vmatpush1.msra.mxu0 0.0
  %2305 = vmatprep.subr.mxu0 0.0
  %2306 = vmatpush1.msra.mxu0 0.0
  %2307 = vmatprep.subr.mxu0 0.0
  %2308 = vmatpush1.msra.mxu0 0.0
  %2309 = vmatprep.subr.mxu0 0.0
  %2310 = vmatpush1.msra.mxu0 0.0
  %2311 = vmatprep.subr.mxu0 0.0
  %2312 = vmatpush1.msra.mxu0 0.0
  %2313 = vmatprep.subr.mxu0 0.0
  %2314 = vmatpush1.msra.mxu0 0.0
  %2315 = vmatprep.subr.mxu0 0.0
  %2316 = vmatpush1.msra.mxu0 0.0
  %2317 = vmatprep.subr.mxu0 0.0
  %2318 = vmatpush1.msra.mxu0 0.0
  %2319 = vmatprep.subr.mxu0 0.0
  %2320 = vmatpush1.msra.mxu0 %v2278
  %2321 = vmatprep.subr.mxu0 0.0
  %2322 = vmatpush1.msra.mxu0 %v2277
  %2323 = vmatprep.subr.mxu0 0.0
  %2324 = vmatpush1.msra.mxu0 %v2276
  %2325 = vmatprep.subr.mxu0 0.0
  %2326 = vmatpush1.msra.mxu0 %v2275
  %2327 = vmatprep.subr.mxu0 0.0
  %2328 = vmatpush1.msra.mxu0 %v2274
  %2329 = vmatprep.subr.mxu0 0.0
  %2330 = vmatpush1.msra.mxu0 %v2273
  %2331 = vmatprep.subr.mxu0 0.0
  %2332 = vmatpush1.msra.mxu0 %v2272
  %2333 = vmatprep.subr.mxu0 0.0
  %2334 = vmatpush1.msra.mxu0 %v2271
  %2335 = vmatprep.subr.mxu0 0.0
  %2336 = vmatpush2.msra.mxu0 0.0
  %2337 = vmatprep.subr.mxu0 0.0
  %2338 = vmatpush2.msra.mxu0 0.0
  %2339 = vmatprep.subr.mxu0 0.0
  %2340 = vmatpush2.msra.mxu0 0.0
  %2341 = vmatprep.subr.mxu0 0.0
  %2342 = vmatpush2.msra.mxu0 0.0
  %2343 = vmatprep.subr.mxu0 0.0
  %2344 = vmatpush2.msra.mxu0 0.0
  %2345 = vmatprep.subr.mxu0 0.0
  %2346 = vmatpush2.msra.mxu0 0.0
  %2347 = vmatprep.subr.mxu0 0.0
  %2348 = vmatpush2.msra.mxu0 0.0
  %2349 = vmatprep.subr.mxu0 0.0
  %2350 = vmatpush2.msra.mxu0 0.0
  %2351 = vmatprep.subr.mxu0 0.0
  %2352 = vmatpush2.msra.mxu0 0.0
  %2353 = vmatprep.subr.mxu0 0.0
  %2354 = vmatpush2.msra.mxu0 0.0
  %2355 = vmatprep.subr.mxu0 0.0
  %2356 = vmatpush2.msra.mxu0 0.0
  %2357 = vmatprep.subr.mxu0 0.0
  %2358 = vmatpush2.msra.mxu0 0.0
  %2359 = vmatprep.subr.mxu0 0.0
  %2360 = vmatpush2.msra.mxu0 0.0
  %2361 = vmatprep.subr.mxu0 0.0
  %2362 = vmatpush2.msra.mxu0 0.0
  %2363 = vmatprep.subr.mxu0 0.0
  %2364 = vmatpush2.msra.mxu0 0.0
  %2365 = vmatprep.subr.mxu0 0.0
  %2366 = vmatpush2.msra.mxu0 0.0
  %2367 = vmatprep.mubr.f32.mxu0 0.0
  %2368 = vmatmul.mubr.f32.gmra.mxu0 %v2280
  %v2369 = vpop.f32.mrf.mxu0
  %v2370 = vadd.f32 0.0, %v2369
  %v2371 = vpop.f32.mrf.mxu0
  %2372 = vmatprep.mubr.f32.mxu0 0.0
  %2373 = vmatmul.mubr.f32.gmra.mxu0 %v2283
  %v2374 = vpop.f32.mrf.mxu0
  %v2375 = vadd.f32 0.0, %v2374
  %v2376 = vpop.f32.mrf.mxu0
  %2377 = vmatprep.mubr.f32.mxu0 0.0
  %2378 = vmatmul.mubr.f32.gmra.mxu0 %v2286
  %v2379 = vpop.f32.mrf.mxu0
  %v2380 = vadd.f32 0.0, %v2379
  %v2381 = vpop.f32.mrf.mxu0
  %2382 = vmatprep.mubr.f32.mxu0 0.0
  %2383 = vmatmul.mubr.f32.gmra.mxu0 %v2289
  %v2384 = vpop.f32.mrf.mxu0
  %v2385 = vadd.f32 0.0, %v2384
  %v2386 = vpop.f32.mrf.mxu0
  %2387 = vmatprep.mubr.f32.mxu0 0.0
  %2388 = vmatmul.mubr.f32.gmra.mxu0 %v2292
  %v2389 = vpop.f32.mrf.mxu0
  %v2390 = vadd.f32 0.0, %v2389
  %v2391 = vpop.f32.mrf.mxu0
  %2392 = vmatprep.mubr.f32.mxu0 0.0
  %2393 = vmatmul.mubr.f32.gmra.mxu0 %v2295
  %v2394 = vpop.f32.mrf.mxu0
  %v2395 = vadd.f32 0.0, %v2394
  %v2396 = vpop.f32.mrf.mxu0
  %2397 = vmatprep.mubr.f32.mxu0 0.0
  %2398 = vmatmul.mubr.f32.gmra.mxu0 %v2298
  %v2399 = vpop.f32.mrf.mxu0
  %v2400 = vadd.f32 0.0, %v2399
  %v2401 = vpop.f32.mrf.mxu0
  %2402 = vmatprep.mubr.f32.mxu0 0.0
  %2403 = vmatmul.mubr.f32.gmra.mxu0 %v2301
  %v2404 = vpop.f32.mrf.mxu0
  %v2405 = vadd.f32 0.0, %v2404
  %v2406 = vpop.f32.mrf.mxu0
  %2407 = vdwg.mxu0
  %v2408 = vsel %vm172, %v2370, 0.0
  %2409 = vadd.xlane.f32.xlu0 %v2408
  %v2410 = vpop.xlane.xlu0 %2409
  %v2411 = vsel %vm172, %v2375, 0.0
  %2412 = vadd.xlane.f32.xlu0 %v2411
  %v2413 = vpop.xlane.xlu0 %2412
  %v2414 = vsel %vm172, %v2380, 0.0
  %2415 = vadd.xlane.f32.xlu0 %v2414
  %v2416 = vpop.xlane.xlu0 %2415
  %v2417 = vsel %vm172, %v2385, 0.0
  %2418 = vadd.xlane.f32.xlu0 %v2417
  %v2419 = vpop.xlane.xlu0 %2418
  %v2420 = vsel %vm172, %v2390, 0.0
  %2421 = vadd.xlane.f32.xlu0 %v2420
  %v2422 = vpop.xlane.xlu0 %2421
  %v2423 = vsel %vm172, %v2395, 0.0
  %2424 = vadd.xlane.f32.xlu0 %v2423
  %v2425 = vpop.xlane.xlu0 %2424
  %v2426 = vsel %vm172, %v2400, 0.0
  %2427 = vadd.xlane.f32.xlu0 %v2426
  %v2428 = vpop.xlane.xlu0 %2427
  %v2429 = vsel %vm172, %v2405, 0.0
  %2430 = vadd.xlane.f32.xlu0 %v2429
  %v2431 = vpop.xlane.xlu0 %2430
  %v2432 = vadd.f32 %v2410, %v2413
  %v2433 = vadd.f32 %v2432, %v2416
  %v2434 = vadd.f32 %v2433, %v2419
  %v2435 = vadd.f32 %v2434, %v2422
  %v2436 = vadd.f32 %v2435, %v2425
  %v2437 = vadd.f32 %v2436, %v2428
  %v2438 = vadd.f32 %v2437, %v2431
  %v2439 = vrot.slane %v2438, 4
  %v2440 = vadd.f32 %v2438, %v2439
  %v2441 = vrot.slane %v2440, 2
  %v2442 = vadd.f32 %v2440, %v2441
  %v2443 = vrot.slane %v2442, 1
  %v2444 = vadd.f32 %v2442, %v2443
  %v2445 = vmul.f32 %v2444, 0.001953125
  %v2446 = vand.u32 %v293, 7
  %v2447 = vand.u32 %v294, 7
  %v2448 = vand.u32 %v295, 7
  %v2449 = vand.u32 %v296, 7
  %vm2450 = vcmp.eq.s32.totalorder %v2446, 0
  %vm2451 = vcmp.eq.s32.totalorder %v2447, 0
  %vm2452 = vcmp.eq.s32.totalorder %v2448, 0
  %vm2453 = vcmp.eq.s32.totalorder %v2449, 0
  %v2454 = vsel %vm2450, 1, 0
  %v2455 = vsel %vm2451, 1, 0
  %v2456 = vsel %vm2452, 1, 0
  %v2457 = vsel %vm2453, 1, 0
  %v2458 = vcvt.s32.f32 %v2454
  %v2459 = vcvt.s32.f32 %v2455
  %v2460 = vcvt.s32.f32 %v2456
  %v2461 = vcvt.s32.f32 %v2457
  %vm2462 = vcmp.eq.s32.totalorder %v2446, 7
  %vm2463 = vcmp.eq.s32.totalorder %v2447, 7
  %vm2464 = vcmp.eq.s32.totalorder %v2448, 7
  %vm2465 = vcmp.eq.s32.totalorder %v2449, 7
  %v2466 = vsel %vm2462, 1, 0
  %v2467 = vsel %vm2463, 1, 0
  %v2468 = vsel %vm2464, 1, 0
  %v2469 = vsel %vm2465, 1, 0
  %v2470 = vcvt.s32.f32 %v2466
  %v2471 = vcvt.s32.f32 %v2467
  %v2472 = vcvt.s32.f32 %v2468
  %v2473 = vcvt.s32.f32 %v2469
  %v2474 = vrot.slane %v2390, 7
  %v2475 = vrot.slane %v2395, 7
  %v2476 = vrot.slane %v2400, 7
  %v2477 = vrot.slane %v2405, 7
  %v2478 = vsel %vm365, %v2476, %v2477
  %v2479 = vsel %vm365, %v2475, %v2476
  %v2480 = vsel %vm365, %v2474, %v2475
  %v2481 = vsel %vm365, %v2477, %v2474
  %v2482 = vrot.slane %v2390, 1
  %v2483 = vrot.slane %v2395, 1
  %v2484 = vrot.slane %v2400, 1
  %v2485 = vrot.slane %v2405, 1
  %v2486 = vsel %vm382, %v2484, %v2485
  %v2487 = vsel %vm382, %v2483, %v2484
  %v2488 = vsel %vm382, %v2482, %v2483
  %v2489 = vsel %vm382, %v2485, %v2482
  %v2490 = vsub.f32 %v2488, %v2481
  %v2491 = vsub.f32 %v2487, %v2480
  %v2492 = vsub.f32 %v2486, %v2479
  %v2493 = vsub.f32 %v2489, %v2478
  %v2494 = vmul.f32 %v2458, %v2490
  %v2495 = vmul.f32 %v2459, %v2491
  %v2496 = vmul.f32 %v2460, %v2492
  %v2497 = vmul.f32 %v2461, %v2493
  %v2498 = vadd.f32 %v2481, %v2494
  %v2499 = vadd.f32 %v2480, %v2495
  %v2500 = vadd.f32 %v2479, %v2496
  %v2501 = vadd.f32 %v2478, %v2497
  %v2502 = vsub.f32 %v2481, %v2488
  %v2503 = vsub.f32 %v2480, %v2487
  %v2504 = vsub.f32 %v2479, %v2486
  %v2505 = vsub.f32 %v2478, %v2489
  %v2506 = vmul.f32 %v2470, %v2502
  %v2507 = vmul.f32 %v2471, %v2503
  %v2508 = vmul.f32 %v2472, %v2504
  %v2509 = vmul.f32 %v2473, %v2505
  %v2510 = vadd.f32 %v2488, %v2506
  %v2511 = vadd.f32 %v2487, %v2507
  %v2512 = vadd.f32 %v2486, %v2508
  %v2513 = vadd.f32 %v2489, %v2509
  %2518 = vrot.lane.b32.xlu0 %v2390, 8
  %v2519 = vpop.permute.xlu0 %2518
  %2520 = vrot.lane.b32.xlu0 %v2395, 8
  %v2521 = vpop.permute.xlu0 %2520
  %2522 = vrot.lane.b32.xlu0 %v2400, 8
  %v2523 = vpop.permute.xlu0 %2522
  %2524 = vrot.lane.b32.xlu0 %v2405, 8
  %v2525 = vpop.permute.xlu0 %2524
  %2534 = vrot.lane.b32.xlu0 %v2510, 16
  %v2535 = vpop.permute.xlu0 %2534
  %2536 = vrot.lane.b32.xlu0 %v2511, 16
  %v2537 = vpop.permute.xlu0 %2536
  %2538 = vrot.lane.b32.xlu0 %v2512, 16
  %v2539 = vpop.permute.xlu0 %2538
  %2540 = vrot.lane.b32.xlu0 %v2513, 16
  %v2541 = vpop.permute.xlu0 %2540
  %v2546 = vsel %vm172, %v2498, %v2519
  %v2547 = vsel %vm172, %v2499, %v2521
  %v2548 = vsel %vm172, %v2500, %v2523
  %v2549 = vsel %vm172, %v2501, %v2525
  %v2550 = vsel %vm495, %v2546, %v2535
  %v2551 = vsel %vm495, %v2547, %v2537
  %v2552 = vsel %vm495, %v2548, %v2539
  %v2553 = vsel %vm495, %v2549, %v2541
  %v2554 = vld [vmem:[%s0 + $0x198] sm:$0xff]
  %v2555 = vld [vmem:[%s0 + $0x1a0] sm:$0xff]
  %v2556 = vld [vmem:[%s0 + $0x1a8] sm:$0xff]
  %v2558 = vsel %vm512, %v2550, 0
  %v2561 = vsel %vm512, %v2551, 0
  %v2564 = vsel %vm512, %v2552, 0
  %v2567 = vsel %vm512, %v2553, 0
  %2569 = vmatprep.subr.mxu0 0.0
  %2570 = vmatpush1.msra.mxu0 0.0
  %2571 = vmatprep.subr.mxu0 0.0
  %2572 = vmatpush1.msra.mxu0 0.0
  %2573 = vmatprep.subr.mxu0 0.0
  %2574 = vmatpush1.msra.mxu0 0.0
  %2575 = vmatprep.subr.mxu0 0.0
  %2576 = vmatpush1.msra.mxu0 0.0
  %2577 = vmatprep.subr.mxu0 0.0
  %2578 = vmatpush1.msra.mxu0 0.0
  %2579 = vmatprep.subr.mxu0 0.0
  %2580 = vmatpush1.msra.mxu0 0.0
  %2581 = vmatprep.subr.mxu0 0.0
  %2582 = vmatpush1.msra.mxu0 0.0
  %2583 = vmatprep.subr.mxu0 0.0
  %2584 = vmatpush1.msra.mxu0 0.0
  %2585 = vmatprep.subr.mxu0 0.0
  %2586 = vmatpush1.msra.mxu0 0.0
  %2587 = vmatprep.subr.mxu0 0.0
  %2588 = vmatpush1.msra.mxu0 0.0
  %2589 = vmatprep.subr.mxu0 0.0
  %2590 = vmatpush1.msra.mxu0 0.0
  %2591 = vmatprep.subr.mxu0 0.0
  %2592 = vmatpush1.msra.mxu0 0.0
  %2593 = vmatprep.subr.mxu0 0.0
  %2594 = vmatpush1.msra.mxu0 0.0
  %2595 = vmatprep.subr.mxu0 0.0
  %2596 = vmatpush1.msra.mxu0 %v2556
  %2597 = vmatprep.subr.mxu0 0.0
  %2598 = vmatpush1.msra.mxu0 %v2555
  %2599 = vmatprep.subr.mxu0 0.0
  %2600 = vmatpush1.msra.mxu0 %v2554
  %2601 = vmatprep.subr.mxu0 0.0
  %2602 = vmatpush2.msra.mxu0 0.0
  %2603 = vmatprep.subr.mxu0 0.0
  %2604 = vmatpush2.msra.mxu0 0.0
  %2605 = vmatprep.subr.mxu0 0.0
  %2606 = vmatpush2.msra.mxu0 0.0
  %2607 = vmatprep.subr.mxu0 0.0
  %2608 = vmatpush2.msra.mxu0 0.0
  %2609 = vmatprep.subr.mxu0 0.0
  %2610 = vmatpush2.msra.mxu0 0.0
  %2611 = vmatprep.subr.mxu0 0.0
  %2612 = vmatpush2.msra.mxu0 0.0
  %2613 = vmatprep.subr.mxu0 0.0
  %2614 = vmatpush2.msra.mxu0 0.0
  %2615 = vmatprep.subr.mxu0 0.0
  %2616 = vmatpush2.msra.mxu0 0.0
  %2617 = vmatprep.subr.mxu0 0.0
  %2618 = vmatpush2.msra.mxu0 0.0
  %2619 = vmatprep.subr.mxu0 0.0
  %2620 = vmatpush2.msra.mxu0 0.0
  %2621 = vmatprep.subr.mxu0 0.0
  %2622 = vmatpush2.msra.mxu0 0.0
  %2623 = vmatprep.subr.mxu0 0.0
  %2624 = vmatpush2.msra.mxu0 0.0
  %2625 = vmatprep.subr.mxu0 0.0
  %2626 = vmatpush2.msra.mxu0 0.0
  %2627 = vmatprep.subr.mxu0 0.0
  %2628 = vmatpush2.msra.mxu0 0.0
  %2629 = vmatprep.subr.mxu0 0.0
  %2630 = vmatpush2.msra.mxu0 0.0
  %2631 = vmatprep.subr.mxu0 0.0
  %2632 = vmatpush2.msra.mxu0 0.0
  %2633 = vmatprep.mubr.f32.mxu0 0.0
  %2634 = vmatmul.mubr.f32.gmra.mxu0 %v2558
  %v2635 = vpop.f32.mrf.mxu0
  %v2636 = vadd.f32 0.0, %v2635
  %v2637 = vpop.f32.mrf.mxu0
  %2638 = vmatprep.mubr.f32.mxu0 0.0
  %2639 = vmatmul.mubr.f32.gmra.mxu0 %v2561
  %v2640 = vpop.f32.mrf.mxu0
  %v2641 = vadd.f32 0.0, %v2640
  %v2642 = vpop.f32.mrf.mxu0
  %2643 = vmatprep.mubr.f32.mxu0 0.0
  %2644 = vmatmul.mubr.f32.gmra.mxu0 %v2564
  %v2645 = vpop.f32.mrf.mxu0
  %v2646 = vadd.f32 0.0, %v2645
  %v2647 = vpop.f32.mrf.mxu0
  %2648 = vmatprep.mubr.f32.mxu0 0.0
  %2649 = vmatmul.mubr.f32.gmra.mxu0 %v2567
  %v2650 = vpop.f32.mrf.mxu0
  %v2651 = vadd.f32 0.0, %v2650
  %v2652 = vpop.f32.mrf.mxu0
  %2653 = vdwg.mxu0
  %vm2654 = vcmp.ge.f32.partialorder %v2636, 0.0
  %vm2655 = vcmp.ge.f32.partialorder %v2641, 0.0
  %vm2656 = vcmp.ge.f32.partialorder %v2646, 0.0
  %vm2657 = vcmp.ge.f32.partialorder %v2651, 0.0
  %v2658 = vmul.f32 %v2636, 0.25
  %v2659 = vmul.f32 %v2641, 0.25
  %v2660 = vmul.f32 %v2646, 0.25
  %v2661 = vmul.f32 %v2651, 0.25
  %v2662 = vsel %vm2654, %v2636, %v2658
  %v2663 = vsel %vm2655, %v2641, %v2659
  %v2664 = vsel %vm2656, %v2646, %v2660
  %v2665 = vsel %vm2657, %v2651, %v2661
  %v2666 = vld [vmem:[%s0 + $0x1b0] sm:$0xff]
  %v2668 = vsel %vm172, %v2662, 0
  %v2671 = vsel %vm172, %v2663, 0
  %v2674 = vsel %vm172, %v2664, 0
  %v2677 = vsel %vm172, %v2665, 0
  %2679 = vmatprep.subr.mxu0 0.0
  %2680 = vmatpush1.msra.mxu0 0.0
  %2681 = vmatprep.subr.mxu0 0.0
  %2682 = vmatpush1.msra.mxu0 0.0
  %2683 = vmatprep.subr.mxu0 0.0
  %2684 = vmatpush1.msra.mxu0 0.0
  %2685 = vmatprep.subr.mxu0 0.0
  %2686 = vmatpush1.msra.mxu0 0.0
  %2687 = vmatprep.subr.mxu0 0.0
  %2688 = vmatpush1.msra.mxu0 0.0
  %2689 = vmatprep.subr.mxu0 0.0
  %2690 = vmatpush1.msra.mxu0 0.0
  %2691 = vmatprep.subr.mxu0 0.0
  %2692 = vmatpush1.msra.mxu0 0.0
  %2693 = vmatprep.subr.mxu0 0.0
  %2694 = vmatpush1.msra.mxu0 0.0
  %2695 = vmatprep.subr.mxu0 0.0
  %2696 = vmatpush1.msra.mxu0 0.0
  %2697 = vmatprep.subr.mxu0 0.0
  %2698 = vmatpush1.msra.mxu0 0.0
  %2699 = vmatprep.subr.mxu0 0.0
  %2700 = vmatpush1.msra.mxu0 0.0
  %2701 = vmatprep.subr.mxu0 0.0
  %2702 = vmatpush1.msra.mxu0 0.0
  %2703 = vmatprep.subr.mxu0 0.0
  %2704 = vmatpush1.msra.mxu0 0.0
  %2705 = vmatprep.subr.mxu0 0.0
  %2706 = vmatpush1.msra.mxu0 0.0
  %2707 = vmatprep.subr.mxu0 0.0
  %2708 = vmatpush1.msra.mxu0 0.0
  %2709 = vmatprep.subr.mxu0 0.0
  %2710 = vmatpush1.msra.mxu0 %v2666
  %2711 = vmatprep.subr.mxu0 0.0
  %2712 = vmatpush2.msra.mxu0 0.0
  %2713 = vmatprep.subr.mxu0 0.0
  %2714 = vmatpush2.msra.mxu0 0.0
  %2715 = vmatprep.subr.mxu0 0.0
  %2716 = vmatpush2.msra.mxu0 0.0
  %2717 = vmatprep.subr.mxu0 0.0
  %2718 = vmatpush2.msra.mxu0 0.0
  %2719 = vmatprep.subr.mxu0 0.0
  %2720 = vmatpush2.msra.mxu0 0.0
  %2721 = vmatprep.subr.mxu0 0.0
  %2722 = vmatpush2.msra.mxu0 0.0
  %2723 = vmatprep.subr.mxu0 0.0
  %2724 = vmatpush2.msra.mxu0 0.0
  %2725 = vmatprep.subr.mxu0 0.0
  %2726 = vmatpush2.msra.mxu0 0.0
  %2727 = vmatprep.subr.mxu0 0.0
  %2728 = vmatpush2.msra.mxu0 0.0
  %2729 = vmatprep.subr.mxu0 0.0
  %2730 = vmatpush2.msra.mxu0 0.0
  %2731 = vmatprep.subr.mxu0 0.0
  %2732 = vmatpush2.msra.mxu0 0.0
  %2733 = vmatprep.subr.mxu0 0.0
  %2734 = vmatpush2.msra.mxu0 0.0
  %2735 = vmatprep.subr.mxu0 0.0
  %2736 = vmatpush2.msra.mxu0 0.0
  %2737 = vmatprep.subr.mxu0 0.0
  %2738 = vmatpush2.msra.mxu0 0.0
  %2739 = vmatprep.subr.mxu0 0.0
  %2740 = vmatpush2.msra.mxu0 0.0
  %2741 = vmatprep.subr.mxu0 0.0
  %2742 = vmatpush2.msra.mxu0 0.0
  %2743 = vmatprep.mubr.f32.mxu0 0.0
  %2744 = vmatmul.mubr.f32.gmra.mxu0 %v2668
  %v2745 = vpop.f32.mrf.mxu0
  %v2746 = vadd.f32 0.0, %v2745
  %v2747 = vpop.f32.mrf.mxu0
  %2748 = vmatprep.mubr.f32.mxu0 0.0
  %2749 = vmatmul.mubr.f32.gmra.mxu0 %v2671
  %v2750 = vpop.f32.mrf.mxu0
  %v2751 = vadd.f32 0.0, %v2750
  %v2752 = vpop.f32.mrf.mxu0
  %2753 = vmatprep.mubr.f32.mxu0 0.0
  %2754 = vmatmul.mubr.f32.gmra.mxu0 %v2674
  %v2755 = vpop.f32.mrf.mxu0
  %v2756 = vadd.f32 0.0, %v2755
  %v2757 = vpop.f32.mrf.mxu0
  %2758 = vmatprep.mubr.f32.mxu0 0.0
  %2759 = vmatmul.mubr.f32.gmra.mxu0 %v2677
  %v2760 = vpop.f32.mrf.mxu0
  %v2761 = vadd.f32 0.0, %v2760
  %v2762 = vpop.f32.mrf.mxu0
  %2763 = vdwg.mxu0
  %v2764 = vtanh.pop %v2746
  %v2765 = vtanh.pop %v2751
  %v2766 = vtanh.pop %v2756
  %v2767 = vtanh.pop %v2761
  %v2768 = vadd.f32 %v2370, %v2764
  %v2769 = vadd.f32 %v2375, %v2765
  %v2770 = vadd.f32 %v2380, %v2766
  %v2771 = vadd.f32 %v2385, %v2767
  %v2772 = vrot.slane %v2768, 7
  %v2773 = vrot.slane %v2769, 7
  %v2774 = vrot.slane %v2770, 7
  %v2775 = vrot.slane %v2771, 7
  %v2776 = vsel %vm365, %v2774, %v2775
  %v2777 = vsel %vm365, %v2773, %v2774
  %v2778 = vsel %vm365, %v2772, %v2773
  %v2779 = vsel %vm365, %v2775, %v2772
  %v2780 = vrot.slane %v2768, 1
  %v2781 = vrot.slane %v2769, 1
  %v2782 = vrot.slane %v2770, 1
  %v2783 = vrot.slane %v2771, 1
  %v2784 = vsel %vm382, %v2782, %v2783
  %v2785 = vsel %vm382, %v2781, %v2782
  %v2786 = vsel %vm382, %v2780, %v2781
  %v2787 = vsel %vm382, %v2783, %v2780
  %v2788 = vsub.f32 %v2786, %v2779
  %v2789 = vsub.f32 %v2785, %v2778
  %v2790 = vsub.f32 %v2784, %v2777
  %v2791 = vsub.f32 %v2787, %v2776
  %v2792 = vmul.f32 %v2458, %v2788
  %v2793 = vmul.f32 %v2459, %v2789
  %v2794 = vmul.f32 %v2460, %v2790
  %v2795 = vmul.f32 %v2461, %v2791
  %v2796 = vadd.f32 %v2779, %v2792
  %v2797 = vadd.f32 %v2778, %v2793
  %v2798 = vadd.f32 %v2777, %v2794
  %v2799 = vadd.f32 %v2776, %v2795
  %v2800 = vsub.f32 %v2779, %v2786
  %v2801 = vsub.f32 %v2778, %v2785
  %v2802 = vsub.f32 %v2777, %v2784
  %v2803 = vsub.f32 %v2776, %v2787
  %v2804 = vmul.f32 %v2470, %v2800
  %v2805 = vmul.f32 %v2471, %v2801
  %v2806 = vmul.f32 %v2472, %v2802
  %v2807 = vmul.f32 %v2473, %v2803
  %v2808 = vadd.f32 %v2786, %v2804
  %v2809 = vadd.f32 %v2785, %v2805
  %v2810 = vadd.f32 %v2784, %v2806
  %v2811 = vadd.f32 %v2787, %v2807
  %2816 = vrot.lane.b32.xlu0 %v2768, 8
  %v2817 = vpop.permute.xlu0 %2816
  %2818 = vrot.lane.b32.xlu0 %v2769, 8
  %v2819 = vpop.permute.xlu0 %2818
  %2820 = vrot.lane.b32.xlu0 %v2770, 8
  %v2821 = vpop.permute.xlu0 %2820
  %2822 = vrot.lane.b32.xlu0 %v2771, 8
  %v2823 = vpop.permute.xlu0 %2822
  %2832 = vrot.lane.b32.xlu0 %v2808, 16
  %v2833 = vpop.permute.xlu0 %2832
  %2834 = vrot.lane.b32.xlu0 %v2809, 16
  %v2835 = vpop.permute.xlu0 %2834
  %2836 = vrot.lane.b32.xlu0 %v2810, 16
  %v2837 = vpop.permute.xlu0 %2836
  %2838 = vrot.lane.b32.xlu0 %v2811, 16
  %v2839 = vpop.permute.xlu0 %2838
  %v2844 = vsel %vm172, %v2796, %v2817
  %v2845 = vsel %vm172, %v2797, %v2819
  %v2846 = vsel %vm172, %v2798, %v2821
  %v2847 = vsel %vm172, %v2799, %v2823
  %v2848 = vsel %vm495, %v2844, %v2833
  %v2849 = vsel %vm495, %v2845, %v2835
  %v2850 = vsel %vm495, %v2846, %v2837
  %v2851 = vsel %vm495, %v2847, %v2839
  %v2852 = vld [vmem:[%s0 + $0x1b8] sm:$0xff]
  %v2853 = vld [vmem:[%s0 + $0x1c0] sm:$0xff]
  %v2854 = vld [vmem:[%s0 + $0x1c8] sm:$0xff]
  %v2856 = vsel %vm512, %v2848, 0
  %v2859 = vsel %vm512, %v2849, 0
  %v2862 = vsel %vm512, %v2850, 0
  %v2865 = vsel %vm512, %v2851, 0
  %2867 = vmatprep.subr.mxu0 0.0
  %2868 = vmatpush1.msra.mxu0 0.0
  %2869 = vmatprep.subr.mxu0 0.0
  %2870 = vmatpush1.msra.mxu0 0.0
  %2871 = vmatprep.subr.mxu0 0.0
  %2872 = vmatpush1.msra.mxu0 0.0
  %2873 = vmatprep.subr.mxu0 0.0
  %2874 = vmatpush1.msra.mxu0 0.0
  %2875 = vmatprep.subr.mxu0 0.0
  %2876 = vmatpush1.msra.mxu0 0.0
  %2877 = vmatprep.subr.mxu0 0.0
  %2878 = vmatpush1.msra.mxu0 0.0
  %2879 = vmatprep.subr.mxu0 0.0
  %2880 = vmatpush1.msra.mxu0 0.0
  %2881 = vmatprep.subr.mxu0 0.0
  %2882 = vmatpush1.msra.mxu0 0.0
  %2883 = vmatprep.subr.mxu0 0.0
  %2884 = vmatpush1.msra.mxu0 0.0
  %2885 = vmatprep.subr.mxu0 0.0
  %2886 = vmatpush1.msra.mxu0 0.0
  %2887 = vmatprep.subr.mxu0 0.0
  %2888 = vmatpush1.msra.mxu0 0.0
  %2889 = vmatprep.subr.mxu0 0.0
  %2890 = vmatpush1.msra.mxu0 0.0
  %2891 = vmatprep.subr.mxu0 0.0
  %2892 = vmatpush1.msra.mxu0 0.0
  %2893 = vmatprep.subr.mxu0 0.0
  %2894 = vmatpush1.msra.mxu0 %v2854
  %2895 = vmatprep.subr.mxu0 0.0
  %2896 = vmatpush1.msra.mxu0 %v2853
  %2897 = vmatprep.subr.mxu0 0.0
  %2898 = vmatpush1.msra.mxu0 %v2852
  %2899 = vmatprep.subr.mxu0 0.0
  %2900 = vmatpush2.msra.mxu0 0.0
  %2901 = vmatprep.subr.mxu0 0.0
  %2902 = vmatpush2.msra.mxu0 0.0
  %2903 = vmatprep.subr.mxu0 0.0
  %2904 = vmatpush2.msra.mxu0 0.0
  %2905 = vmatprep.subr.mxu0 0.0
  %2906 = vmatpush2.msra.mxu0 0.0
  %2907 = vmatprep.subr.mxu0 0.0
  %2908 = vmatpush2.msra.mxu0 0.0
  %2909 = vmatprep.subr.mxu0 0.0
  %2910 = vmatpush2.msra.mxu0 0.0
  %2911 = vmatprep.subr.mxu0 0.0
  %2912 = vmatpush2.msra.mxu0 0.0
  %2913 = vmatprep.subr.mxu0 0.0
  %2914 = vmatpush2.msra.mxu0 0.0
  %2915 = vmatprep.subr.mxu0 0.0
  %2916 = vmatpush2.msra.mxu0 0.0
  %2917 = vmatprep.subr.mxu0 0.0
  %2918 = vmatpush2.msra.mxu0 0.0
  %2919 = vmatprep.subr.mxu0 0.0
  %2920 = vmatpush2.msra.mxu0 0.0
  %2921 = vmatprep.subr.mxu0 0.0
  %2922 = vmatpush2.msra.mxu0 0.0
  %2923 = vmatprep.subr.mxu0 0.0
  %2924 = vmatpush2.msra.mxu0 0.0
  %2925 = vmatprep.subr.mxu0 0.0
  %2926 = vmatpush2.msra.mxu0 0.0
  %2927 = vmatprep.subr.mxu0 0.0
  %2928 = vmatpush2.msra.mxu0 0.0
  %2929 = vmatprep.subr.mxu0 0.0
  %2930 = vmatpush2.msra.mxu0 0.0
  %2931 = vmatprep.mubr.f32.mxu0 0.0
  %2932 = vmatmul.mubr.f32.gmra.mxu0 %v2856
  %v2933 = vpop.f32.mrf.mxu0
  %v2934 = vadd.f32 0.0, %v2933
  %v2935 = vpop.f32.mrf.mxu0
  %2936 = vmatprep.mubr.f32.mxu0 0.0
  %2937 = vmatmul.mubr.f32.gmra.mxu0 %v2859
  %v2938 = vpop.f32.mrf.mxu0
  %v2939 = vadd.f32 0.0, %v2938
  %v2940 = vpop.f32.mrf.mxu0
  %2941 = vmatprep.mubr.f32.mxu0 0.0
  %2942 = vmatmul.mubr.f32.gmra.mxu0 %v2862
  %v2943 = vpop.f32.mrf.mxu0
  %v2944 = vadd.f32 0.0, %v2943
  %v2945 = vpop.f32.mrf.mxu0
  %2946 = vmatprep.mubr.f32.mxu0 0.0
  %2947 = vmatmul.mubr.f32.gmra.mxu0 %v2865
  %v2948 = vpop.f32.mrf.mxu0
  %v2949 = vadd.f32 0.0, %v2948
  %v2950 = vpop.f32.mrf.mxu0
  %2951 = vdwg.mxu0
  %vm2952 = vcmp.ge.f32.partialorder %v2934, 0.0
  %vm2953 = vcmp.ge.f32.partialorder %v2939, 0.0
  %vm2954 = vcmp.ge.f32.partialorder %v2944, 0.0
  %vm2955 = vcmp.ge.f32.partialorder %v2949, 0.0
  %v2956 = vmul.f32 %v2934, 0.25
  %v2957 = vmul.f32 %v2939, 0.25
  %v2958 = vmul.f32 %v2944, 0.25
  %v2959 = vmul.f32 %v2949, 0.25
  %v2960 = vsel %vm2952, %v2934, %v2956
  %v2961 = vsel %vm2953, %v2939, %v2957
  %v2962 = vsel %vm2954, %v2944, %v2958
  %v2963 = vsel %vm2955, %v2949, %v2959
  %v2964 = vld [vmem:[%s0 + $0x1d0] sm:$0xff]
  %v2966 = vsel %vm172, %v2960, 0
  %v2969 = vsel %vm172, %v2961, 0
  %v2972 = vsel %vm172, %v2962, 0
  %v2975 = vsel %vm172, %v2963, 0
  %2977 = vmatprep.subr.mxu0 0.0
  %2978 = vmatpush1.msra.mxu0 0.0
  %2979 = vmatprep.subr.mxu0 0.0
  %2980 = vmatpush1.msra.mxu0 0.0
  %2981 = vmatprep.subr.mxu0 0.0
  %2982 = vmatpush1.msra.mxu0 0.0
  %2983 = vmatprep.subr.mxu0 0.0
  %2984 = vmatpush1.msra.mxu0 0.0
  %2985 = vmatprep.subr.mxu0 0.0
  %2986 = vmatpush1.msra.mxu0 0.0
  %2987 = vmatprep.subr.mxu0 0.0
  %2988 = vmatpush1.msra.mxu0 0.0
  %2989 = vmatprep.subr.mxu0 0.0
  %2990 = vmatpush1.msra.mxu0 0.0
  %2991 = vmatprep.subr.mxu0 0.0
  %2992 = vmatpush1.msra.mxu0 0.0
  %2993 = vmatprep.subr.mxu0 0.0
  %2994 = vmatpush1.msra.mxu0 0.0
  %2995 = vmatprep.subr.mxu0 0.0
  %2996 = vmatpush1.msra.mxu0 0.0
  %2997 = vmatprep.subr.mxu0 0.0
  %2998 = vmatpush1.msra.mxu0 0.0
  %2999 = vmatprep.subr.mxu0 0.0
  %3000 = vmatpush1.msra.mxu0 0.0
  %3001 = vmatprep.subr.mxu0 0.0
  %3002 = vmatpush1.msra.mxu0 0.0
  %3003 = vmatprep.subr.mxu0 0.0
  %3004 = vmatpush1.msra.mxu0 0.0
  %3005 = vmatprep.subr.mxu0 0.0
  %3006 = vmatpush1.msra.mxu0 0.0
  %3007 = vmatprep.subr.mxu0 0.0
  %3008 = vmatpush1.msra.mxu0 %v2964
  %3009 = vmatprep.subr.mxu0 0.0
  %3010 = vmatpush2.msra.mxu0 0.0
  %3011 = vmatprep.subr.mxu0 0.0
  %3012 = vmatpush2.msra.mxu0 0.0
  %3013 = vmatprep.subr.mxu0 0.0
  %3014 = vmatpush2.msra.mxu0 0.0
  %3015 = vmatprep.subr.mxu0 0.0
  %3016 = vmatpush2.msra.mxu0 0.0
  %3017 = vmatprep.subr.mxu0 0.0
  %3018 = vmatpush2.msra.mxu0 0.0
  %3019 = vmatprep.subr.mxu0 0.0
  %3020 = vmatpush2.msra.mxu0 0.0
  %3021 = vmatprep.subr.mxu0 0.0
  %3022 = vmatpush2.msra.mxu0 0.0
  %3023 = vmatprep.subr.mxu0 0.0
  %3024 = vmatpush2.msra.mxu0 0.0
  %3025 = vmatprep.subr.mxu0 0.0
  %3026 = vmatpush2.msra.mxu0 0.0
  %3027 = vmatprep.subr.mxu0 0.0
  %3028 = vmatpush2.msra.mxu0 0.0
  %3029 = vmatprep.subr.mxu0 0.0
  %3030 = vmatpush2.msra.mxu0 0.0
  %3031 = vmatprep.subr.mxu0 0.0
  %3032 = vmatpush2.msra.mxu0 0.0
  %3033 = vmatprep.subr.mxu0 0.0
  %3034 = vmatpush2.msra.mxu0 0.0
  %3035 = vmatprep.subr.mxu0 0.0
  %3036 = vmatpush2.msra.mxu0 0.0
  %3037 = vmatprep.subr.mxu0 0.0
  %3038 = vmatpush2.msra.mxu0 0.0
  %3039 = vmatprep.subr.mxu0 0.0
  %3040 = vmatpush2.msra.mxu0 0.0
  %3041 = vmatprep.mubr.f32.mxu0 0.0
  %3042 = vmatmul.mubr.f32.gmra.mxu0 %v2966
  %v3043 = vpop.f32.mrf.mxu0
  %v3044 = vadd.f32 0.0, %v3043
  %v3045 = vpop.f32.mrf.mxu0
  %3046 = vmatprep.mubr.f32.mxu0 0.0
  %3047 = vmatmul.mubr.f32.gmra.mxu0 %v2969
  %v3048 = vpop.f32.mrf.mxu0
  %v3049 = vadd.f32 0.0, %v3048
  %v3050 = vpop.f32.mrf.mxu0
  %3051 = vmatprep.mubr.f32.mxu0 0.0
  %3052 = vmatmul.mubr.f32.gmra.mxu0 %v2972
  %v3053 = vpop.f32.mrf.mxu0
  %v3054 = vadd.f32 0.0, %v3053
  %v3055 = vpop.f32.mrf.mxu0
  %3056 = vmatprep.mubr.f32.mxu0 0.0
  %3057 = vmatmul.mubr.f32.gmra.mxu0 %v2975
  %v3058 = vpop.f32.mrf.mxu0
  %v3059 = vadd.f32 0.0, %v3058
  %v3060 = vpop.f32.mrf.mxu0
  %3061 = vdwg.mxu0
  %v3062 = vtanh.pop %v3044
  %v3063 = vtanh.pop %v3049
  %v3064 = vtanh.pop %v3054
  %v3065 = vtanh.pop %v3059
  %v3066 = vsub.f32 %v2390, %v3062
  %v3067 = vsub.f32 %v2395, %v3063
  %v3068 = vsub.f32 %v2400, %v3064
  %v3069 = vsub.f32 %v2405, %v3065
  %v3070 = vand.u32 2147483647, %v3066
  %v3071 = vand.u32 2147483647, %v3067
  %v3072 = vand.u32 2147483647, %v3068
  %v3073 = vand.u32 2147483647, %v3069
  %v3074 = vsel %vm172, %v3070, 0.0
  %3075 = vadd.xlane.f32.xlu0 %v3074
  %v3076 = vpop.xlane.xlu0 %3075
  %v3077 = vsel %vm172, %v3071, 0.0
  %3078 = vadd.xlane.f32.xlu0 %v3077
  %v3079 = vpop.xlane.xlu0 %3078
  %v3080 = vsel %vm172, %v3072, 0.0
  %3081 = vadd.xlane.f32.xlu0 %v3080
  %v3082 = vpop.xlane.xlu0 %3081
  %v3083 = vsel %vm172, %v3073, 0.0
  %3084 = vadd.xlane.f32.xlu0 %v3083
  %v3085 = vpop.xlane.xlu0 %3084
  %v3086 = vadd.f32 %v3076, %v3079
  %v3087 = vadd.f32 %v3086, %v3082
  %v3088 = vadd.f32 %v3087, %v3085
  %v3089 = vrot.slane %v3088, 4
  %v3090 = vadd.f32 %v3088, %v3089
  %v3091 = vrot.slane %v3090, 2
  %v3092 = vadd.f32 %v3090, %v3091
  %v3093 = vrot.slane %v3092, 1
  %v3094 = vadd.f32 %v3092, %v3093
  %v3095 = vmul.f32 %v3094, 0.00390625
  %v3096 = vmul.f32 %v3095, 0.01
  %v3097 = vsel %vm172, %v2768, 0.0
  %3098 = vadd.xlane.f32.xlu0 %v3097
  %v3099 = vpop.xlane.xlu0 %3098
  %v3100 = vsel %vm172, %v2769, 0.0
  %3101 = vadd.xlane.f32.xlu0 %v3100
  %v3102 = vpop.xlane.xlu0 %3101
  %v3103 = vsel %vm172, %v2770, 0.0
  %3104 = vadd.xlane.f32.xlu0 %v3103
  %v3105 = vpop.xlane.xlu0 %3104
  %v3106 = vsel %vm172, %v2771, 0.0
  %3107 = vadd.xlane.f32.xlu0 %v3106
  %v3108 = vpop.xlane.xlu0 %3107
  %v3109 = vadd.f32 %v3099, %v3102
  %v3110 = vadd.f32 %v3109, %v3105
  %v3111 = vadd.f32 %v3110, %v3108
  %v3112 = vrot.slane %v3111, 4
  %v3113 = vadd.f32 %v3111, %v3112
  %v3114 = vrot.slane %v3113, 2
  %v3115 = vadd.f32 %v3113, %v3114
  %v3116 = vrot.slane %v3115, 1
  %v3117 = vadd.f32 %v3115, %v3116
  %v3118 = vmul.f32 %v3117, 0.00390625
  %v3119 = vsub.f32 %v3118, %v2445
  %v3120 = vand.u32 2147483647, %v3119
  %v3121 = vmul.f32 %v3120, 0.01
  %v3122 = vadd.f32 %v3096, %v3121
  %vm3123 = vcmask 8200
  %3124 = vst.msk [vmem:[%s4 + $0x2] sm:$0x1] %vm3123, %v3122
  %v3125 = vld [vmem:[%s0 + $0x1e8] sm:$0xff]
  %v3126 = vld [vmem:[%s0 + $0x1f0] sm:$0xff]
  %v3128 = vsel %vm770, %v3125, 0
  %v3131 = vsel %vm770, %v3126, 0
  %3133 = vmatprep.subr.mxu0 0.0
  %3134 = vmatpush1.msra.mxu0 0.0
  %3135 = vmatprep.subr.mxu0 0.0
  %3136 = vmatpush1.msra.mxu0 0.0
  %3137 = vmatprep.subr.mxu0 0.0
  %3138 = vmatpush1.msra.mxu0 0.0
  %3139 = vmatprep.subr.mxu0 0.0
  %3140 = vmatpush1.msra.mxu0 0.0
  %3141 = vmatprep.subr.mxu0 0.0
  %3142 = vmatpush1.msra.mxu0 0.0
  %3143 = vmatprep.subr.mxu0 0.0
  %3144 = vmatpush1.msra.mxu0 0.0
  %3145 = vmatprep.subr.mxu0 0.0
  %3146 = vmatpush1.msra.mxu0 0.0
  %3147 = vmatprep.subr.mxu0 0.0
  %3148 = vmatpush1.msra.mxu0 0.0
  %3149 = vmatprep.subr.mxu0 0.0
  %3150 = vmatpush1.msra.mxu0 %v3069
  %3151 = vmatprep.subr.mxu0 0.0
  %3152 = vmatpush1.msra.mxu0 %v3068
  %3153 = vmatprep.subr.mxu0 0.0
  %3154 = vmatpush1.msra.mxu0 %v3067
  %3155 = vmatprep.subr.mxu0 0.0
  %3156 = vmatpush1.msra.mxu0 %v3066
  %3157 = vmatprep.subr.mxu0 0.0
  %3158 = vmatpush1.msra.mxu0 %v2771
  %3159 = vmatprep.subr.mxu0 0.0
  %3160 = vmatpush1.msra.mxu0 %v2770
  %3161 = vmatprep.subr.mxu0 0.0
  %3162 = vmatpush1.msra.mxu0 %v2769
  %3163 = vmatprep.subr.mxu0 0.0
  %3164 = vmatpush1.msra.mxu0 %v2768
  %3165 = vmatprep.subr.mxu0 0.0
  %3166 = vmatpush2.msra.mxu0 0.0
  %3167 = vmatprep.subr.mxu0 0.0
  %3168 = vmatpush2.msra.mxu0 0.0
  %3169 = vmatprep.subr.mxu0 0.0
  %3170 = vmatpush2.msra.mxu0 0.0
  %3171 = vmatprep.subr.mxu0 0.0
  %3172 = vmatpush2.msra.mxu0 0.0
  %3173 = vmatprep.subr.mxu0 0.0
  %3174 = vmatpush2.msra.mxu0 0.0
  %3175 = vmatprep.subr.mxu0 0.0
  %3176 = vmatpush2.msra.mxu0 0.0
  %3177 = vmatprep.subr.mxu0 0.0
  %3178 = vmatpush2.msra.mxu0 0.0
  %3179 = vmatprep.subr.mxu0 0.0
  %3180 = vmatpush2.msra.mxu0 0.0
  %3181 = vmatprep.subr.mxu0 0.0
  %3182 = vmatpush2.msra.mxu0 0.0
  %3183 = vmatprep.subr.mxu0 0.0
  %3184 = vmatpush2.msra.mxu0 0.0
  %3185 = vmatprep.subr.mxu0 0.0
  %3186 = vmatpush2.msra.mxu0 0.0
  %3187 = vmatprep.subr.mxu0 0.0
  %3188 = vmatpush2.msra.mxu0 0.0
  %3189 = vmatprep.subr.mxu0 0.0
  %3190 = vmatpush2.msra.mxu0 0.0
  %3191 = vmatprep.subr.mxu0 0.0
  %3192 = vmatpush2.msra.mxu0 0.0
  %3193 = vmatprep.subr.mxu0 0.0
  %3194 = vmatpush2.msra.mxu0 0.0
  %3195 = vmatprep.subr.mxu0 0.0
  %3196 = vmatpush2.msra.mxu0 0.0
  %3197 = vmatprep.mubr.f32.mxu0 0.0
  %3198 = vmatmul.mubr.f32.gmra.mxu0 %v3128
  %v3199 = vpop.f32.mrf.mxu0
  %v3200 = vadd.f32 0.0, %v3199
  %v3201 = vpop.f32.mrf.mxu0
  %3202 = vmatprep.mubr.f32.mxu0 0.0
  %3203 = vmatmul.mubr.f32.gmra.mxu0 %v3131
  %v3204 = vpop.f32.mrf.mxu0
  %v3205 = vadd.f32 0.0, %v3204
  %v3206 = vpop.f32.mrf.mxu0
  %3207 = vdwg.mxu0
  %v3208 = vld [vmem:[%s0 + $0x1d8] sm:$0xff]
  %v3210 = vsel %vm172, %v3200, 0
  %v3213 = vsel %vm172, %v3205, 0
  %3215 = vmatprep.subr.mxu0 0.0
  %3216 = vmatpush1.msra.mxu0 0.0
  %3217 = vmatprep.subr.mxu0 0.0
  %3218 = vmatpush1.msra.mxu0 0.0
  %3219 = vmatprep.subr.mxu0 0.0
  %3220 = vmatpush1.msra.mxu0 0.0
  %3221 = vmatprep.subr.mxu0 0.0
  %3222 = vmatpush1.msra.mxu0 0.0
  %3223 = vmatprep.subr.mxu0 0.0
  %3224 = vmatpush1.msra.mxu0 0.0
  %3225 = vmatprep.subr.mxu0 0.0
  %3226 = vmatpush1.msra.mxu0 0.0
  %3227 = vmatprep.subr.mxu0 0.0
  %3228 = vmatpush1.msra.mxu0 0.0
  %3229 = vmatprep.subr.mxu0 0.0
  %3230 = vmatpush1.msra.mxu0 0.0
  %3231 = vmatprep.subr.mxu0 0.0
  %3232 = vmatpush1.msra.mxu0 0.0
  %3233 = vmatprep.subr.mxu0 0.0
  %3234 = vmatpush1.msra.mxu0 0.0
  %3235 = vmatprep.subr.mxu0 0.0
  %3236 = vmatpush1.msra.mxu0 0.0
  %3237 = vmatprep.subr.mxu0 0.0
  %3238 = vmatpush1.msra.mxu0 0.0
  %3239 = vmatprep.subr.mxu0 0.0
  %3240 = vmatpush1.msra.mxu0 0.0
  %3241 = vmatprep.subr.mxu0 0.0
  %3242 = vmatpush1.msra.mxu0 0.0
  %3243 = vmatprep.subr.mxu0 0.0
  %3244 = vmatpush1.msra.mxu0 0.0
  %3245 = vmatprep.subr.mxu0 0.0
  %3246 = vmatpush1.msra.mxu0 %v3208
  %3247 = vmatprep.subr.mxu0 0.0
  %3248 = vmatpush2.msra.mxu0 0.0
  %3249 = vmatprep.subr.mxu0 0.0
  %3250 = vmatpush2.msra.mxu0 0.0
  %3251 = vmatprep.subr.mxu0 0.0
  %3252 = vmatpush2.msra.mxu0 0.0
  %3253 = vmatprep.subr.mxu0 0.0
  %3254 = vmatpush2.msra.mxu0 0.0
  %3255 = vmatprep.subr.mxu0 0.0
  %3256 = vmatpush2.msra.mxu0 0.0
  %3257 = vmatprep.subr.mxu0 0.0
  %3258 = vmatpush2.msra.mxu0 0.0
  %3259 = vmatprep.subr.mxu0 0.0
  %3260 = vmatpush2.msra.mxu0 0.0
  %3261 = vmatprep.subr.mxu0 0.0
  %3262 = vmatpush2.msra.mxu0 0.0
  %3263 = vmatprep.subr.mxu0 0.0
  %3264 = vmatpush2.msra.mxu0 0.0
  %3265 = vmatprep.subr.mxu0 0.0
  %3266 = vmatpush2.msra.mxu0 0.0
  %3267 = vmatprep.subr.mxu0 0.0
  %3268 = vmatpush2.msra.mxu0 0.0
  %3269 = vmatprep.subr.mxu0 0.0
  %3270 = vmatpush2.msra.mxu0 0.0
  %3271 = vmatprep.subr.mxu0 0.0
  %3272 = vmatpush2.msra.mxu0 0.0
  %3273 = vmatprep.subr.mxu0 0.0
  %3274 = vmatpush2.msra.mxu0 0.0
  %3275 = vmatprep.subr.mxu0 0.0
  %3276 = vmatpush2.msra.mxu0 0.0
  %3277 = vmatprep.subr.mxu0 0.0
  %3278 = vmatpush2.msra.mxu0 0.0
  %3279 = vmatprep.mubr.f32.mxu0 0.0
  %3280 = vmatmul.mubr.f32.gmra.mxu0 %v3210
  %v3281 = vpop.f32.mrf.mxu0
  %v3282 = vadd.f32 0.0, %v3281
  %v3283 = vpop.f32.mrf.mxu0
  %3284 = vmatprep.mubr.f32.mxu0 0.0
  %3285 = vmatmul.mubr.f32.gmra.mxu0 %v3213
  %v3286 = vpop.f32.mrf.mxu0
  %v3287 = vadd.f32 0.0, %v3286
  %v3288 = vpop.f32.mrf.mxu0
  %3289 = vdwg.mxu0
  %vm3290 = vcmp.ge.f32.partialorder %v3282, 0.0
  %vm3291 = vcmp.ge.f32.partialorder %v3287, 0.0
  %v3292 = vmul.f32 %v3282, 0.25
  %v3293 = vmul.f32 %v3287, 0.25
  %v3294 = vsel %vm3290, %v3282, %v3292
  %v3295 = vsel %vm3291, %v3287, %v3293
  %v3296 = vld [vmem:[%s0 + $0x1e0] sm:$0xff]
  %v3298 = vsel %vm172, %v3294, 0
  %v3301 = vsel %vm172, %v3295, 0
  %3303 = vmatprep.subr.mxu0 0.0
  %3304 = vmatpush1.msra.mxu0 0.0
  %3305 = vmatprep.subr.mxu0 0.0
  %3306 = vmatpush1.msra.mxu0 0.0
  %3307 = vmatprep.subr.mxu0 0.0
  %3308 = vmatpush1.msra.mxu0 0.0
  %3309 = vmatprep.subr.mxu0 0.0
  %3310 = vmatpush1.msra.mxu0 0.0
  %3311 = vmatprep.subr.mxu0 0.0
  %3312 = vmatpush1.msra.mxu0 0.0
  %3313 = vmatprep.subr.mxu0 0.0
  %3314 = vmatpush1.msra.mxu0 0.0
  %3315 = vmatprep.subr.mxu0 0.0
  %3316 = vmatpush1.msra.mxu0 0.0
  %3317 = vmatprep.subr.mxu0 0.0
  %3318 = vmatpush1.msra.mxu0 0.0
  %3319 = vmatprep.subr.mxu0 0.0
  %3320 = vmatpush1.msra.mxu0 0.0
  %3321 = vmatprep.subr.mxu0 0.0
  %3322 = vmatpush1.msra.mxu0 0.0
  %3323 = vmatprep.subr.mxu0 0.0
  %3324 = vmatpush1.msra.mxu0 0.0
  %3325 = vmatprep.subr.mxu0 0.0
  %3326 = vmatpush1.msra.mxu0 0.0
  %3327 = vmatprep.subr.mxu0 0.0
  %3328 = vmatpush1.msra.mxu0 0.0
  %3329 = vmatprep.subr.mxu0 0.0
  %3330 = vmatpush1.msra.mxu0 0.0
  %3331 = vmatprep.subr.mxu0 0.0
  %3332 = vmatpush1.msra.mxu0 0.0
  %3333 = vmatprep.subr.mxu0 0.0
  %3334 = vmatpush1.msra.mxu0 %v3296
  %3335 = vmatprep.subr.mxu0 0.0
  %3336 = vmatpush2.msra.mxu0 0.0
  %3337 = vmatprep.subr.mxu0 0.0
  %3338 = vmatpush2.msra.mxu0 0.0
  %3339 = vmatprep.subr.mxu0 0.0
  %3340 = vmatpush2.msra.mxu0 0.0
  %3341 = vmatprep.subr.mxu0 0.0
  %3342 = vmatpush2.msra.mxu0 0.0
  %3343 = vmatprep.subr.mxu0 0.0
  %3344 = vmatpush2.msra.mxu0 0.0
  %3345 = vmatprep.subr.mxu0 0.0
  %3346 = vmatpush2.msra.mxu0 0.0
  %3347 = vmatprep.subr.mxu0 0.0
  %3348 = vmatpush2.msra.mxu0 0.0
  %3349 = vmatprep.subr.mxu0 0.0
  %3350 = vmatpush2.msra.mxu0 0.0
  %3351 = vmatprep.subr.mxu0 0.0
  %3352 = vmatpush2.msra.mxu0 0.0
  %3353 = vmatprep.subr.mxu0 0.0
  %3354 = vmatpush2.msra.mxu0 0.0
  %3355 = vmatprep.subr.mxu0 0.0
  %3356 = vmatpush2.msra.mxu0 0.0
  %3357 = vmatprep.subr.mxu0 0.0
  %3358 = vmatpush2.msra.mxu0 0.0
  %3359 = vmatprep.subr.mxu0 0.0
  %3360 = vmatpush2.msra.mxu0 0.0
  %3361 = vmatprep.subr.mxu0 0.0
  %3362 = vmatpush2.msra.mxu0 0.0
  %3363 = vmatprep.subr.mxu0 0.0
  %3364 = vmatpush2.msra.mxu0 0.0
  %3365 = vmatprep.subr.mxu0 0.0
  %3366 = vmatpush2.msra.mxu0 0.0
  %3367 = vmatprep.mubr.f32.mxu0 0.0
  %3368 = vmatmul.mubr.f32.gmra.mxu0 %v3298
  %v3369 = vpop.f32.mrf.mxu0
  %v3370 = vadd.f32 0.0, %v3369
  %v3371 = vpop.f32.mrf.mxu0
  %3372 = vmatprep.mubr.f32.mxu0 0.0
  %3373 = vmatmul.mubr.f32.gmra.mxu0 %v3301
  %v3374 = vpop.f32.mrf.mxu0
  %v3375 = vadd.f32 0.0, %v3374
  %v3376 = vpop.f32.mrf.mxu0
  %3377 = vdwg.mxu0
  %vm3378 = vcmp.ge.f32.partialorder %v3370, 0.0
  %vm3379 = vcmp.ge.f32.partialorder %v3375, 0.0
  %v3380 = vmul.f32 %v3370, 0.25
  %v3381 = vmul.f32 %v3375, 0.25
  %v3382 = vsel %vm3378, %v3370, %v3380
  %v3383 = vsel %vm3379, %v3375, %v3381
  %3386 = vrot.lane.b32.xlu0 %v3382, 127
  %v3387 = vpop.permute.xlu0 %3386
  %3388 = vrot.lane.b32.xlu0 %v3383, 127
  %v3389 = vpop.permute.xlu0 %3388
  %v3392 = vsub.f32 %v3382, %v3387
  %v3393 = vsub.f32 %v3383, %v3389
  %v3394 = vsub.f32 0.0, %v3392
  %v3395 = vsub.f32 0.0, %v3393
  %v3396 = vmul.f32 %v3394, 1.442695
  %v3397 = vpow.pop %v3396
  %v3398 = vmul.f32 %v3395, 1.442695
  %v3399 = vpow.pop %v3398
  %v3400 = vadd.f32 %v3397, 1.0
  %v3401 = vadd.f32 %v3399, 1.0
  %v3402 = vrcp.pop %v3400
  %v3403 = vrcp.pop %v3401
  %v3404 = vld [vmem:[%s2 + $0x10] sm:$0xff]
  %v3405 = vld [vmem:[%s2 + $0x18] sm:$0xff]
  %v3406 = vmul.f32 %v3402, 2.0
  %v3407 = vmul.f32 %v3403, 2.0
  %v3408 = vsub.f32 %v3406, 1.0
  %v3409 = vsub.f32 %v3407, 1.0
  %v3410 = vadd.f32 %v3408, %v3404
  %v3411 = vadd.f32 %v3409, %v3405
  %v3412 = vsub.f32 0.0, %v3410
  %v3413 = vsub.f32 0.0, %v3411
  %v3414 = vmul.f32 %v3412, 1.442695
  %v3415 = vpow.pop %v3414
  %v3416 = vmul.f32 %v3413, 1.442695
  %v3417 = vpow.pop %v3416
  %v3418 = vadd.f32 %v3415, 1.0
  %v3419 = vadd.f32 %v3417, 1.0
  %v3420 = vrcp.pop %v3418
  %v3421 = vrcp.pop %v3419
  %v3422 = vsub.f32 1.0, %v3420
  %v3423 = vsub.f32 1.0, %v3421
  %v3424 = vld [vmem:[%s0 + $0x238] sm:$0x3]
  %3426 = vset.pattern.permute.xlu0 0
  %3427 = vperm.xlu0 %3426, %v3420
  %v3428 = vpop.permute.xlu0 %3427
  %3431 = vset.pattern.permute.xlu0 0
  %3432 = vperm.xlu0 %3431, %v3421
  %v3433 = vpop.permute.xlu0 %3432
  %v3435 = vmul.f32 %v3200, %v3428
  %v3436 = vmul.f32 %v3205, %v3433
  %v3438 = vsel %vm495, %v3424, 0
  %3440 = vmatprep.subr.mxu0 0.0
  %3441 = vmatpush1.msra.mxu0 0.0
  %3442 = vmatprep.subr.mxu0 0.0
  %3443 = vmatpush1.msra.mxu0 0.0
  %3444 = vmatprep.subr.mxu0 0.0
  %3445 = vmatpush1.msra.mxu0 0.0
  %3446 = vmatprep.subr.mxu0 0.0
  %3447 = vmatpush1.msra.mxu0 0.0
  %3448 = vmatprep.subr.mxu0 0.0
  %3449 = vmatpush1.msra.mxu0 0.0
  %3450 = vmatprep.subr.mxu0 0.0
  %3451 = vmatpush1.msra.mxu0 0.0
  %3452 = vmatprep.subr.mxu0 0.0
  %3453 = vmatpush1.msra.mxu0 0.0
  %3454 = vmatprep.subr.mxu0 0.0
  %3455 = vmatpush1.msra.mxu0 0.0
  %3456 = vmatprep.subr.mxu0 0.0
  %3457 = vmatpush1.msra.mxu0 0.0
  %3458 = vmatprep.subr.mxu0 0.0
  %3459 = vmatpush1.msra.mxu0 0.0
  %3460 = vmatprep.subr.mxu0 0.0
  %3461 = vmatpush1.msra.mxu0 0.0
  %3462 = vmatprep.subr.mxu0 0.0
  %3463 = vmatpush1.msra.mxu0 0.0
  %3464 = vmatprep.subr.mxu0 0.0
  %3465 = vmatpush1.msra.mxu0 0.0
  %3466 = vmatprep.subr.mxu0 0.0
  %3467 = vmatpush1.msra.mxu0 0.0
  %3468 = vmatprep.subr.mxu0 0.0
  %3469 = vmatpush1.msra.mxu0 %v3436
  %3470 = vmatprep.subr.mxu0 0.0
  %3471 = vmatpush1.msra.mxu0 %v3435
  %3472 = vmatprep.subr.mxu0 0.0
  %3473 = vmatpush2.msra.mxu0 0.0
  %3474 = vmatprep.subr.mxu0 0.0
  %3475 = vmatpush2.msra.mxu0 0.0
  %3476 = vmatprep.subr.mxu0 0.0
  %3477 = vmatpush2.msra.mxu0 0.0
  %3478 = vmatprep.subr.mxu0 0.0
  %3479 = vmatpush2.msra.mxu0 0.0
  %3480 = vmatprep.subr.mxu0 0.0
  %3481 = vmatpush2.msra.mxu0 0.0
  %3482 = vmatprep.subr.mxu0 0.0
  %3483 = vmatpush2.msra.mxu0 0.0
  %3484 = vmatprep.subr.mxu0 0.0
  %3485 = vmatpush2.msra.mxu0 0.0
  %3486 = vmatprep.subr.mxu0 0.0
  %3487 = vmatpush2.msra.mxu0 0.0
  %3488 = vmatprep.subr.mxu0 0.0
  %3489 = vmatpush2.msra.mxu0 0.0
  %3490 = vmatprep.subr.mxu0 0.0
  %3491 = vmatpush2.msra.mxu0 0.0
  %3492 = vmatprep.subr.mxu0 0.0
  %3493 = vmatpush2.msra.mxu0 0.0
  %3494 = vmatprep.subr.mxu0 0.0
  %3495 = vmatpush2.msra.mxu0 0.0
  %3496 = vmatprep.subr.mxu0 0.0
  %3497 = vmatpush2.msra.mxu0 0.0
  %3498 = vmatprep.subr.mxu0 0.0
  %3499 = vmatpush2.msra.mxu0 0.0
  %3500 = vmatprep.subr.mxu0 0.0
  %3501 = vmatpush2.msra.mxu0 0.0
  %3502 = vmatprep.subr.mxu0 0.0
  %3503 = vmatpush2.msra.mxu0 0.0
  %3504 = vmatprep.mubr.f32.mxu0 0.0
  %3505 = vmatmul.mubr.f32.gmra.mxu0 %v3438
  %v3506 = vpop.f32.mrf.mxu0
  %v3507 = vadd.f32 0.0, %v3506
  %v3508 = vpop.f32.mrf.mxu0
  %3509 = vdwg.mxu0
  %3511 = vset.pattern.permute.xlu0 0
  %3512 = vperm.xlu0 %3511, %v3422
  %v3513 = vpop.permute.xlu0 %3512
  %3516 = vset.pattern.permute.xlu0 0
  %3517 = vperm.xlu0 %3516, %v3423
  %v3518 = vpop.permute.xlu0 %3517
  %v3520 = vmul.f32 %v3200, %v3513
  %v3521 = vmul.f32 %v3205, %v3518
  %3522 = vmatprep.subr.mxu0 0.0
  %3523 = vmatpush1.msra.mxu0 0.0
  %3524 = vmatprep.subr.mxu0 0.0
  %3525 = vmatpush1.msra.mxu0 0.0
  %3526 = vmatprep.subr.mxu0 0.0
  %3527 = vmatpush1.msra.mxu0 0.0
  %3528 = vmatprep.subr.mxu0 0.0
  %3529 = vmatpush1.msra.mxu0 0.0
  %3530 = vmatprep.subr.mxu0 0.0
  %3531 = vmatpush1.msra.mxu0 0.0
  %3532 = vmatprep.subr.mxu0 0.0
  %3533 = vmatpush1.msra.mxu0 0.0
  %3534 = vmatprep.subr.mxu0 0.0
  %3535 = vmatpush1.msra.mxu0 0.0
  %3536 = vmatprep.subr.mxu0 0.0
  %3537 = vmatpush1.msra.mxu0 0.0
  %3538 = vmatprep.subr.mxu0 0.0
  %3539 = vmatpush1.msra.mxu0 0.0
  %3540 = vmatprep.subr.mxu0 0.0
  %3541 = vmatpush1.msra.mxu0 0.0
  %3542 = vmatprep.subr.mxu0 0.0
  %3543 = vmatpush1.msra.mxu0 0.0
  %3544 = vmatprep.subr.mxu0 0.0
  %3545 = vmatpush1.msra.mxu0 0.0
  %3546 = vmatprep.subr.mxu0 0.0
  %3547 = vmatpush1.msra.mxu0 0.0
  %3548 = vmatprep.subr.mxu0 0.0
  %3549 = vmatpush1.msra.mxu0 0.0
  %3550 = vmatprep.subr.mxu0 0.0
  %3551 = vmatpush1.msra.mxu0 %v3521
  %3552 = vmatprep.subr.mxu0 0.0
  %3553 = vmatpush1.msra.mxu0 %v3520
  %3554 = vmatprep.subr.mxu0 0.0
  %3555 = vmatpush2.msra.mxu0 0.0
  %3556 = vmatprep.subr.mxu0 0.0
  %3557 = vmatpush2.msra.mxu0 0.0
  %3558 = vmatprep.subr.mxu0 0.0
  %3559 = vmatpush2.msra.mxu0 0.0
  %3560 = vmatprep.subr.mxu0 0.0
  %3561 = vmatpush2.msra.mxu0 0.0
  %3562 = vmatprep.subr.mxu0 0.0
  %3563 = vmatpush2.msra.mxu0 0.0
  %3564 = vmatprep.subr.mxu0 0.0
  %3565 = vmatpush2.msra.mxu0 0.0
  %3566 = vmatprep.subr.mxu0 0.0
  %3567 = vmatpush2.msra.mxu0 0.0
  %3568 = vmatprep.subr.mxu0 0.0
  %3569 = vmatpush2.msra.mxu0 0.0
  %3570 = vmatprep.subr.mxu0 0.0
  %3571 = vmatpush2.msra.mxu0 0.0
  %3572 = vmatprep.subr.mxu0 0.0
  %3573 = vmatpush2.msra.mxu0 0.0
  %3574 = vmatprep.subr.mxu0 0.0
  %3575 = vmatpush2.msra.mxu0 0.0
  %3576 = vmatprep.subr.mxu0 0.0
  %3577 = vmatpush2.msra.mxu0 0.0
  %3578 = vmatprep.subr.mxu0 0.0
  %3579 = vmatpush2.msra.mxu0 0.0
  %3580 = vmatprep.subr.mxu0 0.0
  %3581 = vmatpush2.msra.mxu0 0.0
  %3582 = vmatprep.subr.mxu0 0.0
  %3583 = vmatpush2.msra.mxu0 0.0
  %3584 = vmatprep.subr.mxu0 0.0
  %3585 = vmatpush2.msra.mxu0 0.0
  %3586 = vmatprep.mubr.f32.mxu0 0.0
  %3587 = vmatmul.mubr.f32.gmra.mxu0 %v3438
  %v3588 = vpop.f32.mrf.mxu0
  %v3589 = vadd.f32 0.0, %v3588
  %v3590 = vpop.f32.mrf.mxu0
  %3591 = vdwg.mxu0
  %v3592 = vadd.f32 %v2084, %v3589
  %v3593 = vadd.f32 %v3592, %v3507
  %v3594 = vld [vmem:[%s0 + $0x1f8] sm:$0xff]
  %v3595 = vld [vmem:[%s0 + $0x200] sm:$0xff]
  %v3596 = vld [vmem:[%s0 + $0x208] sm:$0xff]
  %v3597 = vld [vmem:[%s0 + $0x210] sm:$0xff]
  %v3598 = vld [vmem:[%s0 + $0x218] sm:$0xff]
  %v3599 = vld [vmem:[%s0 + $0x220] sm:$0xff]
  %v3600 = vld [vmem:[%s0 + $0x228] sm:$0xff]
  %v3601 = vld [vmem:[%s0 + $0x230] sm:$0xff]
  %v3603 = vsel %vm495, %v3594, 0
  %v3606 = vsel %vm495, %v3595, 0
  %v3609 = vsel %vm495, %v3596, 0
  %v3612 = vsel %vm495, %v3597, 0
  %v3615 = vsel %vm495, %v3598, 0
  %v3618 = vsel %vm495, %v3599, 0
  %v3621 = vsel %vm495, %v3600, 0
  %v3624 = vsel %vm495, %v3601, 0
  %3626 = vmatprep.subr.mxu0 0.0
  %3627 = vmatpush1.msra.mxu0 0.0
  %3628 = vmatprep.subr.mxu0 0.0
  %3629 = vmatpush1.msra.mxu0 0.0
  %3630 = vmatprep.subr.mxu0 0.0
  %3631 = vmatpush1.msra.mxu0 0.0
  %3632 = vmatprep.subr.mxu0 0.0
  %3633 = vmatpush1.msra.mxu0 0.0
  %3634 = vmatprep.subr.mxu0 0.0
  %3635 = vmatpush1.msra.mxu0 0.0
  %3636 = vmatprep.subr.mxu0 0.0
  %3637 = vmatpush1.msra.mxu0 0.0
  %3638 = vmatprep.subr.mxu0 0.0
  %3639 = vmatpush1.msra.mxu0 0.0
  %3640 = vmatprep.subr.mxu0 0.0
  %3641 = vmatpush1.msra.mxu0 0.0
  %3642 = vmatprep.subr.mxu0 0.0
  %3643 = vmatpush1.msra.mxu0 0.0
  %3644 = vmatprep.subr.mxu0 0.0
  %3645 = vmatpush1.msra.mxu0 0.0
  %3646 = vmatprep.subr.mxu0 0.0
  %3647 = vmatpush1.msra.mxu0 0.0
  %3648 = vmatprep.subr.mxu0 0.0
  %3649 = vmatpush1.msra.mxu0 0.0
  %3650 = vmatprep.subr.mxu0 0.0
  %3651 = vmatpush1.msra.mxu0 0.0
  %3652 = vmatprep.subr.mxu0 0.0
  %3653 = vmatpush1.msra.mxu0 0.0
  %3654 = vmatprep.subr.mxu0 0.0
  %3655 = vmatpush1.msra.mxu0 %v3421
  %3656 = vmatprep.subr.mxu0 0.0
  %3657 = vmatpush1.msra.mxu0 %v3420
  %3658 = vmatprep.subr.mxu0 0.0
  %3659 = vmatpush2.msra.mxu0 0.0
  %3660 = vmatprep.subr.mxu0 0.0
  %3661 = vmatpush2.msra.mxu0 0.0
  %3662 = vmatprep.subr.mxu0 0.0
  %3663 = vmatpush2.msra.mxu0 0.0
  %3664 = vmatprep.subr.mxu0 0.0
  %3665 = vmatpush2.msra.mxu0 0.0
  %3666 = vmatprep.subr.mxu0 0.0
  %3667 = vmatpush2.msra.mxu0 0.0
  %3668 = vmatprep.subr.mxu0 0.0
  %3669 = vmatpush2.msra.mxu0 0.0
  %3670 = vmatprep.subr.mxu0 0.0
  %3671 = vmatpush2.msra.mxu0 0.0
  %3672 = vmatprep.subr.mxu0 0.0
  %3673 = vmatpush2.msra.mxu0 0.0
  %3674 = vmatprep.subr.mxu0 0.0
  %3675 = vmatpush2.msra.mxu0 0.0
  %3676 = vmatprep.subr.mxu0 0.0
  %3677 = vmatpush2.msra.mxu0 0.0
  %3678 = vmatprep.subr.mxu0 0.0
  %3679 = vmatpush2.msra.mxu0 0.0
  %3680 = vmatprep.subr.mxu0 0.0
  %3681 = vmatpush2.msra.mxu0 0.0
  %3682 = vmatprep.subr.mxu0 0.0
  %3683 = vmatpush2.msra.mxu0 0.0
  %3684 = vmatprep.subr.mxu0 0.0
  %3685 = vmatpush2.msra.mxu0 0.0
  %3686 = vmatprep.subr.mxu0 0.0
  %3687 = vmatpush2.msra.mxu0 0.0
  %3688 = vmatprep.subr.mxu0 0.0
  %3689 = vmatpush2.msra.mxu0 0.0
  %3690 = vmatprep.mubr.f32.mxu0 0.0
  %3691 = vmatmul.mubr.f32.gmra.mxu0 %v3603
  %v3692 = vpop.f32.mrf.mxu0
  %v3693 = vadd.f32 0.0, %v3692
  %v3694 = vpop.f32.mrf.mxu0
  %3695 = vmatprep.mubr.f32.mxu0 0.0
  %3696 = vmatmul.mubr.f32.gmra.mxu0 %v3606
  %v3697 = vpop.f32.mrf.mxu0
  %v3698 = vadd.f32 0.0, %v3697
  %v3699 = vpop.f32.mrf.mxu0
  %3700 = vmatprep.mubr.f32.mxu0 0.0
  %3701 = vmatmul.mubr.f32.gmra.mxu0 %v3609
  %v3702 = vpop.f32.mrf.mxu0
  %v3703 = vadd.f32 0.0, %v3702
  %v3704 = vpop.f32.mrf.mxu0
  %3705 = vmatprep.mubr.f32.mxu0 0.0
  %3706 = vmatmul.mubr.f32.gmra.mxu0 %v3612
  %v3707 = vpop.f32.mrf.mxu0
  %v3708 = vadd.f32 0.0, %v3707
  %v3709 = vpop.f32.mrf.mxu0
  %3710 = vmatprep.mubr.f32.mxu0 0.0
  %3711 = vmatmul.mubr.f32.gmra.mxu0 %v3615
  %v3712 = vpop.f32.mrf.mxu0
  %v3713 = vadd.f32 0.0, %v3712
  %v3714 = vpop.f32.mrf.mxu0
  %3715 = vmatprep.mubr.f32.mxu0 0.0
  %3716 = vmatmul.mubr.f32.gmra.mxu0 %v3618
  %v3717 = vpop.f32.mrf.mxu0
  %v3718 = vadd.f32 0.0, %v3717
  %v3719 = vpop.f32.mrf.mxu0
  %3720 = vmatprep.mubr.f32.mxu0 0.0
  %3721 = vmatmul.mubr.f32.gmra.mxu0 %v3621
  %v3722 = vpop.f32.mrf.mxu0
  %v3723 = vadd.f32 0.0, %v3722
  %v3724 = vpop.f32.mrf.mxu0
  %3725 = vmatprep.mubr.f32.mxu0 0.0
  %3726 = vmatmul.mubr.f32.gmra.mxu0 %v3624
  %v3727 = vpop.f32.mrf.mxu0
  %v3728 = vadd.f32 0.0, %v3727
  %v3729 = vpop.f32.mrf.mxu0
  %3730 = vdwg.mxu0
  %v3731 = vld [vmem:[%s0 + $0x240] sm:$0xff]
  %v3732 = vld [vmem:[%s0 + $0x248] sm:$0xff]
  %v3733 = vld [vmem:[%s0 + $0x250] sm:$0xff]
  %v3734 = vld [vmem:[%s0 + $0x258] sm:$0xff]
  %v3735 = vld [vmem:[%s0 + $0x260] sm:$0xff]
  %v3736 = vld [vmem:[%s0 + $0x268] sm:$0xff]
  %v3737 = vld [vmem:[%s0 + $0x270] sm:$0xff]
  %v3738 = vld [vmem:[%s0 + $0x278] sm:$0xff]
  %3740 = vset.pattern.permute.xlu0 0
  %3741 = vperm.xlu0 %3740, %v3693
  %v3742 = vpop.permute.xlu0 %3741
  %3745 = vset.pattern.permute.xlu0 0
  %3746 = vperm.xlu0 %3745, %v3698
  %v3747 = vpop.permute.xlu0 %3746
  %3750 = vset.pattern.permute.xlu0 0
  %3751 = vperm.xlu0 %3750, %v3703
  %v3752 = vpop.permute.xlu0 %3751
  %3755 = vset.pattern.permute.xlu0 0
  %3756 = vperm.xlu0 %3755, %v3708
  %v3757 = vpop.permute.xlu0 %3756
  %3760 = vset.pattern.permute.xlu0 0
  %3761 = vperm.xlu0 %3760, %v3713
  %v3762 = vpop.permute.xlu0 %3761
  %3765 = vset.pattern.permute.xlu0 0
  %3766 = vperm.xlu0 %3765, %v3718
  %v3767 = vpop.permute.xlu0 %3766
  %3770 = vset.pattern.permute.xlu0 0
  %3771 = vperm.xlu0 %3770, %v3723
  %v3772 = vpop.permute.xlu0 %3771
  %3775 = vset.pattern.permute.xlu0 0
  %3776 = vperm.xlu0 %3775, %v3728
  %v3777 = vpop.permute.xlu0 %3776
  %v3779 = vmul.f32 %v2768, %v3742
  %v3780 = vmul.f32 %v2769, %v3747
  %v3781 = vmul.f32 %v2770, %v3752
  %v3782 = vmul.f32 %v2771, %v3757
  %v3783 = vmul.f32 %v3066, %v3762
  %v3784 = vmul.f32 %v3067, %v3767
  %v3785 = vmul.f32 %v3068, %v3772
  %v3786 = vmul.f32 %v3069, %v3777
  %v3788 = vsel %vm770, %v3731, 0
  %v3791 = vsel %vm770, %v3732, 0
  %v3794 = vsel %vm770, %v3733, 0
  %v3797 = vsel %vm770, %v3734, 0
  %v3800 = vsel %vm770, %v3735, 0
  %v3803 = vsel %vm770, %v3736, 0
  %v3806 = vsel %vm770, %v3737, 0
  %v3809 = vsel %vm770, %v3738, 0
  %3811 = vmatprep.subr.mxu0 0.0
  %3812 = vmatpush1.msra.mxu0 0.0
  %3813 = vmatprep.subr.mxu0 0.0
  %3814 = vmatpush1.msra.mxu0 0.0
  %3815 = vmatprep.subr.mxu0 0.0
  %3816 = vmatpush1.msra.mxu0 0.0
  %3817 = vmatprep.subr.mxu0 0.0
  %3818 = vmatpush1.msra.mxu0 0.0
  %3819 = vmatprep.subr.mxu0 0.0
  %3820 = vmatpush1.msra.mxu0 0.0
  %3821 = vmatprep.subr.mxu0 0.0
  %3822 = vmatpush1.msra.mxu0 0.0
  %3823 = vmatprep.subr.mxu0 0.0
  %3824 = vmatpush1.msra.mxu0 0.0
  %3825 = vmatprep.subr.mxu0 0.0
  %3826 = vmatpush1.msra.mxu0 0.0
  %3827 = vmatprep.subr.mxu0 0.0
  %3828 = vmatpush1.msra.mxu0 %v3786
  %3829 = vmatprep.subr.mxu0 0.0
  %3830 = vmatpush1.msra.mxu0 %v3785
  %3831 = vmatprep.subr.mxu0 0.0
  %3832 = vmatpush1.msra.mxu0 %v3784
  %3833 = vmatprep.subr.mxu0 0.0
  %3834 = vmatpush1.msra.mxu0 %v3783
  %3835 = vmatprep.subr.mxu0 0.0
  %3836 = vmatpush1.msra.mxu0 %v3782
  %3837 = vmatprep.subr.mxu0 0.0
  %3838 = vmatpush1.msra.mxu0 %v3781
  %3839 = vmatprep.subr.mxu0 0.0
  %3840 = vmatpush1.msra.mxu0 %v3780
  %3841 = vmatprep.subr.mxu0 0.0
  %3842 = vmatpush1.msra.mxu0 %v3779
  %3843 = vmatprep.subr.mxu0 0.0
  %3844 = vmatpush2.msra.mxu0 0.0
  %3845 = vmatprep.subr.mxu0 0.0
  %3846 = vmatpush2.msra.mxu0 0.0
  %3847 = vmatprep.subr.mxu0 0.0
  %3848 = vmatpush2.msra.mxu0 0.0
  %3849 = vmatprep.subr.mxu0 0.0
  %3850 = vmatpush2.msra.mxu0 0.0
  %3851 = vmatprep.subr.mxu0 0.0
  %3852 = vmatpush2.msra.mxu0 0.0
  %3853 = vmatprep.subr.mxu0 0.0
  %3854 = vmatpush2.msra.mxu0 0.0
  %3855 = vmatprep.subr.mxu0 0.0
  %3856 = vmatpush2.msra.mxu0 0.0
  %3857 = vmatprep.subr.mxu0 0.0
  %3858 = vmatpush2.msra.mxu0 0.0
  %3859 = vmatprep.subr.mxu0 0.0
  %3860 = vmatpush2.msra.mxu0 0.0
  %3861 = vmatprep.subr.mxu0 0.0
  %3862 = vmatpush2.msra.mxu0 0.0
  %3863 = vmatprep.subr.mxu0 0.0
  %3864 = vmatpush2.msra.mxu0 0.0
  %3865 = vmatprep.subr.mxu0 0.0
  %3866 = vmatpush2.msra.mxu0 0.0
  %3867 = vmatprep.subr.mxu0 0.0
  %3868 = vmatpush2.msra.mxu0 0.0
  %3869 = vmatprep.subr.mxu0 0.0
  %3870 = vmatpush2.msra.mxu0 0.0
  %3871 = vmatprep.subr.mxu0 0.0
  %3872 = vmatpush2.msra.mxu0 0.0
  %3873 = vmatprep.subr.mxu0 0.0
  %3874 = vmatpush2.msra.mxu0 0.0
  %3875 = vmatprep.mubr.f32.mxu0 0.0
  %3876 = vmatmul.mubr.f32.gmra.mxu0 %v3788
  %v3877 = vpop.f32.mrf.mxu0
  %v3878 = vadd.f32 0.0, %v3877
  %v3879 = vpop.f32.mrf.mxu0
  %3880 = vmatprep.mubr.f32.mxu0 0.0
  %3881 = vmatmul.mubr.f32.gmra.mxu0 %v3791
  %v3882 = vpop.f32.mrf.mxu0
  %v3883 = vadd.f32 0.0, %v3882
  %v3884 = vpop.f32.mrf.mxu0
  %3885 = vmatprep.mubr.f32.mxu0 0.0
  %3886 = vmatmul.mubr.f32.gmra.mxu0 %v3794
  %v3887 = vpop.f32.mrf.mxu0
  %v3888 = vadd.f32 0.0, %v3887
  %v3889 = vpop.f32.mrf.mxu0
  %3890 = vmatprep.mubr.f32.mxu0 0.0
  %3891 = vmatmul.mubr.f32.gmra.mxu0 %v3797
  %v3892 = vpop.f32.mrf.mxu0
  %v3893 = vadd.f32 0.0, %v3892
  %v3894 = vpop.f32.mrf.mxu0
  %3895 = vmatprep.mubr.f32.mxu0 0.0
  %3896 = vmatmul.mubr.f32.gmra.mxu0 %v3800
  %v3897 = vpop.f32.mrf.mxu0
  %v3898 = vadd.f32 0.0, %v3897
  %v3899 = vpop.f32.mrf.mxu0
  %3900 = vmatprep.mubr.f32.mxu0 0.0
  %3901 = vmatmul.mubr.f32.gmra.mxu0 %v3803
  %v3902 = vpop.f32.mrf.mxu0
  %v3903 = vadd.f32 0.0, %v3902
  %v3904 = vpop.f32.mrf.mxu0
  %3905 = vmatprep.mubr.f32.mxu0 0.0
  %3906 = vmatmul.mubr.f32.gmra.mxu0 %v3806
  %v3907 = vpop.f32.mrf.mxu0
  %v3908 = vadd.f32 0.0, %v3907
  %v3909 = vpop.f32.mrf.mxu0
  %3910 = vmatprep.mubr.f32.mxu0 0.0
  %3911 = vmatmul.mubr.f32.gmra.mxu0 %v3809
  %v3912 = vpop.f32.mrf.mxu0
  %v3913 = vadd.f32 0.0, %v3912
  %v3914 = vpop.f32.mrf.mxu0
  %3915 = vdwg.mxu0
  %v3916 = vsel %vm172, %v3878, 0.0
  %3917 = vadd.xlane.f32.xlu0 %v3916
  %v3918 = vpop.xlane.xlu0 %3917
  %v3919 = vsel %vm172, %v3883, 0.0
  %3920 = vadd.xlane.f32.xlu0 %v3919
  %v3921 = vpop.xlane.xlu0 %3920
  %v3922 = vsel %vm172, %v3888, 0.0
  %3923 = vadd.xlane.f32.xlu0 %v3922
  %v3924 = vpop.xlane.xlu0 %3923
  %v3925 = vsel %vm172, %v3893, 0.0
  %3926 = vadd.xlane.f32.xlu0 %v3925
  %v3927 = vpop.xlane.xlu0 %3926
  %v3928 = vsel %vm172, %v3898, 0.0
  %3929 = vadd.xlane.f32.xlu0 %v3928
  %v3930 = vpop.xlane.xlu0 %3929
  %v3931 = vsel %vm172, %v3903, 0.0
  %3932 = vadd.xlane.f32.xlu0 %v3931
  %v3933 = vpop.xlane.xlu0 %3932
  %v3934 = vsel %vm172, %v3908, 0.0
  %3935 = vadd.xlane.f32.xlu0 %v3934
  %v3936 = vpop.xlane.xlu0 %3935
  %v3937 = vsel %vm172, %v3913, 0.0
  %3938 = vadd.xlane.f32.xlu0 %v3937
  %v3939 = vpop.xlane.xlu0 %3938
  %v3940 = vadd.f32 %v3918, %v3921
  %v3941 = vadd.f32 %v3940, %v3924
  %v3942 = vadd.f32 %v3941, %v3927
  %v3943 = vadd.f32 %v3942, %v3930
  %v3944 = vadd.f32 %v3943, %v3933
  %v3945 = vadd.f32 %v3944, %v3936
  %v3946 = vadd.f32 %v3945, %v3939
  %v3947 = vrot.slane %v3946, 4
  %v3948 = vadd.f32 %v3946, %v3947
  %v3949 = vrot.slane %v3948, 2
  %v3950 = vadd.f32 %v3948, %v3949
  %v3951 = vrot.slane %v3950, 1
  %v3952 = vadd.f32 %v3950, %v3951
  %v3953 = vmul.f32 %v3952, 0.001953125
  %v3954 = vand.u32 %v293, 3
  %v3955 = vand.u32 %v294, 3
  %v3956 = vand.u32 %v295, 3
  %v3957 = vand.u32 %v296, 3
  %vm3958 = vcmp.eq.s32.totalorder %v3954, 0
  %vm3959 = vcmp.eq.s32.totalorder %v3955, 0
  %vm3960 = vcmp.eq.s32.totalorder %v3956, 0
  %vm3961 = vcmp.eq.s32.totalorder %v3957, 0
  %v3962 = vsel %vm3958, 1, 0
  %v3963 = vsel %vm3959, 1, 0
  %v3964 = vsel %vm3960, 1, 0
  %v3965 = vsel %vm3961, 1, 0
  %v3966 = vcvt.s32.f32 %v3962
  %v3967 = vcvt.s32.f32 %v3963
  %v3968 = vcvt.s32.f32 %v3964
  %v3969 = vcvt.s32.f32 %v3965
  %vm3970 = vcmp.eq.s32.totalorder %v3954, 3
  %vm3971 = vcmp.eq.s32.totalorder %v3955, 3
  %vm3972 = vcmp.eq.s32.totalorder %v3956, 3
  %vm3973 = vcmp.eq.s32.totalorder %v3957, 3
  %v3974 = vsel %vm3970, 1, 0
  %v3975 = vsel %vm3971, 1, 0
  %v3976 = vsel %vm3972, 1, 0
  %v3977 = vsel %vm3973, 1, 0
  %v3978 = vcvt.s32.f32 %v3974
  %v3979 = vcvt.s32.f32 %v3975
  %v3980 = vcvt.s32.f32 %v3976
  %v3981 = vcvt.s32.f32 %v3977
  %v3982 = vrot.slane %v3898, 7
  %v3983 = vrot.slane %v3903, 7
  %v3984 = vrot.slane %v3908, 7
  %v3985 = vrot.slane %v3913, 7
  %v3986 = vsel %vm365, %v3984, %v3985
  %v3987 = vsel %vm365, %v3983, %v3984
  %v3988 = vsel %vm365, %v3982, %v3983
  %v3989 = vsel %vm365, %v3985, %v3982
  %v3990 = vrot.slane %v3898, 1
  %v3991 = vrot.slane %v3903, 1
  %v3992 = vrot.slane %v3908, 1
  %v3993 = vrot.slane %v3913, 1
  %v3994 = vsel %vm382, %v3992, %v3993
  %v3995 = vsel %vm382, %v3991, %v3992
  %v3996 = vsel %vm382, %v3990, %v3991
  %v3997 = vsel %vm382, %v3993, %v3990
  %v3998 = vsub.f32 %v3996, %v3989
  %v3999 = vsub.f32 %v3995, %v3988
  %v4000 = vsub.f32 %v3994, %v3987
  %v4001 = vsub.f32 %v3997, %v3986
  %v4002 = vmul.f32 %v3966, %v3998
  %v4003 = vmul.f32 %v3967, %v3999
  %v4004 = vmul.f32 %v3968, %v4000
  %v4005 = vmul.f32 %v3969, %v4001
  %v4006 = vadd.f32 %v3989, %v4002
  %v4007 = vadd.f32 %v3988, %v4003
  %v4008 = vadd.f32 %v3987, %v4004
  %v4009 = vadd.f32 %v3986, %v4005
  %v4010 = vsub.f32 %v3989, %v3996
  %v4011 = vsub.f32 %v3988, %v3995
  %v4012 = vsub.f32 %v3987, %v3994
  %v4013 = vsub.f32 %v3986, %v3997
  %v4014 = vmul.f32 %v3978, %v4010
  %v4015 = vmul.f32 %v3979, %v4011
  %v4016 = vmul.f32 %v3980, %v4012
  %v4017 = vmul.f32 %v3981, %v4013
  %v4018 = vadd.f32 %v3996, %v4014
  %v4019 = vadd.f32 %v3995, %v4015
  %v4020 = vadd.f32 %v3994, %v4016
  %v4021 = vadd.f32 %v3997, %v4017
  %4026 = vrot.lane.b32.xlu0 %v3898, 8
  %v4027 = vpop.permute.xlu0 %4026
  %4028 = vrot.lane.b32.xlu0 %v3903, 8
  %v4029 = vpop.permute.xlu0 %4028
  %4030 = vrot.lane.b32.xlu0 %v3908, 8
  %v4031 = vpop.permute.xlu0 %4030
  %4032 = vrot.lane.b32.xlu0 %v3913, 8
  %v4033 = vpop.permute.xlu0 %4032
  %4042 = vrot.lane.b32.xlu0 %v4018, 16
  %v4043 = vpop.permute.xlu0 %4042
  %4044 = vrot.lane.b32.xlu0 %v4019, 16
  %v4045 = vpop.permute.xlu0 %4044
  %4046 = vrot.lane.b32.xlu0 %v4020, 16
  %v4047 = vpop.permute.xlu0 %4046
  %4048 = vrot.lane.b32.xlu0 %v4021, 16
  %v4049 = vpop.permute.xlu0 %4048
  %v4054 = vsel %vm172, %v4006, %v4027
  %v4055 = vsel %vm172, %v4007, %v4029
  %v4056 = vsel %vm172, %v4008, %v4031
  %v4057 = vsel %vm172, %v4009, %v4033
  %v4058 = vsel %vm495, %v4054, %v4043
  %v4059 = vsel %vm495, %v4055, %v4045
  %v4060 = vsel %vm495, %v4056, %v4047
  %v4061 = vsel %vm495, %v4057, %v4049
  %v4062 = vld [vmem:[%s0 + $0x280] sm:$0xff]
  %v4063 = vld [vmem:[%s0 + $0x288] sm:$0xff]
  %v4064 = vld [vmem:[%s0 + $0x290] sm:$0xff]
  %v4066 = vsel %vm512, %v4058, 0
  %v4069 = vsel %vm512, %v4059, 0
  %v4072 = vsel %vm512, %v4060, 0
  %v4075 = vsel %vm512, %v4061, 0
  %4077 = vmatprep.subr.mxu0 0.0
  %4078 = vmatpush1.msra.mxu0 0.0
  %4079 = vmatprep.subr.mxu0 0.0
  %4080 = vmatpush1.msra.mxu0 0.0
  %4081 = vmatprep.subr.mxu0 0.0
  %4082 = vmatpush1.msra.mxu0 0.0
  %4083 = vmatprep.subr.mxu0 0.0
  %4084 = vmatpush1.msra.mxu0 0.0
  %4085 = vmatprep.subr.mxu0 0.0
  %4086 = vmatpush1.msra.mxu0 0.0
  %4087 = vmatprep.subr.mxu0 0.0
  %4088 = vmatpush1.msra.mxu0 0.0
  %4089 = vmatprep.subr.mxu0 0.0
  %4090 = vmatpush1.msra.mxu0 0.0
  %4091 = vmatprep.subr.mxu0 0.0
  %4092 = vmatpush1.msra.mxu0 0.0
  %4093 = vmatprep.subr.mxu0 0.0
  %4094 = vmatpush1.msra.mxu0 0.0
  %4095 = vmatprep.subr.mxu0 0.0
  %4096 = vmatpush1.msra.mxu0 0.0
  %4097 = vmatprep.subr.mxu0 0.0
  %4098 = vmatpush1.msra.mxu0 0.0
  %4099 = vmatprep.subr.mxu0 0.0
  %4100 = vmatpush1.msra.mxu0 0.0
  %4101 = vmatprep.subr.mxu0 0.0
  %4102 = vmatpush1.msra.mxu0 0.0
  %4103 = vmatprep.subr.mxu0 0.0
  %4104 = vmatpush1.msra.mxu0 %v4064
  %4105 = vmatprep.subr.mxu0 0.0
  %4106 = vmatpush1.msra.mxu0 %v4063
  %4107 = vmatprep.subr.mxu0 0.0
  %4108 = vmatpush1.msra.mxu0 %v4062
  %4109 = vmatprep.subr.mxu0 0.0
  %4110 = vmatpush2.msra.mxu0 0.0
  %4111 = vmatprep.subr.mxu0 0.0
  %4112 = vmatpush2.msra.mxu0 0.0
  %4113 = vmatprep.subr.mxu0 0.0
  %4114 = vmatpush2.msra.mxu0 0.0
  %4115 = vmatprep.subr.mxu0 0.0
  %4116 = vmatpush2.msra.mxu0 0.0
  %4117 = vmatprep.subr.mxu0 0.0
  %4118 = vmatpush2.msra.mxu0 0.0
  %4119 = vmatprep.subr.mxu0 0.0
  %4120 = vmatpush2.msra.mxu0 0.0
  %4121 = vmatprep.subr.mxu0 0.0
  %4122 = vmatpush2.msra.mxu0 0.0
  %4123 = vmatprep.subr.mxu0 0.0
  %4124 = vmatpush2.msra.mxu0 0.0
  %4125 = vmatprep.subr.mxu0 0.0
  %4126 = vmatpush2.msra.mxu0 0.0
  %4127 = vmatprep.subr.mxu0 0.0
  %4128 = vmatpush2.msra.mxu0 0.0
  %4129 = vmatprep.subr.mxu0 0.0
  %4130 = vmatpush2.msra.mxu0 0.0
  %4131 = vmatprep.subr.mxu0 0.0
  %4132 = vmatpush2.msra.mxu0 0.0
  %4133 = vmatprep.subr.mxu0 0.0
  %4134 = vmatpush2.msra.mxu0 0.0
  %4135 = vmatprep.subr.mxu0 0.0
  %4136 = vmatpush2.msra.mxu0 0.0
  %4137 = vmatprep.subr.mxu0 0.0
  %4138 = vmatpush2.msra.mxu0 0.0
  %4139 = vmatprep.subr.mxu0 0.0
  %4140 = vmatpush2.msra.mxu0 0.0
  %4141 = vmatprep.mubr.f32.mxu0 0.0
  %4142 = vmatmul.mubr.f32.gmra.mxu0 %v4066
  %v4143 = vpop.f32.mrf.mxu0
  %v4144 = vadd.f32 0.0, %v4143
  %v4145 = vpop.f32.mrf.mxu0
  %4146 = vmatprep.mubr.f32.mxu0 0.0
  %4147 = vmatmul.mubr.f32.gmra.mxu0 %v4069
  %v4148 = vpop.f32.mrf.mxu0
  %v4149 = vadd.f32 0.0, %v4148
  %v4150 = vpop.f32.mrf.mxu0
  %4151 = vmatprep.mubr.f32.mxu0 0.0
  %4152 = vmatmul.mubr.f32.gmra.mxu0 %v4072
  %v4153 = vpop.f32.mrf.mxu0
  %v4154 = vadd.f32 0.0, %v4153
  %v4155 = vpop.f32.mrf.mxu0
  %4156 = vmatprep.mubr.f32.mxu0 0.0
  %4157 = vmatmul.mubr.f32.gmra.mxu0 %v4075
  %v4158 = vpop.f32.mrf.mxu0
  %v4159 = vadd.f32 0.0, %v4158
  %v4160 = vpop.f32.mrf.mxu0
  %4161 = vdwg.mxu0
  %vm4162 = vcmp.ge.f32.partialorder %v4144, 0.0
  %vm4163 = vcmp.ge.f32.partialorder %v4149, 0.0
  %vm4164 = vcmp.ge.f32.partialorder %v4154, 0.0
  %vm4165 = vcmp.ge.f32.partialorder %v4159, 0.0
  %v4166 = vmul.f32 %v4144, 0.25
  %v4167 = vmul.f32 %v4149, 0.25
  %v4168 = vmul.f32 %v4154, 0.25
  %v4169 = vmul.f32 %v4159, 0.25
  %v4170 = vsel %vm4162, %v4144, %v4166
  %v4171 = vsel %vm4163, %v4149, %v4167
  %v4172 = vsel %vm4164, %v4154, %v4168
  %v4173 = vsel %vm4165, %v4159, %v4169
  %v4174 = vld [vmem:[%s0 + $0x298] sm:$0xff]
  %v4176 = vsel %vm172, %v4170, 0
  %v4179 = vsel %vm172, %v4171, 0
  %v4182 = vsel %vm172, %v4172, 0
  %v4185 = vsel %vm172, %v4173, 0
  %4187 = vmatprep.subr.mxu0 0.0
  %4188 = vmatpush1.msra.mxu0 0.0
  %4189 = vmatprep.subr.mxu0 0.0
  %4190 = vmatpush1.msra.mxu0 0.0
  %4191 = vmatprep.subr.mxu0 0.0
  %4192 = vmatpush1.msra.mxu0 0.0
  %4193 = vmatprep.subr.mxu0 0.0
  %4194 = vmatpush1.msra.mxu0 0.0
  %4195 = vmatprep.subr.mxu0 0.0
  %4196 = vmatpush1.msra.mxu0 0.0
  %4197 = vmatprep.subr.mxu0 0.0
  %4198 = vmatpush1.msra.mxu0 0.0
  %4199 = vmatprep.subr.mxu0 0.0
  %4200 = vmatpush1.msra.mxu0 0.0
  %4201 = vmatprep.subr.mxu0 0.0
  %4202 = vmatpush1.msra.mxu0 0.0
  %4203 = vmatprep.subr.mxu0 0.0
  %4204 = vmatpush1.msra.mxu0 0.0
  %4205 = vmatprep.subr.mxu0 0.0
  %4206 = vmatpush1.msra.mxu0 0.0
  %4207 = vmatprep.subr.mxu0 0.0
  %4208 = vmatpush1.msra.mxu0 0.0
  %4209 = vmatprep.subr.mxu0 0.0
  %4210 = vmatpush1.msra.mxu0 0.0
  %4211 = vmatprep.subr.mxu0 0.0
  %4212 = vmatpush1.msra.mxu0 0.0
  %4213 = vmatprep.subr.mxu0 0.0
  %4214 = vmatpush1.msra.mxu0 0.0
  %4215 = vmatprep.subr.mxu0 0.0
  %4216 = vmatpush1.msra.mxu0 0.0
  %4217 = vmatprep.subr.mxu0 0.0
  %4218 = vmatpush1.msra.mxu0 %v4174
  %4219 = vmatprep.subr.mxu0 0.0
  %4220 = vmatpush2.msra.mxu0 0.0
  %4221 = vmatprep.subr.mxu0 0.0
  %4222 = vmatpush2.msra.mxu0 0.0
  %4223 = vmatprep.subr.mxu0 0.0
  %4224 = vmatpush2.msra.mxu0 0.0
  %4225 = vmatprep.subr.mxu0 0.0
  %4226 = vmatpush2.msra.mxu0 0.0
  %4227 = vmatprep.subr.mxu0 0.0
  %4228 = vmatpush2.msra.mxu0 0.0
  %4229 = vmatprep.subr.mxu0 0.0
  %4230 = vmatpush2.msra.mxu0 0.0
  %4231 = vmatprep.subr.mxu0 0.0
  %4232 = vmatpush2.msra.mxu0 0.0
  %4233 = vmatprep.subr.mxu0 0.0
  %4234 = vmatpush2.msra.mxu0 0.0
  %4235 = vmatprep.subr.mxu0 0.0
  %4236 = vmatpush2.msra.mxu0 0.0
  %4237 = vmatprep.subr.mxu0 0.0
  %4238 = vmatpush2.msra.mxu0 0.0
  %4239 = vmatprep.subr.mxu0 0.0
  %4240 = vmatpush2.msra.mxu0 0.0
  %4241 = vmatprep.subr.mxu0 0.0
  %4242 = vmatpush2.msra.mxu0 0.0
  %4243 = vmatprep.subr.mxu0 0.0
  %4244 = vmatpush2.msra.mxu0 0.0
  %4245 = vmatprep.subr.mxu0 0.0
  %4246 = vmatpush2.msra.mxu0 0.0
  %4247 = vmatprep.subr.mxu0 0.0
  %4248 = vmatpush2.msra.mxu0 0.0
  %4249 = vmatprep.subr.mxu0 0.0
  %4250 = vmatpush2.msra.mxu0 0.0
  %4251 = vmatprep.mubr.f32.mxu0 0.0
  %4252 = vmatmul.mubr.f32.gmra.mxu0 %v4176
  %v4253 = vpop.f32.mrf.mxu0
  %v4254 = vadd.f32 0.0, %v4253
  %v4255 = vpop.f32.mrf.mxu0
  %4256 = vmatprep.mubr.f32.mxu0 0.0
  %4257 = vmatmul.mubr.f32.gmra.mxu0 %v4179
  %v4258 = vpop.f32.mrf.mxu0
  %v4259 = vadd.f32 0.0, %v4258
  %v4260 = vpop.f32.mrf.mxu0
  %4261 = vmatprep.mubr.f32.mxu0 0.0
  %4262 = vmatmul.mubr.f32.gmra.mxu0 %v4182
  %v4263 = vpop.f32.mrf.mxu0
  %v4264 = vadd.f32 0.0, %v4263
  %v4265 = vpop.f32.mrf.mxu0
  %4266 = vmatprep.mubr.f32.mxu0 0.0
  %4267 = vmatmul.mubr.f32.gmra.mxu0 %v4185
  %v4268 = vpop.f32.mrf.mxu0
  %v4269 = vadd.f32 0.0, %v4268
  %v4270 = vpop.f32.mrf.mxu0
  %4271 = vdwg.mxu0
  %v4272 = vtanh.pop %v4254
  %v4273 = vtanh.pop %v4259
  %v4274 = vtanh.pop %v4264
  %v4275 = vtanh.pop %v4269
  %v4276 = vadd.f32 %v3878, %v4272
  %v4277 = vadd.f32 %v3883, %v4273
  %v4278 = vadd.f32 %v3888, %v4274
  %v4279 = vadd.f32 %v3893, %v4275
  %v4280 = vrot.slane %v4276, 7
  %v4281 = vrot.slane %v4277, 7
  %v4282 = vrot.slane %v4278, 7
  %v4283 = vrot.slane %v4279, 7
  %v4284 = vsel %vm365, %v4282, %v4283
  %v4285 = vsel %vm365, %v4281, %v4282
  %v4286 = vsel %vm365, %v4280, %v4281
  %v4287 = vsel %vm365, %v4283, %v4280
  %v4288 = vrot.slane %v4276, 1
  %v4289 = vrot.slane %v4277, 1
  %v4290 = vrot.slane %v4278, 1
  %v4291 = vrot.slane %v4279, 1
  %v4292 = vsel %vm382, %v4290, %v4291
  %v4293 = vsel %vm382, %v4289, %v4290
  %v4294 = vsel %vm382, %v4288, %v4289
  %v4295 = vsel %vm382, %v4291, %v4288
  %v4296 = vsub.f32 %v4294, %v4287
  %v4297 = vsub.f32 %v4293, %v4286
  %v4298 = vsub.f32 %v4292, %v4285
  %v4299 = vsub.f32 %v4295, %v4284
  %v4300 = vmul.f32 %v3966, %v4296
  %v4301 = vmul.f32 %v3967, %v4297
  %v4302 = vmul.f32 %v3968, %v4298
  %v4303 = vmul.f32 %v3969, %v4299
  %v4304 = vadd.f32 %v4287, %v4300
  %v4305 = vadd.f32 %v4286, %v4301
  %v4306 = vadd.f32 %v4285, %v4302
  %v4307 = vadd.f32 %v4284, %v4303
  %v4308 = vsub.f32 %v4287, %v4294
  %v4309 = vsub.f32 %v4286, %v4293
  %v4310 = vsub.f32 %v4285, %v4292
  %v4311 = vsub.f32 %v4284, %v4295
  %v4312 = vmul.f32 %v3978, %v4308
  %v4313 = vmul.f32 %v3979, %v4309
  %v4314 = vmul.f32 %v3980, %v4310
  %v4315 = vmul.f32 %v3981, %v4311
  %v4316 = vadd.f32 %v4294, %v4312
  %v4317 = vadd.f32 %v4293, %v4313
  %v4318 = vadd.f32 %v4292, %v4314
  %v4319 = vadd.f32 %v4295, %v4315
  %4324 = vrot.lane.b32.xlu0 %v4276, 8
  %v4325 = vpop.permute.xlu0 %4324
  %4326 = vrot.lane.b32.xlu0 %v4277, 8
  %v4327 = vpop.permute.xlu0 %4326
  %4328 = vrot.lane.b32.xlu0 %v4278, 8
  %v4329 = vpop.permute.xlu0 %4328
  %4330 = vrot.lane.b32.xlu0 %v4279, 8
  %v4331 = vpop.permute.xlu0 %4330
  %4340 = vrot.lane.b32.xlu0 %v4316, 16
  %v4341 = vpop.permute.xlu0 %4340
  %4342 = vrot.lane.b32.xlu0 %v4317, 16
  %v4343 = vpop.permute.xlu0 %4342
  %4344 = vrot.lane.b32.xlu0 %v4318, 16
  %v4345 = vpop.permute.xlu0 %4344
  %4346 = vrot.lane.b32.xlu0 %v4319, 16
  %v4347 = vpop.permute.xlu0 %4346
  %v4352 = vsel %vm172, %v4304, %v4325
  %v4353 = vsel %vm172, %v4305, %v4327
  %v4354 = vsel %vm172, %v4306, %v4329
  %v4355 = vsel %vm172, %v4307, %v4331
  %v4356 = vsel %vm495, %v4352, %v4341
  %v4357 = vsel %vm495, %v4353, %v4343
  %v4358 = vsel %vm495, %v4354, %v4345
  %v4359 = vsel %vm495, %v4355, %v4347
  %v4360 = vld [vmem:[%s0 + $0x2a0] sm:$0xff]
  %v4361 = vld [vmem:[%s0 + $0x2a8] sm:$0xff]
  %v4362 = vld [vmem:[%s0 + $0x2b0] sm:$0xff]
  %v4364 = vsel %vm512, %v4356, 0
  %v4367 = vsel %vm512, %v4357, 0
  %v4370 = vsel %vm512, %v4358, 0
  %v4373 = vsel %vm512, %v4359, 0
  %4375 = vmatprep.subr.mxu0 0.0
  %4376 = vmatpush1.msra.mxu0 0.0
  %4377 = vmatprep.subr.mxu0 0.0
  %4378 = vmatpush1.msra.mxu0 0.0
  %4379 = vmatprep.subr.mxu0 0.0
  %4380 = vmatpush1.msra.mxu0 0.0
  %4381 = vmatprep.subr.mxu0 0.0
  %4382 = vmatpush1.msra.mxu0 0.0
  %4383 = vmatprep.subr.mxu0 0.0
  %4384 = vmatpush1.msra.mxu0 0.0
  %4385 = vmatprep.subr.mxu0 0.0
  %4386 = vmatpush1.msra.mxu0 0.0
  %4387 = vmatprep.subr.mxu0 0.0
  %4388 = vmatpush1.msra.mxu0 0.0
  %4389 = vmatprep.subr.mxu0 0.0
  %4390 = vmatpush1.msra.mxu0 0.0
  %4391 = vmatprep.subr.mxu0 0.0
  %4392 = vmatpush1.msra.mxu0 0.0
  %4393 = vmatprep.subr.mxu0 0.0
  %4394 = vmatpush1.msra.mxu0 0.0
  %4395 = vmatprep.subr.mxu0 0.0
  %4396 = vmatpush1.msra.mxu0 0.0
  %4397 = vmatprep.subr.mxu0 0.0
  %4398 = vmatpush1.msra.mxu0 0.0
  %4399 = vmatprep.subr.mxu0 0.0
  %4400 = vmatpush1.msra.mxu0 0.0
  %4401 = vmatprep.subr.mxu0 0.0
  %4402 = vmatpush1.msra.mxu0 %v4362
  %4403 = vmatprep.subr.mxu0 0.0
  %4404 = vmatpush1.msra.mxu0 %v4361
  %4405 = vmatprep.subr.mxu0 0.0
  %4406 = vmatpush1.msra.mxu0 %v4360
  %4407 = vmatprep.subr.mxu0 0.0
  %4408 = vmatpush2.msra.mxu0 0.0
  %4409 = vmatprep.subr.mxu0 0.0
  %4410 = vmatpush2.msra.mxu0 0.0
  %4411 = vmatprep.subr.mxu0 0.0
  %4412 = vmatpush2.msra.mxu0 0.0
  %4413 = vmatprep.subr.mxu0 0.0
  %4414 = vmatpush2.msra.mxu0 0.0
  %4415 = vmatprep.subr.mxu0 0.0
  %4416 = vmatpush2.msra.mxu0 0.0
  %4417 = vmatprep.subr.mxu0 0.0
  %4418 = vmatpush2.msra.mxu0 0.0
  %4419 = vmatprep.subr.mxu0 0.0
  %4420 = vmatpush2.msra.mxu0 0.0
  %4421 = vmatprep.subr.mxu0 0.0
  %4422 = vmatpush2.msra.mxu0 0.0
  %4423 = vmatprep.subr.mxu0 0.0
  %4424 = vmatpush2.msra.mxu0 0.0
  %4425 = vmatprep.subr.mxu0 0.0
  %4426 = vmatpush2.msra.mxu0 0.0
  %4427 = vmatprep.subr.mxu0 0.0
  %4428 = vmatpush2.msra.mxu0 0.0
  %4429 = vmatprep.subr.mxu0 0.0
  %4430 = vmatpush2.msra.mxu0 0.0
  %4431 = vmatprep.subr.mxu0 0.0
  %4432 = vmatpush2.msra.mxu0 0.0
  %4433 = vmatprep.subr.mxu0 0.0
  %4434 = vmatpush2.msra.mxu0 0.0
  %4435 = vmatprep.subr.mxu0 0.0
  %4436 = vmatpush2.msra.mxu0 0.0
  %4437 = vmatprep.subr.mxu0 0.0
  %4438 = vmatpush2.msra.mxu0 0.0
  %4439 = vmatprep.mubr.f32.mxu0 0.0
  %4440 = vmatmul.mubr.f32.gmra.mxu0 %v4364
  %v4441 = vpop.f32.mrf.mxu0
  %v4442 = vadd.f32 0.0, %v4441
  %v4443 = vpop.f32.mrf.mxu0
  %4444 = vmatprep.mubr.f32.mxu0 0.0
  %4445 = vmatmul.mubr.f32.gmra.mxu0 %v4367
  %v4446 = vpop.f32.mrf.mxu0
  %v4447 = vadd.f32 0.0, %v4446
  %v4448 = vpop.f32.mrf.mxu0
  %4449 = vmatprep.mubr.f32.mxu0 0.0
  %4450 = vmatmul.mubr.f32.gmra.mxu0 %v4370
  %v4451 = vpop.f32.mrf.mxu0
  %v4452 = vadd.f32 0.0, %v4451
  %v4453 = vpop.f32.mrf.mxu0
  %4454 = vmatprep.mubr.f32.mxu0 0.0
  %4455 = vmatmul.mubr.f32.gmra.mxu0 %v4373
  %v4456 = vpop.f32.mrf.mxu0
  %v4457 = vadd.f32 0.0, %v4456
  %v4458 = vpop.f32.mrf.mxu0
  %4459 = vdwg.mxu0
  %vm4460 = vcmp.ge.f32.partialorder %v4442, 0.0
  %vm4461 = vcmp.ge.f32.partialorder %v4447, 0.0
  %vm4462 = vcmp.ge.f32.partialorder %v4452, 0.0
  %vm4463 = vcmp.ge.f32.partialorder %v4457, 0.0
  %v4464 = vmul.f32 %v4442, 0.25
  %v4465 = vmul.f32 %v4447, 0.25
  %v4466 = vmul.f32 %v4452, 0.25
  %v4467 = vmul.f32 %v4457, 0.25
  %v4468 = vsel %vm4460, %v4442, %v4464
  %v4469 = vsel %vm4461, %v4447, %v4465
  %v4470 = vsel %vm4462, %v4452, %v4466
  %v4471 = vsel %vm4463, %v4457, %v4467
  %v4472 = vld [vmem:[%s0 + $0x2b8] sm:$0xff]
  %v4474 = vsel %vm172, %v4468, 0
  %v4477 = vsel %vm172, %v4469, 0
  %v4480 = vsel %vm172, %v4470, 0
  %v4483 = vsel %vm172, %v4471, 0
  %4485 = vmatprep.subr.mxu0 0.0
  %4486 = vmatpush1.msra.mxu0 0.0
  %4487 = vmatprep.subr.mxu0 0.0
  %4488 = vmatpush1.msra.mxu0 0.0
  %4489 = vmatprep.subr.mxu0 0.0
  %4490 = vmatpush1.msra.mxu0 0.0
  %4491 = vmatprep.subr.mxu0 0.0
  %4492 = vmatpush1.msra.mxu0 0.0
  %4493 = vmatprep.subr.mxu0 0.0
  %4494 = vmatpush1.msra.mxu0 0.0
  %4495 = vmatprep.subr.mxu0 0.0
  %4496 = vmatpush1.msra.mxu0 0.0
  %4497 = vmatprep.subr.mxu0 0.0
  %4498 = vmatpush1.msra.mxu0 0.0
  %4499 = vmatprep.subr.mxu0 0.0
  %4500 = vmatpush1.msra.mxu0 0.0
  %4501 = vmatprep.subr.mxu0 0.0
  %4502 = vmatpush1.msra.mxu0 0.0
  %4503 = vmatprep.subr.mxu0 0.0
  %4504 = vmatpush1.msra.mxu0 0.0
  %4505 = vmatprep.subr.mxu0 0.0
  %4506 = vmatpush1.msra.mxu0 0.0
  %4507 = vmatprep.subr.mxu0 0.0
  %4508 = vmatpush1.msra.mxu0 0.0
  %4509 = vmatprep.subr.mxu0 0.0
  %4510 = vmatpush1.msra.mxu0 0.0
  %4511 = vmatprep.subr.mxu0 0.0
  %4512 = vmatpush1.msra.mxu0 0.0
  %4513 = vmatprep.subr.mxu0 0.0
  %4514 = vmatpush1.msra.mxu0 0.0
  %4515 = vmatprep.subr.mxu0 0.0
  %4516 = vmatpush1.msra.mxu0 %v4472
  %4517 = vmatprep.subr.mxu0 0.0
  %4518 = vmatpush2.msra.mxu0 0.0
  %4519 = vmatprep.subr.mxu0 0.0
  %4520 = vmatpush2.msra.mxu0 0.0
  %4521 = vmatprep.subr.mxu0 0.0
  %4522 = vmatpush2.msra.mxu0 0.0
  %4523 = vmatprep.subr.mxu0 0.0
  %4524 = vmatpush2.msra.mxu0 0.0
  %4525 = vmatprep.subr.mxu0 0.0
  %4526 = vmatpush2.msra.mxu0 0.0
  %4527 = vmatprep.subr.mxu0 0.0
  %4528 = vmatpush2.msra.mxu0 0.0
  %4529 = vmatprep.subr.mxu0 0.0
  %4530 = vmatpush2.msra.mxu0 0.0
  %4531 = vmatprep.subr.mxu0 0.0
  %4532 = vmatpush2.msra.mxu0 0.0
  %4533 = vmatprep.subr.mxu0 0.0
  %4534 = vmatpush2.msra.mxu0 0.0
  %4535 = vmatprep.subr.mxu0 0.0
  %4536 = vmatpush2.msra.mxu0 0.0
  %4537 = vmatprep.subr.mxu0 0.0
  %4538 = vmatpush2.msra.mxu0 0.0
  %4539 = vmatprep.subr.mxu0 0.0
  %4540 = vmatpush2.msra.mxu0 0.0
  %4541 = vmatprep.subr.mxu0 0.0
  %4542 = vmatpush2.msra.mxu0 0.0
  %4543 = vmatprep.subr.mxu0 0.0
  %4544 = vmatpush2.msra.mxu0 0.0
  %4545 = vmatprep.subr.mxu0 0.0
  %4546 = vmatpush2.msra.mxu0 0.0
  %4547 = vmatprep.subr.mxu0 0.0
  %4548 = vmatpush2.msra.mxu0 0.0
  %4549 = vmatprep.mubr.f32.mxu0 0.0
  %4550 = vmatmul.mubr.f32.gmra.mxu0 %v4474
  %v4551 = vpop.f32.mrf.mxu0
  %v4552 = vadd.f32 0.0, %v4551
  %v4553 = vpop.f32.mrf.mxu0
  %4554 = vmatprep.mubr.f32.mxu0 0.0
  %4555 = vmatmul.mubr.f32.gmra.mxu0 %v4477
  %v4556 = vpop.f32.mrf.mxu0
  %v4557 = vadd.f32 0.0, %v4556
  %v4558 = vpop.f32.mrf.mxu0
  %4559 = vmatprep.mubr.f32.mxu0 0.0
  %4560 = vmatmul.mubr.f32.gmra.mxu0 %v4480
  %v4561 = vpop.f32.mrf.mxu0
  %v4562 = vadd.f32 0.0, %v4561
  %v4563 = vpop.f32.mrf.mxu0
  %4564 = vmatprep.mubr.f32.mxu0 0.0
  %4565 = vmatmul.mubr.f32.gmra.mxu0 %v4483
  %v4566 = vpop.f32.mrf.mxu0
  %v4567 = vadd.f32 0.0, %v4566
  %v4568 = vpop.f32.mrf.mxu0
  %4569 = vdwg.mxu0
  %v4570 = vtanh.pop %v4552
  %v4571 = vtanh.pop %v4557
  %v4572 = vtanh.pop %v4562
  %v4573 = vtanh.pop %v4567
  %v4574 = vsub.f32 %v3898, %v4570
  %v4575 = vsub.f32 %v3903, %v4571
  %v4576 = vsub.f32 %v3908, %v4572
  %v4577 = vsub.f32 %v3913, %v4573
  %v4578 = vand.u32 2147483647, %v4574
  %v4579 = vand.u32 2147483647, %v4575
  %v4580 = vand.u32 2147483647, %v4576
  %v4581 = vand.u32 2147483647, %v4577
  %v4582 = vsel %vm172, %v4578, 0.0
  %4583 = vadd.xlane.f32.xlu0 %v4582
  %v4584 = vpop.xlane.xlu0 %4583
  %v4585 = vsel %vm172, %v4579, 0.0
  %4586 = vadd.xlane.f32.xlu0 %v4585
  %v4587 = vpop.xlane.xlu0 %4586
  %v4588 = vsel %vm172, %v4580, 0.0
  %4589 = vadd.xlane.f32.xlu0 %v4588
  %v4590 = vpop.xlane.xlu0 %4589
  %v4591 = vsel %vm172, %v4581, 0.0
  %4592 = vadd.xlane.f32.xlu0 %v4591
  %v4593 = vpop.xlane.xlu0 %4592
  %v4594 = vadd.f32 %v4584, %v4587
  %v4595 = vadd.f32 %v4594, %v4590
  %v4596 = vadd.f32 %v4595, %v4593
  %v4597 = vrot.slane %v4596, 4
  %v4598 = vadd.f32 %v4596, %v4597
  %v4599 = vrot.slane %v4598, 2
  %v4600 = vadd.f32 %v4598, %v4599
  %v4601 = vrot.slane %v4600, 1
  %v4602 = vadd.f32 %v4600, %v4601
  %v4603 = vmul.f32 %v4602, 0.00390625
  %v4604 = vmul.f32 %v4603, 0.01
  %v4605 = vsel %vm172, %v4276, 0.0
  %4606 = vadd.xlane.f32.xlu0 %v4605
  %v4607 = vpop.xlane.xlu0 %4606
  %v4608 = vsel %vm172, %v4277, 0.0
  %4609 = vadd.xlane.f32.xlu0 %v4608
  %v4610 = vpop.xlane.xlu0 %4609
  %v4611 = vsel %vm172, %v4278, 0.0
  %4612 = vadd.xlane.f32.xlu0 %v4611
  %v4613 = vpop.xlane.xlu0 %4612
  %v4614 = vsel %vm172, %v4279, 0.0
  %4615 = vadd.xlane.f32.xlu0 %v4614
  %v4616 = vpop.xlane.xlu0 %4615
  %v4617 = vadd.f32 %v4607, %v4610
  %v4618 = vadd.f32 %v4617, %v4613
  %v4619 = vadd.f32 %v4618, %v4616
  %v4620 = vrot.slane %v4619, 4
  %v4621 = vadd.f32 %v4619, %v4620
  %v4622 = vrot.slane %v4621, 2
  %v4623 = vadd.f32 %v4621, %v4622
  %v4624 = vrot.slane %v4623, 1
  %v4625 = vadd.f32 %v4623, %v4624
  %v4626 = vmul.f32 %v4625, 0.00390625
  %v4627 = vsub.f32 %v4626, %v3953
  %v4628 = vand.u32 2147483647, %v4627
  %v4629 = vmul.f32 %v4628, 0.01
  %v4630 = vadd.f32 %v4604, %v4629
  %vm4631 = vcmask 16400
  %4632 = vst.msk [vmem:[%s4 + $0x2] sm:$0x1] %vm4631, %v4630
  %v4633 = vld [vmem:[%s0 + $0x2d0] sm:$0xff]
  %v4634 = vld [vmem:[%s0 + $0x2d8] sm:$0xff]
  %v4636 = vsel %vm770, %v4633, 0
  %v4639 = vsel %vm770, %v4634, 0
  %4641 = vmatprep.subr.mxu0 0.0
  %4642 = vmatpush1.msra.mxu0 0.0
  %4643 = vmatprep.subr.mxu0 0.0
  %4644 = vmatpush1.msra.mxu0 0.0
  %4645 = vmatprep.subr.mxu0 0.0
  %4646 = vmatpush1.msra.mxu0 0.0
  %4647 = vmatprep.subr.mxu0 0.0
  %4648 = vmatpush1.msra.mxu0 0.0
  %4649 = vmatprep.subr.mxu0 0.0
  %4650 = vmatpush1.msra.mxu0 0.0
  %4651 = vmatprep.subr.mxu0 0.0
  %4652 = vmatpush1.msra.mxu0 0.0
  %4653 = vmatprep.subr.mxu0 0.0
  %4654 = vmatpush1.msra.mxu0 0.0
  %4655 = vmatprep.subr.mxu0 0.0
  %4656 = vmatpush1.msra.mxu0 0.0
  %4657 = vmatprep.subr.mxu0 0.0
  %4658 = vmatpush1.msra.mxu0 %v4577
  %4659 = vmatprep.subr.mxu0 0.0
  %4660 = vmatpush1.msra.mxu0 %v4576
  %4661 = vmatprep.subr.mxu0 0.0
  %4662 = vmatpush1.msra.mxu0 %v4575
  %4663 = vmatprep.subr.mxu0 0.0
  %4664 = vmatpush1.msra.mxu0 %v4574
  %4665 = vmatprep.subr.mxu0 0.0
  %4666 = vmatpush1.msra.mxu0 %v4279
  %4667 = vmatprep.subr.mxu0 0.0
  %4668 = vmatpush1.msra.mxu0 %v4278
  %4669 = vmatprep.subr.mxu0 0.0
  %4670 = vmatpush1.msra.mxu0 %v4277
  %4671 = vmatprep.subr.mxu0 0.0
  %4672 = vmatpush1.msra.mxu0 %v4276
  %4673 = vmatprep.subr.mxu0 0.0
  %4674 = vmatpush2.msra.mxu0 0.0
  %4675 = vmatprep.subr.mxu0 0.0
  %4676 = vmatpush2.msra.mxu0 0.0
  %4677 = vmatprep.subr.mxu0 0.0
  %4678 = vmatpush2.msra.mxu0 0.0
  %4679 = vmatprep.subr.mxu0 0.0
  %4680 = vmatpush2.msra.mxu0 0.0
  %4681 = vmatprep.subr.mxu0 0.0
  %4682 = vmatpush2.msra.mxu0 0.0
  %4683 = vmatprep.subr.mxu0 0.0
  %4684 = vmatpush2.msra.mxu0 0.0
  %4685 = vmatprep.subr.mxu0 0.0
  %4686 = vmatpush2.msra.mxu0 0.0
  %4687 = vmatprep.subr.mxu0 0.0
  %4688 = vmatpush2.msra.mxu0 0.0
  %4689 = vmatprep.subr.mxu0 0.0
  %4690 = vmatpush2.msra.mxu0 0.0
  %4691 = vmatprep.subr.mxu0 0.0
  %4692 = vmatpush2.msra.mxu0 0.0
  %4693 = vmatprep.subr.mxu0 0.0
  %4694 = vmatpush2.msra.mxu0 0.0
  %4695 = vmatprep.subr.mxu0 0.0
  %4696 = vmatpush2.msra.mxu0 0.0
  %4697 = vmatprep.subr.mxu0 0.0
  %4698 = vmatpush2.msra.mxu0 0.0
  %4699 = vmatprep.subr.mxu0 0.0
  %4700 = vmatpush2.msra.mxu0 0.0
  %4701 = vmatprep.subr.mxu0 0.0
  %4702 = vmatpush2.msra.mxu0 0.0
  %4703 = vmatprep.subr.mxu0 0.0
  %4704 = vmatpush2.msra.mxu0 0.0
  %4705 = vmatprep.mubr.f32.mxu0 0.0
  %4706 = vmatmul.mubr.f32.gmra.mxu0 %v4636
  %v4707 = vpop.f32.mrf.mxu0
  %v4708 = vadd.f32 0.0, %v4707
  %v4709 = vpop.f32.mrf.mxu0
  %4710 = vmatprep.mubr.f32.mxu0 0.0
  %4711 = vmatmul.mubr.f32.gmra.mxu0 %v4639
  %v4712 = vpop.f32.mrf.mxu0
  %v4713 = vadd.f32 0.0, %v4712
  %v4714 = vpop.f32.mrf.mxu0
  %4715 = vdwg.mxu0
  %v4716 = vld [vmem:[%s0 + $0x2c0] sm:$0xff]
  %v4718 = vsel %vm172, %v4708, 0
  %v4721 = vsel %vm172, %v4713, 0
  %4723 = vmatprep.subr.mxu0 0.0
  %4724 = vmatpush1.msra.mxu0 0.0
  %4725 = vmatprep.subr.mxu0 0.0
  %4726 = vmatpush1.msra.mxu0 0.0
  %4727 = vmatprep.subr.mxu0 0.0
  %4728 = vmatpush1.msra.mxu0 0.0
  %4729 = vmatprep.subr.mxu0 0.0
  %4730 = vmatpush1.msra.mxu0 0.0
  %4731 = vmatprep.subr.mxu0 0.0
  %4732 = vmatpush1.msra.mxu0 0.0
  %4733 = vmatprep.subr.mxu0 0.0
  %4734 = vmatpush1.msra.mxu0 0.0
  %4735 = vmatprep.subr.mxu0 0.0
  %4736 = vmatpush1.msra.mxu0 0.0
  %4737 = vmatprep.subr.mxu0 0.0
  %4738 = vmatpush1.msra.mxu0 0.0
  %4739 = vmatprep.subr.mxu0 0.0
  %4740 = vmatpush1.msra.mxu0 0.0
  %4741 = vmatprep.subr.mxu0 0.0
  %4742 = vmatpush1.msra.mxu0 0.0
  %4743 = vmatprep.subr.mxu0 0.0
  %4744 = vmatpush1.msra.mxu0 0.0
  %4745 = vmatprep.subr.mxu0 0.0
  %4746 = vmatpush1.msra.mxu0 0.0
  %4747 = vmatprep.subr.mxu0 0.0
  %4748 = vmatpush1.msra.mxu0 0.0
  %4749 = vmatprep.subr.mxu0 0.0
  %4750 = vmatpush1.msra.mxu0 0.0
  %4751 = vmatprep.subr.mxu0 0.0
  %4752 = vmatpush1.msra.mxu0 0.0
  %4753 = vmatprep.subr.mxu0 0.0
  %4754 = vmatpush1.msra.mxu0 %v4716
  %4755 = vmatprep.subr.mxu0 0.0
  %4756 = vmatpush2.msra.mxu0 0.0
  %4757 = vmatprep.subr.mxu0 0.0
  %4758 = vmatpush2.msra.mxu0 0.0
  %4759 = vmatprep.subr.mxu0 0.0
  %4760 = vmatpush2.msra.mxu0 0.0
  %4761 = vmatprep.subr.mxu0 0.0
  %4762 = vmatpush2.msra.mxu0 0.0
  %4763 = vmatprep.subr.mxu0 0.0
  %4764 = vmatpush2.msra.mxu0 0.0
  %4765 = vmatprep.subr.mxu0 0.0
  %4766 = vmatpush2.msra.mxu0 0.0
  %4767 = vmatprep.subr.mxu0 0.0
  %4768 = vmatpush2.msra.mxu0 0.0
  %4769 = vmatprep.subr.mxu0 0.0
  %4770 = vmatpush2.msra.mxu0 0.0
  %4771 = vmatprep.subr.mxu0 0.0
  %4772 = vmatpush2.msra.mxu0 0.0
  %4773 = vmatprep.subr.mxu0 0.0
  %4774 = vmatpush2.msra.mxu0 0.0
  %4775 = vmatprep.subr.mxu0 0.0
  %4776 = vmatpush2.msra.mxu0 0.0
  %4777 = vmatprep.subr.mxu0 0.0
  %4778 = vmatpush2.msra.mxu0 0.0
  %4779 = vmatprep.subr.mxu0 0.0
  %4780 = vmatpush2.msra.mxu0 0.0
  %4781 = vmatprep.subr.mxu0 0.0
  %4782 = vmatpush2.msra.mxu0 0.0
  %4783 = vmatprep.subr.mxu0 0.0
  %4784 = vmatpush2.msra.mxu0 0.0
  %4785 = vmatprep.subr.mxu0 0.0
  %4786 = vmatpush2.msra.mxu0 0.0
  %4787 = vmatprep.mubr.f32.mxu0 0.0
  %4788 = vmatmul.mubr.f32.gmra.mxu0 %v4718
  %v4789 = vpop.f32.mrf.mxu0
  %v4790 = vadd.f32 0.0, %v4789
  %v4791 = vpop.f32.mrf.mxu0
  %4792 = vmatprep.mubr.f32.mxu0 0.0
  %4793 = vmatmul.mubr.f32.gmra.mxu0 %v4721
  %v4794 = vpop.f32.mrf.mxu0
  %v4795 = vadd.f32 0.0, %v4794
  %v4796 = vpop.f32.mrf.mxu0
  %4797 = vdwg.mxu0
  %vm4798 = vcmp.ge.f32.partialorder %v4790, 0.0
  %vm4799 = vcmp.ge.f32.partialorder %v4795, 0.0
  %v4800 = vmul.f32 %v4790, 0.25
  %v4801 = vmul.f32 %v4795, 0.25
  %v4802 = vsel %vm4798, %v4790, %v4800
  %v4803 = vsel %vm4799, %v4795, %v4801
  %v4804 = vld [vmem:[%s0 + $0x2c8] sm:$0xff]
  %v4806 = vsel %vm172, %v4802, 0
  %v4809 = vsel %vm172, %v4803, 0
  %4811 = vmatprep.subr.mxu0 0.0
  %4812 = vmatpush1.msra.mxu0 0.0
  %4813 = vmatprep.subr.mxu0 0.0
  %4814 = vmatpush1.msra.mxu0 0.0
  %4815 = vmatprep.subr.mxu0 0.0
  %4816 = vmatpush1.msra.mxu0 0.0
  %4817 = vmatprep.subr.mxu0 0.0
  %4818 = vmatpush1.msra.mxu0 0.0
  %4819 = vmatprep.subr.mxu0 0.0
  %4820 = vmatpush1.msra.mxu0 0.0
  %4821 = vmatprep.subr.mxu0 0.0
  %4822 = vmatpush1.msra.mxu0 0.0
  %4823 = vmatprep.subr.mxu0 0.0
  %4824 = vmatpush1.msra.mxu0 0.0
  %4825 = vmatprep.subr.mxu0 0.0
  %4826 = vmatpush1.msra.mxu0 0.0
  %4827 = vmatprep.subr.mxu0 0.0
  %4828 = vmatpush1.msra.mxu0 0.0
  %4829 = vmatprep.subr.mxu0 0.0
  %4830 = vmatpush1.msra.mxu0 0.0
  %4831 = vmatprep.subr.mxu0 0.0
  %4832 = vmatpush1.msra.mxu0 0.0
  %4833 = vmatprep.subr.mxu0 0.0
  %4834 = vmatpush1.msra.mxu0 0.0
  %4835 = vmatprep.subr.mxu0 0.0
  %4836 = vmatpush1.msra.mxu0 0.0
  %4837 = vmatprep.subr.mxu0 0.0
  %4838 = vmatpush1.msra.mxu0 0.0
  %4839 = vmatprep.subr.mxu0 0.0
  %4840 = vmatpush1.msra.mxu0 0.0
  %4841 = vmatprep.subr.mxu0 0.0
  %4842 = vmatpush1.msra.mxu0 %v4804
  %4843 = vmatprep.subr.mxu0 0.0
  %4844 = vmatpush2.msra.mxu0 0.0
  %4845 = vmatprep.subr.mxu0 0.0
  %4846 = vmatpush2.msra.mxu0 0.0
  %4847 = vmatprep.subr.mxu0 0.0
  %4848 = vmatpush2.msra.mxu0 0.0
  %4849 = vmatprep.subr.mxu0 0.0
  %4850 = vmatpush2.msra.mxu0 0.0
  %4851 = vmatprep.subr.mxu0 0.0
  %4852 = vmatpush2.msra.mxu0 0.0
  %4853 = vmatprep.subr.mxu0 0.0
  %4854 = vmatpush2.msra.mxu0 0.0
  %4855 = vmatprep.subr.mxu0 0.0
  %4856 = vmatpush2.msra.mxu0 0.0
  %4857 = vmatprep.subr.mxu0 0.0
  %4858 = vmatpush2.msra.mxu0 0.0
  %4859 = vmatprep.subr.mxu0 0.0
  %4860 = vmatpush2.msra.mxu0 0.0
  %4861 = vmatprep.subr.mxu0 0.0
  %4862 = vmatpush2.msra.mxu0 0.0
  %4863 = vmatprep.subr.mxu0 0.0
  %4864 = vmatpush2.msra.mxu0 0.0
  %4865 = vmatprep.subr.mxu0 0.0
  %4866 = vmatpush2.msra.mxu0 0.0
  %4867 = vmatprep.subr.mxu0 0.0
  %4868 = vmatpush2.msra.mxu0 0.0
  %4869 = vmatprep.subr.mxu0 0.0
  %4870 = vmatpush2.msra.mxu0 0.0
  %4871 = vmatprep.subr.mxu0 0.0
  %4872 = vmatpush2.msra.mxu0 0.0
  %4873 = vmatprep.subr.mxu0 0.0
  %4874 = vmatpush2.msra.mxu0 0.0
  %4875 = vmatprep.mubr.f32.mxu0 0.0
  %4876 = vmatmul.mubr.f32.gmra.mxu0 %v4806
  %v4877 = vpop.f32.mrf.mxu0
  %v4878 = vadd.f32 0.0, %v4877
  %v4879 = vpop.f32.mrf.mxu0
  %4880 = vmatprep.mubr.f32.mxu0 0.0
  %4881 = vmatmul.mubr.f32.gmra.mxu0 %v4809
  %v4882 = vpop.f32.mrf.mxu0
  %v4883 = vadd.f32 0.0, %v4882
  %v4884 = vpop.f32.mrf.mxu0
  %4885 = vdwg.mxu0
  %vm4886 = vcmp.ge.f32.partialorder %v4878, 0.0
  %vm4887 = vcmp.ge.f32.partialorder %v4883, 0.0
  %v4888 = vmul.f32 %v4878, 0.25
  %v4889 = vmul.f32 %v4883, 0.25
  %v4890 = vsel %vm4886, %v4878, %v4888
  %v4891 = vsel %vm4887, %v4883, %v4889
  %4894 = vrot.lane.b32.xlu0 %v4890, 127
  %v4895 = vpop.permute.xlu0 %4894
  %4896 = vrot.lane.b32.xlu0 %v4891, 127
  %v4897 = vpop.permute.xlu0 %4896
  %v4900 = vsub.f32 %v4890, %v4895
  %v4901 = vsub.f32 %v4891, %v4897
  %v4902 = vsub.f32 0.0, %v4900
  %v4903 = vsub.f32 0.0, %v4901
  %v4904 = vmul.f32 %v4902, 1.442695
  %v4905 = vpow.pop %v4904
  %v4906 = vmul.f32 %v4903, 1.442695
  %v4907 = vpow.pop %v4906
  %v4908 = vadd.f32 %v4905, 1.0
  %v4909 = vadd.f32 %v4907, 1.0
  %v4910 = vrcp.pop %v4908
  %v4911 = vrcp.pop %v4909
  %v4912 = vld [vmem:[%s2 + $0x20] sm:$0xff]
  %v4913 = vld [vmem:[%s2 + $0x28] sm:$0xff]
  %v4914 = vmul.f32 %v4910, 2.0
  %v4915 = vmul.f32 %v4911, 2.0
  %v4916 = vsub.f32 %v4914, 1.0
  %v4917 = vsub.f32 %v4915, 1.0
  %v4918 = vadd.f32 %v4916, %v4912
  %v4919 = vadd.f32 %v4917, %v4913
  %v4920 = vsub.f32 0.0, %v4918
  %v4921 = vsub.f32 0.0, %v4919
  %v4922 = vmul.f32 %v4920, 1.442695
  %v4923 = vpow.pop %v4922
  %v4924 = vmul.f32 %v4921, 1.442695
  %v4925 = vpow.pop %v4924
  %v4926 = vadd.f32 %v4923, 1.0
  %v4927 = vadd.f32 %v4925, 1.0
  %v4928 = vrcp.pop %v4926
  %v4929 = vrcp.pop %v4927
  %v4930 = vsub.f32 1.0, %v4928
  %v4931 = vsub.f32 1.0, %v4929
  %v4932 = vld [vmem:[%s0 + $0x320] sm:$0x3]
  %4934 = vset.pattern.permute.xlu0 0
  %4935 = vperm.xlu0 %4934, %v4928
  %v4936 = vpop.permute.xlu0 %4935
  %4939 = vset.pattern.permute.xlu0 0
  %4940 = vperm.xlu0 %4939, %v4929
  %v4941 = vpop.permute.xlu0 %4940
  %v4943 = vmul.f32 %v4708, %v4936
  %v4944 = vmul.f32 %v4713, %v4941
  %v4946 = vsel %vm495, %v4932, 0
  %4948 = vmatprep.subr.mxu0 0.0
  %4949 = vmatpush1.msra.mxu0 0.0
  %4950 = vmatprep.subr.mxu0 0.0
  %4951 = vmatpush1.msra.mxu0 0.0
  %4952 = vmatprep.subr.mxu0 0.0
  %4953 = vmatpush1.msra.mxu0 0.0
  %4954 = vmatprep.subr.mxu0 0.0
  %4955 = vmatpush1.msra.mxu0 0.0
  %4956 = vmatprep.subr.mxu0 0.0
  %4957 = vmatpush1.msra.mxu0 0.0
  %4958 = vmatprep.subr.mxu0 0.0
  %4959 = vmatpush1.msra.mxu0 0.0
  %4960 = vmatprep.subr.mxu0 0.0
  %4961 = vmatpush1.msra.mxu0 0.0
  %4962 = vmatprep.subr.mxu0 0.0
  %4963 = vmatpush1.msra.mxu0 0.0
  %4964 = vmatprep.subr.mxu0 0.0
  %4965 = vmatpush1.msra.mxu0 0.0
  %4966 = vmatprep.subr.mxu0 0.0
  %4967 = vmatpush1.msra.mxu0 0.0
  %4968 = vmatprep.subr.mxu0 0.0
  %4969 = vmatpush1.msra.mxu0 0.0
  %4970 = vmatprep.subr.mxu0 0.0
  %4971 = vmatpush1.msra.mxu0 0.0
  %4972 = vmatprep.subr.mxu0 0.0
  %4973 = vmatpush1.msra.mxu0 0.0
  %4974 = vmatprep.subr.mxu0 0.0
  %4975 = vmatpush1.msra.mxu0 0.0
  %4976 = vmatprep.subr.mxu0 0.0
  %4977 = vmatpush1.msra.mxu0 %v4944
  %4978 = vmatprep.subr.mxu0 0.0
  %4979 = vmatpush1.msra.mxu0 %v4943
  %4980 = vmatprep.subr.mxu0 0.0
  %4981 = vmatpush2.msra.mxu0 0.0
  %4982 = vmatprep.subr.mxu0 0.0
  %4983 = vmatpush2.msra.mxu0 0.0
  %4984 = vmatprep.subr.mxu0 0.0
  %4985 = vmatpush2.msra.mxu0 0.0
  %4986 = vmatprep.subr.mxu0 0.0
  %4987 = vmatpush2.msra.mxu0 0.0
  %4988 = vmatprep.subr.mxu0 0.0
  %4989 = vmatpush2.msra.mxu0 0.0
  %4990 = vmatprep.subr.mxu0 0.0
  %4991 = vmatpush2.msra.mxu0 0.0
  %4992 = vmatprep.subr.mxu0 0.0
  %4993 = vmatpush2.msra.mxu0 0.0
  %4994 = vmatprep.subr.mxu0 0.0
  %4995 = vmatpush2.msra.mxu0 0.0
  %4996 = vmatprep.subr.mxu0 0.0
  %4997 = vmatpush2.msra.mxu0 0.0
  %4998 = vmatprep.subr.mxu0 0.0
  %4999 = vmatpush2.msra.mxu0 0.0
  %5000 = vmatprep.subr.mxu0 0.0
  %5001 = vmatpush2.msra.mxu0 0.0
  %5002 = vmatprep.subr.mxu0 0.0
  %5003 = vmatpush2.msra.mxu0 0.0
  %5004 = vmatprep.subr.mxu0 0.0
  %5005 = vmatpush2.msra.mxu0 0.0
  %5006 = vmatprep.subr.mxu0 0.0
  %5007 = vmatpush2.msra.mxu0 0.0
  %5008 = vmatprep.subr.mxu0 0.0
  %5009 = vmatpush2.msra.mxu0 0.0
  %5010 = vmatprep.subr.mxu0 0.0
  %5011 = vmatpush2.msra.mxu0 0.0
  %5012 = vmatprep.mubr.f32.mxu0 0.0
  %5013 = vmatmul.mubr.f32.gmra.mxu0 %v4946
  %v5014 = vpop.f32.mrf.mxu0
  %v5015 = vadd.f32 0.0, %v5014
  %v5016 = vpop.f32.mrf.mxu0
  %5017 = vdwg.mxu0
  %5019 = vset.pattern.permute.xlu0 0
  %5020 = vperm.xlu0 %5019, %v4930
  %v5021 = vpop.permute.xlu0 %5020
  %5024 = vset.pattern.permute.xlu0 0
  %5025 = vperm.xlu0 %5024, %v4931
  %v5026 = vpop.permute.xlu0 %5025
  %v5028 = vmul.f32 %v4708, %v5021
  %v5029 = vmul.f32 %v4713, %v5026
  %5030 = vmatprep.subr.mxu0 0.0
  %5031 = vmatpush1.msra.mxu0 0.0
  %5032 = vmatprep.subr.mxu0 0.0
  %5033 = vmatpush1.msra.mxu0 0.0
  %5034 = vmatprep.subr.mxu0 0.0
  %5035 = vmatpush1.msra.mxu0 0.0
  %5036 = vmatprep.subr.mxu0 0.0
  %5037 = vmatpush1.msra.mxu0 0.0
  %5038 = vmatprep.subr.mxu0 0.0
  %5039 = vmatpush1.msra.mxu0 0.0
  %5040 = vmatprep.subr.mxu0 0.0
  %5041 = vmatpush1.msra.mxu0 0.0
  %5042 = vmatprep.subr.mxu0 0.0
  %5043 = vmatpush1.msra.mxu0 0.0
  %5044 = vmatprep.subr.mxu0 0.0
  %5045 = vmatpush1.msra.mxu0 0.0
  %5046 = vmatprep.subr.mxu0 0.0
  %5047 = vmatpush1.msra.mxu0 0.0
  %5048 = vmatprep.subr.mxu0 0.0
  %5049 = vmatpush1.msra.mxu0 0.0
  %5050 = vmatprep.subr.mxu0 0.0
  %5051 = vmatpush1.msra.mxu0 0.0
  %5052 = vmatprep.subr.mxu0 0.0
  %5053 = vmatpush1.msra.mxu0 0.0
  %5054 = vmatprep.subr.mxu0 0.0
  %5055 = vmatpush1.msra.mxu0 0.0
  %5056 = vmatprep.subr.mxu0 0.0
  %5057 = vmatpush1.msra.mxu0 0.0
  %5058 = vmatprep.subr.mxu0 0.0
  %5059 = vmatpush1.msra.mxu0 %v5029
  %5060 = vmatprep.subr.mxu0 0.0
  %5061 = vmatpush1.msra.mxu0 %v5028
  %5062 = vmatprep.subr.mxu0 0.0
  %5063 = vmatpush2.msra.mxu0 0.0
  %5064 = vmatprep.subr.mxu0 0.0
  %5065 = vmatpush2.msra.mxu0 0.0
  %5066 = vmatprep.subr.mxu0 0.0
  %5067 = vmatpush2.msra.mxu0 0.0
  %5068 = vmatprep.subr.mxu0 0.0
  %5069 = vmatpush2.msra.mxu0 0.0
  %5070 = vmatprep.subr.mxu0 0.0
  %5071 = vmatpush2.msra.mxu0 0.0
  %5072 = vmatprep.subr.mxu0 0.0
  %5073 = vmatpush2.msra.mxu0 0.0
  %5074 = vmatprep.subr.mxu0 0.0
  %5075 = vmatpush2.msra.mxu0 0.0
  %5076 = vmatprep.subr.mxu0 0.0
  %5077 = vmatpush2.msra.mxu0 0.0
  %5078 = vmatprep.subr.mxu0 0.0
  %5079 = vmatpush2.msra.mxu0 0.0
  %5080 = vmatprep.subr.mxu0 0.0
  %5081 = vmatpush2.msra.mxu0 0.0
  %5082 = vmatprep.subr.mxu0 0.0
  %5083 = vmatpush2.msra.mxu0 0.0
  %5084 = vmatprep.subr.mxu0 0.0
  %5085 = vmatpush2.msra.mxu0 0.0
  %5086 = vmatprep.subr.mxu0 0.0
  %5087 = vmatpush2.msra.mxu0 0.0
  %5088 = vmatprep.subr.mxu0 0.0
  %5089 = vmatpush2.msra.mxu0 0.0
  %5090 = vmatprep.subr.mxu0 0.0
  %5091 = vmatpush2.msra.mxu0 0.0
  %5092 = vmatprep.subr.mxu0 0.0
  %5093 = vmatpush2.msra.mxu0 0.0
  %5094 = vmatprep.mubr.f32.mxu0 0.0
  %5095 = vmatmul.mubr.f32.gmra.mxu0 %v4946
  %v5096 = vpop.f32.mrf.mxu0
  %v5097 = vadd.f32 0.0, %v5096
  %v5098 = vpop.f32.mrf.mxu0
  %5099 = vdwg.mxu0
  %v5100 = vadd.f32 %v3592, %v5097
  %v5101 = vadd.f32 %v5100, %v5015
  %5103 = vrot.lane.b32.xlu0 %v3593, 8
  %v5104 = vpop.permute.xlu0 %5103
  %5107 = vrot.lane.b32.xlu0 %v5101, 16
  %v5108 = vpop.permute.xlu0 %5107
  %v5110 = vsel %vm172, %v2085, %v5104
  %v5111 = vsel %vm495, %v5110, %v5108
  %v5112 = vld [vmem:[%s0 + $0x328] sm:$0xff]
  %v5113 = vld [vmem:[%s0 + $0x330] sm:$0xff]
  %v5114 = vld [vmem:[%s0 + $0x338] sm:$0xff]
  %v5115 = vld [vmem:[%s0 + $0x340] sm:$0x1]
  %v5116 = vlaneseq
  %v5117 = vshrl.u32 %v5116, 7
  %v5118 = vsub.s32 0, %v5117
  %v5119 = vrot.slane %v5115, %v5118
  %v5121 = vsel %vm512, %v5111, 0
  %5123 = vmatprep.subr.mxu0 0.0
  %5124 = vmatpush1.msra.mxu0 0.0
  %5125 = vmatprep.subr.mxu0 0.0
  %5126 = vmatpush1.msra.mxu0 0.0
  %5127 = vmatprep.subr.mxu0 0.0
  %5128 = vmatpush1.msra.mxu0 0.0
  %5129 = vmatprep.subr.mxu0 0.0
  %5130 = vmatpush1.msra.mxu0 0.0
  %5131 = vmatprep.subr.mxu0 0.0
  %5132 = vmatpush1.msra.mxu0 0.0
  %5133 = vmatprep.subr.mxu0 0.0
  %5134 = vmatpush1.msra.mxu0 0.0
  %5135 = vmatprep.subr.mxu0 0.0
  %5136 = vmatpush1.msra.mxu0 0.0
  %5137 = vmatprep.subr.mxu0 0.0
  %5138 = vmatpush1.msra.mxu0 0.0
  %5139 = vmatprep.subr.mxu0 0.0
  %5140 = vmatpush1.msra.mxu0 0.0
  %5141 = vmatprep.subr.mxu0 0.0
  %5142 = vmatpush1.msra.mxu0 0.0
  %5143 = vmatprep.subr.mxu0 0.0
  %5144 = vmatpush1.msra.mxu0 0.0
  %5145 = vmatprep.subr.mxu0 0.0
  %5146 = vmatpush1.msra.mxu0 0.0
  %5147 = vmatprep.subr.mxu0 0.0
  %5148 = vmatpush1.msra.mxu0 0.0
  %5149 = vmatprep.subr.mxu0 0.0
  %5150 = vmatpush1.msra.mxu0 %v5114
  %5151 = vmatprep.subr.mxu0 0.0
  %5152 = vmatpush1.msra.mxu0 %v5113
  %5153 = vmatprep.subr.mxu0 0.0
  %5154 = vmatpush1.msra.mxu0 %v5112
  %5155 = vmatprep.subr.mxu0 0.0
  %5156 = vmatpush2.msra.mxu0 0.0
  %5157 = vmatprep.subr.mxu0 0.0
  %5158 = vmatpush2.msra.mxu0 0.0
  %5159 = vmatprep.subr.mxu0 0.0
  %5160 = vmatpush2.msra.mxu0 0.0
  %5161 = vmatprep.subr.mxu0 0.0
  %5162 = vmatpush2.msra.mxu0 0.0
  %5163 = vmatprep.subr.mxu0 0.0
  %5164 = vmatpush2.msra.mxu0 0.0
  %5165 = vmatprep.subr.mxu0 0.0
  %5166 = vmatpush2.msra.mxu0 0.0
  %5167 = vmatprep.subr.mxu0 0.0
  %5168 = vmatpush2.msra.mxu0 0.0
  %5169 = vmatprep.subr.mxu0 0.0
  %5170 = vmatpush2.msra.mxu0 0.0
  %5171 = vmatprep.subr.mxu0 0.0
  %5172 = vmatpush2.msra.mxu0 0.0
  %5173 = vmatprep.subr.mxu0 0.0
  %5174 = vmatpush2.msra.mxu0 0.0
  %5175 = vmatprep.subr.mxu0 0.0
  %5176 = vmatpush2.msra.mxu0 0.0
  %5177 = vmatprep.subr.mxu0 0.0
  %5178 = vmatpush2.msra.mxu0 0.0
  %5179 = vmatprep.subr.mxu0 0.0
  %5180 = vmatpush2.msra.mxu0 0.0
  %5181 = vmatprep.subr.mxu0 0.0
  %5182 = vmatpush2.msra.mxu0 0.0
  %5183 = vmatprep.subr.mxu0 0.0
  %5184 = vmatpush2.msra.mxu0 0.0
  %5185 = vmatprep.subr.mxu0 0.0
  %5186 = vmatpush2.msra.mxu0 0.0
  %5187 = vmatprep.mubr.f32.mxu0 0.0
  %5188 = vmatmul.mubr.f32.gmra.mxu0 %v5121
  %v5189 = vpop.f32.mrf.mxu0
  %v5190 = vadd.f32 %v5119, %v5189
  %v5191 = vpop.f32.mrf.mxu0
  %5192 = vdwg.mxu0
  %vm5193 = vcmp.ge.f32.partialorder %v5190, 0.0
  %v5194 = vmul.f32 %v5190, 0.25
  %v5195 = vsel %vm5193, %v5190, %v5194
  %v5196 = vld [vmem:[%s0 + $0x348] sm:$0xff]
  %v5197 = vld [vmem:[%s0 + $0x350] sm:$0xff]
  %v5198 = vld [vmem:[%s0 + $0x358] sm:$0xff]
  %v5199 = vld [vmem:[%s0 + $0x360] sm:$0x1]
  %v5200 = vlaneseq
  %v5201 = vshrl.u32 %v5200, 7
  %v5202 = vsub.s32 0, %v5201
  %v5203 = vrot.slane %v5199, %v5202
  %v5205 = vsel %vm512, %v5195, 0
  %5207 = vmatprep.subr.mxu0 0.0
  %5208 = vmatpush1.msra.mxu0 0.0
  %5209 = vmatprep.subr.mxu0 0.0
  %5210 = vmatpush1.msra.mxu0 0.0
  %5211 = vmatprep.subr.mxu0 0.0
  %5212 = vmatpush1.msra.mxu0 0.0
  %5213 = vmatprep.subr.mxu0 0.0
  %5214 = vmatpush1.msra.mxu0 0.0
  %5215 = vmatprep.subr.mxu0 0.0
  %5216 = vmatpush1.msra.mxu0 0.0
  %5217 = vmatprep.subr.mxu0 0.0
  %5218 = vmatpush1.msra.mxu0 0.0
  %5219 = vmatprep.subr.mxu0 0.0
  %5220 = vmatpush1.msra.mxu0 0.0
  %5221 = vmatprep.subr.mxu0 0.0
  %5222 = vmatpush1.msra.mxu0 0.0
  %5223 = vmatprep.subr.mxu0 0.0
  %5224 = vmatpush1.msra.mxu0 0.0
  %5225 = vmatprep.subr.mxu0 0.0
  %5226 = vmatpush1.msra.mxu0 0.0
  %5227 = vmatprep.subr.mxu0 0.0
  %5228 = vmatpush1.msra.mxu0 0.0
  %5229 = vmatprep.subr.mxu0 0.0
  %5230 = vmatpush1.msra.mxu0 0.0
  %5231 = vmatprep.subr.mxu0 0.0
  %5232 = vmatpush1.msra.mxu0 0.0
  %5233 = vmatprep.subr.mxu0 0.0
  %5234 = vmatpush1.msra.mxu0 %v5198
  %5235 = vmatprep.subr.mxu0 0.0
  %5236 = vmatpush1.msra.mxu0 %v5197
  %5237 = vmatprep.subr.mxu0 0.0
  %5238 = vmatpush1.msra.mxu0 %v5196
  %5239 = vmatprep.subr.mxu0 0.0
  %5240 = vmatpush2.msra.mxu0 0.0
  %5241 = vmatprep.subr.mxu0 0.0
  %5242 = vmatpush2.msra.mxu0 0.0
  %5243 = vmatprep.subr.mxu0 0.0
  %5244 = vmatpush2.msra.mxu0 0.0
  %5245 = vmatprep.subr.mxu0 0.0
  %5246 = vmatpush2.msra.mxu0 0.0
  %5247 = vmatprep.subr.mxu0 0.0
  %5248 = vmatpush2.msra.mxu0 0.0
  %5249 = vmatprep.subr.mxu0 0.0
  %5250 = vmatpush2.msra.mxu0 0.0
  %5251 = vmatprep.subr.mxu0 0.0
  %5252 = vmatpush2.msra.mxu0 0.0
  %5253 = vmatprep.subr.mxu0 0.0
  %5254 = vmatpush2.msra.mxu0 0.0
  %5255 = vmatprep.subr.mxu0 0.0
  %5256 = vmatpush2.msra.mxu0 0.0
  %5257 = vmatprep.subr.mxu0 0.0
  %5258 = vmatpush2.msra.mxu0 0.0
  %5259 = vmatprep.subr.mxu0 0.0
  %5260 = vmatpush2.msra.mxu0 0.0
  %5261 = vmatprep.subr.mxu0 0.0
  %5262 = vmatpush2.msra.mxu0 0.0
  %5263 = vmatprep.subr.mxu0 0.0
  %5264 = vmatpush2.msra.mxu0 0.0
  %5265 = vmatprep.subr.mxu0 0.0
  %5266 = vmatpush2.msra.mxu0 0.0
  %5267 = vmatprep.subr.mxu0 0.0
  %5268 = vmatpush2.msra.mxu0 0.0
  %5269 = vmatprep.subr.mxu0 0.0
  %5270 = vmatpush2.msra.mxu0 0.0
  %5271 = vmatprep.mubr.f32.mxu0 0.0
  %5272 = vmatmul.mubr.f32.gmra.mxu0 %v5205
  %v5273 = vpop.f32.mrf.mxu0
  %v5274 = vadd.f32 %v5203, %v5273
  %v5275 = vpop.f32.mrf.mxu0
  %5276 = vdwg.mxu0
  %vm5277 = vcmp.ge.f32.partialorder %v5274, 0.0
  %v5278 = vmul.f32 %v5274, 0.25
  %v5279 = vsel %vm5277, %v5274, %v5278
  %vm5280 = vcmask 17408
  %v5281 = vsel %vm5280, %v5279, -inf
  %5282 = vmax.xlane.f32.xlu0 %v5281
  %v5283 = vpop.xlane.xlu0 %5282
  %v5284 = vsub.f32 %v5279, %v5283
  %v5285 = vmul.f32 %v5284, 1.442695
  %v5286 = vpow.pop %v5285
  %v5287 = vsel %vm5280, %v5286, 0.0
  %5288 = vadd.xlane.f32.xlu0 %v5287
  %v5289 = vpop.xlane.xlu0 %5288
  %v5290 = vrcp.pop %v5289
  %v5291 = vmul.f32 %v5286, %v5290
  %v5292 = vld [vmem:[%s3] sm:$0x3]
  %v5293 = vadd.f32 %v5291, %v5292
  %v5294 = vsel %vm5280, %v5293, -inf
  %5295 = vmax.xlane.f32.xlu0 %v5294
  %v5296 = vpop.xlane.xlu0 %5295
  %v5297 = vsub.f32 %v5293, %v5296
  %v5298 = vmul.f32 %v5297, 1.442695
  %v5299 = vpow.pop %v5298
  %v5300 = vsel %vm5280, %v5299, 0.0
  %5301 = vadd.xlane.f32.xlu0 %v5300
  %v5302 = vpop.xlane.xlu0 %5301
  %v5303 = vrcp.pop %v5302
  %v5304 = vmul.f32 %v5299, %v5303
  %v5305 = vadd.f32 %v5304, 0.0
  %5307 = vrot.lane.b32.xlu0 %v5304, 1
  %v5308 = vpop.permute.xlu0 %5307
  %v5310 = vadd.f32 %v5305, %v5308
  %5311 = vrot.lane.b32.xlu0 %v5304, 2
  %v5312 = vpop.permute.xlu0 %5311
  %v5314 = vadd.f32 %v5310, %v5312
  %5316 = vset.pattern.permute.xlu0 2
  %5317 = vperm.xlu0 %5316, %v5314
  %v5318 = vpop.permute.xlu0 %5317
  %v5320 = vmul.f32 %v5318, %v2081
  %v5321 = vadd.f32 %v5320, 0.0
  %5323 = vset.pattern.permute.xlu0 2
  %5324 = vperm.xlu0 %5323, %v5310
  %v5325 = vpop.permute.xlu0 %5324
  %v5327 = vmul.f32 %v5325, %v3589
  %v5328 = vadd.f32 %v5327, 0.0
  %5329 = vset.pattern.permute.xlu0 0
  %5330 = vperm.xlu0 %5329, %v5304
  %v5331 = vpop.permute.xlu0 %5330
  %v5333 = vmul.f32 %v5331, %v1999
  %v5334 = vadd.f32 %v5328, %v5333
  %5336 = vset.pattern.permute.xlu0 2
  %5337 = vperm.xlu0 %5336, %v5305
  %v5338 = vpop.permute.xlu0 %5337
  %v5340 = vmul.f32 %v5338, %v5097
  %v5341 = vadd.f32 %v5340, 0.0
  %5342 = vset.pattern.permute.xlu0 1
  %5343 = vperm.xlu0 %5342, %v5304
  %v5344 = vpop.permute.xlu0 %5343
  %v5346 = vmul.f32 %v5344, %v3507
  %v5347 = vadd.f32 %v5341, %v5346
  %5348 = vset.pattern.permute.xlu0 2
  %5349 = vperm.xlu0 %5348, %v5304
  %v5350 = vpop.permute.xlu0 %5349
  %v5352 = vmul.f32 %v5350, %v5015
  %v5353 = vadd.f32 %v5352, 0.0
  %5355 = vrot.lane.b32.xlu0 %v5334, 8
  %v5356 = vpop.permute.xlu0 %5355
  %5359 = vrot.lane.b32.xlu0 %v5347, 16
  %v5360 = vpop.permute.xlu0 %5359
  %5363 = vrot.lane.b32.xlu0 %v5353, 24
  %v5364 = vpop.permute.xlu0 %5363
  %v5366 = vsel %vm172, %v5321, %v5356
  %v5367 = vsel %vm495, %v5366, %v5360
  %v5368 = vsel %vm512, %v5367, %v5364
  %v5369 = vld [vmem:[%s0 + $0x368] sm:$0xff]
  %v5370 = vld [vmem:[%s0 + $0x370] sm:$0xff]
  %v5371 = vld [vmem:[%s0 + $0x378] sm:$0xff]
  %v5372 = vld [vmem:[%s0 + $0x380] sm:$0xff]
  %v5373 = vld [vmem:[%s0 + $0x388] sm:$0x1]
  %v5374 = vlaneseq
  %v5375 = vshrl.u32 %v5374, 7
  %v5376 = vsub.s32 0, %v5375
  %v5377 = vrot.slane %v5373, %v5376
  %vm5378 = vcmask 261120
  %v5380 = vsel %vm5378, %v5368, 0
  %5382 = vmatprep.subr.mxu0 0.0
  %5383 = vmatpush1.msra.mxu0 0.0
  %5384 = vmatprep.subr.mxu0 0.0
  %5385 = vmatpush1.msra.mxu0 0.0
  %5386 = vmatprep.subr.mxu0 0.0
  %5387 = vmatpush1.msra.mxu0 0.0
  %5388 = vmatprep.subr.mxu0 0.0
  %5389 = vmatpush1.msra.mxu0 0.0
  %5390 = vmatprep.subr.mxu0 0.0
  %5391 = vmatpush1.msra.mxu0 0.0
  %5392 = vmatprep.subr.mxu0 0.0
  %5393 = vmatpush1.msra.mxu0 0.0
  %5394 = vmatprep.subr.mxu0 0.0
  %5395 = vmatpush1.msra.mxu0 0.0
  %5396 = vmatprep.subr.mxu0 0.0
  %5397 = vmatpush1.msra.mxu0 0.0
  %5398 = vmatprep.subr.mxu0 0.0
  %5399 = vmatpush1.msra.mxu0 0.0
  %5400 = vmatprep.subr.mxu0 0.0
  %5401 = vmatpush1.msra.mxu0 0.0
  %5402 = vmatprep.subr.mxu0 0.0
  %5403 = vmatpush1.msra.mxu0 0.0
  %5404 = vmatprep.subr.mxu0 0.0
  %5405 = vmatpush1.msra.mxu0 0.0
  %5406 = vmatprep.subr.mxu0 0.0
  %5407 = vmatpush1.msra.mxu0 %v5372
  %5408 = vmatprep.subr.mxu0 0.0
  %5409 = vmatpush1.msra.mxu0 %v5371
  %5410 = vmatprep.subr.mxu0 0.0
  %5411 = vmatpush1.msra.mxu0 %v5370
  %5412 = vmatprep.subr.mxu0 0.0
  %5413 = vmatpush1.msra.mxu0 %v5369
  %5414 = vmatprep.subr.mxu0 0.0
  %5415 = vmatpush2.msra.mxu0 0.0
  %5416 = vmatprep.subr.mxu0 0.0
  %5417 = vmatpush2.msra.mxu0 0.0
  %5418 = vmatprep.subr.mxu0 0.0
  %5419 = vmatpush2.msra.mxu0 0.0
  %5420 = vmatprep.subr.mxu0 0.0
  %5421 = vmatpush2.msra.mxu0 0.0
  %5422 = vmatprep.subr.mxu0 0.0
  %5423 = vmatpush2.msra.mxu0 0.0
  %5424 = vmatprep.subr.mxu0 0.0
  %5425 = vmatpush2.msra.mxu0 0.0
  %5426 = vmatprep.subr.mxu0 0.0
  %5427 = vmatpush2.msra.mxu0 0.0
  %5428 = vmatprep.subr.mxu0 0.0
  %5429 = vmatpush2.msra.mxu0 0.0
  %5430 = vmatprep.subr.mxu0 0.0
  %5431 = vmatpush2.msra.mxu0 0.0
  %5432 = vmatprep.subr.mxu0 0.0
  %5433 = vmatpush2.msra.mxu0 0.0
  %5434 = vmatprep.subr.mxu0 0.0
  %5435 = vmatpush2.msra.mxu0 0.0
  %5436 = vmatprep.subr.mxu0 0.0
  %5437 = vmatpush2.msra.mxu0 0.0
  %5438 = vmatprep.subr.mxu0 0.0
  %5439 = vmatpush2.msra.mxu0 0.0
  %5440 = vmatprep.subr.mxu0 0.0
  %5441 = vmatpush2.msra.mxu0 0.0
  %5442 = vmatprep.subr.mxu0 0.0
  %5443 = vmatpush2.msra.mxu0 0.0
  %5444 = vmatprep.subr.mxu0 0.0
  %5445 = vmatpush2.msra.mxu0 0.0
  %5446 = vmatprep.mubr.f32.mxu0 0.0
  %5447 = vmatmul.mubr.f32.gmra.mxu0 %v5380
  %v5448 = vpop.f32.mrf.mxu0
  %v5449 = vadd.f32 %v5377, %v5448
  %v5450 = vpop.f32.mrf.mxu0
  %5451 = vdwg.mxu0
  %v5452 = vld [vmem:[%s0 + $0x390] sm:$0x1]
  %v5453 = vld [vmem:[%s0 + $0x398] sm:$0x1]
  %vm5454 = vcmask 254976
  %v5455 = vsel %vm5454, %v5449, 0.0
  %v5456 = vrot.slane %v5455, 4
  %v5457 = vadd.f32 %v5455, %v5456
  %v5458 = vrot.slane %v5457, 2
  %v5459 = vadd.f32 %v5457, %v5458
  %v5460 = vrot.slane %v5459, 1
  %v5461 = vadd.f32 %v5459, %v5460
  %v5462 = vrcp.pop 2.0
  %v5463 = vmul.f32 %v5461, %v5462
  %v5464 = vsub.f32 %v5449, %v5463
  %v5465 = vmul.f32 %v5464, %v5464
  %v5466 = vsel %vm5454, %v5465, 0.0
  %v5467 = vrot.slane %v5466, 4
  %v5468 = vadd.f32 %v5466, %v5467
  %v5469 = vrot.slane %v5468, 2
  %v5470 = vadd.f32 %v5468, %v5469
  %v5471 = vrot.slane %v5470, 1
  %v5472 = vadd.f32 %v5470, %v5471
  %v5473 = vmul.f32 %v5472, %v5462
  %v5474 = vadd.f32 %v5473, 1e-05
  %v5475 = vrsqrt.pop %v5474
  %v5476 = vmul.f32 %v5464, %v5475
  %v5477 = vlaneseq
  %v5478 = vshrl.u32 %v5477, 7
  %v5479 = vsub.s32 0, %v5478
  %v5480 = vrot.slane %v5452, %v5479
  %v5481 = vmul.f32 %v5476, %v5480
  %v5482 = vlaneseq
  %v5483 = vshrl.u32 %v5482, 7
  %v5484 = vsub.s32 0, %v5483
  %v5485 = vrot.slane %v5453, %v5484
  %v5486 = vadd.f32 %v5481, %v5485
  %vm5487 = vcmp.ge.f32.partialorder %v5486, 0.0
  %v5488 = vmul.f32 %v5486, 0.25
  %v5489 = vsel %vm5487, %v5486, %v5488
  %v5490 = vld [vmem:[%s0 + $0x3a0] sm:$0xff]
  %v5491 = vld [vmem:[%s0 + $0x3a8] sm:$0xff]
  %v5492 = vld [vmem:[%s0 + $0x3b0] sm:$0xff]
  %v5493 = vld [vmem:[%s0 + $0x3b8] sm:$0xff]
  %v5494 = vld [vmem:[%s0 + $0x3c0] sm:$0x1]
  %v5495 = vlaneseq
  %v5496 = vshrl.u32 %v5495, 7
  %v5497 = vsub.s32 0, %v5496
  %v5498 = vrot.slane %v5494, %v5497
  %v5500 = vsel %vm5378, %v5489, 0
  %5502 = vmatprep.subr.mxu0 0.0
  %5503 = vmatpush1.msra.mxu0 0.0
  %5504 = vmatprep.subr.mxu0 0.0
  %5505 = vmatpush1.msra.mxu0 0.0
  %5506 = vmatprep.subr.mxu0 0.0
  %5507 = vmatpush1.msra.mxu0 0.0
  %5508 = vmatprep.subr.mxu0 0.0
  %5509 = vmatpush1.msra.mxu0 0.0
  %5510 = vmatprep.subr.mxu0 0.0
  %5511 = vmatpush1.msra.mxu0 0.0
  %5512 = vmatprep.subr.mxu0 0.0
  %5513 = vmatpush1.msra.mxu0 0.0
  %5514 = vmatprep.subr.mxu0 0.0
  %5515 = vmatpush1.msra.mxu0 0.0
  %5516 = vmatprep.subr.mxu0 0.0
  %5517 = vmatpush1.msra.mxu0 0.0
  %5518 = vmatprep.subr.mxu0 0.0
  %5519 = vmatpush1.msra.mxu0 0.0
  %5520 = vmatprep.subr.mxu0 0.0
  %5521 = vmatpush1.msra.mxu0 0.0
  %5522 = vmatprep.subr.mxu0 0.0
  %5523 = vmatpush1.msra.mxu0 0.0
  %5524 = vmatprep.subr.mxu0 0.0
  %5525 = vmatpush1.msra.mxu0 0.0
  %5526 = vmatprep.subr.mxu0 0.0
  %5527 = vmatpush1.msra.mxu0 %v5493
  %5528 = vmatprep.subr.mxu0 0.0
  %5529 = vmatpush1.msra.mxu0 %v5492
  %5530 = vmatprep.subr.mxu0 0.0
  %5531 = vmatpush1.msra.mxu0 %v5491
  %5532 = vmatprep.subr.mxu0 0.0
  %5533 = vmatpush1.msra.mxu0 %v5490
  %5534 = vmatprep.subr.mxu0 0.0
  %5535 = vmatpush2.msra.mxu0 0.0
  %5536 = vmatprep.subr.mxu0 0.0
  %5537 = vmatpush2.msra.mxu0 0.0
  %5538 = vmatprep.subr.mxu0 0.0
  %5539 = vmatpush2.msra.mxu0 0.0
  %5540 = vmatprep.subr.mxu0 0.0
  %5541 = vmatpush2.msra.mxu0 0.0
  %5542 = vmatprep.subr.mxu0 0.0
  %5543 = vmatpush2.msra.mxu0 0.0
  %5544 = vmatprep.subr.mxu0 0.0
  %5545 = vmatpush2.msra.mxu0 0.0
  %5546 = vmatprep.subr.mxu0 0.0
  %5547 = vmatpush2.msra.mxu0 0.0
  %5548 = vmatprep.subr.mxu0 0.0
  %5549 = vmatpush2.msra.mxu0 0.0
  %5550 = vmatprep.subr.mxu0 0.0
  %5551 = vmatpush2.msra.mxu0 0.0
  %5552 = vmatprep.subr.mxu0 0.0
  %5553 = vmatpush2.msra.mxu0 0.0
  %5554 = vmatprep.subr.mxu0 0.0
  %5555 = vmatpush2.msra.mxu0 0.0
  %5556 = vmatprep.subr.mxu0 0.0
  %5557 = vmatpush2.msra.mxu0 0.0
  %5558 = vmatprep.subr.mxu0 0.0
  %5559 = vmatpush2.msra.mxu0 0.0
  %5560 = vmatprep.subr.mxu0 0.0
  %5561 = vmatpush2.msra.mxu0 0.0
  %5562 = vmatprep.subr.mxu0 0.0
  %5563 = vmatpush2.msra.mxu0 0.0
  %5564 = vmatprep.subr.mxu0 0.0
  %5565 = vmatpush2.msra.mxu0 0.0
  %5566 = vmatprep.mubr.f32.mxu0 0.0
  %5567 = vmatmul.mubr.f32.gmra.mxu0 %v5500
  %v5568 = vpop.f32.mrf.mxu0
  %v5569 = vadd.f32 %v5498, %v5568
  %v5570 = vpop.f32.mrf.mxu0
  %5571 = vdwg.mxu0
  %vm5572 = vcmask 33792
  %5573 = vst.msk [vmem:[%s4] sm:$0x3] %vm5572, %v5569
  // Predicated region
  $region18: #{_lambda_.1} parent=0 // pred_check
    _
  $region19: #{_lambda_.1} parent=0 // pred_check_branch
    %5575 = sbr.rel (0) target = $region21
  $region20: #{_lambda_.1} parent=0 // pred_region
    _
  $region21: #{_lambda_.1} parent=0 // pred_fallthru
    _
  // Predicated region
  $region22: #{_lambda_.1} parent=0 // pred_check
    _
  $region23: #{_lambda_.1} parent=0 // pred_check_branch
    %5577 = sbr.rel (0) target = $region25
  $region24: #{_lambda_.1} parent=0 // pred_region
    _
  $region25: #{_lambda_.1} parent=0 // pred_fallthru
    _

</llo_original>
